<compile_context>
chip_gen: v5e
topology: v5e:2x2
jax: 0.10.0
libtpu: 0.0.40
codegen_flags: <defaults>
</compile_context>

<pallas_src>
import functools

import jax
import jax.numpy as jnp
import numpy as np
from jax.experimental import pallas as pl
from jax.experimental.pallas import tpu as pltpu

# ----------------------------- configuration ------------------------------
INPUT_DIM = 4
DIM = 8
N_DOWNSAMPLE = 2
N_RES = 2
NORM = "in"            # MUNIT ContentEncoder default
ACTIV = "relu"
PAD_TYPE = "reflect"
IN_EPS = 1e-5
LRELU_SLOPE = 0.2

_PAD_MODE = {"reflect": "reflect", "replicate": "edge", "zero": "constant"}


# --------------------------- in-kernel helpers -----------------------------
def _conv_taps_s1(x, w_taps, kh, kw, row_stride, s_out):
    """Stride-1 conv as kh*kw per-tap matmuls over contiguous lane slices.

    x:       (Cin, S_in) flattened padded activation (row stride = row_stride)
    w_taps:  ref/value of shape (kh*kw, Cout, Cin)
    returns: (Cout, s_out) "full width" output (valid cols masked later).
    """
    cout = w_taps.shape[1]
    acc = jnp.zeros((cout, s_out), jnp.float32)
    for i in range(kh):
        for j in range(kw):
            off = i * row_stride + j
            # NOTE: at production sizes cast operands to bf16 here (keep f32
            # accumulate via preferred_element_type) for MXU throughput.
            acc = acc + jnp.dot(w_taps[i * kw + j], x[:, off:off + s_out],
                                preferred_element_type=jnp.float32)
    return acc


def _block_epilogue(acc, bias, mask, *, n_valid, norm, act):
    """bias + InstanceNorm (masked over valid lanes) + activation, fused."""
    acc = acc + bias                                   # (Cout, S) + (Cout, 1)
    if norm == "in":
        inv_n = 1.0 / float(n_valid)
        mean = jnp.sum(acc * mask, axis=1, keepdims=True) * inv_n
        diff = (acc - mean) * mask
        var = jnp.sum(diff * diff, axis=1, keepdims=True) * inv_n
        acc = (acc - mean) * jax.lax.rsqrt(var + IN_EPS)
    if act == "relu":
        acc = jnp.maximum(acc, 0.0)
    elif act == "lrelu":
        acc = jnp.where(acc > 0, acc, LRELU_SLOPE * acc)
    return acc


# ------------------------------ Pallas kernels -----------------------------
def _conv_block_kernel(x_ref, w_ref, b_ref, m_ref, o_ref, *,
                       k, row_stride, s_out, n_valid, norm, act):
    # x_ref: (1, Cin, S_in)  w_ref: (k*k, Cout, Cin)  b_ref: (Cout, 1)
    # m_ref: (1, s_out)      o_ref: (1, Cout, s_out)
    x = x_ref[0]
    acc = _conv_taps_s1(x, w_ref, k, k, row_stride, s_out)
    acc = _block_epilogue(acc, b_ref[...], m_ref[...],
                          n_valid=n_valid, norm=norm, act=act)
    o_ref[0] = acc


def _down_block_kernel(x_ref, w_ref, b_ref, m_ref, o_ref, *,
                       row_stride, s_out, n_valid, norm, act):
    # 4x4 / stride-2 conv on 4 parity planes: sum of four 2x2 stride-1 convs.
    # x_ref: (1, 4, Cin, S_in)  w_ref: (16, Cout, Cin)
    xpar = x_ref[0]
    cout = w_ref.shape[1]
    acc = jnp.zeros((cout, s_out), jnp.float32)
    for i in range(4):
        for j in range(4):
            p = (i % 2) * 2 + (j % 2)               # parity plane
            off = (i // 2) * row_stride + (j // 2)  # 2x2 tap offset
            acc = acc + jnp.dot(w_ref[i * 4 + j], xpar[p][:, off:off + s_out],
                                preferred_element_type=jnp.float32)
    acc = _block_epilogue(acc, b_ref[...], m_ref[...],
                          n_valid=n_valid, norm=norm, act=act)
    o_ref[0] = acc


def _resblock_kernel(x_ref, w1_ref, b1_ref, w2_ref, b2_ref, m_ref, o_ref, *,
                     H, W, norm, act):
    # Fully fused ResBlock: conv3x3+IN+act -> (in-kernel reflect re-pad) ->
    # conv3x3+IN -> + residual.  All handoffs stay in VMEM/vregs.
    wp = W + 2
    s_out = H * wp
    n_valid = H * W
    xp = x_ref[0]                                   # (C, (H+2)*wp + 2)
    c = w1_ref.shape[1]
    mask = m_ref[...]

    # conv1 + IN + activation
    h1 = _conv_taps_s1(xp, w1_ref, 3, 3, wp, s_out)
    h1 = _block_epilogue(h1, b1_ref[...], mask, n_valid=n_valid, norm=norm, act=act)

    # reflect re-pad of conv1's valid region (lane-slice concat, no reshapes)
    pieces = []
    for h2 in range(H + 2):
        hs = 1 if h2 == 0 else (H - 2 if h2 == H + 1 else h2 - 1)
        base = hs * wp
        pieces.append(h1[:, base + 1:base + 2])          # left reflect col
        pieces.append(h1[:, base:base + W])              # valid row
        pieces.append(h1[:, base + W - 2:base + W - 1])  # right reflect col
    pieces.append(jnp.zeros((c, 2), jnp.float32))        # slab tail
    xp2 = jnp.concatenate(pieces, axis=1)                # (C, (H+2)*wp + 2)

    # conv2 + IN (no activation) + residual add
    h2v = _conv_taps_s1(xp2, w2_ref, 3, 3, wp, s_out)
    h2v = _block_epilogue(h2v, b2_ref[...], mask, n_valid=n_valid, norm=norm,
                          act="none")
    res = xp[:, wp + 1:wp + 1 + s_out]                   # input x in output layout
    o_ref[0] = h2v + res


# ------------------------------ host wrappers -------------------------------
def _compiler_params():
    return pltpu.CompilerParams(dimension_semantics=("parallel",),
                                vmem_limit_bytes=32 * 1024 * 1024)


def _taps_weight(w):
    cout, cin, kh, kw = w.shape
    return jnp.transpose(w, (2, 3, 0, 1)).reshape(kh * kw, cout, cin)


def _valid_mask(n_rows, row_stride, valid_w):
    row = (np.arange(row_stride) < valid_w).astype(np.float32)
    return jnp.asarray(np.tile(row, n_rows)[None, :])     # (1, n_rows*row_stride)


def conv_block_pallas(x, w, b, *, k, pad, norm, act, pad_type=PAD_TYPE):
    """Conv2dBlock: KxK stride-1 'same' conv + IN + act (single fused kernel)."""
    B, cin, H, W = x.shape
    cout = w.shape[0]
    hp, wp = H + 2 * pad, W + 2 * pad
    s_out = H * wp
    s_in = hp * wp + 2 * pad
    xp = jnp.pad(x, ((0, 0), (0, 0), (pad, pad), (pad, pad)),
                 mode=_PAD_MODE[pad_type])
    xflat = jnp.pad(xp.reshape(B, cin, hp * wp), ((0, 0), (0, 0), (0, 2 * pad)))
    wt = _taps_weight(w)
    bt = b.reshape(cout, 1)
    mask = _valid_mask(H, wp, W)
    kern = functools.partial(_conv_block_kernel, k=k, row_stride=wp,
                             s_out=s_out, n_valid=H * W, norm=norm, act=act)
    flops = 2 * B * k * k * cout * cin * s_out
    bytes_acc = 4 * (xflat.size + wt.size + B * cout * s_out)
    out = pl.pallas_call(
        kern,
        grid=(B,),
        in_specs=[
            pl.BlockSpec((1, cin, s_in), lambda bb: (bb, 0, 0)),
            pl.BlockSpec((k * k, cout, cin), lambda bb: (0, 0, 0)),
            pl.BlockSpec((cout, 1), lambda bb: (0, 0)),
            pl.BlockSpec((1, s_out), lambda bb: (0, 0)),
        ],
        out_specs=pl.BlockSpec((1, cout, s_out), lambda bb: (bb, 0, 0)),
        out_shape=jax.ShapeDtypeStruct((B, cout, s_out), jnp.float32),
        compiler_params=_compiler_params(),
        cost_estimate=pl.CostEstimate(flops=flops, transcendentals=B * cout,
                                      bytes_accessed=bytes_acc),
    )(xflat, wt, bt, mask)
    return out.reshape(B, cout, H, wp)[:, :, :, :W]


def downsample_block_pallas(x, w, b, *, norm, act, pad_type=PAD_TYPE):
    """Conv2dBlock: 4x4 stride-2 pad-1 conv + IN + act (single fused kernel)."""
    B, cin, H, W = x.shape
    cout = w.shape[0]
    ho, wo = H // 2, W // 2
    hp2, wp2 = ho + 1, wo + 1
    s_out = ho * wp2
    s_in = hp2 * wp2 + 2
    xp = jnp.pad(x, ((0, 0), (0, 0), (1, 1), (1, 1)), mode=_PAD_MODE[pad_type])
    # parity (space-to-depth) split: same total bytes as xp, no duplication.
    parts = [xp[:, :, pi::2, pj::2] for pi in range(2) for pj in range(2)]
    xpar = jnp.stack(parts, axis=1).reshape(B, 4, cin, hp2 * wp2)
    xpar = jnp.pad(xpar, ((0, 0), (0, 0), (0, 0), (0, 2)))
    wt = _taps_weight(w)                                  # (16, cout, cin)
    bt = b.reshape(cout, 1)
    mask = _valid_mask(ho, wp2, wo)
    kern = functools.partial(_down_block_kernel, row_stride=wp2, s_out=s_out,
                             n_valid=ho * wo, norm=norm, act=act)
    flops = 2 * B * 16 * cout * cin * s_out
    bytes_acc = 4 * (xpar.size + wt.size + B * cout * s_out)
    out = pl.pallas_call(
        kern,
        grid=(B,),
        in_specs=[
            pl.BlockSpec((1, 4, cin, s_in), lambda bb: (bb, 0, 0, 0)),
            pl.BlockSpec((16, cout, cin), lambda bb: (0, 0, 0)),
            pl.BlockSpec((cout, 1), lambda bb: (0, 0)),
            pl.BlockSpec((1, s_out), lambda bb: (0, 0)),
        ],
        out_specs=pl.BlockSpec((1, cout, s_out), lambda bb: (bb, 0, 0)),
        out_shape=jax.ShapeDtypeStruct((B, cout, s_out), jnp.float32),
        compiler_params=_compiler_params(),
        cost_estimate=pl.CostEstimate(flops=flops, transcendentals=B * cout,
                                      bytes_accessed=bytes_acc),
    )(xpar, wt, bt, mask)
    return out.reshape(B, cout, ho, wp2)[:, :, :, :wo]


def resblock_pallas(x, w1, b1, w2, b2, *, norm, act, pad_type=PAD_TYPE):
    """Whole ResBlock (2 convs + IN + act + residual) in ONE pallas_call."""
    assert pad_type == "reflect"  # TODO(synk): other pad types in fused re-pad
    B, c, H, W = x.shape
    wp, hp = W + 2, H + 2
    s_out = H * wp
    s_in = hp * wp + 2
    xp = jnp.pad(x, ((0, 0), (0, 0), (1, 1), (1, 1)), mode="reflect")
    xflat = jnp.pad(xp.reshape(B, c, hp * wp), ((0, 0), (0, 0), (0, 2)))
    w1t, w2t = _taps_weight(w1), _taps_weight(w2)
    b1t, b2t = b1.reshape(c, 1), b2.reshape(c, 1)
    mask = _valid_mask(H, wp, W)
    kern = functools.partial(_resblock_kernel, H=H, W=W, norm=norm, act=act)
    flops = 2 * B * 2 * 9 * c * c * s_out
    bytes_acc = 4 * (xflat.size + w1t.size + w2t.size + B * c * s_out)
    out = pl.pallas_call(
        kern,
        grid=(B,),
        in_specs=[
            pl.BlockSpec((1, c, s_in), lambda bb: (bb, 0, 0)),
            pl.BlockSpec((9, c, c), lambda bb: (0, 0, 0)),
            pl.BlockSpec((c, 1), lambda bb: (0, 0)),
            pl.BlockSpec((9, c, c), lambda bb: (0, 0, 0)),
            pl.BlockSpec((c, 1), lambda bb: (0, 0)),
            pl.BlockSpec((1, s_out), lambda bb: (0, 0)),
        ],
        out_specs=pl.BlockSpec((1, c, s_out), lambda bb: (bb, 0, 0)),
        out_shape=jax.ShapeDtypeStruct((B, c, s_out), jnp.float32),
        compiler_params=_compiler_params(),
        cost_estimate=pl.CostEstimate(flops=flops, transcendentals=2 * B * c,
                                      bytes_accessed=bytes_acc),
    )(xflat, w1t, b1t, w2t, b2t, mask)
    return out.reshape(B, c, H, wp)[:, :, :, :W]


# ------------------------------- the module --------------------------------
def init_params(key):
    def conv_init(k_, cout, cin, ksz):
        kw_, kb_ = jax.random.split(k_)
        fan_in = cin * ksz * ksz
        w = jax.random.normal(kw_, (cout, cin, ksz, ksz), jnp.float32) / np.sqrt(fan_in)
        b = 0.05 * jax.random.normal(kb_, (cout,), jnp.float32)
        return w, b

    params = {}
    dim = DIM
    key, k0 = jax.random.split(key)
    params["conv0"] = conv_init(k0, dim, INPUT_DIM, 7)
    for i in range(N_DOWNSAMPLE):
        key, ki = jax.random.split(key)
        params[f"down{i}"] = conv_init(ki, 2 * dim, dim, 4)
        dim *= 2
    for i in range(N_RES):
        key, ka, kb = jax.random.split(key, 3)
        params[f"res{i}_1"] = conv_init(ka, dim, dim, 3)
        params[f"res{i}_2"] = conv_init(kb, dim, dim, 3)
    return params


def encoder_forward(params, x):
    w, b = params["conv0"]
    h = conv_block_pallas(x, w, b, k=7, pad=3, norm=NORM, act=ACTIV)
    for i in range(N_DOWNSAMPLE):
        w, b = params[f"down{i}"]
        h = downsample_block_pallas(h, w, b, norm=NORM, act=ACTIV)
    for i in range(N_RES):
        w1, b1 = params[f"res{i}_1"]
        w2, b2 = params[f"res{i}_2"]
        h = resblock_pallas(h, w1, b1, w2, b2, norm=NORM, act=ACTIV)
    return h


# ------------------------------- pure-JAX ref -------------------------------
def _ref_conv(x, w, b, stride, pad):
    if pad > 0:
        x = jnp.pad(x, ((0, 0), (0, 0), (pad, pad), (pad, pad)),
                    mode=_PAD_MODE[PAD_TYPE])
    y = jax.lax.conv_general_dilated(
        x, w, (stride, stride), "VALID",
        dimension_numbers=("NCHW", "OIHW", "NCHW"),
        precision=jax.lax.Precision.HIGHEST)
    return y + b[None, :, None, None]


def _ref_block(x, w, b, *, stride, pad, norm, act):
    y = _ref_conv(x, w, b, stride, pad)
    if norm == "in":
        mean = jnp.mean(y, axis=(2, 3), keepdims=True)
        var = jnp.mean((y - mean) ** 2, axis=(2, 3), keepdims=True)
        y = (y - mean) * jax.lax.rsqrt(var + IN_EPS)
    if act == "relu":
        y = jnp.maximum(y, 0.0)
    elif act == "lrelu":
        y = jnp.where(y > 0, y, LRELU_SLOPE * y)
    return y


def ref_forward(params, x):
    w, b = params["conv0"]
    h = _ref_block(x, w, b, stride=1, pad=3, norm=NORM, act=ACTIV)
    for i in range(N_DOWNSAMPLE):
        w, b = params[f"down{i}"]
        h = _ref_block(h, w, b, stride=2, pad=1, norm=NORM, act=ACTIV)
    for i in range(N_RES):
        w1, b1 = params[f"res{i}_1"]
        w2, b2 = params[f"res{i}_2"]
        y = _ref_block(h, w1, b1, stride=1, pad=1, norm=NORM, act=ACTIV)
        y = _ref_block(y, w2, b2, stride=1, pad=1, norm=NORM, act="none")
        h = h + y
    return h


# ----------------------------------- main -----------------------------------
if __name__ == "__main__":
    key = jax.random.PRNGKey(0)
    key, kp, kx = jax.random.split(key, 3)
    params = init_params(kp)
    x = jax.random.normal(kx, (2, INPUT_DIM, 16, 16), jnp.float32)  # NCHW

    fwd = jax.jit(lambda xx: encoder_forward(params, xx))
    out = jax.block_until_ready(fwd(x))

    out_dim = DIM * (2 ** N_DOWNSAMPLE)
    out_hw = 16 // (2 ** N_DOWNSAMPLE)
    assert out.shape == (2, out_dim, out_hw, out_hw), out.shape

    ref = ref_forward(params, x)
    max_diff = float(jnp.max(jnp.abs(out - ref)))
    assert max_diff < 1e-3, f"mismatch vs reference: {max_diff}"

    print("KERNEL_OK")
</pallas_src>

<mosaic_0001>
module attributes {stable_mosaic.version = 11 : i64} {
  func.func @_conv_block_kernel(%arg0: i32, %arg1: memref<1x4x490xf32, #tpu.memory_space<vmem>>, %arg2: memref<49x8x4xf32, #tpu.memory_space<vmem>>, %arg3: memref<8x1xf32, #tpu.memory_space<vmem>>, %arg4: memref<1x352xf32, #tpu.memory_space<vmem>>, %arg5: memref<1x8x352xf32, #tpu.memory_space<vmem>>) attributes {dimension_semantics = [#tpu.dimension_semantics<parallel>], iteration_bounds = array<i64: 2>, scalar_prefetch = 0 : i64, scratch_operands = 0 : i64, tpu.core_type = #tpu.core_type<tc>, window_params = [{transform_indices = @transform_0, window_bounds = array<i64: 1, 4, 490>}, {pipeline_mode = #tpu.pipeline_mode<synchronous>, transform_indices = @transform_1, window_bounds = array<i64: 49, 8, 4>}, {pipeline_mode = #tpu.pipeline_mode<synchronous>, transform_indices = @transform_2, window_bounds = array<i64: 8, 1>}, {pipeline_mode = #tpu.pipeline_mode<synchronous>, transform_indices = @transform_3, window_bounds = array<i64: 1, 352>}, {transform_indices = @transform_4, window_bounds = array<i64: 1, 8, 352>}]} {
    %c0 = arith.constant 0 : index
    %c0_0 = arith.constant 0 : index
    %c0_1 = arith.constant 0 : index
    %0 = vector.load %arg1[%c0, %c0_0, %c0_1] : memref<1x4x490xf32, #tpu.memory_space<vmem>>, vector<1x4x490xf32>
    %1 = vector.shape_cast %0 : vector<1x4x490xf32> to vector<4x490xf32>
    %cst = arith.constant 0.000000e+00 : f32
    %2 = vector.broadcast %cst : f32 to vector<8x352xf32>
    %c0_2 = arith.constant 0 : index
    %c0_3 = arith.constant 0 : index
    %c0_4 = arith.constant 0 : index
    %3 = vector.load %arg2[%c0_2, %c0_3, %c0_4] : memref<49x8x4xf32, #tpu.memory_space<vmem>>, vector<1x8x4xf32>
    %4 = vector.shape_cast %3 : vector<1x8x4xf32> to vector<8x4xf32>
    %5 = vector.extract_strided_slice %1 {offsets = [0, 0], sizes = [4, 352], strides = [1, 1]} : vector<4x490xf32> to vector<4x352xf32>
    %cst_5 = arith.constant dense<0.000000e+00> : vector<8x352xf32>
    %6 = tpu.matmul %4, %5, %cst_5 {dimension_numbers = #tpu.dot_dimension_numbers<[1], [0], [0], [1], [0, 0, 1, 1], [], []>} : vector<8x4xf32>, vector<4x352xf32>, vector<8x352xf32> -> vector<8x352xf32>
    %7 = arith.addf %2, %6 : vector<8x352xf32>
    %c1 = arith.constant 1 : index
    %c0_6 = arith.constant 0 : index
    %c0_7 = arith.constant 0 : index
    %8 = vector.load %arg2[%c1, %c0_6, %c0_7] : memref<49x8x4xf32, #tpu.memory_space<vmem>>, vector<1x8x4xf32>
    %9 = vector.shape_cast %8 : vector<1x8x4xf32> to vector<8x4xf32>
    %10 = vector.extract_strided_slice %1 {offsets = [0, 1], sizes = [4, 352], strides = [1, 1]} : vector<4x490xf32> to vector<4x352xf32>
    %cst_8 = arith.constant dense<0.000000e+00> : vector<8x352xf32>
    %11 = tpu.matmul %9, %10, %cst_8 {dimension_numbers = #tpu.dot_dimension_numbers<[1], [0], [0], [1], [0, 0, 1, 1], [], []>} : vector<8x4xf32>, vector<4x352xf32>, vector<8x352xf32> -> vector<8x352xf32>
    %12 = arith.addf %7, %11 : vector<8x352xf32>
    %c2 = arith.constant 2 : index
    %c0_9 = arith.constant 0 : index
    %c0_10 = arith.constant 0 : index
    %13 = vector.load %arg2[%c2, %c0_9, %c0_10] : memref<49x8x4xf32, #tpu.memory_space<vmem>>, vector<1x8x4xf32>
    %14 = vector.shape_cast %13 : vector<1x8x4xf32> to vector<8x4xf32>
    %15 = vector.extract_strided_slice %1 {offsets = [0, 2], sizes = [4, 352], strides = [1, 1]} : vector<4x490xf32> to vector<4x352xf32>
    %cst_11 = arith.constant dense<0.000000e+00> : vector<8x352xf32>
    %16 = tpu.matmul %14, %15, %cst_11 {dimension_numbers = #tpu.dot_dimension_numbers<[1], [0], [0], [1], [0, 0, 1, 1], [], []>} : vector<8x4xf32>, vector<4x352xf32>, vector<8x352xf32> -> vector<8x352xf32>
    %17 = arith.addf %12, %16 : vector<8x352xf32>
    %c3 = arith.constant 3 : index
    %c0_12 = arith.constant 0 : index
    %c0_13 = arith.constant 0 : index
    %18 = vector.load %arg2[%c3, %c0_12, %c0_13] : memref<49x8x4xf32, #tpu.memory_space<vmem>>, vector<1x8x4xf32>
    %19 = vector.shape_cast %18 : vector<1x8x4xf32> to vector<8x4xf32>
    %20 = vector.extract_strided_slice %1 {offsets = [0, 3], sizes = [4, 352], strides = [1, 1]} : vector<4x490xf32> to vector<4x352xf32>
    %cst_14 = arith.constant dense<0.000000e+00> : vector<8x352xf32>
    %21 = tpu.matmul %19, %20, %cst_14 {dimension_numbers = #tpu.dot_dimension_numbers<[1], [0], [0], [1], [0, 0, 1, 1], [], []>} : vector<8x4xf32>, vector<4x352xf32>, vector<8x352xf32> -> vector<8x352xf32>
    %22 = arith.addf %17, %21 : vector<8x352xf32>
    %c4 = arith.constant 4 : index
    %c0_15 = arith.constant 0 : index
    %c0_16 = arith.constant 0 : index
    %23 = vector.load %arg2[%c4, %c0_15, %c0_16] : memref<49x8x4xf32, #tpu.memory_space<vmem>>, vector<1x8x4xf32>
    %24 = vector.shape_cast %23 : vector<1x8x4xf32> to vector<8x4xf32>
    %25 = vector.extract_strided_slice %1 {offsets = [0, 4], sizes = [4, 352], strides = [1, 1]} : vector<4x490xf32> to vector<4x352xf32>
    %cst_17 = arith.constant dense<0.000000e+00> : vector<8x352xf32>
    %26 = tpu.matmul %24, %25, %cst_17 {dimension_numbers = #tpu.dot_dimension_numbers<[1], [0], [0], [1], [0, 0, 1, 1], [], []>} : vector<8x4xf32>, vector<4x352xf32>, vector<8x352xf32> -> vector<8x352xf32>
    %27 = arith.addf %22, %26 : vector<8x352xf32>
    %c5 = arith.constant 5 : index
    %c0_18 = arith.constant 0 : index
    %c0_19 = arith.constant 0 : index
    %28 = vector.load %arg2[%c5, %c0_18, %c0_19] : memref<49x8x4xf32, #tpu.memory_space<vmem>>, vector<1x8x4xf32>
    %29 = vector.shape_cast %28 : vector<1x8x4xf32> to vector<8x4xf32>
    %30 = vector.extract_strided_slice %1 {offsets = [0, 5], sizes = [4, 352], strides = [1, 1]} : vector<4x490xf32> to vector<4x352xf32>
    %cst_20 = arith.constant dense<0.000000e+00> : vector<8x352xf32>
    %31 = tpu.matmul %29, %30, %cst_20 {dimension_numbers = #tpu.dot_dimension_numbers<[1], [0], [0], [1], [0, 0, 1, 1], [], []>} : vector<8x4xf32>, vector<4x352xf32>, vector<8x352xf32> -> vector<8x352xf32>
    %32 = arith.addf %27, %31 : vector<8x352xf32>
    %c6 = arith.constant 6 : index
    %c0_21 = arith.constant 0 : index
    %c0_22 = arith.constant 0 : index
    %33 = vector.load %arg2[%c6, %c0_21, %c0_22] : memref<49x8x4xf32, #tpu.memory_space<vmem>>, vector<1x8x4xf32>
    %34 = vector.shape_cast %33 : vector<1x8x4xf32> to vector<8x4xf32>
    %35 = vector.extract_strided_slice %1 {offsets = [0, 6], sizes = [4, 352], strides = [1, 1]} : vector<4x490xf32> to vector<4x352xf32>
    %cst_23 = arith.constant dense<0.000000e+00> : vector<8x352xf32>
    %36 = tpu.matmul %34, %35, %cst_23 {dimension_numbers = #tpu.dot_dimension_numbers<[1], [0], [0], [1], [0, 0, 1, 1], [], []>} : vector<8x4xf32>, vector<4x352xf32>, vector<8x352xf32> -> vector<8x352xf32>
    %37 = arith.addf %32, %36 : vector<8x352xf32>
    %c7 = arith.constant 7 : index
    %c0_24 = arith.constant 0 : index
    %c0_25 = arith.constant 0 : index
    %38 = vector.load %arg2[%c7, %c0_24, %c0_25] : memref<49x8x4xf32, #tpu.memory_space<vmem>>, vector<1x8x4xf32>
    %39 = vector.shape_cast %38 : vector<1x8x4xf32> to vector<8x4xf32>
    %40 = vector.extract_strided_slice %1 {offsets = [0, 22], sizes = [4, 352], strides = [1, 1]} : vector<4x490xf32> to vector<4x352xf32>
    %cst_26 = arith.constant dense<0.000000e+00> : vector<8x352xf32>
    %41 = tpu.matmul %39, %40, %cst_26 {dimension_numbers = #tpu.dot_dimension_numbers<[1], [0], [0], [1], [0, 0, 1, 1], [], []>} : vector<8x4xf32>, vector<4x352xf32>, vector<8x352xf32> -> vector<8x352xf32>
    %42 = arith.addf %37, %41 : vector<8x352xf32>
    %c8 = arith.constant 8 : index
    %c0_27 = arith.constant 0 : index
    %c0_28 = arith.constant 0 : index
    %43 = vector.load %arg2[%c8, %c0_27, %c0_28] : memref<49x8x4xf32, #tpu.memory_space<vmem>>, vector<1x8x4xf32>
    %44 = vector.shape_cast %43 : vector<1x8x4xf32> to vector<8x4xf32>
    %45 = vector.extract_strided_slice %1 {offsets = [0, 23], sizes = [4, 352], strides = [1, 1]} : vector<4x490xf32> to vector<4x352xf32>
    %cst_29 = arith.constant dense<0.000000e+00> : vector<8x352xf32>
    %46 = tpu.matmul %44, %45, %cst_29 {dimension_numbers = #tpu.dot_dimension_numbers<[1], [0], [0], [1], [0, 0, 1, 1], [], []>} : vector<8x4xf32>, vector<4x352xf32>, vector<8x352xf32> -> vector<8x352xf32>
    %47 = arith.addf %42, %46 : vector<8x352xf32>
    %c9 = arith.constant 9 : index
    %c0_30 = arith.constant 0 : index
    %c0_31 = arith.constant 0 : index
    %48 = vector.load %arg2[%c9, %c0_30, %c0_31] : memref<49x8x4xf32, #tpu.memory_space<vmem>>, vector<1x8x4xf32>
    %49 = vector.shape_cast %48 : vector<1x8x4xf32> to vector<8x4xf32>
    %50 = vector.extract_strided_slice %1 {offsets = [0, 24], sizes = [4, 352], strides = [1, 1]} : vector<4x490xf32> to vector<4x352xf32>
    %cst_32 = arith.constant dense<0.000000e+00> : vector<8x352xf32>
    %51 = tpu.matmul %49, %50, %cst_32 {dimension_numbers = #tpu.dot_dimension_numbers<[1], [0], [0], [1], [0, 0, 1, 1], [], []>} : vector<8x4xf32>, vector<4x352xf32>, vector<8x352xf32> -> vector<8x352xf32>
    %52 = arith.addf %47, %51 : vector<8x352xf32>
    %c10 = arith.constant 10 : index
    %c0_33 = arith.constant 0 : index
    %c0_34 = arith.constant 0 : index
    %53 = vector.load %arg2[%c10, %c0_33, %c0_34] : memref<49x8x4xf32, #tpu.memory_space<vmem>>, vector<1x8x4xf32>
    %54 = vector.shape_cast %53 : vector<1x8x4xf32> to vector<8x4xf32>
    %55 = vector.extract_strided_slice %1 {offsets = [0, 25], sizes = [4, 352], strides = [1, 1]} : vector<4x490xf32> to vector<4x352xf32>
    %cst_35 = arith.constant dense<0.000000e+00> : vector<8x352xf32>
    %56 = tpu.matmul %54, %55, %cst_35 {dimension_numbers = #tpu.dot_dimension_numbers<[1], [0], [0], [1], [0, 0, 1, 1], [], []>} : vector<8x4xf32>, vector<4x352xf32>, vector<8x352xf32> -> vector<8x352xf32>
    %57 = arith.addf %52, %56 : vector<8x352xf32>
    %c11 = arith.constant 11 : index
    %c0_36 = arith.constant 0 : index
    %c0_37 = arith.constant 0 : index
    %58 = vector.load %arg2[%c11, %c0_36, %c0_37] : memref<49x8x4xf32, #tpu.memory_space<vmem>>, vector<1x8x4xf32>
    %59 = vector.shape_cast %58 : vector<1x8x4xf32> to vector<8x4xf32>
    %60 = vector.extract_strided_slice %1 {offsets = [0, 26], sizes = [4, 352], strides = [1, 1]} : vector<4x490xf32> to vector<4x352xf32>
    %cst_38 = arith.constant dense<0.000000e+00> : vector<8x352xf32>
    %61 = tpu.matmul %59, %60, %cst_38 {dimension_numbers = #tpu.dot_dimension_numbers<[1], [0], [0], [1], [0, 0, 1, 1], [], []>} : vector<8x4xf32>, vector<4x352xf32>, vector<8x352xf32> -> vector<8x352xf32>
    %62 = arith.addf %57, %61 : vector<8x352xf32>
    %c12 = arith.constant 12 : index
    %c0_39 = arith.constant 0 : index
    %c0_40 = arith.constant 0 : index
    %63 = vector.load %arg2[%c12, %c0_39, %c0_40] : memref<49x8x4xf32, #tpu.memory_space<vmem>>, vector<1x8x4xf32>
    %64 = vector.shape_cast %63 : vector<1x8x4xf32> to vector<8x4xf32>
    %65 = vector.extract_strided_slice %1 {offsets = [0, 27], sizes = [4, 352], strides = [1, 1]} : vector<4x490xf32> to vector<4x352xf32>
    %cst_41 = arith.constant dense<0.000000e+00> : vector<8x352xf32>
    %66 = tpu.matmul %64, %65, %cst_41 {dimension_numbers = #tpu.dot_dimension_numbers<[1], [0], [0], [1], [0, 0, 1, 1], [], []>} : vector<8x4xf32>, vector<4x352xf32>, vector<8x352xf32> -> vector<8x352xf32>
    %67 = arith.addf %62, %66 : vector<8x352xf32>
    %c13 = arith.constant 13 : index
    %c0_42 = arith.constant 0 : index
    %c0_43 = arith.constant 0 : index
    %68 = vector.load %arg2[%c13, %c0_42, %c0_43] : memref<49x8x4xf32, #tpu.memory_space<vmem>>, vector<1x8x4xf32>
    %69 = vector.shape_cast %68 : vector<1x8x4xf32> to vector<8x4xf32>
    %70 = vector.extract_strided_slice %1 {offsets = [0, 28], sizes = [4, 352], strides = [1, 1]} : vector<4x490xf32> to vector<4x352xf32>
    %cst_44 = arith.constant dense<0.000000e+00> : vector<8x352xf32>
    %71 = tpu.matmul %69, %70, %cst_44 {dimension_numbers = #tpu.dot_dimension_numbers<[1], [0], [0], [1], [0, 0, 1, 1], [], []>} : vector<8x4xf32>, vector<4x352xf32>, vector<8x352xf32> -> vector<8x352xf32>
    %72 = arith.addf %67, %71 : vector<8x352xf32>
    %c14 = arith.constant 14 : index
    %c0_45 = arith.constant 0 : index
    %c0_46 = arith.constant 0 : index
    %73 = vector.load %arg2[%c14, %c0_45, %c0_46] : memref<49x8x4xf32, #tpu.memory_space<vmem>>, vector<1x8x4xf32>
    %74 = vector.shape_cast %73 : vector<1x8x4xf32> to vector<8x4xf32>
    %75 = vector.extract_strided_slice %1 {offsets = [0, 44], sizes = [4, 352], strides = [1, 1]} : vector<4x490xf32> to vector<4x352xf32>
    %cst_47 = arith.constant dense<0.000000e+00> : vector<8x352xf32>
    %76 = tpu.matmul %74, %75, %cst_47 {dimension_numbers = #tpu.dot_dimension_numbers<[1], [0], [0], [1], [0, 0, 1, 1], [], []>} : vector<8x4xf32>, vector<4x352xf32>, vector<8x352xf32> -> vector<8x352xf32>
    %77 = arith.addf %72, %76 : vector<8x352xf32>
    %c15 = arith.constant 15 : index
    %c0_48 = arith.constant 0 : index
    %c0_49 = arith.constant 0 : index
    %78 = vector.load %arg2[%c15, %c0_48, %c0_49] : memref<49x8x4xf32, #tpu.memory_space<vmem>>, vector<1x8x4xf32>
    %79 = vector.shape_cast %78 : vector<1x8x4xf32> to vector<8x4xf32>
    %80 = vector.extract_strided_slice %1 {offsets = [0, 45], sizes = [4, 352], strides = [1, 1]} : vector<4x490xf32> to vector<4x352xf32>
    %cst_50 = arith.constant dense<0.000000e+00> : vector<8x352xf32>
    %81 = tpu.matmul %79, %80, %cst_50 {dimension_numbers = #tpu.dot_dimension_numbers<[1], [0], [0], [1], [0, 0, 1, 1], [], []>} : vector<8x4xf32>, vector<4x352xf32>, vector<8x352xf32> -> vector<8x352xf32>
    %82 = arith.addf %77, %81 : vector<8x352xf32>
    %c16 = arith.constant 16 : index
    %c0_51 = arith.constant 0 : index
    %c0_52 = arith.constant 0 : index
    %83 = vector.load %arg2[%c16, %c0_51, %c0_52] : memref<49x8x4xf32, #tpu.memory_space<vmem>>, vector<1x8x4xf32>
    %84 = vector.shape_cast %83 : vector<1x8x4xf32> to vector<8x4xf32>
    %85 = vector.extract_strided_slice %1 {offsets = [0, 46], sizes = [4, 352], strides = [1, 1]} : vector<4x490xf32> to vector<4x352xf32>
    %cst_53 = arith.constant dense<0.000000e+00> : vector<8x352xf32>
    %86 = tpu.matmul %84, %85, %cst_53 {dimension_numbers = #tpu.dot_dimension_numbers<[1], [0], [0], [1], [0, 0, 1, 1], [], []>} : vector<8x4xf32>, vector<4x352xf32>, vector<8x352xf32> -> vector<8x352xf32>
    %87 = arith.addf %82, %86 : vector<8x352xf32>
    %c17 = arith.constant 17 : index
    %c0_54 = arith.constant 0 : index
    %c0_55 = arith.constant 0 : index
    %88 = vector.load %arg2[%c17, %c0_54, %c0_55] : memref<49x8x4xf32, #tpu.memory_space<vmem>>, vector<1x8x4xf32>
    %89 = vector.shape_cast %88 : vector<1x8x4xf32> to vector<8x4xf32>
    %90 = vector.extract_strided_slice %1 {offsets = [0, 47], sizes = [4, 352], strides = [1, 1]} : vector<4x490xf32> to vector<4x352xf32>
    %cst_56 = arith.constant dense<0.000000e+00> : vector<8x352xf32>
    %91 = tpu.matmul %89, %90, %cst_56 {dimension_numbers = #tpu.dot_dimension_numbers<[1], [0], [0], [1], [0, 0, 1, 1], [], []>} : vector<8x4xf32>, vector<4x352xf32>, vector<8x352xf32> -> vector<8x352xf32>
    %92 = arith.addf %87, %91 : vector<8x352xf32>
    %c18 = arith.constant 18 : index
    %c0_57 = arith.constant 0 : index
    %c0_58 = arith.constant 0 : index
    %93 = vector.load %arg2[%c18, %c0_57, %c0_58] : memref<49x8x4xf32, #tpu.memory_space<vmem>>, vector<1x8x4xf32>
    %94 = vector.shape_cast %93 : vector<1x8x4xf32> to vector<8x4xf32>
    %95 = vector.extract_strided_slice %1 {offsets = [0, 48], sizes = [4, 352], strides = [1, 1]} : vector<4x490xf32> to vector<4x352xf32>
    %cst_59 = arith.constant dense<0.000000e+00> : vector<8x352xf32>
    %96 = tpu.matmul %94, %95, %cst_59 {dimension_numbers = #tpu.dot_dimension_numbers<[1], [0], [0], [1], [0, 0, 1, 1], [], []>} : vector<8x4xf32>, vector<4x352xf32>, vector<8x352xf32> -> vector<8x352xf32>
    %97 = arith.addf %92, %96 : vector<8x352xf32>
    %c19 = arith.constant 19 : index
    %c0_60 = arith.constant 0 : index
    %c0_61 = arith.constant 0 : index
    %98 = vector.load %arg2[%c19, %c0_60, %c0_61] : memref<49x8x4xf32, #tpu.memory_space<vmem>>, vector<1x8x4xf32>
    %99 = vector.shape_cast %98 : vector<1x8x4xf32> to vector<8x4xf32>
    %100 = vector.extract_strided_slice %1 {offsets = [0, 49], sizes = [4, 352], strides = [1, 1]} : vector<4x490xf32> to vector<4x352xf32>
    %cst_62 = arith.constant dense<0.000000e+00> : vector<8x352xf32>
    %101 = tpu.matmul %99, %100, %cst_62 {dimension_numbers = #tpu.dot_dimension_numbers<[1], [0], [0], [1], [0, 0, 1, 1], [], []>} : vector<8x4xf32>, vector<4x352xf32>, vector<8x352xf32> -> vector<8x352xf32>
    %102 = arith.addf %97, %101 : vector<8x352xf32>
    %c20 = arith.constant 20 : index
    %c0_63 = arith.constant 0 : index
    %c0_64 = arith.constant 0 : index
    %103 = vector.load %arg2[%c20, %c0_63, %c0_64] : memref<49x8x4xf32, #tpu.memory_space<vmem>>, vector<1x8x4xf32>
    %104 = vector.shape_cast %103 : vector<1x8x4xf32> to vector<8x4xf32>
    %105 = vector.extract_strided_slice %1 {offsets = [0, 50], sizes = [4, 352], strides = [1, 1]} : vector<4x490xf32> to vector<4x352xf32>
    %cst_65 = arith.constant dense<0.000000e+00> : vector<8x352xf32>
    %106 = tpu.matmul %104, %105, %cst_65 {dimension_numbers = #tpu.dot_dimension_numbers<[1], [0], [0], [1], [0, 0, 1, 1], [], []>} : vector<8x4xf32>, vector<4x352xf32>, vector<8x352xf32> -> vector<8x352xf32>
    %107 = arith.addf %102, %106 : vector<8x352xf32>
    %c21 = arith.constant 21 : index
    %c0_66 = arith.constant 0 : index
    %c0_67 = arith.constant 0 : index
    %108 = vector.load %arg2[%c21, %c0_66, %c0_67] : memref<49x8x4xf32, #tpu.memory_space<vmem>>, vector<1x8x4xf32>
    %109 = vector.shape_cast %108 : vector<1x8x4xf32> to vector<8x4xf32>
    %110 = vector.extract_strided_slice %1 {offsets = [0, 66], sizes = [4, 352], strides = [1, 1]} : vector<4x490xf32> to vector<4x352xf32>
    %cst_68 = arith.constant dense<0.000000e+00> : vector<8x352xf32>
    %111 = tpu.matmul %109, %110, %cst_68 {dimension_numbers = #tpu.dot_dimension_numbers<[1], [0], [0], [1], [0, 0, 1, 1], [], []>} : vector<8x4xf32>, vector<4x352xf32>, vector<8x352xf32> -> vector<8x352xf32>
    %112 = arith.addf %107, %111 : vector<8x352xf32>
    %c22 = arith.constant 22 : index
    %c0_69 = arith.constant 0 : index
    %c0_70 = arith.constant 0 : index
    %113 = vector.load %arg2[%c22, %c0_69, %c0_70] : memref<49x8x4xf32, #tpu.memory_space<vmem>>, vector<1x8x4xf32>
    %114 = vector.shape_cast %113 : vector<1x8x4xf32> to vector<8x4xf32>
    %115 = vector.extract_strided_slice %1 {offsets = [0, 67], sizes = [4, 352], strides = [1, 1]} : vector<4x490xf32> to vector<4x352xf32>
    %cst_71 = arith.constant dense<0.000000e+00> : vector<8x352xf32>
    %116 = tpu.matmul %114, %115, %cst_71 {dimension_numbers = #tpu.dot_dimension_numbers<[1], [0], [0], [1], [0, 0, 1, 1], [], []>} : vector<8x4xf32>, vector<4x352xf32>, vector<8x352xf32> -> vector<8x352xf32>
    %117 = arith.addf %112, %116 : vector<8x352xf32>
    %c23 = arith.constant 23 : index
    %c0_72 = arith.constant 0 : index
    %c0_73 = arith.constant 0 : index
    %118 = vector.load %arg2[%c23, %c0_72, %c0_73] : memref<49x8x4xf32, #tpu.memory_space<vmem>>, vector<1x8x4xf32>
    %119 = vector.shape_cast %118 : vector<1x8x4xf32> to vector<8x4xf32>
    %120 = vector.extract_strided_slice %1 {offsets = [0, 68], sizes = [4, 352], strides = [1, 1]} : vector<4x490xf32> to vector<4x352xf32>
    %cst_74 = arith.constant dense<0.000000e+00> : vector<8x352xf32>
    %121 = tpu.matmul %119, %120, %cst_74 {dimension_numbers = #tpu.dot_dimension_numbers<[1], [0], [0], [1], [0, 0, 1, 1], [], []>} : vector<8x4xf32>, vector<4x352xf32>, vector<8x352xf32> -> vector<8x352xf32>
    %122 = arith.addf %117, %121 : vector<8x352xf32>
    %c24 = arith.constant 24 : index
    %c0_75 = arith.constant 0 : index
    %c0_76 = arith.constant 0 : index
    %123 = vector.load %arg2[%c24, %c0_75, %c0_76] : memref<49x8x4xf32, #tpu.memory_space<vmem>>, vector<1x8x4xf32>
    %124 = vector.shape_cast %123 : vector<1x8x4xf32> to vector<8x4xf32>
    %125 = vector.extract_strided_slice %1 {offsets = [0, 69], sizes = [4, 352], strides = [1, 1]} : vector<4x490xf32> to vector<4x352xf32>
    %cst_77 = arith.constant dense<0.000000e+00> : vector<8x352xf32>
    %126 = tpu.matmul %124, %125, %cst_77 {dimension_numbers = #tpu.dot_dimension_numbers<[1], [0], [0], [1], [0, 0, 1, 1], [], []>} : vector<8x4xf32>, vector<4x352xf32>, vector<8x352xf32> -> vector<8x352xf32>
    %127 = arith.addf %122, %126 : vector<8x352xf32>
    %c25 = arith.constant 25 : index
    %c0_78 = arith.constant 0 : index
    %c0_79 = arith.constant 0 : index
    %128 = vector.load %arg2[%c25, %c0_78, %c0_79] : memref<49x8x4xf32, #tpu.memory_space<vmem>>, vector<1x8x4xf32>
    %129 = vector.shape_cast %128 : vector<1x8x4xf32> to vector<8x4xf32>
    %130 = vector.extract_strided_slice %1 {offsets = [0, 70], sizes = [4, 352], strides = [1, 1]} : vector<4x490xf32> to vector<4x352xf32>
    %cst_80 = arith.constant dense<0.000000e+00> : vector<8x352xf32>
    %131 = tpu.matmul %129, %130, %cst_80 {dimension_numbers = #tpu.dot_dimension_numbers<[1], [0], [0], [1], [0, 0, 1, 1], [], []>} : vector<8x4xf32>, vector<4x352xf32>, vector<8x352xf32> -> vector<8x352xf32>
    %132 = arith.addf %127, %131 : vector<8x352xf32>
    %c26 = arith.constant 26 : index
    %c0_81 = arith.constant 0 : index
    %c0_82 = arith.constant 0 : index
    %133 = vector.load %arg2[%c26, %c0_81, %c0_82] : memref<49x8x4xf32, #tpu.memory_space<vmem>>, vector<1x8x4xf32>
    %134 = vector.shape_cast %133 : vector<1x8x4xf32> to vector<8x4xf32>
    %135 = vector.extract_strided_slice %1 {offsets = [0, 71], sizes = [4, 352], strides = [1, 1]} : vector<4x490xf32> to vector<4x352xf32>
    %cst_83 = arith.constant dense<0.000000e+00> : vector<8x352xf32>
    %136 = tpu.matmul %134, %135, %cst_83 {dimension_numbers = #tpu.dot_dimension_numbers<[1], [0], [0], [1], [0, 0, 1, 1], [], []>} : vector<8x4xf32>, vector<4x352xf32>, vector<8x352xf32> -> vector<8x352xf32>
    %137 = arith.addf %132, %136 : vector<8x352xf32>
    %c27 = arith.constant 27 : index
    %c0_84 = arith.constant 0 : index
    %c0_85 = arith.constant 0 : index
    %138 = vector.load %arg2[%c27, %c0_84, %c0_85] : memref<49x8x4xf32, #tpu.memory_space<vmem>>, vector<1x8x4xf32>
    %139 = vector.shape_cast %138 : vector<1x8x4xf32> to vector<8x4xf32>
    %140 = vector.extract_strided_slice %1 {offsets = [0, 72], sizes = [4, 352], strides = [1, 1]} : vector<4x490xf32> to vector<4x352xf32>
    %cst_86 = arith.constant dense<0.000000e+00> : vector<8x352xf32>
    %141 = tpu.matmul %139, %140, %cst_86 {dimension_numbers = #tpu.dot_dimension_numbers<[1], [0], [0], [1], [0, 0, 1, 1], [], []>} : vector<8x4xf32>, vector<4x352xf32>, vector<8x352xf32> -> vector<8x352xf32>
    %142 = arith.addf %137, %141 : vector<8x352xf32>
    %c28 = arith.constant 28 : index
    %c0_87 = arith.constant 0 : index
    %c0_88 = arith.constant 0 : index
    %143 = vector.load %arg2[%c28, %c0_87, %c0_88] : memref<49x8x4xf32, #tpu.memory_space<vmem>>, vector<1x8x4xf32>
    %144 = vector.shape_cast %143 : vector<1x8x4xf32> to vector<8x4xf32>
    %145 = vector.extract_strided_slice %1 {offsets = [0, 88], sizes = [4, 352], strides = [1, 1]} : vector<4x490xf32> to vector<4x352xf32>
    %cst_89 = arith.constant dense<0.000000e+00> : vector<8x352xf32>
    %146 = tpu.matmul %144, %145, %cst_89 {dimension_numbers = #tpu.dot_dimension_numbers<[1], [0], [0], [1], [0, 0, 1, 1], [], []>} : vector<8x4xf32>, vector<4x352xf32>, vector<8x352xf32> -> vector<8x352xf32>
    %147 = arith.addf %142, %146 : vector<8x352xf32>
    %c29 = arith.constant 29 : index
    %c0_90 = arith.constant 0 : index
    %c0_91 = arith.constant 0 : index
    %148 = vector.load %arg2[%c29, %c0_90, %c0_91] : memref<49x8x4xf32, #tpu.memory_space<vmem>>, vector<1x8x4xf32>
    %149 = vector.shape_cast %148 : vector<1x8x4xf32> to vector<8x4xf32>
    %150 = vector.extract_strided_slice %1 {offsets = [0, 89], sizes = [4, 352], strides = [1, 1]} : vector<4x490xf32> to vector<4x352xf32>
    %cst_92 = arith.constant dense<0.000000e+00> : vector<8x352xf32>
    %151 = tpu.matmul %149, %150, %cst_92 {dimension_numbers = #tpu.dot_dimension_numbers<[1], [0], [0], [1], [0, 0, 1, 1], [], []>} : vector<8x4xf32>, vector<4x352xf32>, vector<8x352xf32> -> vector<8x352xf32>
    %152 = arith.addf %147, %151 : vector<8x352xf32>
    %c30 = arith.constant 30 : index
    %c0_93 = arith.constant 0 : index
    %c0_94 = arith.constant 0 : index
    %153 = vector.load %arg2[%c30, %c0_93, %c0_94] : memref<49x8x4xf32, #tpu.memory_space<vmem>>, vector<1x8x4xf32>
    %154 = vector.shape_cast %153 : vector<1x8x4xf32> to vector<8x4xf32>
    %155 = vector.extract_strided_slice %1 {offsets = [0, 90], sizes = [4, 352], strides = [1, 1]} : vector<4x490xf32> to vector<4x352xf32>
    %cst_95 = arith.constant dense<0.000000e+00> : vector<8x352xf32>
    %156 = tpu.matmul %154, %155, %cst_95 {dimension_numbers = #tpu.dot_dimension_numbers<[1], [0], [0], [1], [0, 0, 1, 1], [], []>} : vector<8x4xf32>, vector<4x352xf32>, vector<8x352xf32> -> vector<8x352xf32>
    %157 = arith.addf %152, %156 : vector<8x352xf32>
    %c31 = arith.constant 31 : index
    %c0_96 = arith.constant 0 : index
    %c0_97 = arith.constant 0 : index
    %158 = vector.load %arg2[%c31, %c0_96, %c0_97] : memref<49x8x4xf32, #tpu.memory_space<vmem>>, vector<1x8x4xf32>
    %159 = vector.shape_cast %158 : vector<1x8x4xf32> to vector<8x4xf32>
    %160 = vector.extract_strided_slice %1 {offsets = [0, 91], sizes = [4, 352], strides = [1, 1]} : vector<4x490xf32> to vector<4x352xf32>
    %cst_98 = arith.constant dense<0.000000e+00> : vector<8x352xf32>
    %161 = tpu.matmul %159, %160, %cst_98 {dimension_numbers = #tpu.dot_dimension_numbers<[1], [0], [0], [1], [0, 0, 1, 1], [], []>} : vector<8x4xf32>, vector<4x352xf32>, vector<8x352xf32> -> vector<8x352xf32>
    %162 = arith.addf %157, %161 : vector<8x352xf32>
    %c32 = arith.constant 32 : index
    %c0_99 = arith.constant 0 : index
    %c0_100 = arith.constant 0 : index
    %163 = vector.load %arg2[%c32, %c0_99, %c0_100] : memref<49x8x4xf32, #tpu.memory_space<vmem>>, vector<1x8x4xf32>
    %164 = vector.shape_cast %163 : vector<1x8x4xf32> to vector<8x4xf32>
    %165 = vector.extract_strided_slice %1 {offsets = [0, 92], sizes = [4, 352], strides = [1, 1]} : vector<4x490xf32> to vector<4x352xf32>
    %cst_101 = arith.constant dense<0.000000e+00> : vector<8x352xf32>
    %166 = tpu.matmul %164, %165, %cst_101 {dimension_numbers = #tpu.dot_dimension_numbers<[1], [0], [0], [1], [0, 0, 1, 1], [], []>} : vector<8x4xf32>, vector<4x352xf32>, vector<8x352xf32> -> vector<8x352xf32>
    %167 = arith.addf %162, %166 : vector<8x352xf32>
    %c33 = arith.constant 33 : index
    %c0_102 = arith.constant 0 : index
    %c0_103 = arith.constant 0 : index
    %168 = vector.load %arg2[%c33, %c0_102, %c0_103] : memref<49x8x4xf32, #tpu.memory_space<vmem>>, vector<1x8x4xf32>
    %169 = vector.shape_cast %168 : vector<1x8x4xf32> to vector<8x4xf32>
    %170 = vector.extract_strided_slice %1 {offsets = [0, 93], sizes = [4, 352], strides = [1, 1]} : vector<4x490xf32> to vector<4x352xf32>
    %cst_104 = arith.constant dense<0.000000e+00> : vector<8x352xf32>
    %171 = tpu.matmul %169, %170, %cst_104 {dimension_numbers = #tpu.dot_dimension_numbers<[1], [0], [0], [1], [0, 0, 1, 1], [], []>} : vector<8x4xf32>, vector<4x352xf32>, vector<8x352xf32> -> vector<8x352xf32>
    %172 = arith.addf %167, %171 : vector<8x352xf32>
    %c34 = arith.constant 34 : index
    %c0_105 = arith.constant 0 : index
    %c0_106 = arith.constant 0 : index
    %173 = vector.load %arg2[%c34, %c0_105, %c0_106] : memref<49x8x4xf32, #tpu.memory_space<vmem>>, vector<1x8x4xf32>
    %174 = vector.shape_cast %173 : vector<1x8x4xf32> to vector<8x4xf32>
    %175 = vector.extract_strided_slice %1 {offsets = [0, 94], sizes = [4, 352], strides = [1, 1]} : vector<4x490xf32> to vector<4x352xf32>
    %cst_107 = arith.constant dense<0.000000e+00> : vector<8x352xf32>
    %176 = tpu.matmul %174, %175, %cst_107 {dimension_numbers = #tpu.dot_dimension_numbers<[1], [0], [0], [1], [0, 0, 1, 1], [], []>} : vector<8x4xf32>, vector<4x352xf32>, vector<8x352xf32> -> vector<8x352xf32>
    %177 = arith.addf %172, %176 : vector<8x352xf32>
    %c35 = arith.constant 35 : index
    %c0_108 = arith.constant 0 : index
    %c0_109 = arith.constant 0 : index
    %178 = vector.load %arg2[%c35, %c0_108, %c0_109] : memref<49x8x4xf32, #tpu.memory_space<vmem>>, vector<1x8x4xf32>
    %179 = vector.shape_cast %178 : vector<1x8x4xf32> to vector<8x4xf32>
    %180 = vector.extract_strided_slice %1 {offsets = [0, 110], sizes = [4, 352], strides = [1, 1]} : vector<4x490xf32> to vector<4x352xf32>
    %cst_110 = arith.constant dense<0.000000e+00> : vector<8x352xf32>
    %181 = tpu.matmul %179, %180, %cst_110 {dimension_numbers = #tpu.dot_dimension_numbers<[1], [0], [0], [1], [0, 0, 1, 1], [], []>} : vector<8x4xf32>, vector<4x352xf32>, vector<8x352xf32> -> vector<8x352xf32>
    %182 = arith.addf %177, %181 : vector<8x352xf32>
    %c36 = arith.constant 36 : index
    %c0_111 = arith.constant 0 : index
    %c0_112 = arith.constant 0 : index
    %183 = vector.load %arg2[%c36, %c0_111, %c0_112] : memref<49x8x4xf32, #tpu.memory_space<vmem>>, vector<1x8x4xf32>
    %184 = vector.shape_cast %183 : vector<1x8x4xf32> to vector<8x4xf32>
    %185 = vector.extract_strided_slice %1 {offsets = [0, 111], sizes = [4, 352], strides = [1, 1]} : vector<4x490xf32> to vector<4x352xf32>
    %cst_113 = arith.constant dense<0.000000e+00> : vector<8x352xf32>
    %186 = tpu.matmul %184, %185, %cst_113 {dimension_numbers = #tpu.dot_dimension_numbers<[1], [0], [0], [1], [0, 0, 1, 1], [], []>} : vector<8x4xf32>, vector<4x352xf32>, vector<8x352xf32> -> vector<8x352xf32>
    %187 = arith.addf %182, %186 : vector<8x352xf32>
    %c37 = arith.constant 37 : index
    %c0_114 = arith.constant 0 : index
    %c0_115 = arith.constant 0 : index
    %188 = vector.load %arg2[%c37, %c0_114, %c0_115] : memref<49x8x4xf32, #tpu.memory_space<vmem>>, vector<1x8x4xf32>
    %189 = vector.shape_cast %188 : vector<1x8x4xf32> to vector<8x4xf32>
    %190 = vector.extract_strided_slice %1 {offsets = [0, 112], sizes = [4, 352], strides = [1, 1]} : vector<4x490xf32> to vector<4x352xf32>
    %cst_116 = arith.constant dense<0.000000e+00> : vector<8x352xf32>
    %191 = tpu.matmul %189, %190, %cst_116 {dimension_numbers = #tpu.dot_dimension_numbers<[1], [0], [0], [1], [0, 0, 1, 1], [], []>} : vector<8x4xf32>, vector<4x352xf32>, vector<8x352xf32> -> vector<8x352xf32>
    %192 = arith.addf %187, %191 : vector<8x352xf32>
    %c38 = arith.constant 38 : index
    %c0_117 = arith.constant 0 : index
    %c0_118 = arith.constant 0 : index
    %193 = vector.load %arg2[%c38, %c0_117, %c0_118] : memref<49x8x4xf32, #tpu.memory_space<vmem>>, vector<1x8x4xf32>
    %194 = vector.shape_cast %193 : vector<1x8x4xf32> to vector<8x4xf32>
    %195 = vector.extract_strided_slice %1 {offsets = [0, 113], sizes = [4, 352], strides = [1, 1]} : vector<4x490xf32> to vector<4x352xf32>
    %cst_119 = arith.constant dense<0.000000e+00> : vector<8x352xf32>
    %196 = tpu.matmul %194, %195, %cst_119 {dimension_numbers = #tpu.dot_dimension_numbers<[1], [0], [0], [1], [0, 0, 1, 1], [], []>} : vector<8x4xf32>, vector<4x352xf32>, vector<8x352xf32> -> vector<8x352xf32>
    %197 = arith.addf %192, %196 : vector<8x352xf32>
    %c39 = arith.constant 39 : index
    %c0_120 = arith.constant 0 : index
    %c0_121 = arith.constant 0 : index
    %198 = vector.load %arg2[%c39, %c0_120, %c0_121] : memref<49x8x4xf32, #tpu.memory_space<vmem>>, vector<1x8x4xf32>
    %199 = vector.shape_cast %198 : vector<1x8x4xf32> to vector<8x4xf32>
    %200 = vector.extract_strided_slice %1 {offsets = [0, 114], sizes = [4, 352], strides = [1, 1]} : vector<4x490xf32> to vector<4x352xf32>
    %cst_122 = arith.constant dense<0.000000e+00> : vector<8x352xf32>
    %201 = tpu.matmul %199, %200, %cst_122 {dimension_numbers = #tpu.dot_dimension_numbers<[1], [0], [0], [1], [0, 0, 1, 1], [], []>} : vector<8x4xf32>, vector<4x352xf32>, vector<8x352xf32> -> vector<8x352xf32>
    %202 = arith.addf %197, %201 : vector<8x352xf32>
    %c40 = arith.constant 40 : index
    %c0_123 = arith.constant 0 : index
    %c0_124 = arith.constant 0 : index
    %203 = vector.load %arg2[%c40, %c0_123, %c0_124] : memref<49x8x4xf32, #tpu.memory_space<vmem>>, vector<1x8x4xf32>
    %204 = vector.shape_cast %203 : vector<1x8x4xf32> to vector<8x4xf32>
    %205 = vector.extract_strided_slice %1 {offsets = [0, 115], sizes = [4, 352], strides = [1, 1]} : vector<4x490xf32> to vector<4x352xf32>
    %cst_125 = arith.constant dense<0.000000e+00> : vector<8x352xf32>
    %206 = tpu.matmul %204, %205, %cst_125 {dimension_numbers = #tpu.dot_dimension_numbers<[1], [0], [0], [1], [0, 0, 1, 1], [], []>} : vector<8x4xf32>, vector<4x352xf32>, vector<8x352xf32> -> vector<8x352xf32>
    %207 = arith.addf %202, %206 : vector<8x352xf32>
    %c41 = arith.constant 41 : index
    %c0_126 = arith.constant 0 : index
    %c0_127 = arith.constant 0 : index
    %208 = vector.load %arg2[%c41, %c0_126, %c0_127] : memref<49x8x4xf32, #tpu.memory_space<vmem>>, vector<1x8x4xf32>
    %209 = vector.shape_cast %208 : vector<1x8x4xf32> to vector<8x4xf32>
    %210 = vector.extract_strided_slice %1 {offsets = [0, 116], sizes = [4, 352], strides = [1, 1]} : vector<4x490xf32> to vector<4x352xf32>
    %cst_128 = arith.constant dense<0.000000e+00> : vector<8x352xf32>
    %211 = tpu.matmul %209, %210, %cst_128 {dimension_numbers = #tpu.dot_dimension_numbers<[1], [0], [0], [1], [0, 0, 1, 1], [], []>} : vector<8x4xf32>, vector<4x352xf32>, vector<8x352xf32> -> vector<8x352xf32>
    %212 = arith.addf %207, %211 : vector<8x352xf32>
    %c42 = arith.constant 42 : index
    %c0_129 = arith.constant 0 : index
    %c0_130 = arith.constant 0 : index
    %213 = vector.load %arg2[%c42, %c0_129, %c0_130] : memref<49x8x4xf32, #tpu.memory_space<vmem>>, vector<1x8x4xf32>
    %214 = vector.shape_cast %213 : vector<1x8x4xf32> to vector<8x4xf32>
    %215 = vector.extract_strided_slice %1 {offsets = [0, 132], sizes = [4, 352], strides = [1, 1]} : vector<4x490xf32> to vector<4x352xf32>
    %cst_131 = arith.constant dense<0.000000e+00> : vector<8x352xf32>
    %216 = tpu.matmul %214, %215, %cst_131 {dimension_numbers = #tpu.dot_dimension_numbers<[1], [0], [0], [1], [0, 0, 1, 1], [], []>} : vector<8x4xf32>, vector<4x352xf32>, vector<8x352xf32> -> vector<8x352xf32>
    %217 = arith.addf %212, %216 : vector<8x352xf32>
    %c43 = arith.constant 43 : index
    %c0_132 = arith.constant 0 : index
    %c0_133 = arith.constant 0 : index
    %218 = vector.load %arg2[%c43, %c0_132, %c0_133] : memref<49x8x4xf32, #tpu.memory_space<vmem>>, vector<1x8x4xf32>
    %219 = vector.shape_cast %218 : vector<1x8x4xf32> to vector<8x4xf32>
    %220 = vector.extract_strided_slice %1 {offsets = [0, 133], sizes = [4, 352], strides = [1, 1]} : vector<4x490xf32> to vector<4x352xf32>
    %cst_134 = arith.constant dense<0.000000e+00> : vector<8x352xf32>
    %221 = tpu.matmul %219, %220, %cst_134 {dimension_numbers = #tpu.dot_dimension_numbers<[1], [0], [0], [1], [0, 0, 1, 1], [], []>} : vector<8x4xf32>, vector<4x352xf32>, vector<8x352xf32> -> vector<8x352xf32>
    %222 = arith.addf %217, %221 : vector<8x352xf32>
    %c44 = arith.constant 44 : index
    %c0_135 = arith.constant 0 : index
    %c0_136 = arith.constant 0 : index
    %223 = vector.load %arg2[%c44, %c0_135, %c0_136] : memref<49x8x4xf32, #tpu.memory_space<vmem>>, vector<1x8x4xf32>
    %224 = vector.shape_cast %223 : vector<1x8x4xf32> to vector<8x4xf32>
    %225 = vector.extract_strided_slice %1 {offsets = [0, 134], sizes = [4, 352], strides = [1, 1]} : vector<4x490xf32> to vector<4x352xf32>
    %cst_137 = arith.constant dense<0.000000e+00> : vector<8x352xf32>
    %226 = tpu.matmul %224, %225, %cst_137 {dimension_numbers = #tpu.dot_dimension_numbers<[1], [0], [0], [1], [0, 0, 1, 1], [], []>} : vector<8x4xf32>, vector<4x352xf32>, vector<8x352xf32> -> vector<8x352xf32>
    %227 = arith.addf %222, %226 : vector<8x352xf32>
    %c45 = arith.constant 45 : index
    %c0_138 = arith.constant 0 : index
    %c0_139 = arith.constant 0 : index
    %228 = vector.load %arg2[%c45, %c0_138, %c0_139] : memref<49x8x4xf32, #tpu.memory_space<vmem>>, vector<1x8x4xf32>
    %229 = vector.shape_cast %228 : vector<1x8x4xf32> to vector<8x4xf32>
    %230 = vector.extract_strided_slice %1 {offsets = [0, 135], sizes = [4, 352], strides = [1, 1]} : vector<4x490xf32> to vector<4x352xf32>
    %cst_140 = arith.constant dense<0.000000e+00> : vector<8x352xf32>
    %231 = tpu.matmul %229, %230, %cst_140 {dimension_numbers = #tpu.dot_dimension_numbers<[1], [0], [0], [1], [0, 0, 1, 1], [], []>} : vector<8x4xf32>, vector<4x352xf32>, vector<8x352xf32> -> vector<8x352xf32>
    %232 = arith.addf %227, %231 : vector<8x352xf32>
    %c46 = arith.constant 46 : index
    %c0_141 = arith.constant 0 : index
    %c0_142 = arith.constant 0 : index
    %233 = vector.load %arg2[%c46, %c0_141, %c0_142] : memref<49x8x4xf32, #tpu.memory_space<vmem>>, vector<1x8x4xf32>
    %234 = vector.shape_cast %233 : vector<1x8x4xf32> to vector<8x4xf32>
    %235 = vector.extract_strided_slice %1 {offsets = [0, 136], sizes = [4, 352], strides = [1, 1]} : vector<4x490xf32> to vector<4x352xf32>
    %cst_143 = arith.constant dense<0.000000e+00> : vector<8x352xf32>
    %236 = tpu.matmul %234, %235, %cst_143 {dimension_numbers = #tpu.dot_dimension_numbers<[1], [0], [0], [1], [0, 0, 1, 1], [], []>} : vector<8x4xf32>, vector<4x352xf32>, vector<8x352xf32> -> vector<8x352xf32>
    %237 = arith.addf %232, %236 : vector<8x352xf32>
    %c47 = arith.constant 47 : index
    %c0_144 = arith.constant 0 : index
    %c0_145 = arith.constant 0 : index
    %238 = vector.load %arg2[%c47, %c0_144, %c0_145] : memref<49x8x4xf32, #tpu.memory_space<vmem>>, vector<1x8x4xf32>
    %239 = vector.shape_cast %238 : vector<1x8x4xf32> to vector<8x4xf32>
    %240 = vector.extract_strided_slice %1 {offsets = [0, 137], sizes = [4, 352], strides = [1, 1]} : vector<4x490xf32> to vector<4x352xf32>
    %cst_146 = arith.constant dense<0.000000e+00> : vector<8x352xf32>
    %241 = tpu.matmul %239, %240, %cst_146 {dimension_numbers = #tpu.dot_dimension_numbers<[1], [0], [0], [1], [0, 0, 1, 1], [], []>} : vector<8x4xf32>, vector<4x352xf32>, vector<8x352xf32> -> vector<8x352xf32>
    %242 = arith.addf %237, %241 : vector<8x352xf32>
    %c48 = arith.constant 48 : index
    %c0_147 = arith.constant 0 : index
    %c0_148 = arith.constant 0 : index
    %243 = vector.load %arg2[%c48, %c0_147, %c0_148] : memref<49x8x4xf32, #tpu.memory_space<vmem>>, vector<1x8x4xf32>
    %244 = vector.shape_cast %243 : vector<1x8x4xf32> to vector<8x4xf32>
    %245 = vector.extract_strided_slice %1 {offsets = [0, 138], sizes = [4, 352], strides = [1, 1]} : vector<4x490xf32> to vector<4x352xf32>
    %cst_149 = arith.constant dense<0.000000e+00> : vector<8x352xf32>
    %246 = tpu.matmul %244, %245, %cst_149 {dimension_numbers = #tpu.dot_dimension_numbers<[1], [0], [0], [1], [0, 0, 1, 1], [], []>} : vector<8x4xf32>, vector<4x352xf32>, vector<8x352xf32> -> vector<8x352xf32>
    %247 = arith.addf %242, %246 : vector<8x352xf32>
    %c0_150 = arith.constant 0 : index
    %c0_151 = arith.constant 0 : index
    %248 = vector.load %arg3[%c0_150, %c0_151] : memref<8x1xf32, #tpu.memory_space<vmem>>, vector<8x1xf32>
    %c0_152 = arith.constant 0 : index
    %c0_153 = arith.constant 0 : index
    %249 = vector.load %arg4[%c0_152, %c0_153] : memref<1x352xf32, #tpu.memory_space<vmem>>, vector<1x352xf32>
    %250 = vector.broadcast %248 : vector<8x1xf32> to vector<8x352xf32>
    %251 = arith.addf %247, %250 : vector<8x352xf32>
    %252 = vector.broadcast %249 : vector<1x352xf32> to vector<8x352xf32>
    %253 = arith.mulf %251, %252 : vector<8x352xf32>
    %cst_154 = arith.constant dense<0.000000e+00> : vector<8xf32>
    %254 = vector.multi_reduction <add>, %253, %cst_154 [1] : vector<8x352xf32> to vector<8xf32>
    %255 = vector.shape_cast %254 : vector<8xf32> to vector<8x1xf32>
    %cst_155 = arith.constant 3.906250e-03 : f32
    %256 = vector.broadcast %cst_155 : f32 to vector<8x1xf32>
    %257 = arith.mulf %255, %256 : vector<8x1xf32>
    %258 = vector.broadcast %257 : vector<8x1xf32> to vector<8x352xf32>
    %259 = arith.subf %251, %258 : vector<8x352xf32>
    %260 = vector.broadcast %249 : vector<1x352xf32> to vector<8x352xf32>
    %261 = arith.mulf %259, %260 : vector<8x352xf32>
    %262 = arith.mulf %261, %261 : vector<8x352xf32>
    %cst_156 = arith.constant dense<0.000000e+00> : vector<8xf32>
    %263 = vector.multi_reduction <add>, %262, %cst_156 [1] : vector<8x352xf32> to vector<8xf32>
    %264 = vector.shape_cast %263 : vector<8xf32> to vector<8x1xf32>
    %cst_157 = arith.constant 3.906250e-03 : f32
    %265 = vector.broadcast %cst_157 : f32 to vector<8x1xf32>
    %266 = arith.mulf %264, %265 : vector<8x1xf32>
    %267 = vector.broadcast %257 : vector<8x1xf32> to vector<8x352xf32>
    %268 = arith.subf %251, %267 : vector<8x352xf32>
    %cst_158 = arith.constant 9.99999974E-6 : f32
    %269 = vector.broadcast %cst_158 : f32 to vector<8x1xf32>
    %270 = arith.addf %266, %269 : vector<8x1xf32>
    %271 = math.rsqrt %270 : vector<8x1xf32>
    %272 = vector.broadcast %271 : vector<8x1xf32> to vector<8x352xf32>
    %273 = arith.mulf %268, %272 : vector<8x352xf32>
    %cst_159 = arith.constant 0.000000e+00 : f32
    %274 = vector.broadcast %cst_159 : f32 to vector<8x352xf32>
    %275 = arith.maximumf %273, %274 : vector<8x352xf32>
    %c0_160 = arith.constant 0 : index
    %c0_161 = arith.constant 0 : index
    %c0_162 = arith.constant 0 : index
    %276 = vector.load %arg5[%c0_160, %c0_161, %c0_162] : memref<1x8x352xf32, #tpu.memory_space<vmem>>, vector<1x8x352xf32>
    %277 = vector.shape_cast %276 : vector<1x8x352xf32> to vector<8x352xf32>
    %278 = vector.shape_cast %275 : vector<8x352xf32> to vector<1x8x352xf32>
    tpu.vector_store %arg5[%c0_160, %c0_161, %c0_162], %278 {strides = array<i32>} : memref<1x8x352xf32, #tpu.memory_space<vmem>>, vector<1x8x352xf32>,
    return
  }
  func.func @transform_0(%arg0: i32) -> (i32, i32, i32) {
    %c0_i32 = arith.constant 0 : i32
    %c0_i32_0 = arith.constant 0 : i32
    %c0_i32_1 = arith.constant 0 : i32
    return %arg0, %c0_i32, %c0_i32_0 : i32, i32, i32
  }
  func.func @transform_1(%arg0: i32) -> (i32, i32, i32) {
    %c0_i32 = arith.constant 0 : i32
    %c0_i32_0 = arith.constant 0 : i32
    %c0_i32_1 = arith.constant 0 : i32
    %c0_i32_2 = arith.constant 0 : i32
    return %c0_i32, %c0_i32_0, %c0_i32_1 : i32, i32, i32
  }
  func.func @transform_2(%arg0: i32) -> (i32, i32) {
    %c0_i32 = arith.constant 0 : i32
    %c0_i32_0 = arith.constant 0 : i32
    %c0_i32_1 = arith.constant 0 : i32
    return %c0_i32, %c0_i32_0 : i32, i32
  }
  func.func @transform_3(%arg0: i32) -> (i32, i32) {
    %c0_i32 = arith.constant 0 : i32
    %c0_i32_0 = arith.constant 0 : i32
    %c0_i32_1 = arith.constant 0 : i32
    return %c0_i32, %c0_i32_0 : i32, i32
  }
  func.func @transform_4(%arg0: i32) -> (i32, i32, i32) {
    %c0_i32 = arith.constant 0 : i32
    %c0_i32_0 = arith.constant 0 : i32
    %c0_i32_1 = arith.constant 0 : i32
    return %arg0, %c0_i32, %c0_i32_0 : i32, i32, i32
  }
}

module attributes {stable_mosaic.version = 11 : i64} {
  func.func @_down_block_kernel(%arg0: i32, %arg1: memref<1x4x8x83xf32, #tpu.memory_space<vmem>>, %arg2: memref<16x16x8xf32, #tpu.memory_space<vmem>>, %arg3: memref<16x1xf32, #tpu.memory_space<vmem>>, %arg4: memref<1x72xf32, #tpu.memory_space<vmem>>, %arg5: memref<1x16x72xf32, #tpu.memory_space<vmem>>) attributes {dimension_semantics = [#tpu.dimension_semantics<parallel>], iteration_bounds = array<i64: 2>, scalar_prefetch = 0 : i64, scratch_operands = 0 : i64, tpu.core_type = #tpu.core_type<tc>, window_params = [{transform_indices = @transform_0, window_bounds = array<i64: 1, 4, 8, 83>}, {pipeline_mode = #tpu.pipeline_mode<synchronous>, transform_indices = @transform_1, window_bounds = array<i64: 16, 16, 8>}, {pipeline_mode = #tpu.pipeline_mode<synchronous>, transform_indices = @transform_2, window_bounds = array<i64: 16, 1>}, {pipeline_mode = #tpu.pipeline_mode<synchronous>, transform_indices = @transform_3, window_bounds = array<i64: 1, 72>}, {transform_indices = @transform_4, window_bounds = array<i64: 1, 16, 72>}]} {
    %c0 = arith.constant 0 : index
    %c0_0 = arith.constant 0 : index
    %c0_1 = arith.constant 0 : index
    %c0_2 = arith.constant 0 : index
    %0 = vector.load %arg1[%c0, %c0_0, %c0_1, %c0_2] : memref<1x4x8x83xf32, #tpu.memory_space<vmem>>, vector<1x4x8x83xf32>
    %1 = vector.shape_cast %0 : vector<1x4x8x83xf32> to vector<4x8x83xf32>
    %cst = arith.constant 0.000000e+00 : f32
    %2 = vector.broadcast %cst : f32 to vector<16x72xf32>
    %c0_3 = arith.constant 0 : index
    %c0_4 = arith.constant 0 : index
    %c0_5 = arith.constant 0 : index
    %3 = vector.load %arg2[%c0_3, %c0_4, %c0_5] : memref<16x16x8xf32, #tpu.memory_space<vmem>>, vector<1x16x8xf32>
    %4 = vector.shape_cast %3 : vector<1x16x8xf32> to vector<16x8xf32>
    %5 = vector.extract_strided_slice %1 {offsets = [0, 0, 0], sizes = [1, 8, 83], strides = [1, 1, 1]} : vector<4x8x83xf32> to vector<1x8x83xf32>
    %6 = vector.shape_cast %5 : vector<1x8x83xf32> to vector<8x83xf32>
    %7 = vector.extract_strided_slice %6 {offsets = [0, 0], sizes = [8, 72], strides = [1, 1]} : vector<8x83xf32> to vector<8x72xf32>
    %cst_6 = arith.constant dense<0.000000e+00> : vector<16x72xf32>
    %8 = tpu.matmul %4, %7, %cst_6 {dimension_numbers = #tpu.dot_dimension_numbers<[1], [0], [0], [1], [0, 0, 1, 1], [], []>} : vector<16x8xf32>, vector<8x72xf32>, vector<16x72xf32> -> vector<16x72xf32>
    %9 = arith.addf %2, %8 : vector<16x72xf32>
    %c1 = arith.constant 1 : index
    %c0_7 = arith.constant 0 : index
    %c0_8 = arith.constant 0 : index
    %10 = vector.load %arg2[%c1, %c0_7, %c0_8] : memref<16x16x8xf32, #tpu.memory_space<vmem>>, vector<1x16x8xf32>
    %11 = vector.shape_cast %10 : vector<1x16x8xf32> to vector<16x8xf32>
    %12 = vector.extract_strided_slice %1 {offsets = [1, 0, 0], sizes = [1, 8, 83], strides = [1, 1, 1]} : vector<4x8x83xf32> to vector<1x8x83xf32>
    %13 = vector.shape_cast %12 : vector<1x8x83xf32> to vector<8x83xf32>
    %14 = vector.extract_strided_slice %13 {offsets = [0, 0], sizes = [8, 72], strides = [1, 1]} : vector<8x83xf32> to vector<8x72xf32>
    %cst_9 = arith.constant dense<0.000000e+00> : vector<16x72xf32>
    %15 = tpu.matmul %11, %14, %cst_9 {dimension_numbers = #tpu.dot_dimension_numbers<[1], [0], [0], [1], [0, 0, 1, 1], [], []>} : vector<16x8xf32>, vector<8x72xf32>, vector<16x72xf32> -> vector<16x72xf32>
    %16 = arith.addf %9, %15 : vector<16x72xf32>
    %c2 = arith.constant 2 : index
    %c0_10 = arith.constant 0 : index
    %c0_11 = arith.constant 0 : index
    %17 = vector.load %arg2[%c2, %c0_10, %c0_11] : memref<16x16x8xf32, #tpu.memory_space<vmem>>, vector<1x16x8xf32>
    %18 = vector.shape_cast %17 : vector<1x16x8xf32> to vector<16x8xf32>
    %19 = vector.extract_strided_slice %1 {offsets = [0, 0, 0], sizes = [1, 8, 83], strides = [1, 1, 1]} : vector<4x8x83xf32> to vector<1x8x83xf32>
    %20 = vector.shape_cast %19 : vector<1x8x83xf32> to vector<8x83xf32>
    %21 = vector.extract_strided_slice %20 {offsets = [0, 1], sizes = [8, 72], strides = [1, 1]} : vector<8x83xf32> to vector<8x72xf32>
    %cst_12 = arith.constant dense<0.000000e+00> : vector<16x72xf32>
    %22 = tpu.matmul %18, %21, %cst_12 {dimension_numbers = #tpu.dot_dimension_numbers<[1], [0], [0], [1], [0, 0, 1, 1], [], []>} : vector<16x8xf32>, vector<8x72xf32>, vector<16x72xf32> -> vector<16x72xf32>
    %23 = arith.addf %16, %22 : vector<16x72xf32>
    %c3 = arith.constant 3 : index
    %c0_13 = arith.constant 0 : index
    %c0_14 = arith.constant 0 : index
    %24 = vector.load %arg2[%c3, %c0_13, %c0_14] : memref<16x16x8xf32, #tpu.memory_space<vmem>>, vector<1x16x8xf32>
    %25 = vector.shape_cast %24 : vector<1x16x8xf32> to vector<16x8xf32>
    %26 = vector.extract_strided_slice %1 {offsets = [1, 0, 0], sizes = [1, 8, 83], strides = [1, 1, 1]} : vector<4x8x83xf32> to vector<1x8x83xf32>
    %27 = vector.shape_cast %26 : vector<1x8x83xf32> to vector<8x83xf32>
    %28 = vector.extract_strided_slice %27 {offsets = [0, 1], sizes = [8, 72], strides = [1, 1]} : vector<8x83xf32> to vector<8x72xf32>
    %cst_15 = arith.constant dense<0.000000e+00> : vector<16x72xf32>
    %29 = tpu.matmul %25, %28, %cst_15 {dimension_numbers = #tpu.dot_dimension_numbers<[1], [0], [0], [1], [0, 0, 1, 1], [], []>} : vector<16x8xf32>, vector<8x72xf32>, vector<16x72xf32> -> vector<16x72xf32>
    %30 = arith.addf %23, %29 : vector<16x72xf32>
    %c4 = arith.constant 4 : index
    %c0_16 = arith.constant 0 : index
    %c0_17 = arith.constant 0 : index
    %31 = vector.load %arg2[%c4, %c0_16, %c0_17] : memref<16x16x8xf32, #tpu.memory_space<vmem>>, vector<1x16x8xf32>
    %32 = vector.shape_cast %31 : vector<1x16x8xf32> to vector<16x8xf32>
    %33 = vector.extract_strided_slice %1 {offsets = [2, 0, 0], sizes = [1, 8, 83], strides = [1, 1, 1]} : vector<4x8x83xf32> to vector<1x8x83xf32>
    %34 = vector.shape_cast %33 : vector<1x8x83xf32> to vector<8x83xf32>
    %35 = vector.extract_strided_slice %34 {offsets = [0, 0], sizes = [8, 72], strides = [1, 1]} : vector<8x83xf32> to vector<8x72xf32>
    %cst_18 = arith.constant dense<0.000000e+00> : vector<16x72xf32>
    %36 = tpu.matmul %32, %35, %cst_18 {dimension_numbers = #tpu.dot_dimension_numbers<[1], [0], [0], [1], [0, 0, 1, 1], [], []>} : vector<16x8xf32>, vector<8x72xf32>, vector<16x72xf32> -> vector<16x72xf32>
    %37 = arith.addf %30, %36 : vector<16x72xf32>
    %c5 = arith.constant 5 : index
    %c0_19 = arith.constant 0 : index
    %c0_20 = arith.constant 0 : index
    %38 = vector.load %arg2[%c5, %c0_19, %c0_20] : memref<16x16x8xf32, #tpu.memory_space<vmem>>, vector<1x16x8xf32>
    %39 = vector.shape_cast %38 : vector<1x16x8xf32> to vector<16x8xf32>
    %40 = vector.extract_strided_slice %1 {offsets = [3, 0, 0], sizes = [1, 8, 83], strides = [1, 1, 1]} : vector<4x8x83xf32> to vector<1x8x83xf32>
    %41 = vector.shape_cast %40 : vector<1x8x83xf32> to vector<8x83xf32>
    %42 = vector.extract_strided_slice %41 {offsets = [0, 0], sizes = [8, 72], strides = [1, 1]} : vector<8x83xf32> to vector<8x72xf32>
    %cst_21 = arith.constant dense<0.000000e+00> : vector<16x72xf32>
    %43 = tpu.matmul %39, %42, %cst_21 {dimension_numbers = #tpu.dot_dimension_numbers<[1], [0], [0], [1], [0, 0, 1, 1], [], []>} : vector<16x8xf32>, vector<8x72xf32>, vector<16x72xf32> -> vector<16x72xf32>
    %44 = arith.addf %37, %43 : vector<16x72xf32>
    %c6 = arith.constant 6 : index
    %c0_22 = arith.constant 0 : index
    %c0_23 = arith.constant 0 : index
    %45 = vector.load %arg2[%c6, %c0_22, %c0_23] : memref<16x16x8xf32, #tpu.memory_space<vmem>>, vector<1x16x8xf32>
    %46 = vector.shape_cast %45 : vector<1x16x8xf32> to vector<16x8xf32>
    %47 = vector.extract_strided_slice %1 {offsets = [2, 0, 0], sizes = [1, 8, 83], strides = [1, 1, 1]} : vector<4x8x83xf32> to vector<1x8x83xf32>
    %48 = vector.shape_cast %47 : vector<1x8x83xf32> to vector<8x83xf32>
    %49 = vector.extract_strided_slice %48 {offsets = [0, 1], sizes = [8, 72], strides = [1, 1]} : vector<8x83xf32> to vector<8x72xf32>
    %cst_24 = arith.constant dense<0.000000e+00> : vector<16x72xf32>
    %50 = tpu.matmul %46, %49, %cst_24 {dimension_numbers = #tpu.dot_dimension_numbers<[1], [0], [0], [1], [0, 0, 1, 1], [], []>} : vector<16x8xf32>, vector<8x72xf32>, vector<16x72xf32> -> vector<16x72xf32>
    %51 = arith.addf %44, %50 : vector<16x72xf32>
    %c7 = arith.constant 7 : index
    %c0_25 = arith.constant 0 : index
    %c0_26 = arith.constant 0 : index
    %52 = vector.load %arg2[%c7, %c0_25, %c0_26] : memref<16x16x8xf32, #tpu.memory_space<vmem>>, vector<1x16x8xf32>
    %53 = vector.shape_cast %52 : vector<1x16x8xf32> to vector<16x8xf32>
    %54 = vector.extract_strided_slice %1 {offsets = [3, 0, 0], sizes = [1, 8, 83], strides = [1, 1, 1]} : vector<4x8x83xf32> to vector<1x8x83xf32>
    %55 = vector.shape_cast %54 : vector<1x8x83xf32> to vector<8x83xf32>
    %56 = vector.extract_strided_slice %55 {offsets = [0, 1], sizes = [8, 72], strides = [1, 1]} : vector<8x83xf32> to vector<8x72xf32>
    %cst_27 = arith.constant dense<0.000000e+00> : vector<16x72xf32>
    %57 = tpu.matmul %53, %56, %cst_27 {dimension_numbers = #tpu.dot_dimension_numbers<[1], [0], [0], [1], [0, 0, 1, 1], [], []>} : vector<16x8xf32>, vector<8x72xf32>, vector<16x72xf32> -> vector<16x72xf32>
    %58 = arith.addf %51, %57 : vector<16x72xf32>
    %c8 = arith.constant 8 : index
    %c0_28 = arith.constant 0 : index
    %c0_29 = arith.constant 0 : index
    %59 = vector.load %arg2[%c8, %c0_28, %c0_29] : memref<16x16x8xf32, #tpu.memory_space<vmem>>, vector<1x16x8xf32>
    %60 = vector.shape_cast %59 : vector<1x16x8xf32> to vector<16x8xf32>
    %61 = vector.extract_strided_slice %1 {offsets = [0, 0, 0], sizes = [1, 8, 83], strides = [1, 1, 1]} : vector<4x8x83xf32> to vector<1x8x83xf32>
    %62 = vector.shape_cast %61 : vector<1x8x83xf32> to vector<8x83xf32>
    %63 = vector.extract_strided_slice %62 {offsets = [0, 9], sizes = [8, 72], strides = [1, 1]} : vector<8x83xf32> to vector<8x72xf32>
    %cst_30 = arith.constant dense<0.000000e+00> : vector<16x72xf32>
    %64 = tpu.matmul %60, %63, %cst_30 {dimension_numbers = #tpu.dot_dimension_numbers<[1], [0], [0], [1], [0, 0, 1, 1], [], []>} : vector<16x8xf32>, vector<8x72xf32>, vector<16x72xf32> -> vector<16x72xf32>
    %65 = arith.addf %58, %64 : vector<16x72xf32>
    %c9 = arith.constant 9 : index
    %c0_31 = arith.constant 0 : index
    %c0_32 = arith.constant 0 : index
    %66 = vector.load %arg2[%c9, %c0_31, %c0_32] : memref<16x16x8xf32, #tpu.memory_space<vmem>>, vector<1x16x8xf32>
    %67 = vector.shape_cast %66 : vector<1x16x8xf32> to vector<16x8xf32>
    %68 = vector.extract_strided_slice %1 {offsets = [1, 0, 0], sizes = [1, 8, 83], strides = [1, 1, 1]} : vector<4x8x83xf32> to vector<1x8x83xf32>
    %69 = vector.shape_cast %68 : vector<1x8x83xf32> to vector<8x83xf32>
    %70 = vector.extract_strided_slice %69 {offsets = [0, 9], sizes = [8, 72], strides = [1, 1]} : vector<8x83xf32> to vector<8x72xf32>
    %cst_33 = arith.constant dense<0.000000e+00> : vector<16x72xf32>
    %71 = tpu.matmul %67, %70, %cst_33 {dimension_numbers = #tpu.dot_dimension_numbers<[1], [0], [0], [1], [0, 0, 1, 1], [], []>} : vector<16x8xf32>, vector<8x72xf32>, vector<16x72xf32> -> vector<16x72xf32>
    %72 = arith.addf %65, %71 : vector<16x72xf32>
    %c10 = arith.constant 10 : index
    %c0_34 = arith.constant 0 : index
    %c0_35 = arith.constant 0 : index
    %73 = vector.load %arg2[%c10, %c0_34, %c0_35] : memref<16x16x8xf32, #tpu.memory_space<vmem>>, vector<1x16x8xf32>
    %74 = vector.shape_cast %73 : vector<1x16x8xf32> to vector<16x8xf32>
    %75 = vector.extract_strided_slice %1 {offsets = [0, 0, 0], sizes = [1, 8, 83], strides = [1, 1, 1]} : vector<4x8x83xf32> to vector<1x8x83xf32>
    %76 = vector.shape_cast %75 : vector<1x8x83xf32> to vector<8x83xf32>
    %77 = vector.extract_strided_slice %76 {offsets = [0, 10], sizes = [8, 72], strides = [1, 1]} : vector<8x83xf32> to vector<8x72xf32>
    %cst_36 = arith.constant dense<0.000000e+00> : vector<16x72xf32>
    %78 = tpu.matmul %74, %77, %cst_36 {dimension_numbers = #tpu.dot_dimension_numbers<[1], [0], [0], [1], [0, 0, 1, 1], [], []>} : vector<16x8xf32>, vector<8x72xf32>, vector<16x72xf32> -> vector<16x72xf32>
    %79 = arith.addf %72, %78 : vector<16x72xf32>
    %c11 = arith.constant 11 : index
    %c0_37 = arith.constant 0 : index
    %c0_38 = arith.constant 0 : index
    %80 = vector.load %arg2[%c11, %c0_37, %c0_38] : memref<16x16x8xf32, #tpu.memory_space<vmem>>, vector<1x16x8xf32>
    %81 = vector.shape_cast %80 : vector<1x16x8xf32> to vector<16x8xf32>
    %82 = vector.extract_strided_slice %1 {offsets = [1, 0, 0], sizes = [1, 8, 83], strides = [1, 1, 1]} : vector<4x8x83xf32> to vector<1x8x83xf32>
    %83 = vector.shape_cast %82 : vector<1x8x83xf32> to vector<8x83xf32>
    %84 = vector.extract_strided_slice %83 {offsets = [0, 10], sizes = [8, 72], strides = [1, 1]} : vector<8x83xf32> to vector<8x72xf32>
    %cst_39 = arith.constant dense<0.000000e+00> : vector<16x72xf32>
    %85 = tpu.matmul %81, %84, %cst_39 {dimension_numbers = #tpu.dot_dimension_numbers<[1], [0], [0], [1], [0, 0, 1, 1], [], []>} : vector<16x8xf32>, vector<8x72xf32>, vector<16x72xf32> -> vector<16x72xf32>
    %86 = arith.addf %79, %85 : vector<16x72xf32>
    %c12 = arith.constant 12 : index
    %c0_40 = arith.constant 0 : index
    %c0_41 = arith.constant 0 : index
    %87 = vector.load %arg2[%c12, %c0_40, %c0_41] : memref<16x16x8xf32, #tpu.memory_space<vmem>>, vector<1x16x8xf32>
    %88 = vector.shape_cast %87 : vector<1x16x8xf32> to vector<16x8xf32>
    %89 = vector.extract_strided_slice %1 {offsets = [2, 0, 0], sizes = [1, 8, 83], strides = [1, 1, 1]} : vector<4x8x83xf32> to vector<1x8x83xf32>
    %90 = vector.shape_cast %89 : vector<1x8x83xf32> to vector<8x83xf32>
    %91 = vector.extract_strided_slice %90 {offsets = [0, 9], sizes = [8, 72], strides = [1, 1]} : vector<8x83xf32> to vector<8x72xf32>
    %cst_42 = arith.constant dense<0.000000e+00> : vector<16x72xf32>
    %92 = tpu.matmul %88, %91, %cst_42 {dimension_numbers = #tpu.dot_dimension_numbers<[1], [0], [0], [1], [0, 0, 1, 1], [], []>} : vector<16x8xf32>, vector<8x72xf32>, vector<16x72xf32> -> vector<16x72xf32>
    %93 = arith.addf %86, %92 : vector<16x72xf32>
    %c13 = arith.constant 13 : index
    %c0_43 = arith.constant 0 : index
    %c0_44 = arith.constant 0 : index
    %94 = vector.load %arg2[%c13, %c0_43, %c0_44] : memref<16x16x8xf32, #tpu.memory_space<vmem>>, vector<1x16x8xf32>
    %95 = vector.shape_cast %94 : vector<1x16x8xf32> to vector<16x8xf32>
    %96 = vector.extract_strided_slice %1 {offsets = [3, 0, 0], sizes = [1, 8, 83], strides = [1, 1, 1]} : vector<4x8x83xf32> to vector<1x8x83xf32>
    %97 = vector.shape_cast %96 : vector<1x8x83xf32> to vector<8x83xf32>
    %98 = vector.extract_strided_slice %97 {offsets = [0, 9], sizes = [8, 72], strides = [1, 1]} : vector<8x83xf32> to vector<8x72xf32>
    %cst_45 = arith.constant dense<0.000000e+00> : vector<16x72xf32>
    %99 = tpu.matmul %95, %98, %cst_45 {dimension_numbers = #tpu.dot_dimension_numbers<[1], [0], [0], [1], [0, 0, 1, 1], [], []>} : vector<16x8xf32>, vector<8x72xf32>, vector<16x72xf32> -> vector<16x72xf32>
    %100 = arith.addf %93, %99 : vector<16x72xf32>
    %c14 = arith.constant 14 : index
    %c0_46 = arith.constant 0 : index
    %c0_47 = arith.constant 0 : index
    %101 = vector.load %arg2[%c14, %c0_46, %c0_47] : memref<16x16x8xf32, #tpu.memory_space<vmem>>, vector<1x16x8xf32>
    %102 = vector.shape_cast %101 : vector<1x16x8xf32> to vector<16x8xf32>
    %103 = vector.extract_strided_slice %1 {offsets = [2, 0, 0], sizes = [1, 8, 83], strides = [1, 1, 1]} : vector<4x8x83xf32> to vector<1x8x83xf32>
    %104 = vector.shape_cast %103 : vector<1x8x83xf32> to vector<8x83xf32>
    %105 = vector.extract_strided_slice %104 {offsets = [0, 10], sizes = [8, 72], strides = [1, 1]} : vector<8x83xf32> to vector<8x72xf32>
    %cst_48 = arith.constant dense<0.000000e+00> : vector<16x72xf32>
    %106 = tpu.matmul %102, %105, %cst_48 {dimension_numbers = #tpu.dot_dimension_numbers<[1], [0], [0], [1], [0, 0, 1, 1], [], []>} : vector<16x8xf32>, vector<8x72xf32>, vector<16x72xf32> -> vector<16x72xf32>
    %107 = arith.addf %100, %106 : vector<16x72xf32>
    %c15 = arith.constant 15 : index
    %c0_49 = arith.constant 0 : index
    %c0_50 = arith.constant 0 : index
    %108 = vector.load %arg2[%c15, %c0_49, %c0_50] : memref<16x16x8xf32, #tpu.memory_space<vmem>>, vector<1x16x8xf32>
    %109 = vector.shape_cast %108 : vector<1x16x8xf32> to vector<16x8xf32>
    %110 = vector.extract_strided_slice %1 {offsets = [3, 0, 0], sizes = [1, 8, 83], strides = [1, 1, 1]} : vector<4x8x83xf32> to vector<1x8x83xf32>
    %111 = vector.shape_cast %110 : vector<1x8x83xf32> to vector<8x83xf32>
    %112 = vector.extract_strided_slice %111 {offsets = [0, 10], sizes = [8, 72], strides = [1, 1]} : vector<8x83xf32> to vector<8x72xf32>
    %cst_51 = arith.constant dense<0.000000e+00> : vector<16x72xf32>
    %113 = tpu.matmul %109, %112, %cst_51 {dimension_numbers = #tpu.dot_dimension_numbers<[1], [0], [0], [1], [0, 0, 1, 1], [], []>} : vector<16x8xf32>, vector<8x72xf32>, vector<16x72xf32> -> vector<16x72xf32>
    %114 = arith.addf %107, %113 : vector<16x72xf32>
    %c0_52 = arith.constant 0 : index
    %c0_53 = arith.constant 0 : index
    %115 = vector.load %arg3[%c0_52, %c0_53] : memref<16x1xf32, #tpu.memory_space<vmem>>, vector<16x1xf32>
    %c0_54 = arith.constant 0 : index
    %c0_55 = arith.constant 0 : index
    %116 = vector.load %arg4[%c0_54, %c0_55] : memref<1x72xf32, #tpu.memory_space<vmem>>, vector<1x72xf32>
    %117 = vector.broadcast %115 : vector<16x1xf32> to vector<16x72xf32>
    %118 = arith.addf %114, %117 : vector<16x72xf32>
    %119 = vector.broadcast %116 : vector<1x72xf32> to vector<16x72xf32>
    %120 = arith.mulf %118, %119 : vector<16x72xf32>
    %cst_56 = arith.constant dense<0.000000e+00> : vector<16xf32>
    %121 = vector.multi_reduction <add>, %120, %cst_56 [1] : vector<16x72xf32> to vector<16xf32>
    %122 = vector.shape_cast %121 : vector<16xf32> to vector<16x1xf32>
    %cst_57 = arith.constant 1.562500e-02 : f32
    %123 = vector.broadcast %cst_57 : f32 to vector<16x1xf32>
    %124 = arith.mulf %122, %123 : vector<16x1xf32>
    %125 = vector.broadcast %124 : vector<16x1xf32> to vector<16x72xf32>
    %126 = arith.subf %118, %125 : vector<16x72xf32>
    %127 = vector.broadcast %116 : vector<1x72xf32> to vector<16x72xf32>
    %128 = arith.mulf %126, %127 : vector<16x72xf32>
    %129 = arith.mulf %128, %128 : vector<16x72xf32>
    %cst_58 = arith.constant dense<0.000000e+00> : vector<16xf32>
    %130 = vector.multi_reduction <add>, %129, %cst_58 [1] : vector<16x72xf32> to vector<16xf32>
    %131 = vector.shape_cast %130 : vector<16xf32> to vector<16x1xf32>
    %cst_59 = arith.constant 1.562500e-02 : f32
    %132 = vector.broadcast %cst_59 : f32 to vector<16x1xf32>
    %133 = arith.mulf %131, %132 : vector<16x1xf32>
    %134 = vector.broadcast %124 : vector<16x1xf32> to vector<16x72xf32>
    %135 = arith.subf %118, %134 : vector<16x72xf32>
    %cst_60 = arith.constant 9.99999974E-6 : f32
    %136 = vector.broadcast %cst_60 : f32 to vector<16x1xf32>
    %137 = arith.addf %133, %136 : vector<16x1xf32>
    %138 = math.rsqrt %137 : vector<16x1xf32>
    %139 = vector.broadcast %138 : vector<16x1xf32> to vector<16x72xf32>
    %140 = arith.mulf %135, %139 : vector<16x72xf32>
    %cst_61 = arith.constant 0.000000e+00 : f32
    %141 = vector.broadcast %cst_61 : f32 to vector<16x72xf32>
    %142 = arith.maximumf %140, %141 : vector<16x72xf32>
    %c0_62 = arith.constant 0 : index
    %c0_63 = arith.constant 0 : index
    %c0_64 = arith.constant 0 : index
    %143 = vector.load %arg5[%c0_62, %c0_63, %c0_64] : memref<1x16x72xf32, #tpu.memory_space<vmem>>, vector<1x16x72xf32>
    %144 = vector.shape_cast %143 : vector<1x16x72xf32> to vector<16x72xf32>
    %145 = vector.shape_cast %142 : vector<16x72xf32> to vector<1x16x72xf32>
    tpu.vector_store %arg5[%c0_62, %c0_63, %c0_64], %145 {strides = array<i32>} : memref<1x16x72xf32, #tpu.memory_space<vmem>>, vector<1x16x72xf32>,
    return
  }
  func.func @transform_0(%arg0: i32) -> (i32, i32, i32, i32) {
    %c0_i32 = arith.constant 0 : i32
    %c0_i32_0 = arith.constant 0 : i32
    %c0_i32_1 = arith.constant 0 : i32
    %c0_i32_2 = arith.constant 0 : i32
    return %arg0, %c0_i32, %c0_i32_0, %c0_i32_1 : i32, i32, i32, i32
  }
  func.func @transform_1(%arg0: i32) -> (i32, i32, i32) {
    %c0_i32 = arith.constant 0 : i32
    %c0_i32_0 = arith.constant 0 : i32
    %c0_i32_1 = arith.constant 0 : i32
    %c0_i32_2 = arith.constant 0 : i32
    return %c0_i32, %c0_i32_0, %c0_i32_1 : i32, i32, i32
  }
  func.func @transform_2(%arg0: i32) -> (i32, i32) {
    %c0_i32 = arith.constant 0 : i32
    %c0_i32_0 = arith.constant 0 : i32
    %c0_i32_1 = arith.constant 0 : i32
    return %c0_i32, %c0_i32_0 : i32, i32
  }
  func.func @transform_3(%arg0: i32) -> (i32, i32) {
    %c0_i32 = arith.constant 0 : i32
    %c0_i32_0 = arith.constant 0 : i32
    %c0_i32_1 = arith.constant 0 : i32
    return %c0_i32, %c0_i32_0 : i32, i32
  }
  func.func @transform_4(%arg0: i32) -> (i32, i32, i32) {
    %c0_i32 = arith.constant 0 : i32
    %c0_i32_0 = arith.constant 0 : i32
    %c0_i32_1 = arith.constant 0 : i32
    return %arg0, %c0_i32, %c0_i32_0 : i32, i32, i32
  }
}

module attributes {stable_mosaic.version = 11 : i64} {
  func.func @_down_block_kernel(%arg0: i32, %arg1: memref<1x4x16x27xf32, #tpu.memory_space<vmem>>, %arg2: memref<16x32x16xf32, #tpu.memory_space<vmem>>, %arg3: memref<32x1xf32, #tpu.memory_space<vmem>>, %arg4: memref<1x20xf32, #tpu.memory_space<vmem>>, %arg5: memref<1x32x20xf32, #tpu.memory_space<vmem>>) attributes {dimension_semantics = [#tpu.dimension_semantics<parallel>], iteration_bounds = array<i64: 2>, scalar_prefetch = 0 : i64, scratch_operands = 0 : i64, tpu.core_type = #tpu.core_type<tc>, window_params = [{transform_indices = @transform_0, window_bounds = array<i64: 1, 4, 16, 27>}, {pipeline_mode = #tpu.pipeline_mode<synchronous>, transform_indices = @transform_1, window_bounds = array<i64: 16, 32, 16>}, {pipeline_mode = #tpu.pipeline_mode<synchronous>, transform_indices = @transform_2, window_bounds = array<i64: 32, 1>}, {pipeline_mode = #tpu.pipeline_mode<synchronous>, transform_indices = @transform_3, window_bounds = array<i64: 1, 20>}, {transform_indices = @transform_4, window_bounds = array<i64: 1, 32, 20>}]} {
    %c0 = arith.constant 0 : index
    %c0_0 = arith.constant 0 : index
    %c0_1 = arith.constant 0 : index
    %c0_2 = arith.constant 0 : index
    %0 = vector.load %arg1[%c0, %c0_0, %c0_1, %c0_2] : memref<1x4x16x27xf32, #tpu.memory_space<vmem>>, vector<1x4x16x27xf32>
    %1 = vector.shape_cast %0 : vector<1x4x16x27xf32> to vector<4x16x27xf32>
    %cst = arith.constant 0.000000e+00 : f32
    %2 = vector.broadcast %cst : f32 to vector<32x20xf32>
    %c0_3 = arith.constant 0 : index
    %c0_4 = arith.constant 0 : index
    %c0_5 = arith.constant 0 : index
    %3 = vector.load %arg2[%c0_3, %c0_4, %c0_5] : memref<16x32x16xf32, #tpu.memory_space<vmem>>, vector<1x32x16xf32>
    %4 = vector.shape_cast %3 : vector<1x32x16xf32> to vector<32x16xf32>
    %5 = vector.extract_strided_slice %1 {offsets = [0, 0, 0], sizes = [1, 16, 27], strides = [1, 1, 1]} : vector<4x16x27xf32> to vector<1x16x27xf32>
    %6 = vector.shape_cast %5 : vector<1x16x27xf32> to vector<16x27xf32>
    %7 = vector.extract_strided_slice %6 {offsets = [0, 0], sizes = [16, 20], strides = [1, 1]} : vector<16x27xf32> to vector<16x20xf32>
    %cst_6 = arith.constant dense<0.000000e+00> : vector<32x20xf32>
    %8 = tpu.matmul %4, %7, %cst_6 {dimension_numbers = #tpu.dot_dimension_numbers<[1], [0], [0], [1], [0, 0, 1, 1], [], []>} : vector<32x16xf32>, vector<16x20xf32>, vector<32x20xf32> -> vector<32x20xf32>
    %9 = arith.addf %2, %8 : vector<32x20xf32>
    %c1 = arith.constant 1 : index
    %c0_7 = arith.constant 0 : index
    %c0_8 = arith.constant 0 : index
    %10 = vector.load %arg2[%c1, %c0_7, %c0_8] : memref<16x32x16xf32, #tpu.memory_space<vmem>>, vector<1x32x16xf32>
    %11 = vector.shape_cast %10 : vector<1x32x16xf32> to vector<32x16xf32>
    %12 = vector.extract_strided_slice %1 {offsets = [1, 0, 0], sizes = [1, 16, 27], strides = [1, 1, 1]} : vector<4x16x27xf32> to vector<1x16x27xf32>
    %13 = vector.shape_cast %12 : vector<1x16x27xf32> to vector<16x27xf32>
    %14 = vector.extract_strided_slice %13 {offsets = [0, 0], sizes = [16, 20], strides = [1, 1]} : vector<16x27xf32> to vector<16x20xf32>
    %cst_9 = arith.constant dense<0.000000e+00> : vector<32x20xf32>
    %15 = tpu.matmul %11, %14, %cst_9 {dimension_numbers = #tpu.dot_dimension_numbers<[1], [0], [0], [1], [0, 0, 1, 1], [], []>} : vector<32x16xf32>, vector<16x20xf32>, vector<32x20xf32> -> vector<32x20xf32>
    %16 = arith.addf %9, %15 : vector<32x20xf32>
    %c2 = arith.constant 2 : index
    %c0_10 = arith.constant 0 : index
    %c0_11 = arith.constant 0 : index
    %17 = vector.load %arg2[%c2, %c0_10, %c0_11] : memref<16x32x16xf32, #tpu.memory_space<vmem>>, vector<1x32x16xf32>
    %18 = vector.shape_cast %17 : vector<1x32x16xf32> to vector<32x16xf32>
    %19 = vector.extract_strided_slice %1 {offsets = [0, 0, 0], sizes = [1, 16, 27], strides = [1, 1, 1]} : vector<4x16x27xf32> to vector<1x16x27xf32>
    %20 = vector.shape_cast %19 : vector<1x16x27xf32> to vector<16x27xf32>
    %21 = vector.extract_strided_slice %20 {offsets = [0, 1], sizes = [16, 20], strides = [1, 1]} : vector<16x27xf32> to vector<16x20xf32>
    %cst_12 = arith.constant dense<0.000000e+00> : vector<32x20xf32>
    %22 = tpu.matmul %18, %21, %cst_12 {dimension_numbers = #tpu.dot_dimension_numbers<[1], [0], [0], [1], [0, 0, 1, 1], [], []>} : vector<32x16xf32>, vector<16x20xf32>, vector<32x20xf32> -> vector<32x20xf32>
    %23 = arith.addf %16, %22 : vector<32x20xf32>
    %c3 = arith.constant 3 : index
    %c0_13 = arith.constant 0 : index
    %c0_14 = arith.constant 0 : index
    %24 = vector.load %arg2[%c3, %c0_13, %c0_14] : memref<16x32x16xf32, #tpu.memory_space<vmem>>, vector<1x32x16xf32>
    %25 = vector.shape_cast %24 : vector<1x32x16xf32> to vector<32x16xf32>
    %26 = vector.extract_strided_slice %1 {offsets = [1, 0, 0], sizes = [1, 16, 27], strides = [1, 1, 1]} : vector<4x16x27xf32> to vector<1x16x27xf32>
    %27 = vector.shape_cast %26 : vector<1x16x27xf32> to vector<16x27xf32>
    %28 = vector.extract_strided_slice %27 {offsets = [0, 1], sizes = [16, 20], strides = [1, 1]} : vector<16x27xf32> to vector<16x20xf32>
    %cst_15 = arith.constant dense<0.000000e+00> : vector<32x20xf32>
    %29 = tpu.matmul %25, %28, %cst_15 {dimension_numbers = #tpu.dot_dimension_numbers<[1], [0], [0], [1], [0, 0, 1, 1], [], []>} : vector<32x16xf32>, vector<16x20xf32>, vector<32x20xf32> -> vector<32x20xf32>
    %30 = arith.addf %23, %29 : vector<32x20xf32>
    %c4 = arith.constant 4 : index
    %c0_16 = arith.constant 0 : index
    %c0_17 = arith.constant 0 : index
    %31 = vector.load %arg2[%c4, %c0_16, %c0_17] : memref<16x32x16xf32, #tpu.memory_space<vmem>>, vector<1x32x16xf32>
    %32 = vector.shape_cast %31 : vector<1x32x16xf32> to vector<32x16xf32>
    %33 = vector.extract_strided_slice %1 {offsets = [2, 0, 0], sizes = [1, 16, 27], strides = [1, 1, 1]} : vector<4x16x27xf32> to vector<1x16x27xf32>
    %34 = vector.shape_cast %33 : vector<1x16x27xf32> to vector<16x27xf32>
    %35 = vector.extract_strided_slice %34 {offsets = [0, 0], sizes = [16, 20], strides = [1, 1]} : vector<16x27xf32> to vector<16x20xf32>
    %cst_18 = arith.constant dense<0.000000e+00> : vector<32x20xf32>
    %36 = tpu.matmul %32, %35, %cst_18 {dimension_numbers = #tpu.dot_dimension_numbers<[1], [0], [0], [1], [0, 0, 1, 1], [], []>} : vector<32x16xf32>, vector<16x20xf32>, vector<32x20xf32> -> vector<32x20xf32>
    %37 = arith.addf %30, %36 : vector<32x20xf32>
    %c5 = arith.constant 5 : index
    %c0_19 = arith.constant 0 : index
    %c0_20 = arith.constant 0 : index
    %38 = vector.load %arg2[%c5, %c0_19, %c0_20] : memref<16x32x16xf32, #tpu.memory_space<vmem>>, vector<1x32x16xf32>
    %39 = vector.shape_cast %38 : vector<1x32x16xf32> to vector<32x16xf32>
    %40 = vector.extract_strided_slice %1 {offsets = [3, 0, 0], sizes = [1, 16, 27], strides = [1, 1, 1]} : vector<4x16x27xf32> to vector<1x16x27xf32>
    %41 = vector.shape_cast %40 : vector<1x16x27xf32> to vector<16x27xf32>
    %42 = vector.extract_strided_slice %41 {offsets = [0, 0], sizes = [16, 20], strides = [1, 1]} : vector<16x27xf32> to vector<16x20xf32>
    %cst_21 = arith.constant dense<0.000000e+00> : vector<32x20xf32>
    %43 = tpu.matmul %39, %42, %cst_21 {dimension_numbers = #tpu.dot_dimension_numbers<[1], [0], [0], [1], [0, 0, 1, 1], [], []>} : vector<32x16xf32>, vector<16x20xf32>, vector<32x20xf32> -> vector<32x20xf32>
    %44 = arith.addf %37, %43 : vector<32x20xf32>
    %c6 = arith.constant 6 : index
    %c0_22 = arith.constant 0 : index
    %c0_23 = arith.constant 0 : index
    %45 = vector.load %arg2[%c6, %c0_22, %c0_23] : memref<16x32x16xf32, #tpu.memory_space<vmem>>, vector<1x32x16xf32>
    %46 = vector.shape_cast %45 : vector<1x32x16xf32> to vector<32x16xf32>
    %47 = vector.extract_strided_slice %1 {offsets = [2, 0, 0], sizes = [1, 16, 27], strides = [1, 1, 1]} : vector<4x16x27xf32> to vector<1x16x27xf32>
    %48 = vector.shape_cast %47 : vector<1x16x27xf32> to vector<16x27xf32>
    %49 = vector.extract_strided_slice %48 {offsets = [0, 1], sizes = [16, 20], strides = [1, 1]} : vector<16x27xf32> to vector<16x20xf32>
    %cst_24 = arith.constant dense<0.000000e+00> : vector<32x20xf32>
    %50 = tpu.matmul %46, %49, %cst_24 {dimension_numbers = #tpu.dot_dimension_numbers<[1], [0], [0], [1], [0, 0, 1, 1], [], []>} : vector<32x16xf32>, vector<16x20xf32>, vector<32x20xf32> -> vector<32x20xf32>
    %51 = arith.addf %44, %50 : vector<32x20xf32>
    %c7 = arith.constant 7 : index
    %c0_25 = arith.constant 0 : index
    %c0_26 = arith.constant 0 : index
    %52 = vector.load %arg2[%c7, %c0_25, %c0_26] : memref<16x32x16xf32, #tpu.memory_space<vmem>>, vector<1x32x16xf32>
    %53 = vector.shape_cast %52 : vector<1x32x16xf32> to vector<32x16xf32>
    %54 = vector.extract_strided_slice %1 {offsets = [3, 0, 0], sizes = [1, 16, 27], strides = [1, 1, 1]} : vector<4x16x27xf32> to vector<1x16x27xf32>
    %55 = vector.shape_cast %54 : vector<1x16x27xf32> to vector<16x27xf32>
    %56 = vector.extract_strided_slice %55 {offsets = [0, 1], sizes = [16, 20], strides = [1, 1]} : vector<16x27xf32> to vector<16x20xf32>
    %cst_27 = arith.constant dense<0.000000e+00> : vector<32x20xf32>
    %57 = tpu.matmul %53, %56, %cst_27 {dimension_numbers = #tpu.dot_dimension_numbers<[1], [0], [0], [1], [0, 0, 1, 1], [], []>} : vector<32x16xf32>, vector<16x20xf32>, vector<32x20xf32> -> vector<32x20xf32>
    %58 = arith.addf %51, %57 : vector<32x20xf32>
    %c8 = arith.constant 8 : index
    %c0_28 = arith.constant 0 : index
    %c0_29 = arith.constant 0 : index
    %59 = vector.load %arg2[%c8, %c0_28, %c0_29] : memref<16x32x16xf32, #tpu.memory_space<vmem>>, vector<1x32x16xf32>
    %60 = vector.shape_cast %59 : vector<1x32x16xf32> to vector<32x16xf32>
    %61 = vector.extract_strided_slice %1 {offsets = [0, 0, 0], sizes = [1, 16, 27], strides = [1, 1, 1]} : vector<4x16x27xf32> to vector<1x16x27xf32>
    %62 = vector.shape_cast %61 : vector<1x16x27xf32> to vector<16x27xf32>
    %63 = vector.extract_strided_slice %62 {offsets = [0, 5], sizes = [16, 20], strides = [1, 1]} : vector<16x27xf32> to vector<16x20xf32>
    %cst_30 = arith.constant dense<0.000000e+00> : vector<32x20xf32>
    %64 = tpu.matmul %60, %63, %cst_30 {dimension_numbers = #tpu.dot_dimension_numbers<[1], [0], [0], [1], [0, 0, 1, 1], [], []>} : vector<32x16xf32>, vector<16x20xf32>, vector<32x20xf32> -> vector<32x20xf32>
    %65 = arith.addf %58, %64 : vector<32x20xf32>
    %c9 = arith.constant 9 : index
    %c0_31 = arith.constant 0 : index
    %c0_32 = arith.constant 0 : index
    %66 = vector.load %arg2[%c9, %c0_31, %c0_32] : memref<16x32x16xf32, #tpu.memory_space<vmem>>, vector<1x32x16xf32>
    %67 = vector.shape_cast %66 : vector<1x32x16xf32> to vector<32x16xf32>
    %68 = vector.extract_strided_slice %1 {offsets = [1, 0, 0], sizes = [1, 16, 27], strides = [1, 1, 1]} : vector<4x16x27xf32> to vector<1x16x27xf32>
    %69 = vector.shape_cast %68 : vector<1x16x27xf32> to vector<16x27xf32>
    %70 = vector.extract_strided_slice %69 {offsets = [0, 5], sizes = [16, 20], strides = [1, 1]} : vector<16x27xf32> to vector<16x20xf32>
    %cst_33 = arith.constant dense<0.000000e+00> : vector<32x20xf32>
    %71 = tpu.matmul %67, %70, %cst_33 {dimension_numbers = #tpu.dot_dimension_numbers<[1], [0], [0], [1], [0, 0, 1, 1], [], []>} : vector<32x16xf32>, vector<16x20xf32>, vector<32x20xf32> -> vector<32x20xf32>
    %72 = arith.addf %65, %71 : vector<32x20xf32>
    %c10 = arith.constant 10 : index
    %c0_34 = arith.constant 0 : index
    %c0_35 = arith.constant 0 : index
    %73 = vector.load %arg2[%c10, %c0_34, %c0_35] : memref<16x32x16xf32, #tpu.memory_space<vmem>>, vector<1x32x16xf32>
    %74 = vector.shape_cast %73 : vector<1x32x16xf32> to vector<32x16xf32>
    %75 = vector.extract_strided_slice %1 {offsets = [0, 0, 0], sizes = [1, 16, 27], strides = [1, 1, 1]} : vector<4x16x27xf32> to vector<1x16x27xf32>
    %76 = vector.shape_cast %75 : vector<1x16x27xf32> to vector<16x27xf32>
    %77 = vector.extract_strided_slice %76 {offsets = [0, 6], sizes = [16, 20], strides = [1, 1]} : vector<16x27xf32> to vector<16x20xf32>
    %cst_36 = arith.constant dense<0.000000e+00> : vector<32x20xf32>
    %78 = tpu.matmul %74, %77, %cst_36 {dimension_numbers = #tpu.dot_dimension_numbers<[1], [0], [0], [1], [0, 0, 1, 1], [], []>} : vector<32x16xf32>, vector<16x20xf32>, vector<32x20xf32> -> vector<32x20xf32>
    %79 = arith.addf %72, %78 : vector<32x20xf32>
    %c11 = arith.constant 11 : index
    %c0_37 = arith.constant 0 : index
    %c0_38 = arith.constant 0 : index
    %80 = vector.load %arg2[%c11, %c0_37, %c0_38] : memref<16x32x16xf32, #tpu.memory_space<vmem>>, vector<1x32x16xf32>
    %81 = vector.shape_cast %80 : vector<1x32x16xf32> to vector<32x16xf32>
    %82 = vector.extract_strided_slice %1 {offsets = [1, 0, 0], sizes = [1, 16, 27], strides = [1, 1, 1]} : vector<4x16x27xf32> to vector<1x16x27xf32>
    %83 = vector.shape_cast %82 : vector<1x16x27xf32> to vector<16x27xf32>
    %84 = vector.extract_strided_slice %83 {offsets = [0, 6], sizes = [16, 20], strides = [1, 1]} : vector<16x27xf32> to vector<16x20xf32>
    %cst_39 = arith.constant dense<0.000000e+00> : vector<32x20xf32>
    %85 = tpu.matmul %81, %84, %cst_39 {dimension_numbers = #tpu.dot_dimension_numbers<[1], [0], [0], [1], [0, 0, 1, 1], [], []>} : vector<32x16xf32>, vector<16x20xf32>, vector<32x20xf32> -> vector<32x20xf32>
    %86 = arith.addf %79, %85 : vector<32x20xf32>
    %c12 = arith.constant 12 : index
    %c0_40 = arith.constant 0 : index
    %c0_41 = arith.constant 0 : index
    %87 = vector.load %arg2[%c12, %c0_40, %c0_41] : memref<16x32x16xf32, #tpu.memory_space<vmem>>, vector<1x32x16xf32>
    %88 = vector.shape_cast %87 : vector<1x32x16xf32> to vector<32x16xf32>
    %89 = vector.extract_strided_slice %1 {offsets = [2, 0, 0], sizes = [1, 16, 27], strides = [1, 1, 1]} : vector<4x16x27xf32> to vector<1x16x27xf32>
    %90 = vector.shape_cast %89 : vector<1x16x27xf32> to vector<16x27xf32>
    %91 = vector.extract_strided_slice %90 {offsets = [0, 5], sizes = [16, 20], strides = [1, 1]} : vector<16x27xf32> to vector<16x20xf32>
    %cst_42 = arith.constant dense<0.000000e+00> : vector<32x20xf32>
    %92 = tpu.matmul %88, %91, %cst_42 {dimension_numbers = #tpu.dot_dimension_numbers<[1], [0], [0], [1], [0, 0, 1, 1], [], []>} : vector<32x16xf32>, vector<16x20xf32>, vector<32x20xf32> -> vector<32x20xf32>
    %93 = arith.addf %86, %92 : vector<32x20xf32>
    %c13 = arith.constant 13 : index
    %c0_43 = arith.constant 0 : index
    %c0_44 = arith.constant 0 : index
    %94 = vector.load %arg2[%c13, %c0_43, %c0_44] : memref<16x32x16xf32, #tpu.memory_space<vmem>>, vector<1x32x16xf32>
    %95 = vector.shape_cast %94 : vector<1x32x16xf32> to vector<32x16xf32>
    %96 = vector.extract_strided_slice %1 {offsets = [3, 0, 0], sizes = [1, 16, 27], strides = [1, 1, 1]} : vector<4x16x27xf32> to vector<1x16x27xf32>
    %97 = vector.shape_cast %96 : vector<1x16x27xf32> to vector<16x27xf32>
    %98 = vector.extract_strided_slice %97 {offsets = [0, 5], sizes = [16, 20], strides = [1, 1]} : vector<16x27xf32> to vector<16x20xf32>
    %cst_45 = arith.constant dense<0.000000e+00> : vector<32x20xf32>
    %99 = tpu.matmul %95, %98, %cst_45 {dimension_numbers = #tpu.dot_dimension_numbers<[1], [0], [0], [1], [0, 0, 1, 1], [], []>} : vector<32x16xf32>, vector<16x20xf32>, vector<32x20xf32> -> vector<32x20xf32>
    %100 = arith.addf %93, %99 : vector<32x20xf32>
    %c14 = arith.constant 14 : index
    %c0_46 = arith.constant 0 : index
    %c0_47 = arith.constant 0 : index
    %101 = vector.load %arg2[%c14, %c0_46, %c0_47] : memref<16x32x16xf32, #tpu.memory_space<vmem>>, vector<1x32x16xf32>
    %102 = vector.shape_cast %101 : vector<1x32x16xf32> to vector<32x16xf32>
    %103 = vector.extract_strided_slice %1 {offsets = [2, 0, 0], sizes = [1, 16, 27], strides = [1, 1, 1]} : vector<4x16x27xf32> to vector<1x16x27xf32>
    %104 = vector.shape_cast %103 : vector<1x16x27xf32> to vector<16x27xf32>
    %105 = vector.extract_strided_slice %104 {offsets = [0, 6], sizes = [16, 20], strides = [1, 1]} : vector<16x27xf32> to vector<16x20xf32>
    %cst_48 = arith.constant dense<0.000000e+00> : vector<32x20xf32>
    %106 = tpu.matmul %102, %105, %cst_48 {dimension_numbers = #tpu.dot_dimension_numbers<[1], [0], [0], [1], [0, 0, 1, 1], [], []>} : vector<32x16xf32>, vector<16x20xf32>, vector<32x20xf32> -> vector<32x20xf32>
    %107 = arith.addf %100, %106 : vector<32x20xf32>
    %c15 = arith.constant 15 : index
    %c0_49 = arith.constant 0 : index
    %c0_50 = arith.constant 0 : index
    %108 = vector.load %arg2[%c15, %c0_49, %c0_50] : memref<16x32x16xf32, #tpu.memory_space<vmem>>, vector<1x32x16xf32>
    %109 = vector.shape_cast %108 : vector<1x32x16xf32> to vector<32x16xf32>
    %110 = vector.extract_strided_slice %1 {offsets = [3, 0, 0], sizes = [1, 16, 27], strides = [1, 1, 1]} : vector<4x16x27xf32> to vector<1x16x27xf32>
    %111 = vector.shape_cast %110 : vector<1x16x27xf32> to vector<16x27xf32>
    %112 = vector.extract_strided_slice %111 {offsets = [0, 6], sizes = [16, 20], strides = [1, 1]} : vector<16x27xf32> to vector<16x20xf32>
    %cst_51 = arith.constant dense<0.000000e+00> : vector<32x20xf32>
    %113 = tpu.matmul %109, %112, %cst_51 {dimension_numbers = #tpu.dot_dimension_numbers<[1], [0], [0], [1], [0, 0, 1, 1], [], []>} : vector<32x16xf32>, vector<16x20xf32>, vector<32x20xf32> -> vector<32x20xf32>
    %114 = arith.addf %107, %113 : vector<32x20xf32>
    %c0_52 = arith.constant 0 : index
    %c0_53 = arith.constant 0 : index
    %115 = vector.load %arg3[%c0_52, %c0_53] : memref<32x1xf32, #tpu.memory_space<vmem>>, vector<32x1xf32>
    %c0_54 = arith.constant 0 : index
    %c0_55 = arith.constant 0 : index
    %116 = vector.load %arg4[%c0_54, %c0_55] : memref<1x20xf32, #tpu.memory_space<vmem>>, vector<1x20xf32>
    %117 = vector.broadcast %115 : vector<32x1xf32> to vector<32x20xf32>
    %118 = arith.addf %114, %117 : vector<32x20xf32>
    %119 = vector.broadcast %116 : vector<1x20xf32> to vector<32x20xf32>
    %120 = arith.mulf %118, %119 : vector<32x20xf32>
    %cst_56 = arith.constant dense<0.000000e+00> : vector<32xf32>
    %121 = vector.multi_reduction <add>, %120, %cst_56 [1] : vector<32x20xf32> to vector<32xf32>
    %122 = vector.shape_cast %121 : vector<32xf32> to vector<32x1xf32>
    %cst_57 = arith.constant 6.250000e-02 : f32
    %123 = vector.broadcast %cst_57 : f32 to vector<32x1xf32>
    %124 = arith.mulf %122, %123 : vector<32x1xf32>
    %125 = vector.broadcast %124 : vector<32x1xf32> to vector<32x20xf32>
    %126 = arith.subf %118, %125 : vector<32x20xf32>
    %127 = vector.broadcast %116 : vector<1x20xf32> to vector<32x20xf32>
    %128 = arith.mulf %126, %127 : vector<32x20xf32>
    %129 = arith.mulf %128, %128 : vector<32x20xf32>
    %cst_58 = arith.constant dense<0.000000e+00> : vector<32xf32>
    %130 = vector.multi_reduction <add>, %129, %cst_58 [1] : vector<32x20xf32> to vector<32xf32>
    %131 = vector.shape_cast %130 : vector<32xf32> to vector<32x1xf32>
    %cst_59 = arith.constant 6.250000e-02 : f32
    %132 = vector.broadcast %cst_59 : f32 to vector<32x1xf32>
    %133 = arith.mulf %131, %132 : vector<32x1xf32>
    %134 = vector.broadcast %124 : vector<32x1xf32> to vector<32x20xf32>
    %135 = arith.subf %118, %134 : vector<32x20xf32>
    %cst_60 = arith.constant 9.99999974E-6 : f32
    %136 = vector.broadcast %cst_60 : f32 to vector<32x1xf32>
    %137 = arith.addf %133, %136 : vector<32x1xf32>
    %138 = math.rsqrt %137 : vector<32x1xf32>
    %139 = vector.broadcast %138 : vector<32x1xf32> to vector<32x20xf32>
    %140 = arith.mulf %135, %139 : vector<32x20xf32>
    %cst_61 = arith.constant 0.000000e+00 : f32
    %141 = vector.broadcast %cst_61 : f32 to vector<32x20xf32>
    %142 = arith.maximumf %140, %141 : vector<32x20xf32>
    %c0_62 = arith.constant 0 : index
    %c0_63 = arith.constant 0 : index
    %c0_64 = arith.constant 0 : index
    %143 = vector.load %arg5[%c0_62, %c0_63, %c0_64] : memref<1x32x20xf32, #tpu.memory_space<vmem>>, vector<1x32x20xf32>
    %144 = vector.shape_cast %143 : vector<1x32x20xf32> to vector<32x20xf32>
    %145 = vector.shape_cast %142 : vector<32x20xf32> to vector<1x32x20xf32>
    tpu.vector_store %arg5[%c0_62, %c0_63, %c0_64], %145 {strides = array<i32>} : memref<1x32x20xf32, #tpu.memory_space<vmem>>, vector<1x32x20xf32>,
    return
  }
  func.func @transform_0(%arg0: i32) -> (i32, i32, i32, i32) {
    %c0_i32 = arith.constant 0 : i32
    %c0_i32_0 = arith.constant 0 : i32
    %c0_i32_1 = arith.constant 0 : i32
    %c0_i32_2 = arith.constant 0 : i32
    return %arg0, %c0_i32, %c0_i32_0, %c0_i32_1 : i32, i32, i32, i32
  }
  func.func @transform_1(%arg0: i32) -> (i32, i32, i32) {
    %c0_i32 = arith.constant 0 : i32
    %c0_i32_0 = arith.constant 0 : i32
    %c0_i32_1 = arith.constant 0 : i32
    %c0_i32_2 = arith.constant 0 : i32
    return %c0_i32, %c0_i32_0, %c0_i32_1 : i32, i32, i32
  }
  func.func @transform_2(%arg0: i32) -> (i32, i32) {
    %c0_i32 = arith.constant 0 : i32
    %c0_i32_0 = arith.constant 0 : i32
    %c0_i32_1 = arith.constant 0 : i32
    return %c0_i32, %c0_i32_0 : i32, i32
  }
  func.func @transform_3(%arg0: i32) -> (i32, i32) {
    %c0_i32 = arith.constant 0 : i32
    %c0_i32_0 = arith.constant 0 : i32
    %c0_i32_1 = arith.constant 0 : i32
    return %c0_i32, %c0_i32_0 : i32, i32
  }
  func.func @transform_4(%arg0: i32) -> (i32, i32, i32) {
    %c0_i32 = arith.constant 0 : i32
    %c0_i32_0 = arith.constant 0 : i32
    %c0_i32_1 = arith.constant 0 : i32
    return %arg0, %c0_i32, %c0_i32_0 : i32, i32, i32
  }
}

module attributes {stable_mosaic.version = 11 : i64} {
  func.func @_resblock_kernel(%arg0: i32, %arg1: memref<1x32x38xf32, #tpu.memory_space<vmem>>, %arg2: memref<9x32x32xf32, #tpu.memory_space<vmem>>, %arg3: memref<32x1xf32, #tpu.memory_space<vmem>>, %arg4: memref<9x32x32xf32, #tpu.memory_space<vmem>>, %arg5: memref<32x1xf32, #tpu.memory_space<vmem>>, %arg6: memref<1x24xf32, #tpu.memory_space<vmem>>, %arg7: memref<1x32x24xf32, #tpu.memory_space<vmem>>) attributes {dimension_semantics = [#tpu.dimension_semantics<parallel>], iteration_bounds = array<i64: 2>, scalar_prefetch = 0 : i64, scratch_operands = 0 : i64, tpu.core_type = #tpu.core_type<tc>, window_params = [{transform_indices = @transform_0, window_bounds = array<i64: 1, 32, 38>}, {pipeline_mode = #tpu.pipeline_mode<synchronous>, transform_indices = @transform_1, window_bounds = array<i64: 9, 32, 32>}, {pipeline_mode = #tpu.pipeline_mode<synchronous>, transform_indices = @transform_2, window_bounds = array<i64: 32, 1>}, {pipeline_mode = #tpu.pipeline_mode<synchronous>, transform_indices = @transform_3, window_bounds = array<i64: 9, 32, 32>}, {pipeline_mode = #tpu.pipeline_mode<synchronous>, transform_indices = @transform_4, window_bounds = array<i64: 32, 1>}, {pipeline_mode = #tpu.pipeline_mode<synchronous>, transform_indices = @transform_5, window_bounds = array<i64: 1, 24>}, {transform_indices = @transform_6, window_bounds = array<i64: 1, 32, 24>}]} {
    %c0 = arith.constant 0 : index
    %c0_0 = arith.constant 0 : index
    %c0_1 = arith.constant 0 : index
    %0 = vector.load %arg1[%c0, %c0_0, %c0_1] : memref<1x32x38xf32, #tpu.memory_space<vmem>>, vector<1x32x38xf32>
    %1 = vector.shape_cast %0 : vector<1x32x38xf32> to vector<32x38xf32>
    %c0_2 = arith.constant 0 : index
    %c0_3 = arith.constant 0 : index
    %2 = vector.load %arg6[%c0_2, %c0_3] : memref<1x24xf32, #tpu.memory_space<vmem>>, vector<1x24xf32>
    %cst = arith.constant 0.000000e+00 : f32
    %3 = vector.broadcast %cst : f32 to vector<32x24xf32>
    %c0_4 = arith.constant 0 : index
    %c0_5 = arith.constant 0 : index
    %c0_6 = arith.constant 0 : index
    %4 = vector.load %arg2[%c0_4, %c0_5, %c0_6] : memref<9x32x32xf32, #tpu.memory_space<vmem>>, vector<1x32x32xf32>
    %5 = vector.shape_cast %4 : vector<1x32x32xf32> to vector<32x32xf32>
    %6 = vector.extract_strided_slice %1 {offsets = [0, 0], sizes = [32, 24], strides = [1, 1]} : vector<32x38xf32> to vector<32x24xf32>
    %cst_7 = arith.constant dense<0.000000e+00> : vector<32x24xf32>
    %7 = tpu.matmul %5, %6, %cst_7 {dimension_numbers = #tpu.dot_dimension_numbers<[1], [0], [0], [1], [0, 0, 1, 1], [], []>} : vector<32x32xf32>, vector<32x24xf32>, vector<32x24xf32> -> vector<32x24xf32>
    %8 = arith.addf %3, %7 : vector<32x24xf32>
    %c1 = arith.constant 1 : index
    %c0_8 = arith.constant 0 : index
    %c0_9 = arith.constant 0 : index
    %9 = vector.load %arg2[%c1, %c0_8, %c0_9] : memref<9x32x32xf32, #tpu.memory_space<vmem>>, vector<1x32x32xf32>
    %10 = vector.shape_cast %9 : vector<1x32x32xf32> to vector<32x32xf32>
    %11 = vector.extract_strided_slice %1 {offsets = [0, 1], sizes = [32, 24], strides = [1, 1]} : vector<32x38xf32> to vector<32x24xf32>
    %cst_10 = arith.constant dense<0.000000e+00> : vector<32x24xf32>
    %12 = tpu.matmul %10, %11, %cst_10 {dimension_numbers = #tpu.dot_dimension_numbers<[1], [0], [0], [1], [0, 0, 1, 1], [], []>} : vector<32x32xf32>, vector<32x24xf32>, vector<32x24xf32> -> vector<32x24xf32>
    %13 = arith.addf %8, %12 : vector<32x24xf32>
    %c2 = arith.constant 2 : index
    %c0_11 = arith.constant 0 : index
    %c0_12 = arith.constant 0 : index
    %14 = vector.load %arg2[%c2, %c0_11, %c0_12] : memref<9x32x32xf32, #tpu.memory_space<vmem>>, vector<1x32x32xf32>
    %15 = vector.shape_cast %14 : vector<1x32x32xf32> to vector<32x32xf32>
    %16 = vector.extract_strided_slice %1 {offsets = [0, 2], sizes = [32, 24], strides = [1, 1]} : vector<32x38xf32> to vector<32x24xf32>
    %cst_13 = arith.constant dense<0.000000e+00> : vector<32x24xf32>
    %17 = tpu.matmul %15, %16, %cst_13 {dimension_numbers = #tpu.dot_dimension_numbers<[1], [0], [0], [1], [0, 0, 1, 1], [], []>} : vector<32x32xf32>, vector<32x24xf32>, vector<32x24xf32> -> vector<32x24xf32>
    %18 = arith.addf %13, %17 : vector<32x24xf32>
    %c3 = arith.constant 3 : index
    %c0_14 = arith.constant 0 : index
    %c0_15 = arith.constant 0 : index
    %19 = vector.load %arg2[%c3, %c0_14, %c0_15] : memref<9x32x32xf32, #tpu.memory_space<vmem>>, vector<1x32x32xf32>
    %20 = vector.shape_cast %19 : vector<1x32x32xf32> to vector<32x32xf32>
    %21 = vector.extract_strided_slice %1 {offsets = [0, 6], sizes = [32, 24], strides = [1, 1]} : vector<32x38xf32> to vector<32x24xf32>
    %cst_16 = arith.constant dense<0.000000e+00> : vector<32x24xf32>
    %22 = tpu.matmul %20, %21, %cst_16 {dimension_numbers = #tpu.dot_dimension_numbers<[1], [0], [0], [1], [0, 0, 1, 1], [], []>} : vector<32x32xf32>, vector<32x24xf32>, vector<32x24xf32> -> vector<32x24xf32>
    %23 = arith.addf %18, %22 : vector<32x24xf32>
    %c4 = arith.constant 4 : index
    %c0_17 = arith.constant 0 : index
    %c0_18 = arith.constant 0 : index
    %24 = vector.load %arg2[%c4, %c0_17, %c0_18] : memref<9x32x32xf32, #tpu.memory_space<vmem>>, vector<1x32x32xf32>
    %25 = vector.shape_cast %24 : vector<1x32x32xf32> to vector<32x32xf32>
    %26 = vector.extract_strided_slice %1 {offsets = [0, 7], sizes = [32, 24], strides = [1, 1]} : vector<32x38xf32> to vector<32x24xf32>
    %cst_19 = arith.constant dense<0.000000e+00> : vector<32x24xf32>
    %27 = tpu.matmul %25, %26, %cst_19 {dimension_numbers = #tpu.dot_dimension_numbers<[1], [0], [0], [1], [0, 0, 1, 1], [], []>} : vector<32x32xf32>, vector<32x24xf32>, vector<32x24xf32> -> vector<32x24xf32>
    %28 = arith.addf %23, %27 : vector<32x24xf32>
    %c5 = arith.constant 5 : index
    %c0_20 = arith.constant 0 : index
    %c0_21 = arith.constant 0 : index
    %29 = vector.load %arg2[%c5, %c0_20, %c0_21] : memref<9x32x32xf32, #tpu.memory_space<vmem>>, vector<1x32x32xf32>
    %30 = vector.shape_cast %29 : vector<1x32x32xf32> to vector<32x32xf32>
    %31 = vector.extract_strided_slice %1 {offsets = [0, 8], sizes = [32, 24], strides = [1, 1]} : vector<32x38xf32> to vector<32x24xf32>
    %cst_22 = arith.constant dense<0.000000e+00> : vector<32x24xf32>
    %32 = tpu.matmul %30, %31, %cst_22 {dimension_numbers = #tpu.dot_dimension_numbers<[1], [0], [0], [1], [0, 0, 1, 1], [], []>} : vector<32x32xf32>, vector<32x24xf32>, vector<32x24xf32> -> vector<32x24xf32>
    %33 = arith.addf %28, %32 : vector<32x24xf32>
    %c6 = arith.constant 6 : index
    %c0_23 = arith.constant 0 : index
    %c0_24 = arith.constant 0 : index
    %34 = vector.load %arg2[%c6, %c0_23, %c0_24] : memref<9x32x32xf32, #tpu.memory_space<vmem>>, vector<1x32x32xf32>
    %35 = vector.shape_cast %34 : vector<1x32x32xf32> to vector<32x32xf32>
    %36 = vector.extract_strided_slice %1 {offsets = [0, 12], sizes = [32, 24], strides = [1, 1]} : vector<32x38xf32> to vector<32x24xf32>
    %cst_25 = arith.constant dense<0.000000e+00> : vector<32x24xf32>
    %37 = tpu.matmul %35, %36, %cst_25 {dimension_numbers = #tpu.dot_dimension_numbers<[1], [0], [0], [1], [0, 0, 1, 1], [], []>} : vector<32x32xf32>, vector<32x24xf32>, vector<32x24xf32> -> vector<32x24xf32>
    %38 = arith.addf %33, %37 : vector<32x24xf32>
    %c7 = arith.constant 7 : index
    %c0_26 = arith.constant 0 : index
    %c0_27 = arith.constant 0 : index
    %39 = vector.load %arg2[%c7, %c0_26, %c0_27] : memref<9x32x32xf32, #tpu.memory_space<vmem>>, vector<1x32x32xf32>
    %40 = vector.shape_cast %39 : vector<1x32x32xf32> to vector<32x32xf32>
    %41 = vector.extract_strided_slice %1 {offsets = [0, 13], sizes = [32, 24], strides = [1, 1]} : vector<32x38xf32> to vector<32x24xf32>
    %cst_28 = arith.constant dense<0.000000e+00> : vector<32x24xf32>
    %42 = tpu.matmul %40, %41, %cst_28 {dimension_numbers = #tpu.dot_dimension_numbers<[1], [0], [0], [1], [0, 0, 1, 1], [], []>} : vector<32x32xf32>, vector<32x24xf32>, vector<32x24xf32> -> vector<32x24xf32>
    %43 = arith.addf %38, %42 : vector<32x24xf32>
    %c8 = arith.constant 8 : index
    %c0_29 = arith.constant 0 : index
    %c0_30 = arith.constant 0 : index
    %44 = vector.load %arg2[%c8, %c0_29, %c0_30] : memref<9x32x32xf32, #tpu.memory_space<vmem>>, vector<1x32x32xf32>
    %45 = vector.shape_cast %44 : vector<1x32x32xf32> to vector<32x32xf32>
    %46 = vector.extract_strided_slice %1 {offsets = [0, 14], sizes = [32, 24], strides = [1, 1]} : vector<32x38xf32> to vector<32x24xf32>
    %cst_31 = arith.constant dense<0.000000e+00> : vector<32x24xf32>
    %47 = tpu.matmul %45, %46, %cst_31 {dimension_numbers = #tpu.dot_dimension_numbers<[1], [0], [0], [1], [0, 0, 1, 1], [], []>} : vector<32x32xf32>, vector<32x24xf32>, vector<32x24xf32> -> vector<32x24xf32>
    %48 = arith.addf %43, %47 : vector<32x24xf32>
    %c0_32 = arith.constant 0 : index
    %c0_33 = arith.constant 0 : index
    %49 = vector.load %arg3[%c0_32, %c0_33] : memref<32x1xf32, #tpu.memory_space<vmem>>, vector<32x1xf32>
    %50 = vector.broadcast %49 : vector<32x1xf32> to vector<32x24xf32>
    %51 = arith.addf %48, %50 : vector<32x24xf32>
    %52 = vector.broadcast %2 : vector<1x24xf32> to vector<32x24xf32>
    %53 = arith.mulf %51, %52 : vector<32x24xf32>
    %cst_34 = arith.constant dense<0.000000e+00> : vector<32xf32>
    %54 = vector.multi_reduction <add>, %53, %cst_34 [1] : vector<32x24xf32> to vector<32xf32>
    %55 = vector.shape_cast %54 : vector<32xf32> to vector<32x1xf32>
    %cst_35 = arith.constant 6.250000e-02 : f32
    %56 = vector.broadcast %cst_35 : f32 to vector<32x1xf32>
    %57 = arith.mulf %55, %56 : vector<32x1xf32>
    %58 = vector.broadcast %57 : vector<32x1xf32> to vector<32x24xf32>
    %59 = arith.subf %51, %58 : vector<32x24xf32>
    %60 = vector.broadcast %2 : vector<1x24xf32> to vector<32x24xf32>
    %61 = arith.mulf %59, %60 : vector<32x24xf32>
    %62 = arith.mulf %61, %61 : vector<32x24xf32>
    %cst_36 = arith.constant dense<0.000000e+00> : vector<32xf32>
    %63 = vector.multi_reduction <add>, %62, %cst_36 [1] : vector<32x24xf32> to vector<32xf32>
    %64 = vector.shape_cast %63 : vector<32xf32> to vector<32x1xf32>
    %cst_37 = arith.constant 6.250000e-02 : f32
    %65 = vector.broadcast %cst_37 : f32 to vector<32x1xf32>
    %66 = arith.mulf %64, %65 : vector<32x1xf32>
    %67 = vector.broadcast %57 : vector<32x1xf32> to vector<32x24xf32>
    %68 = arith.subf %51, %67 : vector<32x24xf32>
    %cst_38 = arith.constant 9.99999974E-6 : f32
    %69 = vector.broadcast %cst_38 : f32 to vector<32x1xf32>
    %70 = arith.addf %66, %69 : vector<32x1xf32>
    %71 = math.rsqrt %70 : vector<32x1xf32>
    %72 = vector.broadcast %71 : vector<32x1xf32> to vector<32x24xf32>
    %73 = arith.mulf %68, %72 : vector<32x24xf32>
    %cst_39 = arith.constant 0.000000e+00 : f32
    %74 = vector.broadcast %cst_39 : f32 to vector<32x24xf32>
    %75 = arith.maximumf %73, %74 : vector<32x24xf32>
    %76 = vector.extract_strided_slice %75 {offsets = [0, 7], sizes = [32, 1], strides = [1, 1]} : vector<32x24xf32> to vector<32x1xf32>
    %77 = vector.extract_strided_slice %75 {offsets = [0, 6], sizes = [32, 4], strides = [1, 1]} : vector<32x24xf32> to vector<32x4xf32>
    %78 = vector.extract_strided_slice %75 {offsets = [0, 8], sizes = [32, 1], strides = [1, 1]} : vector<32x24xf32> to vector<32x1xf32>
    %79 = vector.extract_strided_slice %75 {offsets = [0, 1], sizes = [32, 1], strides = [1, 1]} : vector<32x24xf32> to vector<32x1xf32>
    %80 = vector.extract_strided_slice %75 {offsets = [0, 0], sizes = [32, 4], strides = [1, 1]} : vector<32x24xf32> to vector<32x4xf32>
    %81 = vector.extract_strided_slice %75 {offsets = [0, 2], sizes = [32, 1], strides = [1, 1]} : vector<32x24xf32> to vector<32x1xf32>
    %82 = vector.extract_strided_slice %75 {offsets = [0, 7], sizes = [32, 1], strides = [1, 1]} : vector<32x24xf32> to vector<32x1xf32>
    %83 = vector.extract_strided_slice %75 {offsets = [0, 6], sizes = [32, 4], strides = [1, 1]} : vector<32x24xf32> to vector<32x4xf32>
    %84 = vector.extract_strided_slice %75 {offsets = [0, 8], sizes = [32, 1], strides = [1, 1]} : vector<32x24xf32> to vector<32x1xf32>
    %85 = vector.extract_strided_slice %75 {offsets = [0, 13], sizes = [32, 1], strides = [1, 1]} : vector<32x24xf32> to vector<32x1xf32>
    %86 = vector.extract_strided_slice %75 {offsets = [0, 12], sizes = [32, 4], strides = [1, 1]} : vector<32x24xf32> to vector<32x4xf32>
    %87 = vector.extract_strided_slice %75 {offsets = [0, 14], sizes = [32, 1], strides = [1, 1]} : vector<32x24xf32> to vector<32x1xf32>
    %88 = vector.extract_strided_slice %75 {offsets = [0, 19], sizes = [32, 1], strides = [1, 1]} : vector<32x24xf32> to vector<32x1xf32>
    %89 = vector.extract_strided_slice %75 {offsets = [0, 18], sizes = [32, 4], strides = [1, 1]} : vector<32x24xf32> to vector<32x4xf32>
    %90 = vector.extract_strided_slice %75 {offsets = [0, 20], sizes = [32, 1], strides = [1, 1]} : vector<32x24xf32> to vector<32x1xf32>
    %91 = vector.extract_strided_slice %75 {offsets = [0, 13], sizes = [32, 1], strides = [1, 1]} : vector<32x24xf32> to vector<32x1xf32>
    %92 = vector.extract_strided_slice %75 {offsets = [0, 12], sizes = [32, 4], strides = [1, 1]} : vector<32x24xf32> to vector<32x4xf32>
    %93 = vector.extract_strided_slice %75 {offsets = [0, 14], sizes = [32, 1], strides = [1, 1]} : vector<32x24xf32> to vector<32x1xf32>
    %cst_40 = arith.constant 0.000000e+00 : f32
    %94 = vector.broadcast %cst_40 : f32 to vector<32x2xf32>
    %95 = tpu.concatenate %76, %77, %78, %79, %80, %81, %82, %83, %84, %85, %86, %87, %88, %89, %90, %91 in 1 : vector<32x1xf32>, vector<32x4xf32>, vector<32x1xf32>, vector<32x1xf32>, vector<32x4xf32>, vector<32x1xf32>, vector<32x1xf32>, vector<32x4xf32>, vector<32x1xf32>, vector<32x1xf32>, vector<32x4xf32>, vector<32x1xf32>, vector<32x1xf32>, vector<32x4xf32>, vector<32x1xf32>, vector<32x1xf32> -> vector<32x31xf32>
    %96 = tpu.concatenate %92, %93, %94 in 1 : vector<32x4xf32>, vector<32x1xf32>, vector<32x2xf32> -> vector<32x7xf32>
    %97 = tpu.concatenate %95, %96 in 1 : vector<32x31xf32>, vector<32x7xf32> -> vector<32x38xf32>
    %cst_41 = arith.constant 0.000000e+00 : f32
    %98 = vector.broadcast %cst_41 : f32 to vector<32x24xf32>
    %c0_42 = arith.constant 0 : index
    %c0_43 = arith.constant 0 : index
    %c0_44 = arith.constant 0 : index
    %99 = vector.load %arg4[%c0_42, %c0_43, %c0_44] : memref<9x32x32xf32, #tpu.memory_space<vmem>>, vector<1x32x32xf32>
    %100 = vector.shape_cast %99 : vector<1x32x32xf32> to vector<32x32xf32>
    %101 = vector.extract_strided_slice %97 {offsets = [0, 0], sizes = [32, 24], strides = [1, 1]} : vector<32x38xf32> to vector<32x24xf32>
    %cst_45 = arith.constant dense<0.000000e+00> : vector<32x24xf32>
    %102 = tpu.matmul %100, %101, %cst_45 {dimension_numbers = #tpu.dot_dimension_numbers<[1], [0], [0], [1], [0, 0, 1, 1], [], []>} : vector<32x32xf32>, vector<32x24xf32>, vector<32x24xf32> -> vector<32x24xf32>
    %103 = arith.addf %98, %102 : vector<32x24xf32>
    %c1_46 = arith.constant 1 : index
    %c0_47 = arith.constant 0 : index
    %c0_48 = arith.constant 0 : index
    %104 = vector.load %arg4[%c1_46, %c0_47, %c0_48] : memref<9x32x32xf32, #tpu.memory_space<vmem>>, vector<1x32x32xf32>
    %105 = vector.shape_cast %104 : vector<1x32x32xf32> to vector<32x32xf32>
    %106 = vector.extract_strided_slice %97 {offsets = [0, 1], sizes = [32, 24], strides = [1, 1]} : vector<32x38xf32> to vector<32x24xf32>
    %cst_49 = arith.constant dense<0.000000e+00> : vector<32x24xf32>
    %107 = tpu.matmul %105, %106, %cst_49 {dimension_numbers = #tpu.dot_dimension_numbers<[1], [0], [0], [1], [0, 0, 1, 1], [], []>} : vector<32x32xf32>, vector<32x24xf32>, vector<32x24xf32> -> vector<32x24xf32>
    %108 = arith.addf %103, %107 : vector<32x24xf32>
    %c2_50 = arith.constant 2 : index
    %c0_51 = arith.constant 0 : index
    %c0_52 = arith.constant 0 : index
    %109 = vector.load %arg4[%c2_50, %c0_51, %c0_52] : memref<9x32x32xf32, #tpu.memory_space<vmem>>, vector<1x32x32xf32>
    %110 = vector.shape_cast %109 : vector<1x32x32xf32> to vector<32x32xf32>
    %111 = vector.extract_strided_slice %97 {offsets = [0, 2], sizes = [32, 24], strides = [1, 1]} : vector<32x38xf32> to vector<32x24xf32>
    %cst_53 = arith.constant dense<0.000000e+00> : vector<32x24xf32>
    %112 = tpu.matmul %110, %111, %cst_53 {dimension_numbers = #tpu.dot_dimension_numbers<[1], [0], [0], [1], [0, 0, 1, 1], [], []>} : vector<32x32xf32>, vector<32x24xf32>, vector<32x24xf32> -> vector<32x24xf32>
    %113 = arith.addf %108, %112 : vector<32x24xf32>
    %c3_54 = arith.constant 3 : index
    %c0_55 = arith.constant 0 : index
    %c0_56 = arith.constant 0 : index
    %114 = vector.load %arg4[%c3_54, %c0_55, %c0_56] : memref<9x32x32xf32, #tpu.memory_space<vmem>>, vector<1x32x32xf32>
    %115 = vector.shape_cast %114 : vector<1x32x32xf32> to vector<32x32xf32>
    %116 = vector.extract_strided_slice %97 {offsets = [0, 6], sizes = [32, 24], strides = [1, 1]} : vector<32x38xf32> to vector<32x24xf32>
    %cst_57 = arith.constant dense<0.000000e+00> : vector<32x24xf32>
    %117 = tpu.matmul %115, %116, %cst_57 {dimension_numbers = #tpu.dot_dimension_numbers<[1], [0], [0], [1], [0, 0, 1, 1], [], []>} : vector<32x32xf32>, vector<32x24xf32>, vector<32x24xf32> -> vector<32x24xf32>
    %118 = arith.addf %113, %117 : vector<32x24xf32>
    %c4_58 = arith.constant 4 : index
    %c0_59 = arith.constant 0 : index
    %c0_60 = arith.constant 0 : index
    %119 = vector.load %arg4[%c4_58, %c0_59, %c0_60] : memref<9x32x32xf32, #tpu.memory_space<vmem>>, vector<1x32x32xf32>
    %120 = vector.shape_cast %119 : vector<1x32x32xf32> to vector<32x32xf32>
    %121 = vector.extract_strided_slice %97 {offsets = [0, 7], sizes = [32, 24], strides = [1, 1]} : vector<32x38xf32> to vector<32x24xf32>
    %cst_61 = arith.constant dense<0.000000e+00> : vector<32x24xf32>
    %122 = tpu.matmul %120, %121, %cst_61 {dimension_numbers = #tpu.dot_dimension_numbers<[1], [0], [0], [1], [0, 0, 1, 1], [], []>} : vector<32x32xf32>, vector<32x24xf32>, vector<32x24xf32> -> vector<32x24xf32>
    %123 = arith.addf %118, %122 : vector<32x24xf32>
    %c5_62 = arith.constant 5 : index
    %c0_63 = arith.constant 0 : index
    %c0_64 = arith.constant 0 : index
    %124 = vector.load %arg4[%c5_62, %c0_63, %c0_64] : memref<9x32x32xf32, #tpu.memory_space<vmem>>, vector<1x32x32xf32>
    %125 = vector.shape_cast %124 : vector<1x32x32xf32> to vector<32x32xf32>
    %126 = vector.extract_strided_slice %97 {offsets = [0, 8], sizes = [32, 24], strides = [1, 1]} : vector<32x38xf32> to vector<32x24xf32>
    %cst_65 = arith.constant dense<0.000000e+00> : vector<32x24xf32>
    %127 = tpu.matmul %125, %126, %cst_65 {dimension_numbers = #tpu.dot_dimension_numbers<[1], [0], [0], [1], [0, 0, 1, 1], [], []>} : vector<32x32xf32>, vector<32x24xf32>, vector<32x24xf32> -> vector<32x24xf32>
    %128 = arith.addf %123, %127 : vector<32x24xf32>
    %c6_66 = arith.constant 6 : index
    %c0_67 = arith.constant 0 : index
    %c0_68 = arith.constant 0 : index
    %129 = vector.load %arg4[%c6_66, %c0_67, %c0_68] : memref<9x32x32xf32, #tpu.memory_space<vmem>>, vector<1x32x32xf32>
    %130 = vector.shape_cast %129 : vector<1x32x32xf32> to vector<32x32xf32>
    %131 = vector.extract_strided_slice %97 {offsets = [0, 12], sizes = [32, 24], strides = [1, 1]} : vector<32x38xf32> to vector<32x24xf32>
    %cst_69 = arith.constant dense<0.000000e+00> : vector<32x24xf32>
    %132 = tpu.matmul %130, %131, %cst_69 {dimension_numbers = #tpu.dot_dimension_numbers<[1], [0], [0], [1], [0, 0, 1, 1], [], []>} : vector<32x32xf32>, vector<32x24xf32>, vector<32x24xf32> -> vector<32x24xf32>
    %133 = arith.addf %128, %132 : vector<32x24xf32>
    %c7_70 = arith.constant 7 : index
    %c0_71 = arith.constant 0 : index
    %c0_72 = arith.constant 0 : index
    %134 = vector.load %arg4[%c7_70, %c0_71, %c0_72] : memref<9x32x32xf32, #tpu.memory_space<vmem>>, vector<1x32x32xf32>
    %135 = vector.shape_cast %134 : vector<1x32x32xf32> to vector<32x32xf32>
    %136 = vector.extract_strided_slice %97 {offsets = [0, 13], sizes = [32, 24], strides = [1, 1]} : vector<32x38xf32> to vector<32x24xf32>
    %cst_73 = arith.constant dense<0.000000e+00> : vector<32x24xf32>
    %137 = tpu.matmul %135, %136, %cst_73 {dimension_numbers = #tpu.dot_dimension_numbers<[1], [0], [0], [1], [0, 0, 1, 1], [], []>} : vector<32x32xf32>, vector<32x24xf32>, vector<32x24xf32> -> vector<32x24xf32>
    %138 = arith.addf %133, %137 : vector<32x24xf32>
    %c8_74 = arith.constant 8 : index
    %c0_75 = arith.constant 0 : index
    %c0_76 = arith.constant 0 : index
    %139 = vector.load %arg4[%c8_74, %c0_75, %c0_76] : memref<9x32x32xf32, #tpu.memory_space<vmem>>, vector<1x32x32xf32>
    %140 = vector.shape_cast %139 : vector<1x32x32xf32> to vector<32x32xf32>
    %141 = vector.extract_strided_slice %97 {offsets = [0, 14], sizes = [32, 24], strides = [1, 1]} : vector<32x38xf32> to vector<32x24xf32>
    %cst_77 = arith.constant dense<0.000000e+00> : vector<32x24xf32>
    %142 = tpu.matmul %140, %141, %cst_77 {dimension_numbers = #tpu.dot_dimension_numbers<[1], [0], [0], [1], [0, 0, 1, 1], [], []>} : vector<32x32xf32>, vector<32x24xf32>, vector<32x24xf32> -> vector<32x24xf32>
    %143 = arith.addf %138, %142 : vector<32x24xf32>
    %c0_78 = arith.constant 0 : index
    %c0_79 = arith.constant 0 : index
    %144 = vector.load %arg5[%c0_78, %c0_79] : memref<32x1xf32, #tpu.memory_space<vmem>>, vector<32x1xf32>
    %145 = vector.broadcast %144 : vector<32x1xf32> to vector<32x24xf32>
    %146 = arith.addf %143, %145 : vector<32x24xf32>
    %147 = vector.broadcast %2 : vector<1x24xf32> to vector<32x24xf32>
    %148 = arith.mulf %146, %147 : vector<32x24xf32>
    %cst_80 = arith.constant dense<0.000000e+00> : vector<32xf32>
    %149 = vector.multi_reduction <add>, %148, %cst_80 [1] : vector<32x24xf32> to vector<32xf32>
    %150 = vector.shape_cast %149 : vector<32xf32> to vector<32x1xf32>
    %cst_81 = arith.constant 6.250000e-02 : f32
    %151 = vector.broadcast %cst_81 : f32 to vector<32x1xf32>
    %152 = arith.mulf %150, %151 : vector<32x1xf32>
    %153 = vector.broadcast %152 : vector<32x1xf32> to vector<32x24xf32>
    %154 = arith.subf %146, %153 : vector<32x24xf32>
    %155 = vector.broadcast %2 : vector<1x24xf32> to vector<32x24xf32>
    %156 = arith.mulf %154, %155 : vector<32x24xf32>
    %157 = arith.mulf %156, %156 : vector<32x24xf32>
    %cst_82 = arith.constant dense<0.000000e+00> : vector<32xf32>
    %158 = vector.multi_reduction <add>, %157, %cst_82 [1] : vector<32x24xf32> to vector<32xf32>
    %159 = vector.shape_cast %158 : vector<32xf32> to vector<32x1xf32>
    %cst_83 = arith.constant 6.250000e-02 : f32
    %160 = vector.broadcast %cst_83 : f32 to vector<32x1xf32>
    %161 = arith.mulf %159, %160 : vector<32x1xf32>
    %162 = vector.broadcast %152 : vector<32x1xf32> to vector<32x24xf32>
    %163 = arith.subf %146, %162 : vector<32x24xf32>
    %cst_84 = arith.constant 9.99999974E-6 : f32
    %164 = vector.broadcast %cst_84 : f32 to vector<32x1xf32>
    %165 = arith.addf %161, %164 : vector<32x1xf32>
    %166 = math.rsqrt %165 : vector<32x1xf32>
    %167 = vector.broadcast %166 : vector<32x1xf32> to vector<32x24xf32>
    %168 = arith.mulf %163, %167 : vector<32x24xf32>
    %169 = vector.extract_strided_slice %1 {offsets = [0, 7], sizes = [32, 24], strides = [1, 1]} : vector<32x38xf32> to vector<32x24xf32>
    %170 = arith.addf %168, %169 : vector<32x24xf32>
    %c0_85 = arith.constant 0 : index
    %c0_86 = arith.constant 0 : index
    %c0_87 = arith.constant 0 : index
    %171 = vector.load %arg7[%c0_85, %c0_86, %c0_87] : memref<1x32x24xf32, #tpu.memory_space<vmem>>, vector<1x32x24xf32>
    %172 = vector.shape_cast %171 : vector<1x32x24xf32> to vector<32x24xf32>
    %173 = vector.shape_cast %170 : vector<32x24xf32> to vector<1x32x24xf32>
    tpu.vector_store %arg7[%c0_85, %c0_86, %c0_87], %173 {strides = array<i32>} : memref<1x32x24xf32, #tpu.memory_space<vmem>>, vector<1x32x24xf32>,
    return
  }
  func.func @transform_0(%arg0: i32) -> (i32, i32, i32) {
    %c0_i32 = arith.constant 0 : i32
    %c0_i32_0 = arith.constant 0 : i32
    %c0_i32_1 = arith.constant 0 : i32
    return %arg0, %c0_i32, %c0_i32_0 : i32, i32, i32
  }
  func.func @transform_1(%arg0: i32) -> (i32, i32, i32) {
    %c0_i32 = arith.constant 0 : i32
    %c0_i32_0 = arith.constant 0 : i32
    %c0_i32_1 = arith.constant 0 : i32
    %c0_i32_2 = arith.constant 0 : i32
    return %c0_i32, %c0_i32_0, %c0_i32_1 : i32, i32, i32
  }
  func.func @transform_2(%arg0: i32) -> (i32, i32) {
    %c0_i32 = arith.constant 0 : i32
    %c0_i32_0 = arith.constant 0 : i32
    %c0_i32_1 = arith.constant 0 : i32
    return %c0_i32, %c0_i32_0 : i32, i32
  }
  func.func @transform_3(%arg0: i32) -> (i32, i32, i32) {
    %c0_i32 = arith.constant 0 : i32
    %c0_i32_0 = arith.constant 0 : i32
    %c0_i32_1 = arith.constant 0 : i32
    %c0_i32_2 = arith.constant 0 : i32
    return %c0_i32, %c0_i32_0, %c0_i32_1 : i32, i32, i32
  }
  func.func @transform_4(%arg0: i32) -> (i32, i32) {
    %c0_i32 = arith.constant 0 : i32
    %c0_i32_0 = arith.constant 0 : i32
    %c0_i32_1 = arith.constant 0 : i32
    return %c0_i32, %c0_i32_0 : i32, i32
  }
  func.func @transform_5(%arg0: i32) -> (i32, i32) {
    %c0_i32 = arith.constant 0 : i32
    %c0_i32_0 = arith.constant 0 : i32
    %c0_i32_1 = arith.constant 0 : i32
    return %c0_i32, %c0_i32_0 : i32, i32
  }
  func.func @transform_6(%arg0: i32) -> (i32, i32, i32) {
    %c0_i32 = arith.constant 0 : i32
    %c0_i32_0 = arith.constant 0 : i32
    %c0_i32_1 = arith.constant 0 : i32
    return %arg0, %c0_i32, %c0_i32_0 : i32, i32, i32
  }
}

</mosaic_0001>

<llo_original>
// kernel: _lambda_.6
$region0: #{_lambda_.6}
  #allocation0 [shape = 'u32[]', space=smem, size = 0x4, offset = 0x4, fixed_abs, tag = 'smem constant byte address 0x4 - core index']
  #allocation1 [shape = 'u32[72,128]{1,0:T(1,128)}', space=vmem, size = 0x9000, scoped, tag = 'internal scratch']
  %s0 = inlined_call_operand.vmem [shape: f32[2,4,8,83], index: 0, kind: input, shape index: {}]
  %s1 = inlined_call_operand.vmem [shape: f32[16,16,8], index: 1, kind: input, shape index: {}]
  %s2 = inlined_call_operand.vmem [shape: f32[16,1], index: 2, kind: input, shape index: {}]
  %s3 = inlined_call_operand.vmem [shape: f32[1,72], index: 3, kind: input, shape index: {}]
  %s4 = inlined_call_operand.vmem [shape: f32[2,16,72], index: 4, kind: output, shape index: {}]
  %s5 = sld [smem:[#allocation0]]
  $region49: #{_lambda_.6} parent=0
    _
  %s7 = ssub.s32 1, %s5
  %s8 = scalar_select 0, %s7, %s5
  loop: start=0, step=1, limit=4
  $region2: #{_lambda_.6} parent=0 // loop_pre_header
    _
  $region3: #{_lambda_.6} parent=0 // loop_header
    %s10 = sphi 0, %s14
    %p11 = scmp.ge.s32.totalorder %s10, 4
    %s20 = sphi 0, %s22
    %s23 = sphi 0, %s20
    %s24 = sphi 0, %s23
    %s40 = sphi 0, %s24
    %s44 = sphi 0, %s44
    %s46 = sphi 0, %s44
    %s47 = sphi 0, %s46
    %s61 = sphi 0, %s47
    %s65 = sphi 0, %s65
    %s67 = sphi 0, %s65
    %s68 = sphi 0, %s67
    %s82 = sphi 0, %s68
    %s86 = sphi 0, %s86
    %s88 = sphi 0, %s86
    %s89 = sphi 0, %s88
    %s103 = sphi 0, %s89
    %s109 = sphi 0, %s111
    %s112 = sphi 0, %s109
    %s113 = sphi 0, %s112
    %s129 = sphi 0, %s113
  $region4: #{_lambda_.6} parent=0 // loop_header_branch
    %13 = sbr.rel (%p11) target = $region8
  $region5: #{_lambda_.6} parent=0 // loop_body
    %s15 = ssub.s32 %s10, 1
    %s16 = ssub.s32 %s10, 2
    %s17 = sadd.s32 %s10, 1
    %s18 = ssub.s32 %s10, %s17
    %p19 = scmp.eq.s32.totalorder %s18, 0
    %s21 = sadd.s32 %s20, 1
    %s22 = scalar_select %p19, %s20, %s21
    %p25 = pneg %p19
    %p26 = scmp.eq.s32.totalorder %s10, 1
    %p27 = por %p25, %p26
    %p28 = scmp.ne.s32.totalorder %s20, %s23
    %p29 = scmp.eq.s32.totalorder %s10, 0
    %p30 = por %p28, %p29
    %p31 = scmp.ne.s32.totalorder %s20, %s23
    %p32 = scmp.eq.s32.totalorder %s15, 1
    %p33 = por %p31, %p32
    %p34 = scmp.ne.s32.totalorder %s23, %s24
    %p35 = scmp.eq.s32.totalorder %s15, 0
    %p36 = por %p34, %p35
    %p37 = scmp.ne.s32.totalorder %s23, %s24
    %p38 = scmp.eq.s32.totalorder %s16, 1
    %p39 = por %p37, %p38
    %p41 = scmp.ne.s32.totalorder %s24, %s40
    %p42 = scmp.eq.s32.totalorder %s16, 0
    %p43 = por %p41, %p42
    %s45 = sadd.s32 %s44, 1
    %p48 = scmp.eq.s32.totalorder %s10, 1
    %p49 = scmp.ne.s32.totalorder %s44, %s46
    %p50 = scmp.eq.s32.totalorder %s10, 0
    %p51 = por %p49, %p50
    %p52 = scmp.ne.s32.totalorder %s44, %s46
    %p53 = scmp.eq.s32.totalorder %s15, 1
    %p54 = por %p52, %p53
    %p55 = scmp.ne.s32.totalorder %s46, %s47
    %p56 = scmp.eq.s32.totalorder %s15, 0
    %p57 = por %p55, %p56
    %p58 = scmp.ne.s32.totalorder %s46, %s47
    %p59 = scmp.eq.s32.totalorder %s16, 1
    %p60 = por %p58, %p59
    %p62 = scmp.ne.s32.totalorder %s47, %s61
    %p63 = scmp.eq.s32.totalorder %s16, 0
    %p64 = por %p62, %p63
    %s66 = sadd.s32 %s65, 1
    %p69 = scmp.eq.s32.totalorder %s10, 1
    %p70 = scmp.ne.s32.totalorder %s65, %s67
    %p71 = scmp.eq.s32.totalorder %s10, 0
    %p72 = por %p70, %p71
    %p73 = scmp.ne.s32.totalorder %s65, %s67
    %p74 = scmp.eq.s32.totalorder %s15, 1
    %p75 = por %p73, %p74
    %p76 = scmp.ne.s32.totalorder %s67, %s68
    %p77 = scmp.eq.s32.totalorder %s15, 0
    %p78 = por %p76, %p77
    %p79 = scmp.ne.s32.totalorder %s67, %s68
    %p80 = scmp.eq.s32.totalorder %s16, 1
    %p81 = por %p79, %p80
    %p83 = scmp.ne.s32.totalorder %s68, %s82
    %p84 = scmp.eq.s32.totalorder %s16, 0
    %p85 = por %p83, %p84
    %s87 = sadd.s32 %s86, 1
    %p90 = scmp.eq.s32.totalorder %s10, 1
    %p91 = scmp.ne.s32.totalorder %s86, %s88
    %p92 = scmp.eq.s32.totalorder %s10, 0
    %p93 = por %p91, %p92
    %p94 = scmp.ne.s32.totalorder %s86, %s88
    %p95 = scmp.eq.s32.totalorder %s15, 1
    %p96 = por %p94, %p95
    %p97 = scmp.ne.s32.totalorder %s88, %s89
    %p98 = scmp.eq.s32.totalorder %s15, 0
    %p99 = por %p97, %p98
    %p100 = scmp.ne.s32.totalorder %s88, %s89
    %p101 = scmp.eq.s32.totalorder %s16, 1
    %p102 = por %p100, %p101
    %p104 = scmp.ne.s32.totalorder %s89, %s103
    %p105 = scmp.eq.s32.totalorder %s16, 0
    %p106 = por %p104, %p105
    %s107 = ssub.s32 %s10, %s17
    %p108 = scmp.eq.s32.totalorder %s107, 0
    %s110 = sadd.s32 %s109, 1
    %s111 = scalar_select %p108, %s109, %s110
    %p114 = pneg %p108
    %p115 = scmp.eq.s32.totalorder %s10, 1
    %p116 = por %p114, %p115
    %p117 = scmp.ne.s32.totalorder %s109, %s112
    %p118 = scmp.eq.s32.totalorder %s10, 0
    %p119 = por %p117, %p118
    %p120 = scmp.ne.s32.totalorder %s109, %s112
    %p121 = scmp.eq.s32.totalorder %s15, 1
    %p122 = por %p120, %p121
    %p123 = scmp.ne.s32.totalorder %s112, %s113
    %p124 = scmp.eq.s32.totalorder %s15, 0
    %p125 = por %p123, %p124
    %p126 = scmp.ne.s32.totalorder %s112, %s113
    %p127 = scmp.eq.s32.totalorder %s16, 1
    %p128 = por %p126, %p127
    %p130 = scmp.ne.s32.totalorder %s113, %s129
    %p131 = scmp.eq.s32.totalorder %s16, 0
    %p132 = por %p130, %p131
    %p133 = scmp.le.s32.totalorder 1, %s10
    %p134 = scmp.lt.s32.totalorder %s10, 3
    %p135 = pnand %p133, %p134
    %p136 = pneg %p135
    // Predicated region
    $region9: #{_lambda_.6} parent=5 // pred_check
      _
    $region10: #{_lambda_.6} parent=5 // pred_check_branch
      %138 = sbr.rel (%p135) target = $region12
    $region11: #{_lambda_.6} parent=5 // pred_region
      %s139 = ssub.s32 %s10, 1
      // Predicated region
      $region13: #{_lambda_.6} parent=11 // pred_check
        %p140 = pneg %p57
      $region14: #{_lambda_.6} parent=11 // pred_check_branch
        %142 = sbr.rel (%p140) target = $region16
      $region15: #{_lambda_.6} parent=11 // pred_region
        _
      $region16: #{_lambda_.6} parent=11 // pred_fallthru
        _
      // Predicated region
      $region17: #{_lambda_.6} parent=11 // pred_check
        %p143 = pneg %p78
      $region18: #{_lambda_.6} parent=11 // pred_check_branch
        %145 = sbr.rel (%p143) target = $region20
      $region19: #{_lambda_.6} parent=11 // pred_region
        _
      $region20: #{_lambda_.6} parent=11 // pred_fallthru
        _
      // Predicated region
      $region21: #{_lambda_.6} parent=11 // pred_check
        %p146 = pneg %p99
      $region22: #{_lambda_.6} parent=11 // pred_check_branch
        %148 = sbr.rel (%p146) target = $region24
      $region23: #{_lambda_.6} parent=11 // pred_region
        _
      $region24: #{_lambda_.6} parent=11 // pred_fallthru
        _
    $region12: #{_lambda_.6} parent=5 // pred_fallthru
      _
    %p149 = scmp.lt.s32.totalorder %s10, 2
    // Predicated region
    $region25: #{_lambda_.6} parent=5 // pred_check
      %p150 = pneg %p149
    $region26: #{_lambda_.6} parent=5 // pred_check_branch
      %152 = sbr.rel (%p150) target = $region28
    $region27: #{_lambda_.6} parent=5 // pred_region
      // Predicated region
      $region29: #{_lambda_.6} parent=27 // pred_check
        %p153 = pneg %p30
      $region30: #{_lambda_.6} parent=27 // pred_check_branch
        %155 = sbr.rel (%p153) target = $region32
      $region31: #{_lambda_.6} parent=27 // pred_region
        %p156 = scmp.lt.s32.totalorder %s10, 1
        %s157 = scalar_select %p156, %s10, 1
        %s158 = smul.addr %s157, 4
        %s159 = smul.addr %s158, 8
        %s160 = scalar_lea.vmem %s0, %s159
      $region32: #{_lambda_.6} parent=27 // pred_fallthru
        _
    $region28: #{_lambda_.6} parent=5 // pred_fallthru
      _
    %p161 = scmp.le.s32.totalorder 1, %s10
    %p162 = scmp.lt.s32.totalorder %s10, 3
    %p163 = pnand %p161, %p162
    %p164 = pneg %p163
    // Predicated region
    $region33: #{_lambda_.6} parent=5 // pred_check
      _
    $region34: #{_lambda_.6} parent=5 // pred_check_branch
      %166 = sbr.rel (%p163) target = $region36
    $region35: #{_lambda_.6} parent=5 // pred_region
      %s167 = ssub.s32 %s10, 1
      %p168 = scmp.lt.s32.totalorder %s15, 1
      %s169 = scalar_select %p168, %s15, 1
      %s170 = smul.addr %s169, 4
      %s171 = smul.addr %s170, 8
      %s172 = scalar_lea.vmem %s0, %s171
      %p173 = pneg %p36
      %p174 = pneg %p33
      %p175 = pneg %p57
      %p176 = pneg %p54
      %p177 = pneg %p78
      %p178 = pneg %p75
      %p179 = pneg %p99
      %p180 = pneg %p96
      %p181 = pneg %p125
      %p182 = pneg %p122
      %p183 = scmp.lt.s32.totalorder %s15, 1
      %s184 = scalar_select %p183, %s15, 1
      %s185 = smul.addr %s184, 2
      %s186 = smul.addr %s185, 8
      %s187 = scalar_lea.vmem %s4, %s186
      %p188 = scmp.lt.s32.totalorder %s15, 1
      %s189 = scalar_select %p188, %s15, 1
      %s190 = smul.addr %s189, 4
      %s191 = smul.addr %s190, 8
      %s192 = scalar_lea.vmem %s0, %s191
      %p193 = scmp.lt.s32.totalorder %s15, 1
      %s194 = scalar_select %p193, %s15, 1
      %s195 = smul.addr %s194, 2
      %s196 = smul.addr %s195, 8
      %s197 = scalar_lea.vmem %s4, %s196
      %v198 = vld [vmem:[%s192] sm:$0xff]
      %v199 = vld [vmem:[%s192 + $0x8] sm:$0xff]
      %v200 = vld [vmem:[%s192 + $0x10] sm:$0xff]
      %v201 = vld [vmem:[%s192 + $0x18] sm:$0xff]
      %v202 = vld [vmem:[%s1] sm:$0xff]
      %v203 = vld [vmem:[%s1 + $0x8] sm:$0xff]
      %s204 = scalar_lea.vmem %s1, 16
      %v205 = vld [vmem:[%s204] sm:$0xff]
      %v206 = vld [vmem:[%s204 + $0x8] sm:$0xff]
      %vm207 = vcmask 64512
      %v209 = vsel %vm207, %v205, 0
      %v212 = vsel %vm207, %v206, 0
      %214 = vmatpush.msra.mxu0 0.0
      %215 = vmatpush.msra.mxu0 0.0
      %216 = vmatpush.msra.mxu0 0.0
      %217 = vmatpush.msra.mxu0 0.0
      %218 = vmatpush.msra.mxu0 0.0
      %219 = vmatpush.msra.mxu0 0.0
      %220 = vmatpush.msra.mxu0 0.0
      %221 = vmatpush.msra.mxu0 0.0
      %222 = vmatpush.msra.mxu0 0.0
      %223 = vmatpush.msra.mxu0 0.0
      %224 = vmatpush.msra.mxu0 0.0
      %225 = vmatpush.msra.mxu0 0.0
      %226 = vmatpush.msra.mxu0 0.0
      %227 = vmatpush.msra.mxu0 0.0
      %228 = vmatpush.msra.mxu0 0.0
      %229 = vmatpush.msra.mxu0 %v199
      %230 = vmatmul.f32.gmra.mxu0 %v209
      %v231 = vpop.f32.mrf.mxu0
      %v232 = vadd.f32 0.0, %v231
      %233 = vmatmul.f32.gmra.mxu0 %v212
      %v234 = vpop.f32.mrf.mxu0
      %v235 = vadd.f32 0.0, %v234
      %236 = vdwg.mxu0
      %v238 = vsel %vm207, %v202, 0
      %v241 = vsel %vm207, %v203, 0
      %243 = vmatpush.msra.mxu0 0.0
      %244 = vmatpush.msra.mxu0 0.0
      %245 = vmatpush.msra.mxu0 0.0
      %246 = vmatpush.msra.mxu0 0.0
      %247 = vmatpush.msra.mxu0 0.0
      %248 = vmatpush.msra.mxu0 0.0
      %249 = vmatpush.msra.mxu0 0.0
      %250 = vmatpush.msra.mxu0 0.0
      %251 = vmatpush.msra.mxu0 0.0
      %252 = vmatpush.msra.mxu0 0.0
      %253 = vmatpush.msra.mxu0 0.0
      %254 = vmatpush.msra.mxu0 0.0
      %255 = vmatpush.msra.mxu0 0.0
      %256 = vmatpush.msra.mxu0 0.0
      %257 = vmatpush.msra.mxu0 0.0
      %258 = vmatpush.msra.mxu0 %v198
      %259 = vmatmul.f32.gmra.mxu0 %v238
      %v260 = vpop.f32.mrf.mxu0
      %v261 = vadd.f32 %v232, %v260
      %262 = vmatmul.f32.gmra.mxu0 %v241
      %v263 = vpop.f32.mrf.mxu0
      %v264 = vadd.f32 %v235, %v263
      %265 = vdwg.mxu0
      %s266 = scalar_lea.vmem %s1, 32
      %v267 = vld [vmem:[%s266] sm:$0xff]
      %v268 = vld [vmem:[%s266 + $0x8] sm:$0xff]
      %270 = vrot.lane.b32.xlu0 %v198, 127
      %v271 = vpop.permute.xlu0 %270
      %v274 = vsel %vm207, %v267, 0
      %v277 = vsel %vm207, %v268, 0
      %279 = vmatpush.msra.mxu0 0.0
      %280 = vmatpush.msra.mxu0 0.0
      %281 = vmatpush.msra.mxu0 0.0
      %282 = vmatpush.msra.mxu0 0.0
      %283 = vmatpush.msra.mxu0 0.0
      %284 = vmatpush.msra.mxu0 0.0
      %285 = vmatpush.msra.mxu0 0.0
      %286 = vmatpush.msra.mxu0 0.0
      %287 = vmatpush.msra.mxu0 0.0
      %288 = vmatpush.msra.mxu0 0.0
      %289 = vmatpush.msra.mxu0 0.0
      %290 = vmatpush.msra.mxu0 0.0
      %291 = vmatpush.msra.mxu0 0.0
      %292 = vmatpush.msra.mxu0 0.0
      %293 = vmatpush.msra.mxu0 0.0
      %294 = vmatpush.msra.mxu0 %v271
      %295 = vmatmul.f32.gmra.mxu0 %v274
      %v296 = vpop.f32.mrf.mxu0
      %v297 = vadd.f32 0.0, %v296
      %298 = vmatmul.f32.gmra.mxu0 %v277
      %v299 = vpop.f32.mrf.mxu0
      %v300 = vadd.f32 0.0, %v299
      %301 = vdwg.mxu0
      %v302 = vadd.f32 %v261, %v297
      %v303 = vadd.f32 %v264, %v300
      %s304 = scalar_lea.vmem %s1, 48
      %v305 = vld [vmem:[%s304] sm:$0xff]
      %v306 = vld [vmem:[%s304 + $0x8] sm:$0xff]
      %308 = vrot.lane.b32.xlu0 %v199, 127
      %v309 = vpop.permute.xlu0 %308
      %v312 = vsel %vm207, %v305, 0
      %v315 = vsel %vm207, %v306, 0
      %317 = vmatpush.msra.mxu0 0.0
      %318 = vmatpush.msra.mxu0 0.0
      %319 = vmatpush.msra.mxu0 0.0
      %320 = vmatpush.msra.mxu0 0.0
      %321 = vmatpush.msra.mxu0 0.0
      %322 = vmatpush.msra.mxu0 0.0
      %323 = vmatpush.msra.mxu0 0.0
      %324 = vmatpush.msra.mxu0 0.0
      %325 = vmatpush.msra.mxu0 0.0
      %326 = vmatpush.msra.mxu0 0.0
      %327 = vmatpush.msra.mxu0 0.0
      %328 = vmatpush.msra.mxu0 0.0
      %329 = vmatpush.msra.mxu0 0.0
      %330 = vmatpush.msra.mxu0 0.0
      %331 = vmatpush.msra.mxu0 0.0
      %332 = vmatpush.msra.mxu0 %v309
      %333 = vmatmul.f32.gmra.mxu0 %v312
      %v334 = vpop.f32.mrf.mxu0
      %v335 = vadd.f32 0.0, %v334
      %336 = vmatmul.f32.gmra.mxu0 %v315
      %v337 = vpop.f32.mrf.mxu0
      %v338 = vadd.f32 0.0, %v337
      %339 = vdwg.mxu0
      %v340 = vadd.f32 %v302, %v335
      %v341 = vadd.f32 %v303, %v338
      %s342 = scalar_lea.vmem %s1, 64
      %v343 = vld [vmem:[%s342] sm:$0xff]
      %v344 = vld [vmem:[%s342 + $0x8] sm:$0xff]
      %v346 = vsel %vm207, %v343, 0
      %v349 = vsel %vm207, %v344, 0
      %351 = vmatpush.msra.mxu0 0.0
      %352 = vmatpush.msra.mxu0 0.0
      %353 = vmatpush.msra.mxu0 0.0
      %354 = vmatpush.msra.mxu0 0.0
      %355 = vmatpush.msra.mxu0 0.0
      %356 = vmatpush.msra.mxu0 0.0
      %357 = vmatpush.msra.mxu0 0.0
      %358 = vmatpush.msra.mxu0 0.0
      %359 = vmatpush.msra.mxu0 0.0
      %360 = vmatpush.msra.mxu0 0.0
      %361 = vmatpush.msra.mxu0 0.0
      %362 = vmatpush.msra.mxu0 0.0
      %363 = vmatpush.msra.mxu0 0.0
      %364 = vmatpush.msra.mxu0 0.0
      %365 = vmatpush.msra.mxu0 0.0
      %366 = vmatpush.msra.mxu0 %v200
      %367 = vmatmul.f32.gmra.mxu0 %v346
      %v368 = vpop.f32.mrf.mxu0
      %v369 = vadd.f32 0.0, %v368
      %370 = vmatmul.f32.gmra.mxu0 %v349
      %v371 = vpop.f32.mrf.mxu0
      %v372 = vadd.f32 0.0, %v371
      %373 = vdwg.mxu0
      %v374 = vadd.f32 %v340, %v369
      %v375 = vadd.f32 %v341, %v372
      %s376 = scalar_lea.vmem %s1, 80
      %v377 = vld [vmem:[%s376] sm:$0xff]
      %v378 = vld [vmem:[%s376 + $0x8] sm:$0xff]
      %v380 = vsel %vm207, %v377, 0
      %v383 = vsel %vm207, %v378, 0
      %385 = vmatpush.msra.mxu0 0.0
      %386 = vmatpush.msra.mxu0 0.0
      %387 = vmatpush.msra.mxu0 0.0
      %388 = vmatpush.msra.mxu0 0.0
      %389 = vmatpush.msra.mxu0 0.0
      %390 = vmatpush.msra.mxu0 0.0
      %391 = vmatpush.msra.mxu0 0.0
      %392 = vmatpush.msra.mxu0 0.0
      %393 = vmatpush.msra.mxu0 0.0
      %394 = vmatpush.msra.mxu0 0.0
      %395 = vmatpush.msra.mxu0 0.0
      %396 = vmatpush.msra.mxu0 0.0
      %397 = vmatpush.msra.mxu0 0.0
      %398 = vmatpush.msra.mxu0 0.0
      %399 = vmatpush.msra.mxu0 0.0
      %400 = vmatpush.msra.mxu0 %v201
      %401 = vmatmul.f32.gmra.mxu0 %v380
      %v402 = vpop.f32.mrf.mxu0
      %v403 = vadd.f32 0.0, %v402
      %404 = vmatmul.f32.gmra.mxu0 %v383
      %v405 = vpop.f32.mrf.mxu0
      %v406 = vadd.f32 0.0, %v405
      %407 = vdwg.mxu0
      %v408 = vadd.f32 %v374, %v403
      %v409 = vadd.f32 %v375, %v406
      %s410 = scalar_lea.vmem %s1, 96
      %v411 = vld [vmem:[%s410] sm:$0xff]
      %v412 = vld [vmem:[%s410 + $0x8] sm:$0xff]
      %414 = vrot.lane.b32.xlu0 %v200, 127
      %v415 = vpop.permute.xlu0 %414
      %v418 = vsel %vm207, %v411, 0
      %v421 = vsel %vm207, %v412, 0
      %423 = vmatpush.msra.mxu0 0.0
      %424 = vmatpush.msra.mxu0 0.0
      %425 = vmatpush.msra.mxu0 0.0
      %426 = vmatpush.msra.mxu0 0.0
      %427 = vmatpush.msra.mxu0 0.0
      %428 = vmatpush.msra.mxu0 0.0
      %429 = vmatpush.msra.mxu0 0.0
      %430 = vmatpush.msra.mxu0 0.0
      %431 = vmatpush.msra.mxu0 0.0
      %432 = vmatpush.msra.mxu0 0.0
      %433 = vmatpush.msra.mxu0 0.0
      %434 = vmatpush.msra.mxu0 0.0
      %435 = vmatpush.msra.mxu0 0.0
      %436 = vmatpush.msra.mxu0 0.0
      %437 = vmatpush.msra.mxu0 0.0
      %438 = vmatpush.msra.mxu0 %v415
      %439 = vmatmul.f32.gmra.mxu0 %v418
      %v440 = vpop.f32.mrf.mxu0
      %v441 = vadd.f32 0.0, %v440
      %442 = vmatmul.f32.gmra.mxu0 %v421
      %v443 = vpop.f32.mrf.mxu0
      %v444 = vadd.f32 0.0, %v443
      %445 = vdwg.mxu0
      %v446 = vadd.f32 %v408, %v441
      %v447 = vadd.f32 %v409, %v444
      %s448 = scalar_lea.vmem %s1, 112
      %v449 = vld [vmem:[%s448] sm:$0xff]
      %v450 = vld [vmem:[%s448 + $0x8] sm:$0xff]
      %452 = vrot.lane.b32.xlu0 %v201, 127
      %v453 = vpop.permute.xlu0 %452
      %v456 = vsel %vm207, %v449, 0
      %v459 = vsel %vm207, %v450, 0
      %461 = vmatpush.msra.mxu0 0.0
      %462 = vmatpush.msra.mxu0 0.0
      %463 = vmatpush.msra.mxu0 0.0
      %464 = vmatpush.msra.mxu0 0.0
      %465 = vmatpush.msra.mxu0 0.0
      %466 = vmatpush.msra.mxu0 0.0
      %467 = vmatpush.msra.mxu0 0.0
      %468 = vmatpush.msra.mxu0 0.0
      %469 = vmatpush.msra.mxu0 0.0
      %470 = vmatpush.msra.mxu0 0.0
      %471 = vmatpush.msra.mxu0 0.0
      %472 = vmatpush.msra.mxu0 0.0
      %473 = vmatpush.msra.mxu0 0.0
      %474 = vmatpush.msra.mxu0 0.0
      %475 = vmatpush.msra.mxu0 0.0
      %476 = vmatpush.msra.mxu0 %v453
      %477 = vmatmul.f32.gmra.mxu0 %v456
      %v478 = vpop.f32.mrf.mxu0
      %v479 = vadd.f32 0.0, %v478
      %480 = vmatmul.f32.gmra.mxu0 %v459
      %v481 = vpop.f32.mrf.mxu0
      %v482 = vadd.f32 0.0, %v481
      %483 = vdwg.mxu0
      %v484 = vadd.f32 %v446, %v479
      %v485 = vadd.f32 %v447, %v482
      %s486 = scalar_lea.vmem %s1, 128
      %v487 = vld [vmem:[%s486] sm:$0xff]
      %v488 = vld [vmem:[%s486 + $0x8] sm:$0xff]
      %489 = vrot.lane.b32.xlu0 %v198, 119
      %v490 = vpop.permute.xlu0 %489
      %v493 = vsel %vm207, %v487, 0
      %v496 = vsel %vm207, %v488, 0
      %498 = vmatpush.msra.mxu0 0.0
      %499 = vmatpush.msra.mxu0 0.0
      %500 = vmatpush.msra.mxu0 0.0
      %501 = vmatpush.msra.mxu0 0.0
      %502 = vmatpush.msra.mxu0 0.0
      %503 = vmatpush.msra.mxu0 0.0
      %504 = vmatpush.msra.mxu0 0.0
      %505 = vmatpush.msra.mxu0 0.0
      %506 = vmatpush.msra.mxu0 0.0
      %507 = vmatpush.msra.mxu0 0.0
      %508 = vmatpush.msra.mxu0 0.0
      %509 = vmatpush.msra.mxu0 0.0
      %510 = vmatpush.msra.mxu0 0.0
      %511 = vmatpush.msra.mxu0 0.0
      %512 = vmatpush.msra.mxu0 0.0
      %513 = vmatpush.msra.mxu0 %v490
      %514 = vmatmul.f32.gmra.mxu0 %v493
      %v515 = vpop.f32.mrf.mxu0
      %v516 = vadd.f32 0.0, %v515
      %517 = vmatmul.f32.gmra.mxu0 %v496
      %v518 = vpop.f32.mrf.mxu0
      %v519 = vadd.f32 0.0, %v518
      %520 = vdwg.mxu0
      %v521 = vadd.f32 %v484, %v516
      %v522 = vadd.f32 %v485, %v519
      %s523 = scalar_lea.vmem %s1, 144
      %v524 = vld [vmem:[%s523] sm:$0xff]
      %v525 = vld [vmem:[%s523 + $0x8] sm:$0xff]
      %526 = vrot.lane.b32.xlu0 %v199, 119
      %v527 = vpop.permute.xlu0 %526
      %v530 = vsel %vm207, %v524, 0
      %v533 = vsel %vm207, %v525, 0
      %535 = vmatpush.msra.mxu0 0.0
      %536 = vmatpush.msra.mxu0 0.0
      %537 = vmatpush.msra.mxu0 0.0
      %538 = vmatpush.msra.mxu0 0.0
      %539 = vmatpush.msra.mxu0 0.0
      %540 = vmatpush.msra.mxu0 0.0
      %541 = vmatpush.msra.mxu0 0.0
      %542 = vmatpush.msra.mxu0 0.0
      %543 = vmatpush.msra.mxu0 0.0
      %544 = vmatpush.msra.mxu0 0.0
      %545 = vmatpush.msra.mxu0 0.0
      %546 = vmatpush.msra.mxu0 0.0
      %547 = vmatpush.msra.mxu0 0.0
      %548 = vmatpush.msra.mxu0 0.0
      %549 = vmatpush.msra.mxu0 0.0
      %550 = vmatpush.msra.mxu0 %v527
      %551 = vmatmul.f32.gmra.mxu0 %v530
      %v552 = vpop.f32.mrf.mxu0
      %v553 = vadd.f32 0.0, %v552
      %554 = vmatmul.f32.gmra.mxu0 %v533
      %v555 = vpop.f32.mrf.mxu0
      %v556 = vadd.f32 0.0, %v555
      %557 = vdwg.mxu0
      %v558 = vadd.f32 %v521, %v553
      %v559 = vadd.f32 %v522, %v556
      %s560 = scalar_lea.vmem %s1, 160
      %v561 = vld [vmem:[%s560] sm:$0xff]
      %v562 = vld [vmem:[%s560 + $0x8] sm:$0xff]
      %563 = vrot.lane.b32.xlu0 %v198, 118
      %v564 = vpop.permute.xlu0 %563
      %v567 = vsel %vm207, %v561, 0
      %v570 = vsel %vm207, %v562, 0
      %572 = vmatpush.msra.mxu0 0.0
      %573 = vmatpush.msra.mxu0 0.0
      %574 = vmatpush.msra.mxu0 0.0
      %575 = vmatpush.msra.mxu0 0.0
      %576 = vmatpush.msra.mxu0 0.0
      %577 = vmatpush.msra.mxu0 0.0
      %578 = vmatpush.msra.mxu0 0.0
      %579 = vmatpush.msra.mxu0 0.0
      %580 = vmatpush.msra.mxu0 0.0
      %581 = vmatpush.msra.mxu0 0.0
      %582 = vmatpush.msra.mxu0 0.0
      %583 = vmatpush.msra.mxu0 0.0
      %584 = vmatpush.msra.mxu0 0.0
      %585 = vmatpush.msra.mxu0 0.0
      %586 = vmatpush.msra.mxu0 0.0
      %587 = vmatpush.msra.mxu0 %v564
      %588 = vmatmul.f32.gmra.mxu0 %v567
      %v589 = vpop.f32.mrf.mxu0
      %v590 = vadd.f32 0.0, %v589
      %591 = vmatmul.f32.gmra.mxu0 %v570
      %v592 = vpop.f32.mrf.mxu0
      %v593 = vadd.f32 0.0, %v592
      %594 = vdwg.mxu0
      %v595 = vadd.f32 %v558, %v590
      %v596 = vadd.f32 %v559, %v593
      %s597 = scalar_lea.vmem %s1, 176
      %v598 = vld [vmem:[%s597] sm:$0xff]
      %v599 = vld [vmem:[%s597 + $0x8] sm:$0xff]
      %600 = vrot.lane.b32.xlu0 %v199, 118
      %v601 = vpop.permute.xlu0 %600
      %v604 = vsel %vm207, %v598, 0
      %v607 = vsel %vm207, %v599, 0
      %609 = vmatpush.msra.mxu0 0.0
      %610 = vmatpush.msra.mxu0 0.0
      %611 = vmatpush.msra.mxu0 0.0
      %612 = vmatpush.msra.mxu0 0.0
      %613 = vmatpush.msra.mxu0 0.0
      %614 = vmatpush.msra.mxu0 0.0
      %615 = vmatpush.msra.mxu0 0.0
      %616 = vmatpush.msra.mxu0 0.0
      %617 = vmatpush.msra.mxu0 0.0
      %618 = vmatpush.msra.mxu0 0.0
      %619 = vmatpush.msra.mxu0 0.0
      %620 = vmatpush.msra.mxu0 0.0
      %621 = vmatpush.msra.mxu0 0.0
      %622 = vmatpush.msra.mxu0 0.0
      %623 = vmatpush.msra.mxu0 0.0
      %624 = vmatpush.msra.mxu0 %v601
      %625 = vmatmul.f32.gmra.mxu0 %v604
      %v626 = vpop.f32.mrf.mxu0
      %v627 = vadd.f32 0.0, %v626
      %628 = vmatmul.f32.gmra.mxu0 %v607
      %v629 = vpop.f32.mrf.mxu0
      %v630 = vadd.f32 0.0, %v629
      %631 = vdwg.mxu0
      %v632 = vadd.f32 %v595, %v627
      %v633 = vadd.f32 %v596, %v630
      %s634 = scalar_lea.vmem %s1, 192
      %v635 = vld [vmem:[%s634] sm:$0xff]
      %v636 = vld [vmem:[%s634 + $0x8] sm:$0xff]
      %637 = vrot.lane.b32.xlu0 %v200, 119
      %v638 = vpop.permute.xlu0 %637
      %v641 = vsel %vm207, %v635, 0
      %v644 = vsel %vm207, %v636, 0
      %646 = vmatpush.msra.mxu0 0.0
      %647 = vmatpush.msra.mxu0 0.0
      %648 = vmatpush.msra.mxu0 0.0
      %649 = vmatpush.msra.mxu0 0.0
      %650 = vmatpush.msra.mxu0 0.0
      %651 = vmatpush.msra.mxu0 0.0
      %652 = vmatpush.msra.mxu0 0.0
      %653 = vmatpush.msra.mxu0 0.0
      %654 = vmatpush.msra.mxu0 0.0
      %655 = vmatpush.msra.mxu0 0.0
      %656 = vmatpush.msra.mxu0 0.0
      %657 = vmatpush.msra.mxu0 0.0
      %658 = vmatpush.msra.mxu0 0.0
      %659 = vmatpush.msra.mxu0 0.0
      %660 = vmatpush.msra.mxu0 0.0
      %661 = vmatpush.msra.mxu0 %v638
      %662 = vmatmul.f32.gmra.mxu0 %v641
      %v663 = vpop.f32.mrf.mxu0
      %v664 = vadd.f32 0.0, %v663
      %665 = vmatmul.f32.gmra.mxu0 %v644
      %v666 = vpop.f32.mrf.mxu0
      %v667 = vadd.f32 0.0, %v666
      %668 = vdwg.mxu0
      %v669 = vadd.f32 %v632, %v664
      %v670 = vadd.f32 %v633, %v667
      %s671 = scalar_lea.vmem %s1, 208
      %v672 = vld [vmem:[%s671] sm:$0xff]
      %v673 = vld [vmem:[%s671 + $0x8] sm:$0xff]
      %674 = vrot.lane.b32.xlu0 %v201, 119
      %v675 = vpop.permute.xlu0 %674
      %v678 = vsel %vm207, %v672, 0
      %v681 = vsel %vm207, %v673, 0
      %683 = vmatpush.msra.mxu0 0.0
      %684 = vmatpush.msra.mxu0 0.0
      %685 = vmatpush.msra.mxu0 0.0
      %686 = vmatpush.msra.mxu0 0.0
      %687 = vmatpush.msra.mxu0 0.0
      %688 = vmatpush.msra.mxu0 0.0
      %689 = vmatpush.msra.mxu0 0.0
      %690 = vmatpush.msra.mxu0 0.0
      %691 = vmatpush.msra.mxu0 0.0
      %692 = vmatpush.msra.mxu0 0.0
      %693 = vmatpush.msra.mxu0 0.0
      %694 = vmatpush.msra.mxu0 0.0
      %695 = vmatpush.msra.mxu0 0.0
      %696 = vmatpush.msra.mxu0 0.0
      %697 = vmatpush.msra.mxu0 0.0
      %698 = vmatpush.msra.mxu0 %v675
      %699 = vmatmul.f32.gmra.mxu0 %v678
      %v700 = vpop.f32.mrf.mxu0
      %v701 = vadd.f32 0.0, %v700
      %702 = vmatmul.f32.gmra.mxu0 %v681
      %v703 = vpop.f32.mrf.mxu0
      %v704 = vadd.f32 0.0, %v703
      %705 = vdwg.mxu0
      %v706 = vadd.f32 %v669, %v701
      %v707 = vadd.f32 %v670, %v704
      %s708 = scalar_lea.vmem %s1, 224
      %v709 = vld [vmem:[%s708] sm:$0xff]
      %v710 = vld [vmem:[%s708 + $0x8] sm:$0xff]
      %711 = vrot.lane.b32.xlu0 %v200, 118
      %v712 = vpop.permute.xlu0 %711
      %v715 = vsel %vm207, %v709, 0
      %v718 = vsel %vm207, %v710, 0
      %720 = vmatpush.msra.mxu0 0.0
      %721 = vmatpush.msra.mxu0 0.0
      %722 = vmatpush.msra.mxu0 0.0
      %723 = vmatpush.msra.mxu0 0.0
      %724 = vmatpush.msra.mxu0 0.0
      %725 = vmatpush.msra.mxu0 0.0
      %726 = vmatpush.msra.mxu0 0.0
      %727 = vmatpush.msra.mxu0 0.0
      %728 = vmatpush.msra.mxu0 0.0
      %729 = vmatpush.msra.mxu0 0.0
      %730 = vmatpush.msra.mxu0 0.0
      %731 = vmatpush.msra.mxu0 0.0
      %732 = vmatpush.msra.mxu0 0.0
      %733 = vmatpush.msra.mxu0 0.0
      %734 = vmatpush.msra.mxu0 0.0
      %735 = vmatpush.msra.mxu0 %v712
      %736 = vmatmul.f32.gmra.mxu0 %v715
      %v737 = vpop.f32.mrf.mxu0
      %v738 = vadd.f32 0.0, %v737
      %739 = vmatmul.f32.gmra.mxu0 %v718
      %v740 = vpop.f32.mrf.mxu0
      %v741 = vadd.f32 0.0, %v740
      %742 = vdwg.mxu0
      %v743 = vadd.f32 %v706, %v738
      %v744 = vadd.f32 %v707, %v741
      %s745 = scalar_lea.vmem %s1, 240
      %v746 = vld [vmem:[%s745] sm:$0xff]
      %v747 = vld [vmem:[%s745 + $0x8] sm:$0xff]
      %748 = vrot.lane.b32.xlu0 %v201, 118
      %v749 = vpop.permute.xlu0 %748
      %v752 = vsel %vm207, %v746, 0
      %v755 = vsel %vm207, %v747, 0
      %757 = vmatpush.msra.mxu0 0.0
      %758 = vmatpush.msra.mxu0 0.0
      %759 = vmatpush.msra.mxu0 0.0
      %760 = vmatpush.msra.mxu0 0.0
      %761 = vmatpush.msra.mxu0 0.0
      %762 = vmatpush.msra.mxu0 0.0
      %763 = vmatpush.msra.mxu0 0.0
      %764 = vmatpush.msra.mxu0 0.0
      %765 = vmatpush.msra.mxu0 0.0
      %766 = vmatpush.msra.mxu0 0.0
      %767 = vmatpush.msra.mxu0 0.0
      %768 = vmatpush.msra.mxu0 0.0
      %769 = vmatpush.msra.mxu0 0.0
      %770 = vmatpush.msra.mxu0 0.0
      %771 = vmatpush.msra.mxu0 0.0
      %772 = vmatpush.msra.mxu0 %v749
      %773 = vmatmul.f32.gmra.mxu0 %v752
      %v774 = vpop.f32.mrf.mxu0
      %v775 = vadd.f32 0.0, %v774
      %776 = vmatmul.f32.gmra.mxu0 %v755
      %v777 = vpop.f32.mrf.mxu0
      %v778 = vadd.f32 0.0, %v777
      %779 = vdwg.mxu0
      %v780 = vadd.f32 %v743, %v775
      %v781 = vadd.f32 %v744, %v778
      %v782 = vld [vmem:[%s2] sm:$0xff]
      %v783 = vld [vmem:[%s2 + $0x8] sm:$0xff]
      %v784 = vld [vmem:[%s3] sm:$0x1]
      %786 = vset.pattern.permute.xlu0 0
      %787 = vperm.xlu0 %786, %v782
      %v788 = vpop.permute.xlu0 %787
      %791 = vset.pattern.permute.xlu0 0
      %792 = vperm.xlu0 %791, %v783
      %v793 = vpop.permute.xlu0 %792
      %v795 = vadd.f32 %v780, %v788
      %v796 = vadd.f32 %v781, %v793
      %v798 = vperm.slane %v784, 0
      %v800 = vmul.f32 %v795, %v798
      %v801 = vmul.f32 %v796, %v798
      %vm802 = vcmask 588800
      %v803 = vsel %vm802, %v800, 0.0
      %804 = vadd.xlane.f32.xlu0 %v803
      %v805 = vpop.xlane.xlu0 %804
      %v806 = vsel %vm802, %v801, 0.0
      %807 = vadd.xlane.f32.xlu0 %v806
      %v808 = vpop.xlane.xlu0 %807
      %v809 = vmul.f32 %v805, 0.015625
      %v810 = vmul.f32 %v808, 0.015625
      %v811 = vsub.f32 %v795, %v809
      %v812 = vsub.f32 %v796, %v810
      %v813 = vmul.f32 %v811, %v798
      %v814 = vmul.f32 %v812, %v798
      %v815 = vmul.f32 %v813, %v813
      %v816 = vmul.f32 %v814, %v814
      %v817 = vsel %vm802, %v815, 0.0
      %818 = vadd.xlane.f32.xlu0 %v817
      %v819 = vpop.xlane.xlu0 %818
      %v820 = vsel %vm802, %v816, 0.0
      %821 = vadd.xlane.f32.xlu0 %v820
      %v822 = vpop.xlane.xlu0 %821
      %v823 = vmul.f32 %v819, 0.015625
      %v824 = vmul.f32 %v822, 0.015625
      %v825 = vadd.f32 %v823, 1e-05
      %v826 = vadd.f32 %v824, 1e-05
      %v827 = vrsqrt.pop %v825
      %v828 = vmul.f32 %v827, %v825
      %v829 = vmul.f32 %v828, %v827
      %v830 = vmul.f32 0.5, %v829
      %v831 = vsub.f32 1.5, %v830
      %v832 = vmul.f32 %v827, %v831
      %vm833 = vweird.f32 %v825
      %vm834 = vweird.f32 %v827
      %vm835 = vmor %vm833, %vm834
      %v836 = vsel %vm835, %v827, %v832
      %v837 = vrsqrt.pop %v826
      %v838 = vmul.f32 %v837, %v826
      %v839 = vmul.f32 %v838, %v837
      %v840 = vmul.f32 0.5, %v839
      %v841 = vsub.f32 1.5, %v840
      %v842 = vmul.f32 %v837, %v841
      %vm843 = vweird.f32 %v826
      %vm844 = vweird.f32 %v837
      %vm845 = vmor %vm843, %vm844
      %v846 = vsel %vm845, %v837, %v842
      %v847 = vmul.f32 %v811, %v836
      %v848 = vmul.f32 %v812, %v846
      %v849 = vmax.f32 %v847, 0.0
      %v850 = vmax.f32 %v848, 0.0
      %851 = vst.msk [vmem:[%s197] sm:$0xff] %vm802, %v849
      %852 = vst.msk [vmem:[%s197 + $0x8] sm:$0xff] %vm802, %v850
      %p853 = scmp.lt.s32.totalorder %s15, 1
      %s854 = scalar_select %p853, %s15, 1
      %s855 = smul.addr %s854, 2
      %s856 = smul.addr %s855, 8
      %s857 = scalar_lea.vmem %s4, %s856
      // Predicated region
      $region37: #{_lambda_.6} parent=35 // pred_check
        %p858 = pneg %p122
      $region38: #{_lambda_.6} parent=35 // pred_check_branch
        %860 = sbr.rel (%p858) target = $region40
      $region39: #{_lambda_.6} parent=35 // pred_region
        _
      $region40: #{_lambda_.6} parent=35 // pred_fallthru
        _
    $region36: #{_lambda_.6} parent=5 // pred_fallthru
      _
    %p861 = scmp.le.s32.totalorder 2, %s10
    // Predicated region
    $region41: #{_lambda_.6} parent=5 // pred_check
      %p862 = pneg %p861
    $region42: #{_lambda_.6} parent=5 // pred_check_branch
      %864 = sbr.rel (%p862) target = $region44
    $region43: #{_lambda_.6} parent=5 // pred_region
      %s865 = ssub.s32 %s10, 2
      // Predicated region
      $region45: #{_lambda_.6} parent=43 // pred_check
        %p866 = pneg %p128
      $region46: #{_lambda_.6} parent=43 // pred_check_branch
        %868 = sbr.rel (%p866) target = $region48
      $region47: #{_lambda_.6} parent=43 // pred_region
        %p869 = scmp.lt.s32.totalorder %s16, 1
        %s870 = scalar_select %p869, %s16, 1
        %s871 = smul.addr %s870, 2
        %s872 = smul.addr %s871, 8
        %s873 = scalar_lea.vmem %s4, %s872
      $region48: #{_lambda_.6} parent=43 // pred_fallthru
        _
    $region44: #{_lambda_.6} parent=5 // pred_fallthru
      _
  $region6: #{_lambda_.6} parent=0 // loop_footer
    %s14 = sadd.s32 1, %s10
  $region7: #{_lambda_.6} parent=0 // loop_footer_branch
    %9 = sbr.rel target = $region3
  $region8: #{_lambda_.6} parent=0 // loop_exit
    _

// kernel: _lambda_.5
$region0: #{_lambda_.5}
  #allocation0 [shape = 'u32[]', space=smem, size = 0x4, offset = 0x4, fixed_abs, tag = 'smem constant byte address 0x4 - core index']
  #allocation1 [shape = 'u32[72,128]{1,0:T(1,128)}', space=vmem, size = 0x9000, scoped, tag = 'internal scratch']
  %s0 = inlined_call_operand.vmem [shape: f32[2,4,490], index: 0, kind: input, shape index: {}]
  %s1 = inlined_call_operand.vmem [shape: f32[49,8,4], index: 1, kind: input, shape index: {}]
  %s2 = inlined_call_operand.vmem [shape: f32[8,1], index: 2, kind: input, shape index: {}]
  %s3 = inlined_call_operand.vmem [shape: f32[1,352], index: 3, kind: input, shape index: {}]
  %s4 = inlined_call_operand.vmem [shape: f32[2,8,352], index: 4, kind: output, shape index: {}]
  %s5 = sld [smem:[#allocation0]]
  $region49: #{_lambda_.5} parent=0
    _
  %s7 = ssub.s32 1, %s5
  %s8 = scalar_select 0, %s7, %s5
  loop: start=0, step=1, limit=4
  $region2: #{_lambda_.5} parent=0 // loop_pre_header
    _
  $region3: #{_lambda_.5} parent=0 // loop_header
    %s10 = sphi 0, %s14
    %p11 = scmp.ge.s32.totalorder %s10, 4
    %s20 = sphi 0, %s22
    %s23 = sphi 0, %s20
    %s24 = sphi 0, %s23
    %s40 = sphi 0, %s24
    %s44 = sphi 0, %s44
    %s46 = sphi 0, %s44
    %s47 = sphi 0, %s46
    %s61 = sphi 0, %s47
    %s65 = sphi 0, %s65
    %s67 = sphi 0, %s65
    %s68 = sphi 0, %s67
    %s82 = sphi 0, %s68
    %s86 = sphi 0, %s86
    %s88 = sphi 0, %s86
    %s89 = sphi 0, %s88
    %s103 = sphi 0, %s89
    %s109 = sphi 0, %s111
    %s112 = sphi 0, %s109
    %s113 = sphi 0, %s112
    %s129 = sphi 0, %s113
  $region4: #{_lambda_.5} parent=0 // loop_header_branch
    %13 = sbr.rel (%p11) target = $region8
  $region5: #{_lambda_.5} parent=0 // loop_body
    %s15 = ssub.s32 %s10, 1
    %s16 = ssub.s32 %s10, 2
    %s17 = sadd.s32 %s10, 1
    %s18 = ssub.s32 %s10, %s17
    %p19 = scmp.eq.s32.totalorder %s18, 0
    %s21 = sadd.s32 %s20, 1
    %s22 = scalar_select %p19, %s20, %s21
    %p25 = pneg %p19
    %p26 = scmp.eq.s32.totalorder %s10, 1
    %p27 = por %p25, %p26
    %p28 = scmp.ne.s32.totalorder %s20, %s23
    %p29 = scmp.eq.s32.totalorder %s10, 0
    %p30 = por %p28, %p29
    %p31 = scmp.ne.s32.totalorder %s20, %s23
    %p32 = scmp.eq.s32.totalorder %s15, 1
    %p33 = por %p31, %p32
    %p34 = scmp.ne.s32.totalorder %s23, %s24
    %p35 = scmp.eq.s32.totalorder %s15, 0
    %p36 = por %p34, %p35
    %p37 = scmp.ne.s32.totalorder %s23, %s24
    %p38 = scmp.eq.s32.totalorder %s16, 1
    %p39 = por %p37, %p38
    %p41 = scmp.ne.s32.totalorder %s24, %s40
    %p42 = scmp.eq.s32.totalorder %s16, 0
    %p43 = por %p41, %p42
    %s45 = sadd.s32 %s44, 1
    %p48 = scmp.eq.s32.totalorder %s10, 1
    %p49 = scmp.ne.s32.totalorder %s44, %s46
    %p50 = scmp.eq.s32.totalorder %s10, 0
    %p51 = por %p49, %p50
    %p52 = scmp.ne.s32.totalorder %s44, %s46
    %p53 = scmp.eq.s32.totalorder %s15, 1
    %p54 = por %p52, %p53
    %p55 = scmp.ne.s32.totalorder %s46, %s47
    %p56 = scmp.eq.s32.totalorder %s15, 0
    %p57 = por %p55, %p56
    %p58 = scmp.ne.s32.totalorder %s46, %s47
    %p59 = scmp.eq.s32.totalorder %s16, 1
    %p60 = por %p58, %p59
    %p62 = scmp.ne.s32.totalorder %s47, %s61
    %p63 = scmp.eq.s32.totalorder %s16, 0
    %p64 = por %p62, %p63
    %s66 = sadd.s32 %s65, 1
    %p69 = scmp.eq.s32.totalorder %s10, 1
    %p70 = scmp.ne.s32.totalorder %s65, %s67
    %p71 = scmp.eq.s32.totalorder %s10, 0
    %p72 = por %p70, %p71
    %p73 = scmp.ne.s32.totalorder %s65, %s67
    %p74 = scmp.eq.s32.totalorder %s15, 1
    %p75 = por %p73, %p74
    %p76 = scmp.ne.s32.totalorder %s67, %s68
    %p77 = scmp.eq.s32.totalorder %s15, 0
    %p78 = por %p76, %p77
    %p79 = scmp.ne.s32.totalorder %s67, %s68
    %p80 = scmp.eq.s32.totalorder %s16, 1
    %p81 = por %p79, %p80
    %p83 = scmp.ne.s32.totalorder %s68, %s82
    %p84 = scmp.eq.s32.totalorder %s16, 0
    %p85 = por %p83, %p84
    %s87 = sadd.s32 %s86, 1
    %p90 = scmp.eq.s32.totalorder %s10, 1
    %p91 = scmp.ne.s32.totalorder %s86, %s88
    %p92 = scmp.eq.s32.totalorder %s10, 0
    %p93 = por %p91, %p92
    %p94 = scmp.ne.s32.totalorder %s86, %s88
    %p95 = scmp.eq.s32.totalorder %s15, 1
    %p96 = por %p94, %p95
    %p97 = scmp.ne.s32.totalorder %s88, %s89
    %p98 = scmp.eq.s32.totalorder %s15, 0
    %p99 = por %p97, %p98
    %p100 = scmp.ne.s32.totalorder %s88, %s89
    %p101 = scmp.eq.s32.totalorder %s16, 1
    %p102 = por %p100, %p101
    %p104 = scmp.ne.s32.totalorder %s89, %s103
    %p105 = scmp.eq.s32.totalorder %s16, 0
    %p106 = por %p104, %p105
    %s107 = ssub.s32 %s10, %s17
    %p108 = scmp.eq.s32.totalorder %s107, 0
    %s110 = sadd.s32 %s109, 1
    %s111 = scalar_select %p108, %s109, %s110
    %p114 = pneg %p108
    %p115 = scmp.eq.s32.totalorder %s10, 1
    %p116 = por %p114, %p115
    %p117 = scmp.ne.s32.totalorder %s109, %s112
    %p118 = scmp.eq.s32.totalorder %s10, 0
    %p119 = por %p117, %p118
    %p120 = scmp.ne.s32.totalorder %s109, %s112
    %p121 = scmp.eq.s32.totalorder %s15, 1
    %p122 = por %p120, %p121
    %p123 = scmp.ne.s32.totalorder %s112, %s113
    %p124 = scmp.eq.s32.totalorder %s15, 0
    %p125 = por %p123, %p124
    %p126 = scmp.ne.s32.totalorder %s112, %s113
    %p127 = scmp.eq.s32.totalorder %s16, 1
    %p128 = por %p126, %p127
    %p130 = scmp.ne.s32.totalorder %s113, %s129
    %p131 = scmp.eq.s32.totalorder %s16, 0
    %p132 = por %p130, %p131
    %p133 = scmp.le.s32.totalorder 1, %s10
    %p134 = scmp.lt.s32.totalorder %s10, 3
    %p135 = pnand %p133, %p134
    %p136 = pneg %p135
    // Predicated region
    $region9: #{_lambda_.5} parent=5 // pred_check
      _
    $region10: #{_lambda_.5} parent=5 // pred_check_branch
      %138 = sbr.rel (%p135) target = $region12
    $region11: #{_lambda_.5} parent=5 // pred_region
      %s139 = ssub.s32 %s10, 1
      // Predicated region
      $region13: #{_lambda_.5} parent=11 // pred_check
        %p140 = pneg %p57
      $region14: #{_lambda_.5} parent=11 // pred_check_branch
        %142 = sbr.rel (%p140) target = $region16
      $region15: #{_lambda_.5} parent=11 // pred_region
        _
      $region16: #{_lambda_.5} parent=11 // pred_fallthru
        _
      // Predicated region
      $region17: #{_lambda_.5} parent=11 // pred_check
        %p143 = pneg %p78
      $region18: #{_lambda_.5} parent=11 // pred_check_branch
        %145 = sbr.rel (%p143) target = $region20
      $region19: #{_lambda_.5} parent=11 // pred_region
        _
      $region20: #{_lambda_.5} parent=11 // pred_fallthru
        _
      // Predicated region
      $region21: #{_lambda_.5} parent=11 // pred_check
        %p146 = pneg %p99
      $region22: #{_lambda_.5} parent=11 // pred_check_branch
        %148 = sbr.rel (%p146) target = $region24
      $region23: #{_lambda_.5} parent=11 // pred_region
        _
      $region24: #{_lambda_.5} parent=11 // pred_fallthru
        _
    $region12: #{_lambda_.5} parent=5 // pred_fallthru
      _
    %p149 = scmp.lt.s32.totalorder %s10, 2
    // Predicated region
    $region25: #{_lambda_.5} parent=5 // pred_check
      %p150 = pneg %p149
    $region26: #{_lambda_.5} parent=5 // pred_check_branch
      %152 = sbr.rel (%p150) target = $region28
    $region27: #{_lambda_.5} parent=5 // pred_region
      // Predicated region
      $region29: #{_lambda_.5} parent=27 // pred_check
        %p153 = pneg %p30
      $region30: #{_lambda_.5} parent=27 // pred_check_branch
        %155 = sbr.rel (%p153) target = $region32
      $region31: #{_lambda_.5} parent=27 // pred_region
        %p156 = scmp.lt.s32.totalorder %s10, 1
        %s157 = scalar_select %p156, %s10, 1
        %s158 = smul.addr %s157, 4
        %s159 = smul.addr %s158, 4
        %s160 = scalar_lea.vmem %s0, %s159
      $region32: #{_lambda_.5} parent=27 // pred_fallthru
        _
    $region28: #{_lambda_.5} parent=5 // pred_fallthru
      _
    %p161 = scmp.le.s32.totalorder 1, %s10
    %p162 = scmp.lt.s32.totalorder %s10, 3
    %p163 = pnand %p161, %p162
    %p164 = pneg %p163
    // Predicated region
    $region33: #{_lambda_.5} parent=5 // pred_check
      _
    $region34: #{_lambda_.5} parent=5 // pred_check_branch
      %166 = sbr.rel (%p163) target = $region36
    $region35: #{_lambda_.5} parent=5 // pred_region
      %s167 = ssub.s32 %s10, 1
      %p168 = scmp.lt.s32.totalorder %s15, 1
      %s169 = scalar_select %p168, %s15, 1
      %s170 = smul.addr %s169, 4
      %s171 = smul.addr %s170, 4
      %s172 = scalar_lea.vmem %s0, %s171
      %p173 = pneg %p36
      %p174 = pneg %p33
      %p175 = pneg %p57
      %p176 = pneg %p54
      %p177 = pneg %p78
      %p178 = pneg %p75
      %p179 = pneg %p99
      %p180 = pneg %p96
      %p181 = pneg %p125
      %p182 = pneg %p122
      %p183 = scmp.lt.s32.totalorder %s15, 1
      %s184 = scalar_select %p183, %s15, 1
      %s185 = smul.addr %s184, 3
      %s186 = smul.addr %s185, 8
      %s187 = scalar_lea.vmem %s4, %s186
      %p188 = scmp.lt.s32.totalorder %s15, 1
      %s189 = scalar_select %p188, %s15, 1
      %s190 = smul.addr %s189, 4
      %s191 = smul.addr %s190, 4
      %s192 = scalar_lea.vmem %s0, %s191
      %p193 = scmp.lt.s32.totalorder %s15, 1
      %s194 = scalar_select %p193, %s15, 1
      %s195 = smul.addr %s194, 3
      %s196 = smul.addr %s195, 8
      %s197 = scalar_lea.vmem %s4, %s196
      %v198 = vld [vmem:[%s192] sm:$0xff]
      %v199 = vld [vmem:[%s192 + $0x8] sm:$0xff]
      %v200 = vld [vmem:[%s1] sm:$0xff]
      %s201 = scalar_lea.vmem %s1, 8
      %v202 = vld [vmem:[%s201] sm:$0xff]
      %205 = vst [vmem:[#allocation1] ss:$2 sm:$0xff] %v198
      %s206 = scalar_lea.vmem [#allocation1], 16
      %207 = vst [vmem:[%s206] ss:$2 sm:$0xff] %v199
      %v208 = vld.sshfl [vmem:[#allocation1] sm:$0xff pattern:$0x75316420]
      %v209 = vld.sshfl [vmem:[#allocation1 + $0x8] sm:$0xff pattern:$0x75316420]
      %v210 = vld.sshfl [vmem:[#allocation1 + $0x10] sm:$0xff pattern:$0x75316420]
      %211 = vrot.lane.b32.xlu0 %v208, 127
      %v212 = vpop.permute.xlu0 %211
      %213 = vrot.lane.b32.xlu0 %v209, 127
      %v214 = vpop.permute.xlu0 %213
      %215 = vrot.lane.b32.xlu0 %v210, 127
      %v216 = vpop.permute.xlu0 %215
      %vm217 = vcmask 1039360
      %v218 = vsel %vm217, %v212, %v214
      %v219 = vsel %vm217, %v214, %v216
      %vm220 = vcmask 31744
      %v222 = vsel %vm220, %v202, 0
      %vm224 = vcmask 1043456
      %v225 = vsel %vm224, %v218, 0
      %v227 = vsel %vm224, %v219, 0
      %v229 = vsel %vm224, %v216, 0
      %231 = vmatpush.msra.mxu0 0.0
      %232 = vmatpush.msra.mxu0 0.0
      %233 = vmatpush.msra.mxu0 0.0
      %234 = vmatpush.msra.mxu0 0.0
      %235 = vmatpush.msra.mxu0 0.0
      %236 = vmatpush.msra.mxu0 0.0
      %237 = vmatpush.msra.mxu0 0.0
      %238 = vmatpush.msra.mxu0 0.0
      %239 = vmatpush.msra.mxu0 0.0
      %240 = vmatpush.msra.mxu0 0.0
      %241 = vmatpush.msra.mxu0 0.0
      %242 = vmatpush.msra.mxu0 0.0
      %243 = vmatpush.msra.mxu0 0.0
      %244 = vmatpush.msra.mxu0 0.0
      %245 = vmatpush.msra.mxu0 0.0
      %246 = vmatpush.msra.mxu0 %v225
      %247 = vmatmul.f32.gmra.mxu0 %v222
      %v248 = vpop.f32.mrf.mxu0
      %v249 = vadd.f32 0.0, %v248
      %250 = vdwg.mxu0
      %251 = vmatpush.msra.mxu0 0.0
      %252 = vmatpush.msra.mxu0 0.0
      %253 = vmatpush.msra.mxu0 0.0
      %254 = vmatpush.msra.mxu0 0.0
      %255 = vmatpush.msra.mxu0 0.0
      %256 = vmatpush.msra.mxu0 0.0
      %257 = vmatpush.msra.mxu0 0.0
      %258 = vmatpush.msra.mxu0 0.0
      %259 = vmatpush.msra.mxu0 0.0
      %260 = vmatpush.msra.mxu0 0.0
      %261 = vmatpush.msra.mxu0 0.0
      %262 = vmatpush.msra.mxu0 0.0
      %263 = vmatpush.msra.mxu0 0.0
      %264 = vmatpush.msra.mxu0 0.0
      %265 = vmatpush.msra.mxu0 0.0
      %266 = vmatpush.msra.mxu0 %v227
      %267 = vmatmul.f32.gmra.mxu0 %v222
      %v268 = vpop.f32.mrf.mxu0
      %v269 = vadd.f32 0.0, %v268
      %270 = vdwg.mxu0
      %271 = vmatpush.msra.mxu0 0.0
      %272 = vmatpush.msra.mxu0 0.0
      %273 = vmatpush.msra.mxu0 0.0
      %274 = vmatpush.msra.mxu0 0.0
      %275 = vmatpush.msra.mxu0 0.0
      %276 = vmatpush.msra.mxu0 0.0
      %277 = vmatpush.msra.mxu0 0.0
      %278 = vmatpush.msra.mxu0 0.0
      %279 = vmatpush.msra.mxu0 0.0
      %280 = vmatpush.msra.mxu0 0.0
      %281 = vmatpush.msra.mxu0 0.0
      %282 = vmatpush.msra.mxu0 0.0
      %283 = vmatpush.msra.mxu0 0.0
      %284 = vmatpush.msra.mxu0 0.0
      %285 = vmatpush.msra.mxu0 0.0
      %286 = vmatpush.msra.mxu0 %v229
      %287 = vmatmul.f32.gmra.mxu0 %v222
      %v288 = vpop.f32.mrf.mxu0
      %v289 = vadd.f32 0.0, %v288
      %290 = vdwg.mxu0
      %291 = vst [vmem:[#allocation1] ss:$2 sm:$0xff] %v198
      %s292 = scalar_lea.vmem [#allocation1], 16
      %293 = vst [vmem:[%s292] ss:$2 sm:$0xff] %v199
      %v294 = vld.sshfl [vmem:[#allocation1] sm:$0xff pattern:$0x75316420]
      %v295 = vld.sshfl [vmem:[#allocation1 + $0x8] sm:$0xff pattern:$0x75316420]
      %v296 = vld.sshfl [vmem:[#allocation1 + $0x10] sm:$0xff pattern:$0x75316420]
      %v298 = vsel %vm220, %v200, 0
      %v300 = vsel %vm224, %v294, 0
      %v302 = vsel %vm224, %v295, 0
      %v304 = vsel %vm224, %v296, 0
      %306 = vmatpush.msra.mxu0 0.0
      %307 = vmatpush.msra.mxu0 0.0
      %308 = vmatpush.msra.mxu0 0.0
      %309 = vmatpush.msra.mxu0 0.0
      %310 = vmatpush.msra.mxu0 0.0
      %311 = vmatpush.msra.mxu0 0.0
      %312 = vmatpush.msra.mxu0 0.0
      %313 = vmatpush.msra.mxu0 0.0
      %314 = vmatpush.msra.mxu0 0.0
      %315 = vmatpush.msra.mxu0 0.0
      %316 = vmatpush.msra.mxu0 0.0
      %317 = vmatpush.msra.mxu0 0.0
      %318 = vmatpush.msra.mxu0 0.0
      %319 = vmatpush.msra.mxu0 0.0
      %320 = vmatpush.msra.mxu0 0.0
      %321 = vmatpush.msra.mxu0 %v300
      %322 = vmatmul.f32.gmra.mxu0 %v298
      %v323 = vpop.f32.mrf.mxu0
      %v324 = vadd.f32 %v249, %v323
      %325 = vdwg.mxu0
      %326 = vmatpush.msra.mxu0 0.0
      %327 = vmatpush.msra.mxu0 0.0
      %328 = vmatpush.msra.mxu0 0.0
      %329 = vmatpush.msra.mxu0 0.0
      %330 = vmatpush.msra.mxu0 0.0
      %331 = vmatpush.msra.mxu0 0.0
      %332 = vmatpush.msra.mxu0 0.0
      %333 = vmatpush.msra.mxu0 0.0
      %334 = vmatpush.msra.mxu0 0.0
      %335 = vmatpush.msra.mxu0 0.0
      %336 = vmatpush.msra.mxu0 0.0
      %337 = vmatpush.msra.mxu0 0.0
      %338 = vmatpush.msra.mxu0 0.0
      %339 = vmatpush.msra.mxu0 0.0
      %340 = vmatpush.msra.mxu0 0.0
      %341 = vmatpush.msra.mxu0 %v302
      %342 = vmatmul.f32.gmra.mxu0 %v298
      %v343 = vpop.f32.mrf.mxu0
      %v344 = vadd.f32 %v269, %v343
      %345 = vdwg.mxu0
      %346 = vmatpush.msra.mxu0 0.0
      %347 = vmatpush.msra.mxu0 0.0
      %348 = vmatpush.msra.mxu0 0.0
      %349 = vmatpush.msra.mxu0 0.0
      %350 = vmatpush.msra.mxu0 0.0
      %351 = vmatpush.msra.mxu0 0.0
      %352 = vmatpush.msra.mxu0 0.0
      %353 = vmatpush.msra.mxu0 0.0
      %354 = vmatpush.msra.mxu0 0.0
      %355 = vmatpush.msra.mxu0 0.0
      %356 = vmatpush.msra.mxu0 0.0
      %357 = vmatpush.msra.mxu0 0.0
      %358 = vmatpush.msra.mxu0 0.0
      %359 = vmatpush.msra.mxu0 0.0
      %360 = vmatpush.msra.mxu0 0.0
      %361 = vmatpush.msra.mxu0 %v304
      %362 = vmatmul.f32.gmra.mxu0 %v298
      %v363 = vpop.f32.mrf.mxu0
      %v364 = vadd.f32 %v289, %v363
      %365 = vdwg.mxu0
      %s366 = scalar_lea.vmem %s1, 16
      %v367 = vld [vmem:[%s366] sm:$0xff]
      %368 = vst [vmem:[#allocation1] ss:$2 sm:$0xff] %v198
      %s369 = scalar_lea.vmem [#allocation1], 16
      %370 = vst [vmem:[%s369] ss:$2 sm:$0xff] %v199
      %v371 = vld.sshfl [vmem:[#allocation1] sm:$0xff pattern:$0x75316420]
      %v372 = vld.sshfl [vmem:[#allocation1 + $0x8] sm:$0xff pattern:$0x75316420]
      %v373 = vld.sshfl [vmem:[#allocation1 + $0x10] sm:$0xff pattern:$0x75316420]
      %374 = vrot.lane.b32.xlu0 %v371, 126
      %v375 = vpop.permute.xlu0 %374
      %376 = vrot.lane.b32.xlu0 %v372, 126
      %v377 = vpop.permute.xlu0 %376
      %378 = vrot.lane.b32.xlu0 %v373, 126
      %v379 = vpop.permute.xlu0 %378
      %vm380 = vcmask 1031168
      %v381 = vsel %vm380, %v375, %v377
      %v382 = vsel %vm380, %v377, %v379
      %v384 = vsel %vm220, %v367, 0
      %v386 = vsel %vm224, %v381, 0
      %v388 = vsel %vm224, %v382, 0
      %v390 = vsel %vm224, %v379, 0
      %392 = vmatpush.msra.mxu0 0.0
      %393 = vmatpush.msra.mxu0 0.0
      %394 = vmatpush.msra.mxu0 0.0
      %395 = vmatpush.msra.mxu0 0.0
      %396 = vmatpush.msra.mxu0 0.0
      %397 = vmatpush.msra.mxu0 0.0
      %398 = vmatpush.msra.mxu0 0.0
      %399 = vmatpush.msra.mxu0 0.0
      %400 = vmatpush.msra.mxu0 0.0
      %401 = vmatpush.msra.mxu0 0.0
      %402 = vmatpush.msra.mxu0 0.0
      %403 = vmatpush.msra.mxu0 0.0
      %404 = vmatpush.msra.mxu0 0.0
      %405 = vmatpush.msra.mxu0 0.0
      %406 = vmatpush.msra.mxu0 0.0
      %407 = vmatpush.msra.mxu0 %v386
      %408 = vmatmul.f32.gmra.mxu0 %v384
      %v409 = vpop.f32.mrf.mxu0
      %v410 = vadd.f32 0.0, %v409
      %411 = vdwg.mxu0
      %412 = vmatpush.msra.mxu0 0.0
      %413 = vmatpush.msra.mxu0 0.0
      %414 = vmatpush.msra.mxu0 0.0
      %415 = vmatpush.msra.mxu0 0.0
      %416 = vmatpush.msra.mxu0 0.0
      %417 = vmatpush.msra.mxu0 0.0
      %418 = vmatpush.msra.mxu0 0.0
      %419 = vmatpush.msra.mxu0 0.0
      %420 = vmatpush.msra.mxu0 0.0
      %421 = vmatpush.msra.mxu0 0.0
      %422 = vmatpush.msra.mxu0 0.0
      %423 = vmatpush.msra.mxu0 0.0
      %424 = vmatpush.msra.mxu0 0.0
      %425 = vmatpush.msra.mxu0 0.0
      %426 = vmatpush.msra.mxu0 0.0
      %427 = vmatpush.msra.mxu0 %v388
      %428 = vmatmul.f32.gmra.mxu0 %v384
      %v429 = vpop.f32.mrf.mxu0
      %v430 = vadd.f32 0.0, %v429
      %431 = vdwg.mxu0
      %432 = vmatpush.msra.mxu0 0.0
      %433 = vmatpush.msra.mxu0 0.0
      %434 = vmatpush.msra.mxu0 0.0
      %435 = vmatpush.msra.mxu0 0.0
      %436 = vmatpush.msra.mxu0 0.0
      %437 = vmatpush.msra.mxu0 0.0
      %438 = vmatpush.msra.mxu0 0.0
      %439 = vmatpush.msra.mxu0 0.0
      %440 = vmatpush.msra.mxu0 0.0
      %441 = vmatpush.msra.mxu0 0.0
      %442 = vmatpush.msra.mxu0 0.0
      %443 = vmatpush.msra.mxu0 0.0
      %444 = vmatpush.msra.mxu0 0.0
      %445 = vmatpush.msra.mxu0 0.0
      %446 = vmatpush.msra.mxu0 0.0
      %447 = vmatpush.msra.mxu0 %v390
      %448 = vmatmul.f32.gmra.mxu0 %v384
      %v449 = vpop.f32.mrf.mxu0
      %v450 = vadd.f32 0.0, %v449
      %451 = vdwg.mxu0
      %v452 = vadd.f32 %v324, %v410
      %v453 = vadd.f32 %v344, %v430
      %v454 = vadd.f32 %v364, %v450
      %s455 = scalar_lea.vmem %s1, 24
      %v456 = vld [vmem:[%s455] sm:$0xff]
      %457 = vst [vmem:[#allocation1] ss:$2 sm:$0xff] %v198
      %s458 = scalar_lea.vmem [#allocation1], 16
      %459 = vst [vmem:[%s458] ss:$2 sm:$0xff] %v199
      %v460 = vld.sshfl [vmem:[#allocation1] sm:$0xff pattern:$0x75316420]
      %v461 = vld.sshfl [vmem:[#allocation1 + $0x8] sm:$0xff pattern:$0x75316420]
      %v462 = vld.sshfl [vmem:[#allocation1 + $0x10] sm:$0xff pattern:$0x75316420]
      %463 = vrot.lane.b32.xlu0 %v460, 125
      %v464 = vpop.permute.xlu0 %463
      %465 = vrot.lane.b32.xlu0 %v461, 125
      %v466 = vpop.permute.xlu0 %465
      %467 = vrot.lane.b32.xlu0 %v462, 125
      %v468 = vpop.permute.xlu0 %467
      %vm469 = vcmask 1022976
      %v470 = vsel %vm469, %v464, %v466
      %v471 = vsel %vm469, %v466, %v468
      %v473 = vsel %vm220, %v456, 0
      %v475 = vsel %vm224, %v470, 0
      %v477 = vsel %vm224, %v471, 0
      %v479 = vsel %vm224, %v468, 0
      %481 = vmatpush.msra.mxu0 0.0
      %482 = vmatpush.msra.mxu0 0.0
      %483 = vmatpush.msra.mxu0 0.0
      %484 = vmatpush.msra.mxu0 0.0
      %485 = vmatpush.msra.mxu0 0.0
      %486 = vmatpush.msra.mxu0 0.0
      %487 = vmatpush.msra.mxu0 0.0
      %488 = vmatpush.msra.mxu0 0.0
      %489 = vmatpush.msra.mxu0 0.0
      %490 = vmatpush.msra.mxu0 0.0
      %491 = vmatpush.msra.mxu0 0.0
      %492 = vmatpush.msra.mxu0 0.0
      %493 = vmatpush.msra.mxu0 0.0
      %494 = vmatpush.msra.mxu0 0.0
      %495 = vmatpush.msra.mxu0 0.0
      %496 = vmatpush.msra.mxu0 %v475
      %497 = vmatmul.f32.gmra.mxu0 %v473
      %v498 = vpop.f32.mrf.mxu0
      %v499 = vadd.f32 0.0, %v498
      %500 = vdwg.mxu0
      %501 = vmatpush.msra.mxu0 0.0
      %502 = vmatpush.msra.mxu0 0.0
      %503 = vmatpush.msra.mxu0 0.0
      %504 = vmatpush.msra.mxu0 0.0
      %505 = vmatpush.msra.mxu0 0.0
      %506 = vmatpush.msra.mxu0 0.0
      %507 = vmatpush.msra.mxu0 0.0
      %508 = vmatpush.msra.mxu0 0.0
      %509 = vmatpush.msra.mxu0 0.0
      %510 = vmatpush.msra.mxu0 0.0
      %511 = vmatpush.msra.mxu0 0.0
      %512 = vmatpush.msra.mxu0 0.0
      %513 = vmatpush.msra.mxu0 0.0
      %514 = vmatpush.msra.mxu0 0.0
      %515 = vmatpush.msra.mxu0 0.0
      %516 = vmatpush.msra.mxu0 %v477
      %517 = vmatmul.f32.gmra.mxu0 %v473
      %v518 = vpop.f32.mrf.mxu0
      %v519 = vadd.f32 0.0, %v518
      %520 = vdwg.mxu0
      %521 = vmatpush.msra.mxu0 0.0
      %522 = vmatpush.msra.mxu0 0.0
      %523 = vmatpush.msra.mxu0 0.0
      %524 = vmatpush.msra.mxu0 0.0
      %525 = vmatpush.msra.mxu0 0.0
      %526 = vmatpush.msra.mxu0 0.0
      %527 = vmatpush.msra.mxu0 0.0
      %528 = vmatpush.msra.mxu0 0.0
      %529 = vmatpush.msra.mxu0 0.0
      %530 = vmatpush.msra.mxu0 0.0
      %531 = vmatpush.msra.mxu0 0.0
      %532 = vmatpush.msra.mxu0 0.0
      %533 = vmatpush.msra.mxu0 0.0
      %534 = vmatpush.msra.mxu0 0.0
      %535 = vmatpush.msra.mxu0 0.0
      %536 = vmatpush.msra.mxu0 %v479
      %537 = vmatmul.f32.gmra.mxu0 %v473
      %v538 = vpop.f32.mrf.mxu0
      %v539 = vadd.f32 0.0, %v538
      %540 = vdwg.mxu0
      %v541 = vadd.f32 %v452, %v499
      %v542 = vadd.f32 %v453, %v519
      %v543 = vadd.f32 %v454, %v539
      %s544 = scalar_lea.vmem %s1, 32
      %v545 = vld [vmem:[%s544] sm:$0xff]
      %546 = vst [vmem:[#allocation1] ss:$2 sm:$0xff] %v198
      %s547 = scalar_lea.vmem [#allocation1], 16
      %548 = vst [vmem:[%s547] ss:$2 sm:$0xff] %v199
      %v549 = vld.sshfl [vmem:[#allocation1] sm:$0xff pattern:$0x75316420]
      %v550 = vld.sshfl [vmem:[#allocation1 + $0x8] sm:$0xff pattern:$0x75316420]
      %v551 = vld.sshfl [vmem:[#allocation1 + $0x10] sm:$0xff pattern:$0x75316420]
      %552 = vrot.lane.b32.xlu0 %v549, 124
      %v553 = vpop.permute.xlu0 %552
      %554 = vrot.lane.b32.xlu0 %v550, 124
      %v555 = vpop.permute.xlu0 %554
      %556 = vrot.lane.b32.xlu0 %v551, 124
      %v557 = vpop.permute.xlu0 %556
      %vm558 = vcmask 1014784
      %v559 = vsel %vm558, %v553, %v555
      %v560 = vsel %vm558, %v555, %v557
      %v562 = vsel %vm220, %v545, 0
      %v564 = vsel %vm224, %v559, 0
      %v566 = vsel %vm224, %v560, 0
      %v568 = vsel %vm224, %v557, 0
      %570 = vmatpush.msra.mxu0 0.0
      %571 = vmatpush.msra.mxu0 0.0
      %572 = vmatpush.msra.mxu0 0.0
      %573 = vmatpush.msra.mxu0 0.0
      %574 = vmatpush.msra.mxu0 0.0
      %575 = vmatpush.msra.mxu0 0.0
      %576 = vmatpush.msra.mxu0 0.0
      %577 = vmatpush.msra.mxu0 0.0
      %578 = vmatpush.msra.mxu0 0.0
      %579 = vmatpush.msra.mxu0 0.0
      %580 = vmatpush.msra.mxu0 0.0
      %581 = vmatpush.msra.mxu0 0.0
      %582 = vmatpush.msra.mxu0 0.0
      %583 = vmatpush.msra.mxu0 0.0
      %584 = vmatpush.msra.mxu0 0.0
      %585 = vmatpush.msra.mxu0 %v564
      %586 = vmatmul.f32.gmra.mxu0 %v562
      %v587 = vpop.f32.mrf.mxu0
      %v588 = vadd.f32 0.0, %v587
      %589 = vdwg.mxu0
      %590 = vmatpush.msra.mxu0 0.0
      %591 = vmatpush.msra.mxu0 0.0
      %592 = vmatpush.msra.mxu0 0.0
      %593 = vmatpush.msra.mxu0 0.0
      %594 = vmatpush.msra.mxu0 0.0
      %595 = vmatpush.msra.mxu0 0.0
      %596 = vmatpush.msra.mxu0 0.0
      %597 = vmatpush.msra.mxu0 0.0
      %598 = vmatpush.msra.mxu0 0.0
      %599 = vmatpush.msra.mxu0 0.0
      %600 = vmatpush.msra.mxu0 0.0
      %601 = vmatpush.msra.mxu0 0.0
      %602 = vmatpush.msra.mxu0 0.0
      %603 = vmatpush.msra.mxu0 0.0
      %604 = vmatpush.msra.mxu0 0.0
      %605 = vmatpush.msra.mxu0 %v566
      %606 = vmatmul.f32.gmra.mxu0 %v562
      %v607 = vpop.f32.mrf.mxu0
      %v608 = vadd.f32 0.0, %v607
      %609 = vdwg.mxu0
      %610 = vmatpush.msra.mxu0 0.0
      %611 = vmatpush.msra.mxu0 0.0
      %612 = vmatpush.msra.mxu0 0.0
      %613 = vmatpush.msra.mxu0 0.0
      %614 = vmatpush.msra.mxu0 0.0
      %615 = vmatpush.msra.mxu0 0.0
      %616 = vmatpush.msra.mxu0 0.0
      %617 = vmatpush.msra.mxu0 0.0
      %618 = vmatpush.msra.mxu0 0.0
      %619 = vmatpush.msra.mxu0 0.0
      %620 = vmatpush.msra.mxu0 0.0
      %621 = vmatpush.msra.mxu0 0.0
      %622 = vmatpush.msra.mxu0 0.0
      %623 = vmatpush.msra.mxu0 0.0
      %624 = vmatpush.msra.mxu0 0.0
      %625 = vmatpush.msra.mxu0 %v568
      %626 = vmatmul.f32.gmra.mxu0 %v562
      %v627 = vpop.f32.mrf.mxu0
      %v628 = vadd.f32 0.0, %v627
      %629 = vdwg.mxu0
      %v630 = vadd.f32 %v541, %v588
      %v631 = vadd.f32 %v542, %v608
      %v632 = vadd.f32 %v543, %v628
      %s633 = scalar_lea.vmem %s1, 40
      %v634 = vld [vmem:[%s633] sm:$0xff]
      %635 = vst [vmem:[#allocation1] ss:$2 sm:$0xff] %v198
      %s636 = scalar_lea.vmem [#allocation1], 16
      %637 = vst [vmem:[%s636] ss:$2 sm:$0xff] %v199
      %v638 = vld.sshfl [vmem:[#allocation1] sm:$0xff pattern:$0x75316420]
      %v639 = vld.sshfl [vmem:[#allocation1 + $0x8] sm:$0xff pattern:$0x75316420]
      %v640 = vld.sshfl [vmem:[#allocation1 + $0x10] sm:$0xff pattern:$0x75316420]
      %641 = vrot.lane.b32.xlu0 %v638, 123
      %v642 = vpop.permute.xlu0 %641
      %643 = vrot.lane.b32.xlu0 %v639, 123
      %v644 = vpop.permute.xlu0 %643
      %645 = vrot.lane.b32.xlu0 %v640, 123
      %v646 = vpop.permute.xlu0 %645
      %vm647 = vcmask 1006592
      %v648 = vsel %vm647, %v642, %v644
      %v649 = vsel %vm647, %v644, %v646
      %v651 = vsel %vm220, %v634, 0
      %v653 = vsel %vm224, %v648, 0
      %v655 = vsel %vm224, %v649, 0
      %v657 = vsel %vm224, %v646, 0
      %659 = vmatpush.msra.mxu0 0.0
      %660 = vmatpush.msra.mxu0 0.0
      %661 = vmatpush.msra.mxu0 0.0
      %662 = vmatpush.msra.mxu0 0.0
      %663 = vmatpush.msra.mxu0 0.0
      %664 = vmatpush.msra.mxu0 0.0
      %665 = vmatpush.msra.mxu0 0.0
      %666 = vmatpush.msra.mxu0 0.0
      %667 = vmatpush.msra.mxu0 0.0
      %668 = vmatpush.msra.mxu0 0.0
      %669 = vmatpush.msra.mxu0 0.0
      %670 = vmatpush.msra.mxu0 0.0
      %671 = vmatpush.msra.mxu0 0.0
      %672 = vmatpush.msra.mxu0 0.0
      %673 = vmatpush.msra.mxu0 0.0
      %674 = vmatpush.msra.mxu0 %v653
      %675 = vmatmul.f32.gmra.mxu0 %v651
      %v676 = vpop.f32.mrf.mxu0
      %v677 = vadd.f32 0.0, %v676
      %678 = vdwg.mxu0
      %679 = vmatpush.msra.mxu0 0.0
      %680 = vmatpush.msra.mxu0 0.0
      %681 = vmatpush.msra.mxu0 0.0
      %682 = vmatpush.msra.mxu0 0.0
      %683 = vmatpush.msra.mxu0 0.0
      %684 = vmatpush.msra.mxu0 0.0
      %685 = vmatpush.msra.mxu0 0.0
      %686 = vmatpush.msra.mxu0 0.0
      %687 = vmatpush.msra.mxu0 0.0
      %688 = vmatpush.msra.mxu0 0.0
      %689 = vmatpush.msra.mxu0 0.0
      %690 = vmatpush.msra.mxu0 0.0
      %691 = vmatpush.msra.mxu0 0.0
      %692 = vmatpush.msra.mxu0 0.0
      %693 = vmatpush.msra.mxu0 0.0
      %694 = vmatpush.msra.mxu0 %v655
      %695 = vmatmul.f32.gmra.mxu0 %v651
      %v696 = vpop.f32.mrf.mxu0
      %v697 = vadd.f32 0.0, %v696
      %698 = vdwg.mxu0
      %699 = vmatpush.msra.mxu0 0.0
      %700 = vmatpush.msra.mxu0 0.0
      %701 = vmatpush.msra.mxu0 0.0
      %702 = vmatpush.msra.mxu0 0.0
      %703 = vmatpush.msra.mxu0 0.0
      %704 = vmatpush.msra.mxu0 0.0
      %705 = vmatpush.msra.mxu0 0.0
      %706 = vmatpush.msra.mxu0 0.0
      %707 = vmatpush.msra.mxu0 0.0
      %708 = vmatpush.msra.mxu0 0.0
      %709 = vmatpush.msra.mxu0 0.0
      %710 = vmatpush.msra.mxu0 0.0
      %711 = vmatpush.msra.mxu0 0.0
      %712 = vmatpush.msra.mxu0 0.0
      %713 = vmatpush.msra.mxu0 0.0
      %714 = vmatpush.msra.mxu0 %v657
      %715 = vmatmul.f32.gmra.mxu0 %v651
      %v716 = vpop.f32.mrf.mxu0
      %v717 = vadd.f32 0.0, %v716
      %718 = vdwg.mxu0
      %v719 = vadd.f32 %v630, %v677
      %v720 = vadd.f32 %v631, %v697
      %v721 = vadd.f32 %v632, %v717
      %s722 = scalar_lea.vmem %s1, 48
      %v723 = vld [vmem:[%s722] sm:$0xff]
      %724 = vst [vmem:[#allocation1] ss:$2 sm:$0xff] %v198
      %s725 = scalar_lea.vmem [#allocation1], 16
      %726 = vst [vmem:[%s725] ss:$2 sm:$0xff] %v199
      %v727 = vld.sshfl [vmem:[#allocation1] sm:$0xff pattern:$0x75316420]
      %v728 = vld.sshfl [vmem:[#allocation1 + $0x8] sm:$0xff pattern:$0x75316420]
      %v729 = vld.sshfl [vmem:[#allocation1 + $0x10] sm:$0xff pattern:$0x75316420]
      %730 = vrot.lane.b32.xlu0 %v727, 122
      %v731 = vpop.permute.xlu0 %730
      %732 = vrot.lane.b32.xlu0 %v728, 122
      %v733 = vpop.permute.xlu0 %732
      %734 = vrot.lane.b32.xlu0 %v729, 122
      %v735 = vpop.permute.xlu0 %734
      %vm736 = vcmask 998400
      %v737 = vsel %vm736, %v731, %v733
      %v738 = vsel %vm736, %v733, %v735
      %v740 = vsel %vm220, %v723, 0
      %v742 = vsel %vm224, %v737, 0
      %v744 = vsel %vm224, %v738, 0
      %v746 = vsel %vm224, %v735, 0
      %748 = vmatpush.msra.mxu0 0.0
      %749 = vmatpush.msra.mxu0 0.0
      %750 = vmatpush.msra.mxu0 0.0
      %751 = vmatpush.msra.mxu0 0.0
      %752 = vmatpush.msra.mxu0 0.0
      %753 = vmatpush.msra.mxu0 0.0
      %754 = vmatpush.msra.mxu0 0.0
      %755 = vmatpush.msra.mxu0 0.0
      %756 = vmatpush.msra.mxu0 0.0
      %757 = vmatpush.msra.mxu0 0.0
      %758 = vmatpush.msra.mxu0 0.0
      %759 = vmatpush.msra.mxu0 0.0
      %760 = vmatpush.msra.mxu0 0.0
      %761 = vmatpush.msra.mxu0 0.0
      %762 = vmatpush.msra.mxu0 0.0
      %763 = vmatpush.msra.mxu0 %v742
      %764 = vmatmul.f32.gmra.mxu0 %v740
      %v765 = vpop.f32.mrf.mxu0
      %v766 = vadd.f32 0.0, %v765
      %767 = vdwg.mxu0
      %768 = vmatpush.msra.mxu0 0.0
      %769 = vmatpush.msra.mxu0 0.0
      %770 = vmatpush.msra.mxu0 0.0
      %771 = vmatpush.msra.mxu0 0.0
      %772 = vmatpush.msra.mxu0 0.0
      %773 = vmatpush.msra.mxu0 0.0
      %774 = vmatpush.msra.mxu0 0.0
      %775 = vmatpush.msra.mxu0 0.0
      %776 = vmatpush.msra.mxu0 0.0
      %777 = vmatpush.msra.mxu0 0.0
      %778 = vmatpush.msra.mxu0 0.0
      %779 = vmatpush.msra.mxu0 0.0
      %780 = vmatpush.msra.mxu0 0.0
      %781 = vmatpush.msra.mxu0 0.0
      %782 = vmatpush.msra.mxu0 0.0
      %783 = vmatpush.msra.mxu0 %v744
      %784 = vmatmul.f32.gmra.mxu0 %v740
      %v785 = vpop.f32.mrf.mxu0
      %v786 = vadd.f32 0.0, %v785
      %787 = vdwg.mxu0
      %788 = vmatpush.msra.mxu0 0.0
      %789 = vmatpush.msra.mxu0 0.0
      %790 = vmatpush.msra.mxu0 0.0
      %791 = vmatpush.msra.mxu0 0.0
      %792 = vmatpush.msra.mxu0 0.0
      %793 = vmatpush.msra.mxu0 0.0
      %794 = vmatpush.msra.mxu0 0.0
      %795 = vmatpush.msra.mxu0 0.0
      %796 = vmatpush.msra.mxu0 0.0
      %797 = vmatpush.msra.mxu0 0.0
      %798 = vmatpush.msra.mxu0 0.0
      %799 = vmatpush.msra.mxu0 0.0
      %800 = vmatpush.msra.mxu0 0.0
      %801 = vmatpush.msra.mxu0 0.0
      %802 = vmatpush.msra.mxu0 0.0
      %803 = vmatpush.msra.mxu0 %v746
      %804 = vmatmul.f32.gmra.mxu0 %v740
      %v805 = vpop.f32.mrf.mxu0
      %v806 = vadd.f32 0.0, %v805
      %807 = vdwg.mxu0
      %v808 = vadd.f32 %v719, %v766
      %v809 = vadd.f32 %v720, %v786
      %v810 = vadd.f32 %v721, %v806
      %s811 = scalar_lea.vmem %s1, 56
      %v812 = vld [vmem:[%s811] sm:$0xff]
      %813 = vst [vmem:[#allocation1] ss:$2 sm:$0xff] %v198
      %s814 = scalar_lea.vmem [#allocation1], 16
      %815 = vst [vmem:[%s814] ss:$2 sm:$0xff] %v199
      %v816 = vld.sshfl [vmem:[#allocation1] sm:$0xff pattern:$0x75316420]
      %v817 = vld.sshfl [vmem:[#allocation1 + $0x8] sm:$0xff pattern:$0x75316420]
      %v818 = vld.sshfl [vmem:[#allocation1 + $0x10] sm:$0xff pattern:$0x75316420]
      %819 = vrot.lane.b32.xlu0 %v816, 106
      %v820 = vpop.permute.xlu0 %819
      %821 = vrot.lane.b32.xlu0 %v817, 106
      %v822 = vpop.permute.xlu0 %821
      %823 = vrot.lane.b32.xlu0 %v818, 106
      %v824 = vpop.permute.xlu0 %823
      %vm825 = vcmask 867328
      %v826 = vsel %vm825, %v820, %v822
      %v827 = vsel %vm825, %v822, %v824
      %v829 = vsel %vm220, %v812, 0
      %v831 = vsel %vm224, %v826, 0
      %v833 = vsel %vm224, %v827, 0
      %v835 = vsel %vm224, %v824, 0
      %837 = vmatpush.msra.mxu0 0.0
      %838 = vmatpush.msra.mxu0 0.0
      %839 = vmatpush.msra.mxu0 0.0
      %840 = vmatpush.msra.mxu0 0.0
      %841 = vmatpush.msra.mxu0 0.0
      %842 = vmatpush.msra.mxu0 0.0
      %843 = vmatpush.msra.mxu0 0.0
      %844 = vmatpush.msra.mxu0 0.0
      %845 = vmatpush.msra.mxu0 0.0
      %846 = vmatpush.msra.mxu0 0.0
      %847 = vmatpush.msra.mxu0 0.0
      %848 = vmatpush.msra.mxu0 0.0
      %849 = vmatpush.msra.mxu0 0.0
      %850 = vmatpush.msra.mxu0 0.0
      %851 = vmatpush.msra.mxu0 0.0
      %852 = vmatpush.msra.mxu0 %v831
      %853 = vmatmul.f32.gmra.mxu0 %v829
      %v854 = vpop.f32.mrf.mxu0
      %v855 = vadd.f32 0.0, %v854
      %856 = vdwg.mxu0
      %857 = vmatpush.msra.mxu0 0.0
      %858 = vmatpush.msra.mxu0 0.0
      %859 = vmatpush.msra.mxu0 0.0
      %860 = vmatpush.msra.mxu0 0.0
      %861 = vmatpush.msra.mxu0 0.0
      %862 = vmatpush.msra.mxu0 0.0
      %863 = vmatpush.msra.mxu0 0.0
      %864 = vmatpush.msra.mxu0 0.0
      %865 = vmatpush.msra.mxu0 0.0
      %866 = vmatpush.msra.mxu0 0.0
      %867 = vmatpush.msra.mxu0 0.0
      %868 = vmatpush.msra.mxu0 0.0
      %869 = vmatpush.msra.mxu0 0.0
      %870 = vmatpush.msra.mxu0 0.0
      %871 = vmatpush.msra.mxu0 0.0
      %872 = vmatpush.msra.mxu0 %v833
      %873 = vmatmul.f32.gmra.mxu0 %v829
      %v874 = vpop.f32.mrf.mxu0
      %v875 = vadd.f32 0.0, %v874
      %876 = vdwg.mxu0
      %877 = vmatpush.msra.mxu0 0.0
      %878 = vmatpush.msra.mxu0 0.0
      %879 = vmatpush.msra.mxu0 0.0
      %880 = vmatpush.msra.mxu0 0.0
      %881 = vmatpush.msra.mxu0 0.0
      %882 = vmatpush.msra.mxu0 0.0
      %883 = vmatpush.msra.mxu0 0.0
      %884 = vmatpush.msra.mxu0 0.0
      %885 = vmatpush.msra.mxu0 0.0
      %886 = vmatpush.msra.mxu0 0.0
      %887 = vmatpush.msra.mxu0 0.0
      %888 = vmatpush.msra.mxu0 0.0
      %889 = vmatpush.msra.mxu0 0.0
      %890 = vmatpush.msra.mxu0 0.0
      %891 = vmatpush.msra.mxu0 0.0
      %892 = vmatpush.msra.mxu0 %v835
      %893 = vmatmul.f32.gmra.mxu0 %v829
      %v894 = vpop.f32.mrf.mxu0
      %v895 = vadd.f32 0.0, %v894
      %896 = vdwg.mxu0
      %v897 = vadd.f32 %v808, %v855
      %v898 = vadd.f32 %v809, %v875
      %v899 = vadd.f32 %v810, %v895
      %s900 = scalar_lea.vmem %s1, 64
      %v901 = vld [vmem:[%s900] sm:$0xff]
      %902 = vst [vmem:[#allocation1] ss:$2 sm:$0xff] %v198
      %s903 = scalar_lea.vmem [#allocation1], 16
      %904 = vst [vmem:[%s903] ss:$2 sm:$0xff] %v199
      %v905 = vld.sshfl [vmem:[#allocation1] sm:$0xff pattern:$0x75316420]
      %v906 = vld.sshfl [vmem:[#allocation1 + $0x8] sm:$0xff pattern:$0x75316420]
      %v907 = vld.sshfl [vmem:[#allocation1 + $0x10] sm:$0xff pattern:$0x75316420]
      %908 = vrot.lane.b32.xlu0 %v905, 105
      %v909 = vpop.permute.xlu0 %908
      %910 = vrot.lane.b32.xlu0 %v906, 105
      %v911 = vpop.permute.xlu0 %910
      %912 = vrot.lane.b32.xlu0 %v907, 105
      %v913 = vpop.permute.xlu0 %912
      %vm914 = vcmask 859136
      %v915 = vsel %vm914, %v909, %v911
      %v916 = vsel %vm914, %v911, %v913
      %v918 = vsel %vm220, %v901, 0
      %v920 = vsel %vm224, %v915, 0
      %v922 = vsel %vm224, %v916, 0
      %v924 = vsel %vm224, %v913, 0
      %926 = vmatpush.msra.mxu0 0.0
      %927 = vmatpush.msra.mxu0 0.0
      %928 = vmatpush.msra.mxu0 0.0
      %929 = vmatpush.msra.mxu0 0.0
      %930 = vmatpush.msra.mxu0 0.0
      %931 = vmatpush.msra.mxu0 0.0
      %932 = vmatpush.msra.mxu0 0.0
      %933 = vmatpush.msra.mxu0 0.0
      %934 = vmatpush.msra.mxu0 0.0
      %935 = vmatpush.msra.mxu0 0.0
      %936 = vmatpush.msra.mxu0 0.0
      %937 = vmatpush.msra.mxu0 0.0
      %938 = vmatpush.msra.mxu0 0.0
      %939 = vmatpush.msra.mxu0 0.0
      %940 = vmatpush.msra.mxu0 0.0
      %941 = vmatpush.msra.mxu0 %v920
      %942 = vmatmul.f32.gmra.mxu0 %v918
      %v943 = vpop.f32.mrf.mxu0
      %v944 = vadd.f32 0.0, %v943
      %945 = vdwg.mxu0
      %946 = vmatpush.msra.mxu0 0.0
      %947 = vmatpush.msra.mxu0 0.0
      %948 = vmatpush.msra.mxu0 0.0
      %949 = vmatpush.msra.mxu0 0.0
      %950 = vmatpush.msra.mxu0 0.0
      %951 = vmatpush.msra.mxu0 0.0
      %952 = vmatpush.msra.mxu0 0.0
      %953 = vmatpush.msra.mxu0 0.0
      %954 = vmatpush.msra.mxu0 0.0
      %955 = vmatpush.msra.mxu0 0.0
      %956 = vmatpush.msra.mxu0 0.0
      %957 = vmatpush.msra.mxu0 0.0
      %958 = vmatpush.msra.mxu0 0.0
      %959 = vmatpush.msra.mxu0 0.0
      %960 = vmatpush.msra.mxu0 0.0
      %961 = vmatpush.msra.mxu0 %v922
      %962 = vmatmul.f32.gmra.mxu0 %v918
      %v963 = vpop.f32.mrf.mxu0
      %v964 = vadd.f32 0.0, %v963
      %965 = vdwg.mxu0
      %966 = vmatpush.msra.mxu0 0.0
      %967 = vmatpush.msra.mxu0 0.0
      %968 = vmatpush.msra.mxu0 0.0
      %969 = vmatpush.msra.mxu0 0.0
      %970 = vmatpush.msra.mxu0 0.0
      %971 = vmatpush.msra.mxu0 0.0
      %972 = vmatpush.msra.mxu0 0.0
      %973 = vmatpush.msra.mxu0 0.0
      %974 = vmatpush.msra.mxu0 0.0
      %975 = vmatpush.msra.mxu0 0.0
      %976 = vmatpush.msra.mxu0 0.0
      %977 = vmatpush.msra.mxu0 0.0
      %978 = vmatpush.msra.mxu0 0.0
      %979 = vmatpush.msra.mxu0 0.0
      %980 = vmatpush.msra.mxu0 0.0
      %981 = vmatpush.msra.mxu0 %v924
      %982 = vmatmul.f32.gmra.mxu0 %v918
      %v983 = vpop.f32.mrf.mxu0
      %v984 = vadd.f32 0.0, %v983
      %985 = vdwg.mxu0
      %v986 = vadd.f32 %v897, %v944
      %v987 = vadd.f32 %v898, %v964
      %v988 = vadd.f32 %v899, %v984
      %s989 = scalar_lea.vmem %s1, 72
      %v990 = vld [vmem:[%s989] sm:$0xff]
      %991 = vst [vmem:[#allocation1] ss:$2 sm:$0xff] %v198
      %s992 = scalar_lea.vmem [#allocation1], 16
      %993 = vst [vmem:[%s992] ss:$2 sm:$0xff] %v199
      %v994 = vld.sshfl [vmem:[#allocation1] sm:$0xff pattern:$0x75316420]
      %v995 = vld.sshfl [vmem:[#allocation1 + $0x8] sm:$0xff pattern:$0x75316420]
      %v996 = vld.sshfl [vmem:[#allocation1 + $0x10] sm:$0xff pattern:$0x75316420]
      %997 = vrot.lane.b32.xlu0 %v994, 104
      %v998 = vpop.permute.xlu0 %997
      %999 = vrot.lane.b32.xlu0 %v995, 104
      %v1000 = vpop.permute.xlu0 %999
      %1001 = vrot.lane.b32.xlu0 %v996, 104
      %v1002 = vpop.permute.xlu0 %1001
      %vm1003 = vcmask 850944
      %v1004 = vsel %vm1003, %v998, %v1000
      %v1005 = vsel %vm1003, %v1000, %v1002
      %v1007 = vsel %vm220, %v990, 0
      %v1009 = vsel %vm224, %v1004, 0
      %v1011 = vsel %vm224, %v1005, 0
      %v1013 = vsel %vm224, %v1002, 0
      %1015 = vmatpush.msra.mxu0 0.0
      %1016 = vmatpush.msra.mxu0 0.0
      %1017 = vmatpush.msra.mxu0 0.0
      %1018 = vmatpush.msra.mxu0 0.0
      %1019 = vmatpush.msra.mxu0 0.0
      %1020 = vmatpush.msra.mxu0 0.0
      %1021 = vmatpush.msra.mxu0 0.0
      %1022 = vmatpush.msra.mxu0 0.0
      %1023 = vmatpush.msra.mxu0 0.0
      %1024 = vmatpush.msra.mxu0 0.0
      %1025 = vmatpush.msra.mxu0 0.0
      %1026 = vmatpush.msra.mxu0 0.0
      %1027 = vmatpush.msra.mxu0 0.0
      %1028 = vmatpush.msra.mxu0 0.0
      %1029 = vmatpush.msra.mxu0 0.0
      %1030 = vmatpush.msra.mxu0 %v1009
      %1031 = vmatmul.f32.gmra.mxu0 %v1007
      %v1032 = vpop.f32.mrf.mxu0
      %v1033 = vadd.f32 0.0, %v1032
      %1034 = vdwg.mxu0
      %1035 = vmatpush.msra.mxu0 0.0
      %1036 = vmatpush.msra.mxu0 0.0
      %1037 = vmatpush.msra.mxu0 0.0
      %1038 = vmatpush.msra.mxu0 0.0
      %1039 = vmatpush.msra.mxu0 0.0
      %1040 = vmatpush.msra.mxu0 0.0
      %1041 = vmatpush.msra.mxu0 0.0
      %1042 = vmatpush.msra.mxu0 0.0
      %1043 = vmatpush.msra.mxu0 0.0
      %1044 = vmatpush.msra.mxu0 0.0
      %1045 = vmatpush.msra.mxu0 0.0
      %1046 = vmatpush.msra.mxu0 0.0
      %1047 = vmatpush.msra.mxu0 0.0
      %1048 = vmatpush.msra.mxu0 0.0
      %1049 = vmatpush.msra.mxu0 0.0
      %1050 = vmatpush.msra.mxu0 %v1011
      %1051 = vmatmul.f32.gmra.mxu0 %v1007
      %v1052 = vpop.f32.mrf.mxu0
      %v1053 = vadd.f32 0.0, %v1052
      %1054 = vdwg.mxu0
      %1055 = vmatpush.msra.mxu0 0.0
      %1056 = vmatpush.msra.mxu0 0.0
      %1057 = vmatpush.msra.mxu0 0.0
      %1058 = vmatpush.msra.mxu0 0.0
      %1059 = vmatpush.msra.mxu0 0.0
      %1060 = vmatpush.msra.mxu0 0.0
      %1061 = vmatpush.msra.mxu0 0.0
      %1062 = vmatpush.msra.mxu0 0.0
      %1063 = vmatpush.msra.mxu0 0.0
      %1064 = vmatpush.msra.mxu0 0.0
      %1065 = vmatpush.msra.mxu0 0.0
      %1066 = vmatpush.msra.mxu0 0.0
      %1067 = vmatpush.msra.mxu0 0.0
      %1068 = vmatpush.msra.mxu0 0.0
      %1069 = vmatpush.msra.mxu0 0.0
      %1070 = vmatpush.msra.mxu0 %v1013
      %1071 = vmatmul.f32.gmra.mxu0 %v1007
      %v1072 = vpop.f32.mrf.mxu0
      %v1073 = vadd.f32 0.0, %v1072
      %1074 = vdwg.mxu0
      %v1075 = vadd.f32 %v986, %v1033
      %v1076 = vadd.f32 %v987, %v1053
      %v1077 = vadd.f32 %v988, %v1073
      %s1078 = scalar_lea.vmem %s1, 80
      %v1079 = vld [vmem:[%s1078] sm:$0xff]
      %1080 = vst [vmem:[#allocation1] ss:$2 sm:$0xff] %v198
      %s1081 = scalar_lea.vmem [#allocation1], 16
      %1082 = vst [vmem:[%s1081] ss:$2 sm:$0xff] %v199
      %v1083 = vld.sshfl [vmem:[#allocation1] sm:$0xff pattern:$0x75316420]
      %v1084 = vld.sshfl [vmem:[#allocation1 + $0x8] sm:$0xff pattern:$0x75316420]
      %v1085 = vld.sshfl [vmem:[#allocation1 + $0x10] sm:$0xff pattern:$0x75316420]
      %1086 = vrot.lane.b32.xlu0 %v1083, 103
      %v1087 = vpop.permute.xlu0 %1086
      %1088 = vrot.lane.b32.xlu0 %v1084, 103
      %v1089 = vpop.permute.xlu0 %1088
      %1090 = vrot.lane.b32.xlu0 %v1085, 103
      %v1091 = vpop.permute.xlu0 %1090
      %vm1092 = vcmask 842752
      %v1093 = vsel %vm1092, %v1087, %v1089
      %v1094 = vsel %vm1092, %v1089, %v1091
      %v1096 = vsel %vm220, %v1079, 0
      %v1098 = vsel %vm224, %v1093, 0
      %v1100 = vsel %vm224, %v1094, 0
      %v1102 = vsel %vm224, %v1091, 0
      %1104 = vmatpush.msra.mxu0 0.0
      %1105 = vmatpush.msra.mxu0 0.0
      %1106 = vmatpush.msra.mxu0 0.0
      %1107 = vmatpush.msra.mxu0 0.0
      %1108 = vmatpush.msra.mxu0 0.0
      %1109 = vmatpush.msra.mxu0 0.0
      %1110 = vmatpush.msra.mxu0 0.0
      %1111 = vmatpush.msra.mxu0 0.0
      %1112 = vmatpush.msra.mxu0 0.0
      %1113 = vmatpush.msra.mxu0 0.0
      %1114 = vmatpush.msra.mxu0 0.0
      %1115 = vmatpush.msra.mxu0 0.0
      %1116 = vmatpush.msra.mxu0 0.0
      %1117 = vmatpush.msra.mxu0 0.0
      %1118 = vmatpush.msra.mxu0 0.0
      %1119 = vmatpush.msra.mxu0 %v1098
      %1120 = vmatmul.f32.gmra.mxu0 %v1096
      %v1121 = vpop.f32.mrf.mxu0
      %v1122 = vadd.f32 0.0, %v1121
      %1123 = vdwg.mxu0
      %1124 = vmatpush.msra.mxu0 0.0
      %1125 = vmatpush.msra.mxu0 0.0
      %1126 = vmatpush.msra.mxu0 0.0
      %1127 = vmatpush.msra.mxu0 0.0
      %1128 = vmatpush.msra.mxu0 0.0
      %1129 = vmatpush.msra.mxu0 0.0
      %1130 = vmatpush.msra.mxu0 0.0
      %1131 = vmatpush.msra.mxu0 0.0
      %1132 = vmatpush.msra.mxu0 0.0
      %1133 = vmatpush.msra.mxu0 0.0
      %1134 = vmatpush.msra.mxu0 0.0
      %1135 = vmatpush.msra.mxu0 0.0
      %1136 = vmatpush.msra.mxu0 0.0
      %1137 = vmatpush.msra.mxu0 0.0
      %1138 = vmatpush.msra.mxu0 0.0
      %1139 = vmatpush.msra.mxu0 %v1100
      %1140 = vmatmul.f32.gmra.mxu0 %v1096
      %v1141 = vpop.f32.mrf.mxu0
      %v1142 = vadd.f32 0.0, %v1141
      %1143 = vdwg.mxu0
      %1144 = vmatpush.msra.mxu0 0.0
      %1145 = vmatpush.msra.mxu0 0.0
      %1146 = vmatpush.msra.mxu0 0.0
      %1147 = vmatpush.msra.mxu0 0.0
      %1148 = vmatpush.msra.mxu0 0.0
      %1149 = vmatpush.msra.mxu0 0.0
      %1150 = vmatpush.msra.mxu0 0.0
      %1151 = vmatpush.msra.mxu0 0.0
      %1152 = vmatpush.msra.mxu0 0.0
      %1153 = vmatpush.msra.mxu0 0.0
      %1154 = vmatpush.msra.mxu0 0.0
      %1155 = vmatpush.msra.mxu0 0.0
      %1156 = vmatpush.msra.mxu0 0.0
      %1157 = vmatpush.msra.mxu0 0.0
      %1158 = vmatpush.msra.mxu0 0.0
      %1159 = vmatpush.msra.mxu0 %v1102
      %1160 = vmatmul.f32.gmra.mxu0 %v1096
      %v1161 = vpop.f32.mrf.mxu0
      %v1162 = vadd.f32 0.0, %v1161
      %1163 = vdwg.mxu0
      %v1164 = vadd.f32 %v1075, %v1122
      %v1165 = vadd.f32 %v1076, %v1142
      %v1166 = vadd.f32 %v1077, %v1162
      %s1167 = scalar_lea.vmem %s1, 88
      %v1168 = vld [vmem:[%s1167] sm:$0xff]
      %1169 = vst [vmem:[#allocation1] ss:$2 sm:$0xff] %v198
      %s1170 = scalar_lea.vmem [#allocation1], 16
      %1171 = vst [vmem:[%s1170] ss:$2 sm:$0xff] %v199
      %v1172 = vld.sshfl [vmem:[#allocation1] sm:$0xff pattern:$0x75316420]
      %v1173 = vld.sshfl [vmem:[#allocation1 + $0x8] sm:$0xff pattern:$0x75316420]
      %v1174 = vld.sshfl [vmem:[#allocation1 + $0x10] sm:$0xff pattern:$0x75316420]
      %1175 = vrot.lane.b32.xlu0 %v1172, 102
      %v1176 = vpop.permute.xlu0 %1175
      %1177 = vrot.lane.b32.xlu0 %v1173, 102
      %v1178 = vpop.permute.xlu0 %1177
      %1179 = vrot.lane.b32.xlu0 %v1174, 102
      %v1180 = vpop.permute.xlu0 %1179
      %vm1181 = vcmask 834560
      %v1182 = vsel %vm1181, %v1176, %v1178
      %v1183 = vsel %vm1181, %v1178, %v1180
      %v1185 = vsel %vm220, %v1168, 0
      %v1187 = vsel %vm224, %v1182, 0
      %v1189 = vsel %vm224, %v1183, 0
      %v1191 = vsel %vm224, %v1180, 0
      %1193 = vmatpush.msra.mxu0 0.0
      %1194 = vmatpush.msra.mxu0 0.0
      %1195 = vmatpush.msra.mxu0 0.0
      %1196 = vmatpush.msra.mxu0 0.0
      %1197 = vmatpush.msra.mxu0 0.0
      %1198 = vmatpush.msra.mxu0 0.0
      %1199 = vmatpush.msra.mxu0 0.0
      %1200 = vmatpush.msra.mxu0 0.0
      %1201 = vmatpush.msra.mxu0 0.0
      %1202 = vmatpush.msra.mxu0 0.0
      %1203 = vmatpush.msra.mxu0 0.0
      %1204 = vmatpush.msra.mxu0 0.0
      %1205 = vmatpush.msra.mxu0 0.0
      %1206 = vmatpush.msra.mxu0 0.0
      %1207 = vmatpush.msra.mxu0 0.0
      %1208 = vmatpush.msra.mxu0 %v1187
      %1209 = vmatmul.f32.gmra.mxu0 %v1185
      %v1210 = vpop.f32.mrf.mxu0
      %v1211 = vadd.f32 0.0, %v1210
      %1212 = vdwg.mxu0
      %1213 = vmatpush.msra.mxu0 0.0
      %1214 = vmatpush.msra.mxu0 0.0
      %1215 = vmatpush.msra.mxu0 0.0
      %1216 = vmatpush.msra.mxu0 0.0
      %1217 = vmatpush.msra.mxu0 0.0
      %1218 = vmatpush.msra.mxu0 0.0
      %1219 = vmatpush.msra.mxu0 0.0
      %1220 = vmatpush.msra.mxu0 0.0
      %1221 = vmatpush.msra.mxu0 0.0
      %1222 = vmatpush.msra.mxu0 0.0
      %1223 = vmatpush.msra.mxu0 0.0
      %1224 = vmatpush.msra.mxu0 0.0
      %1225 = vmatpush.msra.mxu0 0.0
      %1226 = vmatpush.msra.mxu0 0.0
      %1227 = vmatpush.msra.mxu0 0.0
      %1228 = vmatpush.msra.mxu0 %v1189
      %1229 = vmatmul.f32.gmra.mxu0 %v1185
      %v1230 = vpop.f32.mrf.mxu0
      %v1231 = vadd.f32 0.0, %v1230
      %1232 = vdwg.mxu0
      %1233 = vmatpush.msra.mxu0 0.0
      %1234 = vmatpush.msra.mxu0 0.0
      %1235 = vmatpush.msra.mxu0 0.0
      %1236 = vmatpush.msra.mxu0 0.0
      %1237 = vmatpush.msra.mxu0 0.0
      %1238 = vmatpush.msra.mxu0 0.0
      %1239 = vmatpush.msra.mxu0 0.0
      %1240 = vmatpush.msra.mxu0 0.0
      %1241 = vmatpush.msra.mxu0 0.0
      %1242 = vmatpush.msra.mxu0 0.0
      %1243 = vmatpush.msra.mxu0 0.0
      %1244 = vmatpush.msra.mxu0 0.0
      %1245 = vmatpush.msra.mxu0 0.0
      %1246 = vmatpush.msra.mxu0 0.0
      %1247 = vmatpush.msra.mxu0 0.0
      %1248 = vmatpush.msra.mxu0 %v1191
      %1249 = vmatmul.f32.gmra.mxu0 %v1185
      %v1250 = vpop.f32.mrf.mxu0
      %v1251 = vadd.f32 0.0, %v1250
      %1252 = vdwg.mxu0
      %v1253 = vadd.f32 %v1164, %v1211
      %v1254 = vadd.f32 %v1165, %v1231
      %v1255 = vadd.f32 %v1166, %v1251
      %s1256 = scalar_lea.vmem %s1, 96
      %v1257 = vld [vmem:[%s1256] sm:$0xff]
      %1258 = vst [vmem:[#allocation1] ss:$2 sm:$0xff] %v198
      %s1259 = scalar_lea.vmem [#allocation1], 16
      %1260 = vst [vmem:[%s1259] ss:$2 sm:$0xff] %v199
      %v1261 = vld.sshfl [vmem:[#allocation1] sm:$0xff pattern:$0x75316420]
      %v1262 = vld.sshfl [vmem:[#allocation1 + $0x8] sm:$0xff pattern:$0x75316420]
      %v1263 = vld.sshfl [vmem:[#allocation1 + $0x10] sm:$0xff pattern:$0x75316420]
      %1264 = vrot.lane.b32.xlu0 %v1261, 101
      %v1265 = vpop.permute.xlu0 %1264
      %1266 = vrot.lane.b32.xlu0 %v1262, 101
      %v1267 = vpop.permute.xlu0 %1266
      %1268 = vrot.lane.b32.xlu0 %v1263, 101
      %v1269 = vpop.permute.xlu0 %1268
      %vm1270 = vcmask 826368
      %v1271 = vsel %vm1270, %v1265, %v1267
      %v1272 = vsel %vm1270, %v1267, %v1269
      %v1274 = vsel %vm220, %v1257, 0
      %v1276 = vsel %vm224, %v1271, 0
      %v1278 = vsel %vm224, %v1272, 0
      %v1280 = vsel %vm224, %v1269, 0
      %1282 = vmatpush.msra.mxu0 0.0
      %1283 = vmatpush.msra.mxu0 0.0
      %1284 = vmatpush.msra.mxu0 0.0
      %1285 = vmatpush.msra.mxu0 0.0
      %1286 = vmatpush.msra.mxu0 0.0
      %1287 = vmatpush.msra.mxu0 0.0
      %1288 = vmatpush.msra.mxu0 0.0
      %1289 = vmatpush.msra.mxu0 0.0
      %1290 = vmatpush.msra.mxu0 0.0
      %1291 = vmatpush.msra.mxu0 0.0
      %1292 = vmatpush.msra.mxu0 0.0
      %1293 = vmatpush.msra.mxu0 0.0
      %1294 = vmatpush.msra.mxu0 0.0
      %1295 = vmatpush.msra.mxu0 0.0
      %1296 = vmatpush.msra.mxu0 0.0
      %1297 = vmatpush.msra.mxu0 %v1276
      %1298 = vmatmul.f32.gmra.mxu0 %v1274
      %v1299 = vpop.f32.mrf.mxu0
      %v1300 = vadd.f32 0.0, %v1299
      %1301 = vdwg.mxu0
      %1302 = vmatpush.msra.mxu0 0.0
      %1303 = vmatpush.msra.mxu0 0.0
      %1304 = vmatpush.msra.mxu0 0.0
      %1305 = vmatpush.msra.mxu0 0.0
      %1306 = vmatpush.msra.mxu0 0.0
      %1307 = vmatpush.msra.mxu0 0.0
      %1308 = vmatpush.msra.mxu0 0.0
      %1309 = vmatpush.msra.mxu0 0.0
      %1310 = vmatpush.msra.mxu0 0.0
      %1311 = vmatpush.msra.mxu0 0.0
      %1312 = vmatpush.msra.mxu0 0.0
      %1313 = vmatpush.msra.mxu0 0.0
      %1314 = vmatpush.msra.mxu0 0.0
      %1315 = vmatpush.msra.mxu0 0.0
      %1316 = vmatpush.msra.mxu0 0.0
      %1317 = vmatpush.msra.mxu0 %v1278
      %1318 = vmatmul.f32.gmra.mxu0 %v1274
      %v1319 = vpop.f32.mrf.mxu0
      %v1320 = vadd.f32 0.0, %v1319
      %1321 = vdwg.mxu0
      %1322 = vmatpush.msra.mxu0 0.0
      %1323 = vmatpush.msra.mxu0 0.0
      %1324 = vmatpush.msra.mxu0 0.0
      %1325 = vmatpush.msra.mxu0 0.0
      %1326 = vmatpush.msra.mxu0 0.0
      %1327 = vmatpush.msra.mxu0 0.0
      %1328 = vmatpush.msra.mxu0 0.0
      %1329 = vmatpush.msra.mxu0 0.0
      %1330 = vmatpush.msra.mxu0 0.0
      %1331 = vmatpush.msra.mxu0 0.0
      %1332 = vmatpush.msra.mxu0 0.0
      %1333 = vmatpush.msra.mxu0 0.0
      %1334 = vmatpush.msra.mxu0 0.0
      %1335 = vmatpush.msra.mxu0 0.0
      %1336 = vmatpush.msra.mxu0 0.0
      %1337 = vmatpush.msra.mxu0 %v1280
      %1338 = vmatmul.f32.gmra.mxu0 %v1274
      %v1339 = vpop.f32.mrf.mxu0
      %v1340 = vadd.f32 0.0, %v1339
      %1341 = vdwg.mxu0
      %v1342 = vadd.f32 %v1253, %v1300
      %v1343 = vadd.f32 %v1254, %v1320
      %v1344 = vadd.f32 %v1255, %v1340
      %s1345 = scalar_lea.vmem %s1, 104
      %v1346 = vld [vmem:[%s1345] sm:$0xff]
      %1347 = vst [vmem:[#allocation1] ss:$2 sm:$0xff] %v198
      %s1348 = scalar_lea.vmem [#allocation1], 16
      %1349 = vst [vmem:[%s1348] ss:$2 sm:$0xff] %v199
      %v1350 = vld.sshfl [vmem:[#allocation1] sm:$0xff pattern:$0x75316420]
      %v1351 = vld.sshfl [vmem:[#allocation1 + $0x8] sm:$0xff pattern:$0x75316420]
      %v1352 = vld.sshfl [vmem:[#allocation1 + $0x10] sm:$0xff pattern:$0x75316420]
      %1353 = vrot.lane.b32.xlu0 %v1350, 100
      %v1354 = vpop.permute.xlu0 %1353
      %1355 = vrot.lane.b32.xlu0 %v1351, 100
      %v1356 = vpop.permute.xlu0 %1355
      %1357 = vrot.lane.b32.xlu0 %v1352, 100
      %v1358 = vpop.permute.xlu0 %1357
      %vm1359 = vcmask 818176
      %v1360 = vsel %vm1359, %v1354, %v1356
      %v1361 = vsel %vm1359, %v1356, %v1358
      %v1363 = vsel %vm220, %v1346, 0
      %v1365 = vsel %vm224, %v1360, 0
      %v1367 = vsel %vm224, %v1361, 0
      %v1369 = vsel %vm224, %v1358, 0
      %1371 = vmatpush.msra.mxu0 0.0
      %1372 = vmatpush.msra.mxu0 0.0
      %1373 = vmatpush.msra.mxu0 0.0
      %1374 = vmatpush.msra.mxu0 0.0
      %1375 = vmatpush.msra.mxu0 0.0
      %1376 = vmatpush.msra.mxu0 0.0
      %1377 = vmatpush.msra.mxu0 0.0
      %1378 = vmatpush.msra.mxu0 0.0
      %1379 = vmatpush.msra.mxu0 0.0
      %1380 = vmatpush.msra.mxu0 0.0
      %1381 = vmatpush.msra.mxu0 0.0
      %1382 = vmatpush.msra.mxu0 0.0
      %1383 = vmatpush.msra.mxu0 0.0
      %1384 = vmatpush.msra.mxu0 0.0
      %1385 = vmatpush.msra.mxu0 0.0
      %1386 = vmatpush.msra.mxu0 %v1365
      %1387 = vmatmul.f32.gmra.mxu0 %v1363
      %v1388 = vpop.f32.mrf.mxu0
      %v1389 = vadd.f32 0.0, %v1388
      %1390 = vdwg.mxu0
      %1391 = vmatpush.msra.mxu0 0.0
      %1392 = vmatpush.msra.mxu0 0.0
      %1393 = vmatpush.msra.mxu0 0.0
      %1394 = vmatpush.msra.mxu0 0.0
      %1395 = vmatpush.msra.mxu0 0.0
      %1396 = vmatpush.msra.mxu0 0.0
      %1397 = vmatpush.msra.mxu0 0.0
      %1398 = vmatpush.msra.mxu0 0.0
      %1399 = vmatpush.msra.mxu0 0.0
      %1400 = vmatpush.msra.mxu0 0.0
      %1401 = vmatpush.msra.mxu0 0.0
      %1402 = vmatpush.msra.mxu0 0.0
      %1403 = vmatpush.msra.mxu0 0.0
      %1404 = vmatpush.msra.mxu0 0.0
      %1405 = vmatpush.msra.mxu0 0.0
      %1406 = vmatpush.msra.mxu0 %v1367
      %1407 = vmatmul.f32.gmra.mxu0 %v1363
      %v1408 = vpop.f32.mrf.mxu0
      %v1409 = vadd.f32 0.0, %v1408
      %1410 = vdwg.mxu0
      %1411 = vmatpush.msra.mxu0 0.0
      %1412 = vmatpush.msra.mxu0 0.0
      %1413 = vmatpush.msra.mxu0 0.0
      %1414 = vmatpush.msra.mxu0 0.0
      %1415 = vmatpush.msra.mxu0 0.0
      %1416 = vmatpush.msra.mxu0 0.0
      %1417 = vmatpush.msra.mxu0 0.0
      %1418 = vmatpush.msra.mxu0 0.0
      %1419 = vmatpush.msra.mxu0 0.0
      %1420 = vmatpush.msra.mxu0 0.0
      %1421 = vmatpush.msra.mxu0 0.0
      %1422 = vmatpush.msra.mxu0 0.0
      %1423 = vmatpush.msra.mxu0 0.0
      %1424 = vmatpush.msra.mxu0 0.0
      %1425 = vmatpush.msra.mxu0 0.0
      %1426 = vmatpush.msra.mxu0 %v1369
      %1427 = vmatmul.f32.gmra.mxu0 %v1363
      %v1428 = vpop.f32.mrf.mxu0
      %v1429 = vadd.f32 0.0, %v1428
      %1430 = vdwg.mxu0
      %v1431 = vadd.f32 %v1342, %v1389
      %v1432 = vadd.f32 %v1343, %v1409
      %v1433 = vadd.f32 %v1344, %v1429
      %s1434 = scalar_lea.vmem %s1, 112
      %v1435 = vld [vmem:[%s1434] sm:$0xff]
      %1436 = vst [vmem:[#allocation1] ss:$2 sm:$0xff] %v198
      %s1437 = scalar_lea.vmem [#allocation1], 16
      %1438 = vst [vmem:[%s1437] ss:$2 sm:$0xff] %v199
      %v1439 = vld.sshfl [vmem:[#allocation1] sm:$0xff pattern:$0x75316420]
      %v1440 = vld.sshfl [vmem:[#allocation1 + $0x8] sm:$0xff pattern:$0x75316420]
      %v1441 = vld.sshfl [vmem:[#allocation1 + $0x10] sm:$0xff pattern:$0x75316420]
      %v1442 = vld.sshfl [vmem:[#allocation1 + $0x18] sm:$0xff pattern:$0x75316420]
      %1443 = vrot.lane.b32.xlu0 %v1439, 84
      %v1444 = vpop.permute.xlu0 %1443
      %1445 = vrot.lane.b32.xlu0 %v1440, 84
      %v1446 = vpop.permute.xlu0 %1445
      %1447 = vrot.lane.b32.xlu0 %v1441, 84
      %v1448 = vpop.permute.xlu0 %1447
      %1449 = vrot.lane.b32.xlu0 %v1442, 84
      %v1450 = vpop.permute.xlu0 %1449
      %vm1451 = vcmask 687104
      %v1452 = vsel %vm1451, %v1444, %v1446
      %v1453 = vsel %vm1451, %v1446, %v1448
      %v1454 = vsel %vm1451, %v1448, %v1450
      %v1456 = vsel %vm220, %v1435, 0
      %v1458 = vsel %vm224, %v1452, 0
      %v1460 = vsel %vm224, %v1453, 0
      %v1462 = vsel %vm224, %v1454, 0
      %1464 = vmatpush.msra.mxu0 0.0
      %1465 = vmatpush.msra.mxu0 0.0
      %1466 = vmatpush.msra.mxu0 0.0
      %1467 = vmatpush.msra.mxu0 0.0
      %1468 = vmatpush.msra.mxu0 0.0
      %1469 = vmatpush.msra.mxu0 0.0
      %1470 = vmatpush.msra.mxu0 0.0
      %1471 = vmatpush.msra.mxu0 0.0
      %1472 = vmatpush.msra.mxu0 0.0
      %1473 = vmatpush.msra.mxu0 0.0
      %1474 = vmatpush.msra.mxu0 0.0
      %1475 = vmatpush.msra.mxu0 0.0
      %1476 = vmatpush.msra.mxu0 0.0
      %1477 = vmatpush.msra.mxu0 0.0
      %1478 = vmatpush.msra.mxu0 0.0
      %1479 = vmatpush.msra.mxu0 %v1458
      %1480 = vmatmul.f32.gmra.mxu0 %v1456
      %v1481 = vpop.f32.mrf.mxu0
      %v1482 = vadd.f32 0.0, %v1481
      %1483 = vdwg.mxu0
      %1484 = vmatpush.msra.mxu0 0.0
      %1485 = vmatpush.msra.mxu0 0.0
      %1486 = vmatpush.msra.mxu0 0.0
      %1487 = vmatpush.msra.mxu0 0.0
      %1488 = vmatpush.msra.mxu0 0.0
      %1489 = vmatpush.msra.mxu0 0.0
      %1490 = vmatpush.msra.mxu0 0.0
      %1491 = vmatpush.msra.mxu0 0.0
      %1492 = vmatpush.msra.mxu0 0.0
      %1493 = vmatpush.msra.mxu0 0.0
      %1494 = vmatpush.msra.mxu0 0.0
      %1495 = vmatpush.msra.mxu0 0.0
      %1496 = vmatpush.msra.mxu0 0.0
      %1497 = vmatpush.msra.mxu0 0.0
      %1498 = vmatpush.msra.mxu0 0.0
      %1499 = vmatpush.msra.mxu0 %v1460
      %1500 = vmatmul.f32.gmra.mxu0 %v1456
      %v1501 = vpop.f32.mrf.mxu0
      %v1502 = vadd.f32 0.0, %v1501
      %1503 = vdwg.mxu0
      %1504 = vmatpush.msra.mxu0 0.0
      %1505 = vmatpush.msra.mxu0 0.0
      %1506 = vmatpush.msra.mxu0 0.0
      %1507 = vmatpush.msra.mxu0 0.0
      %1508 = vmatpush.msra.mxu0 0.0
      %1509 = vmatpush.msra.mxu0 0.0
      %1510 = vmatpush.msra.mxu0 0.0
      %1511 = vmatpush.msra.mxu0 0.0
      %1512 = vmatpush.msra.mxu0 0.0
      %1513 = vmatpush.msra.mxu0 0.0
      %1514 = vmatpush.msra.mxu0 0.0
      %1515 = vmatpush.msra.mxu0 0.0
      %1516 = vmatpush.msra.mxu0 0.0
      %1517 = vmatpush.msra.mxu0 0.0
      %1518 = vmatpush.msra.mxu0 0.0
      %1519 = vmatpush.msra.mxu0 %v1462
      %1520 = vmatmul.f32.gmra.mxu0 %v1456
      %v1521 = vpop.f32.mrf.mxu0
      %v1522 = vadd.f32 0.0, %v1521
      %1523 = vdwg.mxu0
      %v1524 = vadd.f32 %v1431, %v1482
      %v1525 = vadd.f32 %v1432, %v1502
      %v1526 = vadd.f32 %v1433, %v1522
      %s1527 = scalar_lea.vmem %s1, 120
      %v1528 = vld [vmem:[%s1527] sm:$0xff]
      %1529 = vst [vmem:[#allocation1] ss:$2 sm:$0xff] %v198
      %s1530 = scalar_lea.vmem [#allocation1], 16
      %1531 = vst [vmem:[%s1530] ss:$2 sm:$0xff] %v199
      %v1532 = vld.sshfl [vmem:[#allocation1] sm:$0xff pattern:$0x75316420]
      %v1533 = vld.sshfl [vmem:[#allocation1 + $0x8] sm:$0xff pattern:$0x75316420]
      %v1534 = vld.sshfl [vmem:[#allocation1 + $0x10] sm:$0xff pattern:$0x75316420]
      %v1535 = vld.sshfl [vmem:[#allocation1 + $0x18] sm:$0xff pattern:$0x75316420]
      %1536 = vrot.lane.b32.xlu0 %v1532, 83
      %v1537 = vpop.permute.xlu0 %1536
      %1538 = vrot.lane.b32.xlu0 %v1533, 83
      %v1539 = vpop.permute.xlu0 %1538
      %1540 = vrot.lane.b32.xlu0 %v1534, 83
      %v1541 = vpop.permute.xlu0 %1540
      %1542 = vrot.lane.b32.xlu0 %v1535, 83
      %v1543 = vpop.permute.xlu0 %1542
      %vm1544 = vcmask 678912
      %v1545 = vsel %vm1544, %v1537, %v1539
      %v1546 = vsel %vm1544, %v1539, %v1541
      %v1547 = vsel %vm1544, %v1541, %v1543
      %v1549 = vsel %vm220, %v1528, 0
      %v1551 = vsel %vm224, %v1545, 0
      %v1553 = vsel %vm224, %v1546, 0
      %v1555 = vsel %vm224, %v1547, 0
      %1557 = vmatpush.msra.mxu0 0.0
      %1558 = vmatpush.msra.mxu0 0.0
      %1559 = vmatpush.msra.mxu0 0.0
      %1560 = vmatpush.msra.mxu0 0.0
      %1561 = vmatpush.msra.mxu0 0.0
      %1562 = vmatpush.msra.mxu0 0.0
      %1563 = vmatpush.msra.mxu0 0.0
      %1564 = vmatpush.msra.mxu0 0.0
      %1565 = vmatpush.msra.mxu0 0.0
      %1566 = vmatpush.msra.mxu0 0.0
      %1567 = vmatpush.msra.mxu0 0.0
      %1568 = vmatpush.msra.mxu0 0.0
      %1569 = vmatpush.msra.mxu0 0.0
      %1570 = vmatpush.msra.mxu0 0.0
      %1571 = vmatpush.msra.mxu0 0.0
      %1572 = vmatpush.msra.mxu0 %v1551
      %1573 = vmatmul.f32.gmra.mxu0 %v1549
      %v1574 = vpop.f32.mrf.mxu0
      %v1575 = vadd.f32 0.0, %v1574
      %1576 = vdwg.mxu0
      %1577 = vmatpush.msra.mxu0 0.0
      %1578 = vmatpush.msra.mxu0 0.0
      %1579 = vmatpush.msra.mxu0 0.0
      %1580 = vmatpush.msra.mxu0 0.0
      %1581 = vmatpush.msra.mxu0 0.0
      %1582 = vmatpush.msra.mxu0 0.0
      %1583 = vmatpush.msra.mxu0 0.0
      %1584 = vmatpush.msra.mxu0 0.0
      %1585 = vmatpush.msra.mxu0 0.0
      %1586 = vmatpush.msra.mxu0 0.0
      %1587 = vmatpush.msra.mxu0 0.0
      %1588 = vmatpush.msra.mxu0 0.0
      %1589 = vmatpush.msra.mxu0 0.0
      %1590 = vmatpush.msra.mxu0 0.0
      %1591 = vmatpush.msra.mxu0 0.0
      %1592 = vmatpush.msra.mxu0 %v1553
      %1593 = vmatmul.f32.gmra.mxu0 %v1549
      %v1594 = vpop.f32.mrf.mxu0
      %v1595 = vadd.f32 0.0, %v1594
      %1596 = vdwg.mxu0
      %1597 = vmatpush.msra.mxu0 0.0
      %1598 = vmatpush.msra.mxu0 0.0
      %1599 = vmatpush.msra.mxu0 0.0
      %1600 = vmatpush.msra.mxu0 0.0
      %1601 = vmatpush.msra.mxu0 0.0
      %1602 = vmatpush.msra.mxu0 0.0
      %1603 = vmatpush.msra.mxu0 0.0
      %1604 = vmatpush.msra.mxu0 0.0
      %1605 = vmatpush.msra.mxu0 0.0
      %1606 = vmatpush.msra.mxu0 0.0
      %1607 = vmatpush.msra.mxu0 0.0
      %1608 = vmatpush.msra.mxu0 0.0
      %1609 = vmatpush.msra.mxu0 0.0
      %1610 = vmatpush.msra.mxu0 0.0
      %1611 = vmatpush.msra.mxu0 0.0
      %1612 = vmatpush.msra.mxu0 %v1555
      %1613 = vmatmul.f32.gmra.mxu0 %v1549
      %v1614 = vpop.f32.mrf.mxu0
      %v1615 = vadd.f32 0.0, %v1614
      %1616 = vdwg.mxu0
      %v1617 = vadd.f32 %v1524, %v1575
      %v1618 = vadd.f32 %v1525, %v1595
      %v1619 = vadd.f32 %v1526, %v1615
      %s1620 = scalar_lea.vmem %s1, 128
      %v1621 = vld [vmem:[%s1620] sm:$0xff]
      %1622 = vst [vmem:[#allocation1] ss:$2 sm:$0xff] %v198
      %s1623 = scalar_lea.vmem [#allocation1], 16
      %1624 = vst [vmem:[%s1623] ss:$2 sm:$0xff] %v199
      %v1625 = vld.sshfl [vmem:[#allocation1] sm:$0xff pattern:$0x75316420]
      %v1626 = vld.sshfl [vmem:[#allocation1 + $0x8] sm:$0xff pattern:$0x75316420]
      %v1627 = vld.sshfl [vmem:[#allocation1 + $0x10] sm:$0xff pattern:$0x75316420]
      %v1628 = vld.sshfl [vmem:[#allocation1 + $0x18] sm:$0xff pattern:$0x75316420]
      %1629 = vrot.lane.b32.xlu0 %v1625, 82
      %v1630 = vpop.permute.xlu0 %1629
      %1631 = vrot.lane.b32.xlu0 %v1626, 82
      %v1632 = vpop.permute.xlu0 %1631
      %1633 = vrot.lane.b32.xlu0 %v1627, 82
      %v1634 = vpop.permute.xlu0 %1633
      %1635 = vrot.lane.b32.xlu0 %v1628, 82
      %v1636 = vpop.permute.xlu0 %1635
      %vm1637 = vcmask 670720
      %v1638 = vsel %vm1637, %v1630, %v1632
      %v1639 = vsel %vm1637, %v1632, %v1634
      %v1640 = vsel %vm1637, %v1634, %v1636
      %v1642 = vsel %vm220, %v1621, 0
      %v1644 = vsel %vm224, %v1638, 0
      %v1646 = vsel %vm224, %v1639, 0
      %v1648 = vsel %vm224, %v1640, 0
      %1650 = vmatpush.msra.mxu0 0.0
      %1651 = vmatpush.msra.mxu0 0.0
      %1652 = vmatpush.msra.mxu0 0.0
      %1653 = vmatpush.msra.mxu0 0.0
      %1654 = vmatpush.msra.mxu0 0.0
      %1655 = vmatpush.msra.mxu0 0.0
      %1656 = vmatpush.msra.mxu0 0.0
      %1657 = vmatpush.msra.mxu0 0.0
      %1658 = vmatpush.msra.mxu0 0.0
      %1659 = vmatpush.msra.mxu0 0.0
      %1660 = vmatpush.msra.mxu0 0.0
      %1661 = vmatpush.msra.mxu0 0.0
      %1662 = vmatpush.msra.mxu0 0.0
      %1663 = vmatpush.msra.mxu0 0.0
      %1664 = vmatpush.msra.mxu0 0.0
      %1665 = vmatpush.msra.mxu0 %v1644
      %1666 = vmatmul.f32.gmra.mxu0 %v1642
      %v1667 = vpop.f32.mrf.mxu0
      %v1668 = vadd.f32 0.0, %v1667
      %1669 = vdwg.mxu0
      %1670 = vmatpush.msra.mxu0 0.0
      %1671 = vmatpush.msra.mxu0 0.0
      %1672 = vmatpush.msra.mxu0 0.0
      %1673 = vmatpush.msra.mxu0 0.0
      %1674 = vmatpush.msra.mxu0 0.0
      %1675 = vmatpush.msra.mxu0 0.0
      %1676 = vmatpush.msra.mxu0 0.0
      %1677 = vmatpush.msra.mxu0 0.0
      %1678 = vmatpush.msra.mxu0 0.0
      %1679 = vmatpush.msra.mxu0 0.0
      %1680 = vmatpush.msra.mxu0 0.0
      %1681 = vmatpush.msra.mxu0 0.0
      %1682 = vmatpush.msra.mxu0 0.0
      %1683 = vmatpush.msra.mxu0 0.0
      %1684 = vmatpush.msra.mxu0 0.0
      %1685 = vmatpush.msra.mxu0 %v1646
      %1686 = vmatmul.f32.gmra.mxu0 %v1642
      %v1687 = vpop.f32.mrf.mxu0
      %v1688 = vadd.f32 0.0, %v1687
      %1689 = vdwg.mxu0
      %1690 = vmatpush.msra.mxu0 0.0
      %1691 = vmatpush.msra.mxu0 0.0
      %1692 = vmatpush.msra.mxu0 0.0
      %1693 = vmatpush.msra.mxu0 0.0
      %1694 = vmatpush.msra.mxu0 0.0
      %1695 = vmatpush.msra.mxu0 0.0
      %1696 = vmatpush.msra.mxu0 0.0
      %1697 = vmatpush.msra.mxu0 0.0
      %1698 = vmatpush.msra.mxu0 0.0
      %1699 = vmatpush.msra.mxu0 0.0
      %1700 = vmatpush.msra.mxu0 0.0
      %1701 = vmatpush.msra.mxu0 0.0
      %1702 = vmatpush.msra.mxu0 0.0
      %1703 = vmatpush.msra.mxu0 0.0
      %1704 = vmatpush.msra.mxu0 0.0
      %1705 = vmatpush.msra.mxu0 %v1648
      %1706 = vmatmul.f32.gmra.mxu0 %v1642
      %v1707 = vpop.f32.mrf.mxu0
      %v1708 = vadd.f32 0.0, %v1707
      %1709 = vdwg.mxu0
      %v1710 = vadd.f32 %v1617, %v1668
      %v1711 = vadd.f32 %v1618, %v1688
      %v1712 = vadd.f32 %v1619, %v1708
      %s1713 = scalar_lea.vmem %s1, 136
      %v1714 = vld [vmem:[%s1713] sm:$0xff]
      %1715 = vst [vmem:[#allocation1] ss:$2 sm:$0xff] %v198
      %s1716 = scalar_lea.vmem [#allocation1], 16
      %1717 = vst [vmem:[%s1716] ss:$2 sm:$0xff] %v199
      %v1718 = vld.sshfl [vmem:[#allocation1] sm:$0xff pattern:$0x75316420]
      %v1719 = vld.sshfl [vmem:[#allocation1 + $0x8] sm:$0xff pattern:$0x75316420]
      %v1720 = vld.sshfl [vmem:[#allocation1 + $0x10] sm:$0xff pattern:$0x75316420]
      %v1721 = vld.sshfl [vmem:[#allocation1 + $0x18] sm:$0xff pattern:$0x75316420]
      %1722 = vrot.lane.b32.xlu0 %v1718, 81
      %v1723 = vpop.permute.xlu0 %1722
      %1724 = vrot.lane.b32.xlu0 %v1719, 81
      %v1725 = vpop.permute.xlu0 %1724
      %1726 = vrot.lane.b32.xlu0 %v1720, 81
      %v1727 = vpop.permute.xlu0 %1726
      %1728 = vrot.lane.b32.xlu0 %v1721, 81
      %v1729 = vpop.permute.xlu0 %1728
      %vm1730 = vcmask 662528
      %v1731 = vsel %vm1730, %v1723, %v1725
      %v1732 = vsel %vm1730, %v1725, %v1727
      %v1733 = vsel %vm1730, %v1727, %v1729
      %v1735 = vsel %vm220, %v1714, 0
      %v1737 = vsel %vm224, %v1731, 0
      %v1739 = vsel %vm224, %v1732, 0
      %v1741 = vsel %vm224, %v1733, 0
      %1743 = vmatpush.msra.mxu0 0.0
      %1744 = vmatpush.msra.mxu0 0.0
      %1745 = vmatpush.msra.mxu0 0.0
      %1746 = vmatpush.msra.mxu0 0.0
      %1747 = vmatpush.msra.mxu0 0.0
      %1748 = vmatpush.msra.mxu0 0.0
      %1749 = vmatpush.msra.mxu0 0.0
      %1750 = vmatpush.msra.mxu0 0.0
      %1751 = vmatpush.msra.mxu0 0.0
      %1752 = vmatpush.msra.mxu0 0.0
      %1753 = vmatpush.msra.mxu0 0.0
      %1754 = vmatpush.msra.mxu0 0.0
      %1755 = vmatpush.msra.mxu0 0.0
      %1756 = vmatpush.msra.mxu0 0.0
      %1757 = vmatpush.msra.mxu0 0.0
      %1758 = vmatpush.msra.mxu0 %v1737
      %1759 = vmatmul.f32.gmra.mxu0 %v1735
      %v1760 = vpop.f32.mrf.mxu0
      %v1761 = vadd.f32 0.0, %v1760
      %1762 = vdwg.mxu0
      %1763 = vmatpush.msra.mxu0 0.0
      %1764 = vmatpush.msra.mxu0 0.0
      %1765 = vmatpush.msra.mxu0 0.0
      %1766 = vmatpush.msra.mxu0 0.0
      %1767 = vmatpush.msra.mxu0 0.0
      %1768 = vmatpush.msra.mxu0 0.0
      %1769 = vmatpush.msra.mxu0 0.0
      %1770 = vmatpush.msra.mxu0 0.0
      %1771 = vmatpush.msra.mxu0 0.0
      %1772 = vmatpush.msra.mxu0 0.0
      %1773 = vmatpush.msra.mxu0 0.0
      %1774 = vmatpush.msra.mxu0 0.0
      %1775 = vmatpush.msra.mxu0 0.0
      %1776 = vmatpush.msra.mxu0 0.0
      %1777 = vmatpush.msra.mxu0 0.0
      %1778 = vmatpush.msra.mxu0 %v1739
      %1779 = vmatmul.f32.gmra.mxu0 %v1735
      %v1780 = vpop.f32.mrf.mxu0
      %v1781 = vadd.f32 0.0, %v1780
      %1782 = vdwg.mxu0
      %1783 = vmatpush.msra.mxu0 0.0
      %1784 = vmatpush.msra.mxu0 0.0
      %1785 = vmatpush.msra.mxu0 0.0
      %1786 = vmatpush.msra.mxu0 0.0
      %1787 = vmatpush.msra.mxu0 0.0
      %1788 = vmatpush.msra.mxu0 0.0
      %1789 = vmatpush.msra.mxu0 0.0
      %1790 = vmatpush.msra.mxu0 0.0
      %1791 = vmatpush.msra.mxu0 0.0
      %1792 = vmatpush.msra.mxu0 0.0
      %1793 = vmatpush.msra.mxu0 0.0
      %1794 = vmatpush.msra.mxu0 0.0
      %1795 = vmatpush.msra.mxu0 0.0
      %1796 = vmatpush.msra.mxu0 0.0
      %1797 = vmatpush.msra.mxu0 0.0
      %1798 = vmatpush.msra.mxu0 %v1741
      %1799 = vmatmul.f32.gmra.mxu0 %v1735
      %v1800 = vpop.f32.mrf.mxu0
      %v1801 = vadd.f32 0.0, %v1800
      %1802 = vdwg.mxu0
      %v1803 = vadd.f32 %v1710, %v1761
      %v1804 = vadd.f32 %v1711, %v1781
      %v1805 = vadd.f32 %v1712, %v1801
      %s1806 = scalar_lea.vmem %s1, 144
      %v1807 = vld [vmem:[%s1806] sm:$0xff]
      %1808 = vst [vmem:[#allocation1] ss:$2 sm:$0xff] %v198
      %s1809 = scalar_lea.vmem [#allocation1], 16
      %1810 = vst [vmem:[%s1809] ss:$2 sm:$0xff] %v199
      %v1811 = vld.sshfl [vmem:[#allocation1] sm:$0xff pattern:$0x75316420]
      %v1812 = vld.sshfl [vmem:[#allocation1 + $0x8] sm:$0xff pattern:$0x75316420]
      %v1813 = vld.sshfl [vmem:[#allocation1 + $0x10] sm:$0xff pattern:$0x75316420]
      %v1814 = vld.sshfl [vmem:[#allocation1 + $0x18] sm:$0xff pattern:$0x75316420]
      %1815 = vrot.lane.b32.xlu0 %v1811, 80
      %v1816 = vpop.permute.xlu0 %1815
      %1817 = vrot.lane.b32.xlu0 %v1812, 80
      %v1818 = vpop.permute.xlu0 %1817
      %1819 = vrot.lane.b32.xlu0 %v1813, 80
      %v1820 = vpop.permute.xlu0 %1819
      %1821 = vrot.lane.b32.xlu0 %v1814, 80
      %v1822 = vpop.permute.xlu0 %1821
      %vm1823 = vcmask 654336
      %v1824 = vsel %vm1823, %v1816, %v1818
      %v1825 = vsel %vm1823, %v1818, %v1820
      %v1826 = vsel %vm1823, %v1820, %v1822
      %v1828 = vsel %vm220, %v1807, 0
      %v1830 = vsel %vm224, %v1824, 0
      %v1832 = vsel %vm224, %v1825, 0
      %v1834 = vsel %vm224, %v1826, 0
      %1836 = vmatpush.msra.mxu0 0.0
      %1837 = vmatpush.msra.mxu0 0.0
      %1838 = vmatpush.msra.mxu0 0.0
      %1839 = vmatpush.msra.mxu0 0.0
      %1840 = vmatpush.msra.mxu0 0.0
      %1841 = vmatpush.msra.mxu0 0.0
      %1842 = vmatpush.msra.mxu0 0.0
      %1843 = vmatpush.msra.mxu0 0.0
      %1844 = vmatpush.msra.mxu0 0.0
      %1845 = vmatpush.msra.mxu0 0.0
      %1846 = vmatpush.msra.mxu0 0.0
      %1847 = vmatpush.msra.mxu0 0.0
      %1848 = vmatpush.msra.mxu0 0.0
      %1849 = vmatpush.msra.mxu0 0.0
      %1850 = vmatpush.msra.mxu0 0.0
      %1851 = vmatpush.msra.mxu0 %v1830
      %1852 = vmatmul.f32.gmra.mxu0 %v1828
      %v1853 = vpop.f32.mrf.mxu0
      %v1854 = vadd.f32 0.0, %v1853
      %1855 = vdwg.mxu0
      %1856 = vmatpush.msra.mxu0 0.0
      %1857 = vmatpush.msra.mxu0 0.0
      %1858 = vmatpush.msra.mxu0 0.0
      %1859 = vmatpush.msra.mxu0 0.0
      %1860 = vmatpush.msra.mxu0 0.0
      %1861 = vmatpush.msra.mxu0 0.0
      %1862 = vmatpush.msra.mxu0 0.0
      %1863 = vmatpush.msra.mxu0 0.0
      %1864 = vmatpush.msra.mxu0 0.0
      %1865 = vmatpush.msra.mxu0 0.0
      %1866 = vmatpush.msra.mxu0 0.0
      %1867 = vmatpush.msra.mxu0 0.0
      %1868 = vmatpush.msra.mxu0 0.0
      %1869 = vmatpush.msra.mxu0 0.0
      %1870 = vmatpush.msra.mxu0 0.0
      %1871 = vmatpush.msra.mxu0 %v1832
      %1872 = vmatmul.f32.gmra.mxu0 %v1828
      %v1873 = vpop.f32.mrf.mxu0
      %v1874 = vadd.f32 0.0, %v1873
      %1875 = vdwg.mxu0
      %1876 = vmatpush.msra.mxu0 0.0
      %1877 = vmatpush.msra.mxu0 0.0
      %1878 = vmatpush.msra.mxu0 0.0
      %1879 = vmatpush.msra.mxu0 0.0
      %1880 = vmatpush.msra.mxu0 0.0
      %1881 = vmatpush.msra.mxu0 0.0
      %1882 = vmatpush.msra.mxu0 0.0
      %1883 = vmatpush.msra.mxu0 0.0
      %1884 = vmatpush.msra.mxu0 0.0
      %1885 = vmatpush.msra.mxu0 0.0
      %1886 = vmatpush.msra.mxu0 0.0
      %1887 = vmatpush.msra.mxu0 0.0
      %1888 = vmatpush.msra.mxu0 0.0
      %1889 = vmatpush.msra.mxu0 0.0
      %1890 = vmatpush.msra.mxu0 0.0
      %1891 = vmatpush.msra.mxu0 %v1834
      %1892 = vmatmul.f32.gmra.mxu0 %v1828
      %v1893 = vpop.f32.mrf.mxu0
      %v1894 = vadd.f32 0.0, %v1893
      %1895 = vdwg.mxu0
      %v1896 = vadd.f32 %v1803, %v1854
      %v1897 = vadd.f32 %v1804, %v1874
      %v1898 = vadd.f32 %v1805, %v1894
      %s1899 = scalar_lea.vmem %s1, 152
      %v1900 = vld [vmem:[%s1899] sm:$0xff]
      %1901 = vst [vmem:[#allocation1] ss:$2 sm:$0xff] %v198
      %s1902 = scalar_lea.vmem [#allocation1], 16
      %1903 = vst [vmem:[%s1902] ss:$2 sm:$0xff] %v199
      %v1904 = vld.sshfl [vmem:[#allocation1] sm:$0xff pattern:$0x75316420]
      %v1905 = vld.sshfl [vmem:[#allocation1 + $0x8] sm:$0xff pattern:$0x75316420]
      %v1906 = vld.sshfl [vmem:[#allocation1 + $0x10] sm:$0xff pattern:$0x75316420]
      %v1907 = vld.sshfl [vmem:[#allocation1 + $0x18] sm:$0xff pattern:$0x75316420]
      %1908 = vrot.lane.b32.xlu0 %v1904, 79
      %v1909 = vpop.permute.xlu0 %1908
      %1910 = vrot.lane.b32.xlu0 %v1905, 79
      %v1911 = vpop.permute.xlu0 %1910
      %1912 = vrot.lane.b32.xlu0 %v1906, 79
      %v1913 = vpop.permute.xlu0 %1912
      %1914 = vrot.lane.b32.xlu0 %v1907, 79
      %v1915 = vpop.permute.xlu0 %1914
      %vm1916 = vcmask 646144
      %v1917 = vsel %vm1916, %v1909, %v1911
      %v1918 = vsel %vm1916, %v1911, %v1913
      %v1919 = vsel %vm1916, %v1913, %v1915
      %v1921 = vsel %vm220, %v1900, 0
      %v1923 = vsel %vm224, %v1917, 0
      %v1925 = vsel %vm224, %v1918, 0
      %v1927 = vsel %vm224, %v1919, 0
      %1929 = vmatpush.msra.mxu0 0.0
      %1930 = vmatpush.msra.mxu0 0.0
      %1931 = vmatpush.msra.mxu0 0.0
      %1932 = vmatpush.msra.mxu0 0.0
      %1933 = vmatpush.msra.mxu0 0.0
      %1934 = vmatpush.msra.mxu0 0.0
      %1935 = vmatpush.msra.mxu0 0.0
      %1936 = vmatpush.msra.mxu0 0.0
      %1937 = vmatpush.msra.mxu0 0.0
      %1938 = vmatpush.msra.mxu0 0.0
      %1939 = vmatpush.msra.mxu0 0.0
      %1940 = vmatpush.msra.mxu0 0.0
      %1941 = vmatpush.msra.mxu0 0.0
      %1942 = vmatpush.msra.mxu0 0.0
      %1943 = vmatpush.msra.mxu0 0.0
      %1944 = vmatpush.msra.mxu0 %v1923
      %1945 = vmatmul.f32.gmra.mxu0 %v1921
      %v1946 = vpop.f32.mrf.mxu0
      %v1947 = vadd.f32 0.0, %v1946
      %1948 = vdwg.mxu0
      %1949 = vmatpush.msra.mxu0 0.0
      %1950 = vmatpush.msra.mxu0 0.0
      %1951 = vmatpush.msra.mxu0 0.0
      %1952 = vmatpush.msra.mxu0 0.0
      %1953 = vmatpush.msra.mxu0 0.0
      %1954 = vmatpush.msra.mxu0 0.0
      %1955 = vmatpush.msra.mxu0 0.0
      %1956 = vmatpush.msra.mxu0 0.0
      %1957 = vmatpush.msra.mxu0 0.0
      %1958 = vmatpush.msra.mxu0 0.0
      %1959 = vmatpush.msra.mxu0 0.0
      %1960 = vmatpush.msra.mxu0 0.0
      %1961 = vmatpush.msra.mxu0 0.0
      %1962 = vmatpush.msra.mxu0 0.0
      %1963 = vmatpush.msra.mxu0 0.0
      %1964 = vmatpush.msra.mxu0 %v1925
      %1965 = vmatmul.f32.gmra.mxu0 %v1921
      %v1966 = vpop.f32.mrf.mxu0
      %v1967 = vadd.f32 0.0, %v1966
      %1968 = vdwg.mxu0
      %1969 = vmatpush.msra.mxu0 0.0
      %1970 = vmatpush.msra.mxu0 0.0
      %1971 = vmatpush.msra.mxu0 0.0
      %1972 = vmatpush.msra.mxu0 0.0
      %1973 = vmatpush.msra.mxu0 0.0
      %1974 = vmatpush.msra.mxu0 0.0
      %1975 = vmatpush.msra.mxu0 0.0
      %1976 = vmatpush.msra.mxu0 0.0
      %1977 = vmatpush.msra.mxu0 0.0
      %1978 = vmatpush.msra.mxu0 0.0
      %1979 = vmatpush.msra.mxu0 0.0
      %1980 = vmatpush.msra.mxu0 0.0
      %1981 = vmatpush.msra.mxu0 0.0
      %1982 = vmatpush.msra.mxu0 0.0
      %1983 = vmatpush.msra.mxu0 0.0
      %1984 = vmatpush.msra.mxu0 %v1927
      %1985 = vmatmul.f32.gmra.mxu0 %v1921
      %v1986 = vpop.f32.mrf.mxu0
      %v1987 = vadd.f32 0.0, %v1986
      %1988 = vdwg.mxu0
      %v1989 = vadd.f32 %v1896, %v1947
      %v1990 = vadd.f32 %v1897, %v1967
      %v1991 = vadd.f32 %v1898, %v1987
      %s1992 = scalar_lea.vmem %s1, 160
      %v1993 = vld [vmem:[%s1992] sm:$0xff]
      %1994 = vst [vmem:[#allocation1] ss:$2 sm:$0xff] %v198
      %s1995 = scalar_lea.vmem [#allocation1], 16
      %1996 = vst [vmem:[%s1995] ss:$2 sm:$0xff] %v199
      %v1997 = vld.sshfl [vmem:[#allocation1] sm:$0xff pattern:$0x75316420]
      %v1998 = vld.sshfl [vmem:[#allocation1 + $0x8] sm:$0xff pattern:$0x75316420]
      %v1999 = vld.sshfl [vmem:[#allocation1 + $0x10] sm:$0xff pattern:$0x75316420]
      %v2000 = vld.sshfl [vmem:[#allocation1 + $0x18] sm:$0xff pattern:$0x75316420]
      %2001 = vrot.lane.b32.xlu0 %v1997, 78
      %v2002 = vpop.permute.xlu0 %2001
      %2003 = vrot.lane.b32.xlu0 %v1998, 78
      %v2004 = vpop.permute.xlu0 %2003
      %2005 = vrot.lane.b32.xlu0 %v1999, 78
      %v2006 = vpop.permute.xlu0 %2005
      %2007 = vrot.lane.b32.xlu0 %v2000, 78
      %v2008 = vpop.permute.xlu0 %2007
      %vm2009 = vcmask 637952
      %v2010 = vsel %vm2009, %v2002, %v2004
      %v2011 = vsel %vm2009, %v2004, %v2006
      %v2012 = vsel %vm2009, %v2006, %v2008
      %v2014 = vsel %vm220, %v1993, 0
      %v2016 = vsel %vm224, %v2010, 0
      %v2018 = vsel %vm224, %v2011, 0
      %v2020 = vsel %vm224, %v2012, 0
      %2022 = vmatpush.msra.mxu0 0.0
      %2023 = vmatpush.msra.mxu0 0.0
      %2024 = vmatpush.msra.mxu0 0.0
      %2025 = vmatpush.msra.mxu0 0.0
      %2026 = vmatpush.msra.mxu0 0.0
      %2027 = vmatpush.msra.mxu0 0.0
      %2028 = vmatpush.msra.mxu0 0.0
      %2029 = vmatpush.msra.mxu0 0.0
      %2030 = vmatpush.msra.mxu0 0.0
      %2031 = vmatpush.msra.mxu0 0.0
      %2032 = vmatpush.msra.mxu0 0.0
      %2033 = vmatpush.msra.mxu0 0.0
      %2034 = vmatpush.msra.mxu0 0.0
      %2035 = vmatpush.msra.mxu0 0.0
      %2036 = vmatpush.msra.mxu0 0.0
      %2037 = vmatpush.msra.mxu0 %v2016
      %2038 = vmatmul.f32.gmra.mxu0 %v2014
      %v2039 = vpop.f32.mrf.mxu0
      %v2040 = vadd.f32 0.0, %v2039
      %2041 = vdwg.mxu0
      %2042 = vmatpush.msra.mxu0 0.0
      %2043 = vmatpush.msra.mxu0 0.0
      %2044 = vmatpush.msra.mxu0 0.0
      %2045 = vmatpush.msra.mxu0 0.0
      %2046 = vmatpush.msra.mxu0 0.0
      %2047 = vmatpush.msra.mxu0 0.0
      %2048 = vmatpush.msra.mxu0 0.0
      %2049 = vmatpush.msra.mxu0 0.0
      %2050 = vmatpush.msra.mxu0 0.0
      %2051 = vmatpush.msra.mxu0 0.0
      %2052 = vmatpush.msra.mxu0 0.0
      %2053 = vmatpush.msra.mxu0 0.0
      %2054 = vmatpush.msra.mxu0 0.0
      %2055 = vmatpush.msra.mxu0 0.0
      %2056 = vmatpush.msra.mxu0 0.0
      %2057 = vmatpush.msra.mxu0 %v2018
      %2058 = vmatmul.f32.gmra.mxu0 %v2014
      %v2059 = vpop.f32.mrf.mxu0
      %v2060 = vadd.f32 0.0, %v2059
      %2061 = vdwg.mxu0
      %2062 = vmatpush.msra.mxu0 0.0
      %2063 = vmatpush.msra.mxu0 0.0
      %2064 = vmatpush.msra.mxu0 0.0
      %2065 = vmatpush.msra.mxu0 0.0
      %2066 = vmatpush.msra.mxu0 0.0
      %2067 = vmatpush.msra.mxu0 0.0
      %2068 = vmatpush.msra.mxu0 0.0
      %2069 = vmatpush.msra.mxu0 0.0
      %2070 = vmatpush.msra.mxu0 0.0
      %2071 = vmatpush.msra.mxu0 0.0
      %2072 = vmatpush.msra.mxu0 0.0
      %2073 = vmatpush.msra.mxu0 0.0
      %2074 = vmatpush.msra.mxu0 0.0
      %2075 = vmatpush.msra.mxu0 0.0
      %2076 = vmatpush.msra.mxu0 0.0
      %2077 = vmatpush.msra.mxu0 %v2020
      %2078 = vmatmul.f32.gmra.mxu0 %v2014
      %v2079 = vpop.f32.mrf.mxu0
      %v2080 = vadd.f32 0.0, %v2079
      %2081 = vdwg.mxu0
      %v2082 = vadd.f32 %v1989, %v2040
      %v2083 = vadd.f32 %v1990, %v2060
      %v2084 = vadd.f32 %v1991, %v2080
      %s2085 = scalar_lea.vmem %s1, 168
      %v2086 = vld [vmem:[%s2085] sm:$0xff]
      %2087 = vst [vmem:[#allocation1] ss:$2 sm:$0xff] %v198
      %s2088 = scalar_lea.vmem [#allocation1], 16
      %2089 = vst [vmem:[%s2088] ss:$2 sm:$0xff] %v199
      %v2090 = vld.sshfl [vmem:[#allocation1] sm:$0xff pattern:$0x75316420]
      %v2091 = vld.sshfl [vmem:[#allocation1 + $0x8] sm:$0xff pattern:$0x75316420]
      %v2092 = vld.sshfl [vmem:[#allocation1 + $0x10] sm:$0xff pattern:$0x75316420]
      %v2093 = vld.sshfl [vmem:[#allocation1 + $0x18] sm:$0xff pattern:$0x75316420]
      %2094 = vrot.lane.b32.xlu0 %v2090, 62
      %v2095 = vpop.permute.xlu0 %2094
      %2096 = vrot.lane.b32.xlu0 %v2091, 62
      %v2097 = vpop.permute.xlu0 %2096
      %2098 = vrot.lane.b32.xlu0 %v2092, 62
      %v2099 = vpop.permute.xlu0 %2098
      %2100 = vrot.lane.b32.xlu0 %v2093, 62
      %v2101 = vpop.permute.xlu0 %2100
      %vm2102 = vcmask 506880
      %v2103 = vsel %vm2102, %v2095, %v2097
      %v2104 = vsel %vm2102, %v2097, %v2099
      %v2105 = vsel %vm2102, %v2099, %v2101
      %v2107 = vsel %vm220, %v2086, 0
      %v2109 = vsel %vm224, %v2103, 0
      %v2111 = vsel %vm224, %v2104, 0
      %v2113 = vsel %vm224, %v2105, 0
      %2115 = vmatpush.msra.mxu0 0.0
      %2116 = vmatpush.msra.mxu0 0.0
      %2117 = vmatpush.msra.mxu0 0.0
      %2118 = vmatpush.msra.mxu0 0.0
      %2119 = vmatpush.msra.mxu0 0.0
      %2120 = vmatpush.msra.mxu0 0.0
      %2121 = vmatpush.msra.mxu0 0.0
      %2122 = vmatpush.msra.mxu0 0.0
      %2123 = vmatpush.msra.mxu0 0.0
      %2124 = vmatpush.msra.mxu0 0.0
      %2125 = vmatpush.msra.mxu0 0.0
      %2126 = vmatpush.msra.mxu0 0.0
      %2127 = vmatpush.msra.mxu0 0.0
      %2128 = vmatpush.msra.mxu0 0.0
      %2129 = vmatpush.msra.mxu0 0.0
      %2130 = vmatpush.msra.mxu0 %v2109
      %2131 = vmatmul.f32.gmra.mxu0 %v2107
      %v2132 = vpop.f32.mrf.mxu0
      %v2133 = vadd.f32 0.0, %v2132
      %2134 = vdwg.mxu0
      %2135 = vmatpush.msra.mxu0 0.0
      %2136 = vmatpush.msra.mxu0 0.0
      %2137 = vmatpush.msra.mxu0 0.0
      %2138 = vmatpush.msra.mxu0 0.0
      %2139 = vmatpush.msra.mxu0 0.0
      %2140 = vmatpush.msra.mxu0 0.0
      %2141 = vmatpush.msra.mxu0 0.0
      %2142 = vmatpush.msra.mxu0 0.0
      %2143 = vmatpush.msra.mxu0 0.0
      %2144 = vmatpush.msra.mxu0 0.0
      %2145 = vmatpush.msra.mxu0 0.0
      %2146 = vmatpush.msra.mxu0 0.0
      %2147 = vmatpush.msra.mxu0 0.0
      %2148 = vmatpush.msra.mxu0 0.0
      %2149 = vmatpush.msra.mxu0 0.0
      %2150 = vmatpush.msra.mxu0 %v2111
      %2151 = vmatmul.f32.gmra.mxu0 %v2107
      %v2152 = vpop.f32.mrf.mxu0
      %v2153 = vadd.f32 0.0, %v2152
      %2154 = vdwg.mxu0
      %2155 = vmatpush.msra.mxu0 0.0
      %2156 = vmatpush.msra.mxu0 0.0
      %2157 = vmatpush.msra.mxu0 0.0
      %2158 = vmatpush.msra.mxu0 0.0
      %2159 = vmatpush.msra.mxu0 0.0
      %2160 = vmatpush.msra.mxu0 0.0
      %2161 = vmatpush.msra.mxu0 0.0
      %2162 = vmatpush.msra.mxu0 0.0
      %2163 = vmatpush.msra.mxu0 0.0
      %2164 = vmatpush.msra.mxu0 0.0
      %2165 = vmatpush.msra.mxu0 0.0
      %2166 = vmatpush.msra.mxu0 0.0
      %2167 = vmatpush.msra.mxu0 0.0
      %2168 = vmatpush.msra.mxu0 0.0
      %2169 = vmatpush.msra.mxu0 0.0
      %2170 = vmatpush.msra.mxu0 %v2113
      %2171 = vmatmul.f32.gmra.mxu0 %v2107
      %v2172 = vpop.f32.mrf.mxu0
      %v2173 = vadd.f32 0.0, %v2172
      %2174 = vdwg.mxu0
      %v2175 = vadd.f32 %v2082, %v2133
      %v2176 = vadd.f32 %v2083, %v2153
      %v2177 = vadd.f32 %v2084, %v2173
      %s2178 = scalar_lea.vmem %s1, 176
      %v2179 = vld [vmem:[%s2178] sm:$0xff]
      %2180 = vst [vmem:[#allocation1] ss:$2 sm:$0xff] %v198
      %s2181 = scalar_lea.vmem [#allocation1], 16
      %2182 = vst [vmem:[%s2181] ss:$2 sm:$0xff] %v199
      %v2183 = vld.sshfl [vmem:[#allocation1] sm:$0xff pattern:$0x75316420]
      %v2184 = vld.sshfl [vmem:[#allocation1 + $0x8] sm:$0xff pattern:$0x75316420]
      %v2185 = vld.sshfl [vmem:[#allocation1 + $0x10] sm:$0xff pattern:$0x75316420]
      %v2186 = vld.sshfl [vmem:[#allocation1 + $0x18] sm:$0xff pattern:$0x75316420]
      %2187 = vrot.lane.b32.xlu0 %v2183, 61
      %v2188 = vpop.permute.xlu0 %2187
      %2189 = vrot.lane.b32.xlu0 %v2184, 61
      %v2190 = vpop.permute.xlu0 %2189
      %2191 = vrot.lane.b32.xlu0 %v2185, 61
      %v2192 = vpop.permute.xlu0 %2191
      %2193 = vrot.lane.b32.xlu0 %v2186, 61
      %v2194 = vpop.permute.xlu0 %2193
      %vm2195 = vcmask 498688
      %v2196 = vsel %vm2195, %v2188, %v2190
      %v2197 = vsel %vm2195, %v2190, %v2192
      %v2198 = vsel %vm2195, %v2192, %v2194
      %v2200 = vsel %vm220, %v2179, 0
      %v2202 = vsel %vm224, %v2196, 0
      %v2204 = vsel %vm224, %v2197, 0
      %v2206 = vsel %vm224, %v2198, 0
      %2208 = vmatpush.msra.mxu0 0.0
      %2209 = vmatpush.msra.mxu0 0.0
      %2210 = vmatpush.msra.mxu0 0.0
      %2211 = vmatpush.msra.mxu0 0.0
      %2212 = vmatpush.msra.mxu0 0.0
      %2213 = vmatpush.msra.mxu0 0.0
      %2214 = vmatpush.msra.mxu0 0.0
      %2215 = vmatpush.msra.mxu0 0.0
      %2216 = vmatpush.msra.mxu0 0.0
      %2217 = vmatpush.msra.mxu0 0.0
      %2218 = vmatpush.msra.mxu0 0.0
      %2219 = vmatpush.msra.mxu0 0.0
      %2220 = vmatpush.msra.mxu0 0.0
      %2221 = vmatpush.msra.mxu0 0.0
      %2222 = vmatpush.msra.mxu0 0.0
      %2223 = vmatpush.msra.mxu0 %v2202
      %2224 = vmatmul.f32.gmra.mxu0 %v2200
      %v2225 = vpop.f32.mrf.mxu0
      %v2226 = vadd.f32 0.0, %v2225
      %2227 = vdwg.mxu0
      %2228 = vmatpush.msra.mxu0 0.0
      %2229 = vmatpush.msra.mxu0 0.0
      %2230 = vmatpush.msra.mxu0 0.0
      %2231 = vmatpush.msra.mxu0 0.0
      %2232 = vmatpush.msra.mxu0 0.0
      %2233 = vmatpush.msra.mxu0 0.0
      %2234 = vmatpush.msra.mxu0 0.0
      %2235 = vmatpush.msra.mxu0 0.0
      %2236 = vmatpush.msra.mxu0 0.0
      %2237 = vmatpush.msra.mxu0 0.0
      %2238 = vmatpush.msra.mxu0 0.0
      %2239 = vmatpush.msra.mxu0 0.0
      %2240 = vmatpush.msra.mxu0 0.0
      %2241 = vmatpush.msra.mxu0 0.0
      %2242 = vmatpush.msra.mxu0 0.0
      %2243 = vmatpush.msra.mxu0 %v2204
      %2244 = vmatmul.f32.gmra.mxu0 %v2200
      %v2245 = vpop.f32.mrf.mxu0
      %v2246 = vadd.f32 0.0, %v2245
      %2247 = vdwg.mxu0
      %2248 = vmatpush.msra.mxu0 0.0
      %2249 = vmatpush.msra.mxu0 0.0
      %2250 = vmatpush.msra.mxu0 0.0
      %2251 = vmatpush.msra.mxu0 0.0
      %2252 = vmatpush.msra.mxu0 0.0
      %2253 = vmatpush.msra.mxu0 0.0
      %2254 = vmatpush.msra.mxu0 0.0
      %2255 = vmatpush.msra.mxu0 0.0
      %2256 = vmatpush.msra.mxu0 0.0
      %2257 = vmatpush.msra.mxu0 0.0
      %2258 = vmatpush.msra.mxu0 0.0
      %2259 = vmatpush.msra.mxu0 0.0
      %2260 = vmatpush.msra.mxu0 0.0
      %2261 = vmatpush.msra.mxu0 0.0
      %2262 = vmatpush.msra.mxu0 0.0
      %2263 = vmatpush.msra.mxu0 %v2206
      %2264 = vmatmul.f32.gmra.mxu0 %v2200
      %v2265 = vpop.f32.mrf.mxu0
      %v2266 = vadd.f32 0.0, %v2265
      %2267 = vdwg.mxu0
      %v2268 = vadd.f32 %v2175, %v2226
      %v2269 = vadd.f32 %v2176, %v2246
      %v2270 = vadd.f32 %v2177, %v2266
      %s2271 = scalar_lea.vmem %s1, 184
      %v2272 = vld [vmem:[%s2271] sm:$0xff]
      %2273 = vst [vmem:[#allocation1] ss:$2 sm:$0xff] %v198
      %s2274 = scalar_lea.vmem [#allocation1], 16
      %2275 = vst [vmem:[%s2274] ss:$2 sm:$0xff] %v199
      %v2276 = vld.sshfl [vmem:[#allocation1] sm:$0xff pattern:$0x75316420]
      %v2277 = vld.sshfl [vmem:[#allocation1 + $0x8] sm:$0xff pattern:$0x75316420]
      %v2278 = vld.sshfl [vmem:[#allocation1 + $0x10] sm:$0xff pattern:$0x75316420]
      %v2279 = vld.sshfl [vmem:[#allocation1 + $0x18] sm:$0xff pattern:$0x75316420]
      %2280 = vrot.lane.b32.xlu0 %v2276, 60
      %v2281 = vpop.permute.xlu0 %2280
      %2282 = vrot.lane.b32.xlu0 %v2277, 60
      %v2283 = vpop.permute.xlu0 %2282
      %2284 = vrot.lane.b32.xlu0 %v2278, 60
      %v2285 = vpop.permute.xlu0 %2284
      %2286 = vrot.lane.b32.xlu0 %v2279, 60
      %v2287 = vpop.permute.xlu0 %2286
      %vm2288 = vcmask 490496
      %v2289 = vsel %vm2288, %v2281, %v2283
      %v2290 = vsel %vm2288, %v2283, %v2285
      %v2291 = vsel %vm2288, %v2285, %v2287
      %v2293 = vsel %vm220, %v2272, 0
      %v2295 = vsel %vm224, %v2289, 0
      %v2297 = vsel %vm224, %v2290, 0
      %v2299 = vsel %vm224, %v2291, 0
      %2301 = vmatpush.msra.mxu0 0.0
      %2302 = vmatpush.msra.mxu0 0.0
      %2303 = vmatpush.msra.mxu0 0.0
      %2304 = vmatpush.msra.mxu0 0.0
      %2305 = vmatpush.msra.mxu0 0.0
      %2306 = vmatpush.msra.mxu0 0.0
      %2307 = vmatpush.msra.mxu0 0.0
      %2308 = vmatpush.msra.mxu0 0.0
      %2309 = vmatpush.msra.mxu0 0.0
      %2310 = vmatpush.msra.mxu0 0.0
      %2311 = vmatpush.msra.mxu0 0.0
      %2312 = vmatpush.msra.mxu0 0.0
      %2313 = vmatpush.msra.mxu0 0.0
      %2314 = vmatpush.msra.mxu0 0.0
      %2315 = vmatpush.msra.mxu0 0.0
      %2316 = vmatpush.msra.mxu0 %v2295
      %2317 = vmatmul.f32.gmra.mxu0 %v2293
      %v2318 = vpop.f32.mrf.mxu0
      %v2319 = vadd.f32 0.0, %v2318
      %2320 = vdwg.mxu0
      %2321 = vmatpush.msra.mxu0 0.0
      %2322 = vmatpush.msra.mxu0 0.0
      %2323 = vmatpush.msra.mxu0 0.0
      %2324 = vmatpush.msra.mxu0 0.0
      %2325 = vmatpush.msra.mxu0 0.0
      %2326 = vmatpush.msra.mxu0 0.0
      %2327 = vmatpush.msra.mxu0 0.0
      %2328 = vmatpush.msra.mxu0 0.0
      %2329 = vmatpush.msra.mxu0 0.0
      %2330 = vmatpush.msra.mxu0 0.0
      %2331 = vmatpush.msra.mxu0 0.0
      %2332 = vmatpush.msra.mxu0 0.0
      %2333 = vmatpush.msra.mxu0 0.0
      %2334 = vmatpush.msra.mxu0 0.0
      %2335 = vmatpush.msra.mxu0 0.0
      %2336 = vmatpush.msra.mxu0 %v2297
      %2337 = vmatmul.f32.gmra.mxu0 %v2293
      %v2338 = vpop.f32.mrf.mxu0
      %v2339 = vadd.f32 0.0, %v2338
      %2340 = vdwg.mxu0
      %2341 = vmatpush.msra.mxu0 0.0
      %2342 = vmatpush.msra.mxu0 0.0
      %2343 = vmatpush.msra.mxu0 0.0
      %2344 = vmatpush.msra.mxu0 0.0
      %2345 = vmatpush.msra.mxu0 0.0
      %2346 = vmatpush.msra.mxu0 0.0
      %2347 = vmatpush.msra.mxu0 0.0
      %2348 = vmatpush.msra.mxu0 0.0
      %2349 = vmatpush.msra.mxu0 0.0
      %2350 = vmatpush.msra.mxu0 0.0
      %2351 = vmatpush.msra.mxu0 0.0
      %2352 = vmatpush.msra.mxu0 0.0
      %2353 = vmatpush.msra.mxu0 0.0
      %2354 = vmatpush.msra.mxu0 0.0
      %2355 = vmatpush.msra.mxu0 0.0
      %2356 = vmatpush.msra.mxu0 %v2299
      %2357 = vmatmul.f32.gmra.mxu0 %v2293
      %v2358 = vpop.f32.mrf.mxu0
      %v2359 = vadd.f32 0.0, %v2358
      %2360 = vdwg.mxu0
      %v2361 = vadd.f32 %v2268, %v2319
      %v2362 = vadd.f32 %v2269, %v2339
      %v2363 = vadd.f32 %v2270, %v2359
      %s2364 = scalar_lea.vmem %s1, 192
      %v2365 = vld [vmem:[%s2364] sm:$0xff]
      %2366 = vst [vmem:[#allocation1] ss:$2 sm:$0xff] %v198
      %s2367 = scalar_lea.vmem [#allocation1], 16
      %2368 = vst [vmem:[%s2367] ss:$2 sm:$0xff] %v199
      %v2369 = vld.sshfl [vmem:[#allocation1] sm:$0xff pattern:$0x75316420]
      %v2370 = vld.sshfl [vmem:[#allocation1 + $0x8] sm:$0xff pattern:$0x75316420]
      %v2371 = vld.sshfl [vmem:[#allocation1 + $0x10] sm:$0xff pattern:$0x75316420]
      %v2372 = vld.sshfl [vmem:[#allocation1 + $0x18] sm:$0xff pattern:$0x75316420]
      %2373 = vrot.lane.b32.xlu0 %v2369, 59
      %v2374 = vpop.permute.xlu0 %2373
      %2375 = vrot.lane.b32.xlu0 %v2370, 59
      %v2376 = vpop.permute.xlu0 %2375
      %2377 = vrot.lane.b32.xlu0 %v2371, 59
      %v2378 = vpop.permute.xlu0 %2377
      %2379 = vrot.lane.b32.xlu0 %v2372, 59
      %v2380 = vpop.permute.xlu0 %2379
      %vm2381 = vcmask 482304
      %v2382 = vsel %vm2381, %v2374, %v2376
      %v2383 = vsel %vm2381, %v2376, %v2378
      %v2384 = vsel %vm2381, %v2378, %v2380
      %v2386 = vsel %vm220, %v2365, 0
      %v2388 = vsel %vm224, %v2382, 0
      %v2390 = vsel %vm224, %v2383, 0
      %v2392 = vsel %vm224, %v2384, 0
      %2394 = vmatpush.msra.mxu0 0.0
      %2395 = vmatpush.msra.mxu0 0.0
      %2396 = vmatpush.msra.mxu0 0.0
      %2397 = vmatpush.msra.mxu0 0.0
      %2398 = vmatpush.msra.mxu0 0.0
      %2399 = vmatpush.msra.mxu0 0.0
      %2400 = vmatpush.msra.mxu0 0.0
      %2401 = vmatpush.msra.mxu0 0.0
      %2402 = vmatpush.msra.mxu0 0.0
      %2403 = vmatpush.msra.mxu0 0.0
      %2404 = vmatpush.msra.mxu0 0.0
      %2405 = vmatpush.msra.mxu0 0.0
      %2406 = vmatpush.msra.mxu0 0.0
      %2407 = vmatpush.msra.mxu0 0.0
      %2408 = vmatpush.msra.mxu0 0.0
      %2409 = vmatpush.msra.mxu0 %v2388
      %2410 = vmatmul.f32.gmra.mxu0 %v2386
      %v2411 = vpop.f32.mrf.mxu0
      %v2412 = vadd.f32 0.0, %v2411
      %2413 = vdwg.mxu0
      %2414 = vmatpush.msra.mxu0 0.0
      %2415 = vmatpush.msra.mxu0 0.0
      %2416 = vmatpush.msra.mxu0 0.0
      %2417 = vmatpush.msra.mxu0 0.0
      %2418 = vmatpush.msra.mxu0 0.0
      %2419 = vmatpush.msra.mxu0 0.0
      %2420 = vmatpush.msra.mxu0 0.0
      %2421 = vmatpush.msra.mxu0 0.0
      %2422 = vmatpush.msra.mxu0 0.0
      %2423 = vmatpush.msra.mxu0 0.0
      %2424 = vmatpush.msra.mxu0 0.0
      %2425 = vmatpush.msra.mxu0 0.0
      %2426 = vmatpush.msra.mxu0 0.0
      %2427 = vmatpush.msra.mxu0 0.0
      %2428 = vmatpush.msra.mxu0 0.0
      %2429 = vmatpush.msra.mxu0 %v2390
      %2430 = vmatmul.f32.gmra.mxu0 %v2386
      %v2431 = vpop.f32.mrf.mxu0
      %v2432 = vadd.f32 0.0, %v2431
      %2433 = vdwg.mxu0
      %2434 = vmatpush.msra.mxu0 0.0
      %2435 = vmatpush.msra.mxu0 0.0
      %2436 = vmatpush.msra.mxu0 0.0
      %2437 = vmatpush.msra.mxu0 0.0
      %2438 = vmatpush.msra.mxu0 0.0
      %2439 = vmatpush.msra.mxu0 0.0
      %2440 = vmatpush.msra.mxu0 0.0
      %2441 = vmatpush.msra.mxu0 0.0
      %2442 = vmatpush.msra.mxu0 0.0
      %2443 = vmatpush.msra.mxu0 0.0
      %2444 = vmatpush.msra.mxu0 0.0
      %2445 = vmatpush.msra.mxu0 0.0
      %2446 = vmatpush.msra.mxu0 0.0
      %2447 = vmatpush.msra.mxu0 0.0
      %2448 = vmatpush.msra.mxu0 0.0
      %2449 = vmatpush.msra.mxu0 %v2392
      %2450 = vmatmul.f32.gmra.mxu0 %v2386
      %v2451 = vpop.f32.mrf.mxu0
      %v2452 = vadd.f32 0.0, %v2451
      %2453 = vdwg.mxu0
      %v2454 = vadd.f32 %v2361, %v2412
      %v2455 = vadd.f32 %v2362, %v2432
      %v2456 = vadd.f32 %v2363, %v2452
      %s2457 = scalar_lea.vmem %s1, 200
      %v2458 = vld [vmem:[%s2457] sm:$0xff]
      %2459 = vst [vmem:[#allocation1] ss:$2 sm:$0xff] %v198
      %s2460 = scalar_lea.vmem [#allocation1], 16
      %2461 = vst [vmem:[%s2460] ss:$2 sm:$0xff] %v199
      %v2462 = vld.sshfl [vmem:[#allocation1] sm:$0xff pattern:$0x75316420]
      %v2463 = vld.sshfl [vmem:[#allocation1 + $0x8] sm:$0xff pattern:$0x75316420]
      %v2464 = vld.sshfl [vmem:[#allocation1 + $0x10] sm:$0xff pattern:$0x75316420]
      %v2465 = vld.sshfl [vmem:[#allocation1 + $0x18] sm:$0xff pattern:$0x75316420]
      %2466 = vrot.lane.b32.xlu0 %v2462, 58
      %v2467 = vpop.permute.xlu0 %2466
      %2468 = vrot.lane.b32.xlu0 %v2463, 58
      %v2469 = vpop.permute.xlu0 %2468
      %2470 = vrot.lane.b32.xlu0 %v2464, 58
      %v2471 = vpop.permute.xlu0 %2470
      %2472 = vrot.lane.b32.xlu0 %v2465, 58
      %v2473 = vpop.permute.xlu0 %2472
      %vm2474 = vcmask 474112
      %v2475 = vsel %vm2474, %v2467, %v2469
      %v2476 = vsel %vm2474, %v2469, %v2471
      %v2477 = vsel %vm2474, %v2471, %v2473
      %v2479 = vsel %vm220, %v2458, 0
      %v2481 = vsel %vm224, %v2475, 0
      %v2483 = vsel %vm224, %v2476, 0
      %v2485 = vsel %vm224, %v2477, 0
      %2487 = vmatpush.msra.mxu0 0.0
      %2488 = vmatpush.msra.mxu0 0.0
      %2489 = vmatpush.msra.mxu0 0.0
      %2490 = vmatpush.msra.mxu0 0.0
      %2491 = vmatpush.msra.mxu0 0.0
      %2492 = vmatpush.msra.mxu0 0.0
      %2493 = vmatpush.msra.mxu0 0.0
      %2494 = vmatpush.msra.mxu0 0.0
      %2495 = vmatpush.msra.mxu0 0.0
      %2496 = vmatpush.msra.mxu0 0.0
      %2497 = vmatpush.msra.mxu0 0.0
      %2498 = vmatpush.msra.mxu0 0.0
      %2499 = vmatpush.msra.mxu0 0.0
      %2500 = vmatpush.msra.mxu0 0.0
      %2501 = vmatpush.msra.mxu0 0.0
      %2502 = vmatpush.msra.mxu0 %v2481
      %2503 = vmatmul.f32.gmra.mxu0 %v2479
      %v2504 = vpop.f32.mrf.mxu0
      %v2505 = vadd.f32 0.0, %v2504
      %2506 = vdwg.mxu0
      %2507 = vmatpush.msra.mxu0 0.0
      %2508 = vmatpush.msra.mxu0 0.0
      %2509 = vmatpush.msra.mxu0 0.0
      %2510 = vmatpush.msra.mxu0 0.0
      %2511 = vmatpush.msra.mxu0 0.0
      %2512 = vmatpush.msra.mxu0 0.0
      %2513 = vmatpush.msra.mxu0 0.0
      %2514 = vmatpush.msra.mxu0 0.0
      %2515 = vmatpush.msra.mxu0 0.0
      %2516 = vmatpush.msra.mxu0 0.0
      %2517 = vmatpush.msra.mxu0 0.0
      %2518 = vmatpush.msra.mxu0 0.0
      %2519 = vmatpush.msra.mxu0 0.0
      %2520 = vmatpush.msra.mxu0 0.0
      %2521 = vmatpush.msra.mxu0 0.0
      %2522 = vmatpush.msra.mxu0 %v2483
      %2523 = vmatmul.f32.gmra.mxu0 %v2479
      %v2524 = vpop.f32.mrf.mxu0
      %v2525 = vadd.f32 0.0, %v2524
      %2526 = vdwg.mxu0
      %2527 = vmatpush.msra.mxu0 0.0
      %2528 = vmatpush.msra.mxu0 0.0
      %2529 = vmatpush.msra.mxu0 0.0
      %2530 = vmatpush.msra.mxu0 0.0
      %2531 = vmatpush.msra.mxu0 0.0
      %2532 = vmatpush.msra.mxu0 0.0
      %2533 = vmatpush.msra.mxu0 0.0
      %2534 = vmatpush.msra.mxu0 0.0
      %2535 = vmatpush.msra.mxu0 0.0
      %2536 = vmatpush.msra.mxu0 0.0
      %2537 = vmatpush.msra.mxu0 0.0
      %2538 = vmatpush.msra.mxu0 0.0
      %2539 = vmatpush.msra.mxu0 0.0
      %2540 = vmatpush.msra.mxu0 0.0
      %2541 = vmatpush.msra.mxu0 0.0
      %2542 = vmatpush.msra.mxu0 %v2485
      %2543 = vmatmul.f32.gmra.mxu0 %v2479
      %v2544 = vpop.f32.mrf.mxu0
      %v2545 = vadd.f32 0.0, %v2544
      %2546 = vdwg.mxu0
      %v2547 = vadd.f32 %v2454, %v2505
      %v2548 = vadd.f32 %v2455, %v2525
      %v2549 = vadd.f32 %v2456, %v2545
      %s2550 = scalar_lea.vmem %s1, 208
      %v2551 = vld [vmem:[%s2550] sm:$0xff]
      %2552 = vst [vmem:[#allocation1] ss:$2 sm:$0xff] %v198
      %s2553 = scalar_lea.vmem [#allocation1], 16
      %2554 = vst [vmem:[%s2553] ss:$2 sm:$0xff] %v199
      %v2555 = vld.sshfl [vmem:[#allocation1] sm:$0xff pattern:$0x75316420]
      %v2556 = vld.sshfl [vmem:[#allocation1 + $0x8] sm:$0xff pattern:$0x75316420]
      %v2557 = vld.sshfl [vmem:[#allocation1 + $0x10] sm:$0xff pattern:$0x75316420]
      %v2558 = vld.sshfl [vmem:[#allocation1 + $0x18] sm:$0xff pattern:$0x75316420]
      %2559 = vrot.lane.b32.xlu0 %v2555, 57
      %v2560 = vpop.permute.xlu0 %2559
      %2561 = vrot.lane.b32.xlu0 %v2556, 57
      %v2562 = vpop.permute.xlu0 %2561
      %2563 = vrot.lane.b32.xlu0 %v2557, 57
      %v2564 = vpop.permute.xlu0 %2563
      %2565 = vrot.lane.b32.xlu0 %v2558, 57
      %v2566 = vpop.permute.xlu0 %2565
      %vm2567 = vcmask 465920
      %v2568 = vsel %vm2567, %v2560, %v2562
      %v2569 = vsel %vm2567, %v2562, %v2564
      %v2570 = vsel %vm2567, %v2564, %v2566
      %v2572 = vsel %vm220, %v2551, 0
      %v2574 = vsel %vm224, %v2568, 0
      %v2576 = vsel %vm224, %v2569, 0
      %v2578 = vsel %vm224, %v2570, 0
      %2580 = vmatpush.msra.mxu0 0.0
      %2581 = vmatpush.msra.mxu0 0.0
      %2582 = vmatpush.msra.mxu0 0.0
      %2583 = vmatpush.msra.mxu0 0.0
      %2584 = vmatpush.msra.mxu0 0.0
      %2585 = vmatpush.msra.mxu0 0.0
      %2586 = vmatpush.msra.mxu0 0.0
      %2587 = vmatpush.msra.mxu0 0.0
      %2588 = vmatpush.msra.mxu0 0.0
      %2589 = vmatpush.msra.mxu0 0.0
      %2590 = vmatpush.msra.mxu0 0.0
      %2591 = vmatpush.msra.mxu0 0.0
      %2592 = vmatpush.msra.mxu0 0.0
      %2593 = vmatpush.msra.mxu0 0.0
      %2594 = vmatpush.msra.mxu0 0.0
      %2595 = vmatpush.msra.mxu0 %v2574
      %2596 = vmatmul.f32.gmra.mxu0 %v2572
      %v2597 = vpop.f32.mrf.mxu0
      %v2598 = vadd.f32 0.0, %v2597
      %2599 = vdwg.mxu0
      %2600 = vmatpush.msra.mxu0 0.0
      %2601 = vmatpush.msra.mxu0 0.0
      %2602 = vmatpush.msra.mxu0 0.0
      %2603 = vmatpush.msra.mxu0 0.0
      %2604 = vmatpush.msra.mxu0 0.0
      %2605 = vmatpush.msra.mxu0 0.0
      %2606 = vmatpush.msra.mxu0 0.0
      %2607 = vmatpush.msra.mxu0 0.0
      %2608 = vmatpush.msra.mxu0 0.0
      %2609 = vmatpush.msra.mxu0 0.0
      %2610 = vmatpush.msra.mxu0 0.0
      %2611 = vmatpush.msra.mxu0 0.0
      %2612 = vmatpush.msra.mxu0 0.0
      %2613 = vmatpush.msra.mxu0 0.0
      %2614 = vmatpush.msra.mxu0 0.0
      %2615 = vmatpush.msra.mxu0 %v2576
      %2616 = vmatmul.f32.gmra.mxu0 %v2572
      %v2617 = vpop.f32.mrf.mxu0
      %v2618 = vadd.f32 0.0, %v2617
      %2619 = vdwg.mxu0
      %2620 = vmatpush.msra.mxu0 0.0
      %2621 = vmatpush.msra.mxu0 0.0
      %2622 = vmatpush.msra.mxu0 0.0
      %2623 = vmatpush.msra.mxu0 0.0
      %2624 = vmatpush.msra.mxu0 0.0
      %2625 = vmatpush.msra.mxu0 0.0
      %2626 = vmatpush.msra.mxu0 0.0
      %2627 = vmatpush.msra.mxu0 0.0
      %2628 = vmatpush.msra.mxu0 0.0
      %2629 = vmatpush.msra.mxu0 0.0
      %2630 = vmatpush.msra.mxu0 0.0
      %2631 = vmatpush.msra.mxu0 0.0
      %2632 = vmatpush.msra.mxu0 0.0
      %2633 = vmatpush.msra.mxu0 0.0
      %2634 = vmatpush.msra.mxu0 0.0
      %2635 = vmatpush.msra.mxu0 %v2578
      %2636 = vmatmul.f32.gmra.mxu0 %v2572
      %v2637 = vpop.f32.mrf.mxu0
      %v2638 = vadd.f32 0.0, %v2637
      %2639 = vdwg.mxu0
      %v2640 = vadd.f32 %v2547, %v2598
      %v2641 = vadd.f32 %v2548, %v2618
      %v2642 = vadd.f32 %v2549, %v2638
      %s2643 = scalar_lea.vmem %s1, 216
      %v2644 = vld [vmem:[%s2643] sm:$0xff]
      %2645 = vst [vmem:[#allocation1] ss:$2 sm:$0xff] %v198
      %s2646 = scalar_lea.vmem [#allocation1], 16
      %2647 = vst [vmem:[%s2646] ss:$2 sm:$0xff] %v199
      %v2648 = vld.sshfl [vmem:[#allocation1] sm:$0xff pattern:$0x75316420]
      %v2649 = vld.sshfl [vmem:[#allocation1 + $0x8] sm:$0xff pattern:$0x75316420]
      %v2650 = vld.sshfl [vmem:[#allocation1 + $0x10] sm:$0xff pattern:$0x75316420]
      %v2651 = vld.sshfl [vmem:[#allocation1 + $0x18] sm:$0xff pattern:$0x75316420]
      %2652 = vrot.lane.b32.xlu0 %v2648, 56
      %v2653 = vpop.permute.xlu0 %2652
      %2654 = vrot.lane.b32.xlu0 %v2649, 56
      %v2655 = vpop.permute.xlu0 %2654
      %2656 = vrot.lane.b32.xlu0 %v2650, 56
      %v2657 = vpop.permute.xlu0 %2656
      %2658 = vrot.lane.b32.xlu0 %v2651, 56
      %v2659 = vpop.permute.xlu0 %2658
      %vm2660 = vcmask 457728
      %v2661 = vsel %vm2660, %v2653, %v2655
      %v2662 = vsel %vm2660, %v2655, %v2657
      %v2663 = vsel %vm2660, %v2657, %v2659
      %v2665 = vsel %vm220, %v2644, 0
      %v2667 = vsel %vm224, %v2661, 0
      %v2669 = vsel %vm224, %v2662, 0
      %v2671 = vsel %vm224, %v2663, 0
      %2673 = vmatpush.msra.mxu0 0.0
      %2674 = vmatpush.msra.mxu0 0.0
      %2675 = vmatpush.msra.mxu0 0.0
      %2676 = vmatpush.msra.mxu0 0.0
      %2677 = vmatpush.msra.mxu0 0.0
      %2678 = vmatpush.msra.mxu0 0.0
      %2679 = vmatpush.msra.mxu0 0.0
      %2680 = vmatpush.msra.mxu0 0.0
      %2681 = vmatpush.msra.mxu0 0.0
      %2682 = vmatpush.msra.mxu0 0.0
      %2683 = vmatpush.msra.mxu0 0.0
      %2684 = vmatpush.msra.mxu0 0.0
      %2685 = vmatpush.msra.mxu0 0.0
      %2686 = vmatpush.msra.mxu0 0.0
      %2687 = vmatpush.msra.mxu0 0.0
      %2688 = vmatpush.msra.mxu0 %v2667
      %2689 = vmatmul.f32.gmra.mxu0 %v2665
      %v2690 = vpop.f32.mrf.mxu0
      %v2691 = vadd.f32 0.0, %v2690
      %2692 = vdwg.mxu0
      %2693 = vmatpush.msra.mxu0 0.0
      %2694 = vmatpush.msra.mxu0 0.0
      %2695 = vmatpush.msra.mxu0 0.0
      %2696 = vmatpush.msra.mxu0 0.0
      %2697 = vmatpush.msra.mxu0 0.0
      %2698 = vmatpush.msra.mxu0 0.0
      %2699 = vmatpush.msra.mxu0 0.0
      %2700 = vmatpush.msra.mxu0 0.0
      %2701 = vmatpush.msra.mxu0 0.0
      %2702 = vmatpush.msra.mxu0 0.0
      %2703 = vmatpush.msra.mxu0 0.0
      %2704 = vmatpush.msra.mxu0 0.0
      %2705 = vmatpush.msra.mxu0 0.0
      %2706 = vmatpush.msra.mxu0 0.0
      %2707 = vmatpush.msra.mxu0 0.0
      %2708 = vmatpush.msra.mxu0 %v2669
      %2709 = vmatmul.f32.gmra.mxu0 %v2665
      %v2710 = vpop.f32.mrf.mxu0
      %v2711 = vadd.f32 0.0, %v2710
      %2712 = vdwg.mxu0
      %2713 = vmatpush.msra.mxu0 0.0
      %2714 = vmatpush.msra.mxu0 0.0
      %2715 = vmatpush.msra.mxu0 0.0
      %2716 = vmatpush.msra.mxu0 0.0
      %2717 = vmatpush.msra.mxu0 0.0
      %2718 = vmatpush.msra.mxu0 0.0
      %2719 = vmatpush.msra.mxu0 0.0
      %2720 = vmatpush.msra.mxu0 0.0
      %2721 = vmatpush.msra.mxu0 0.0
      %2722 = vmatpush.msra.mxu0 0.0
      %2723 = vmatpush.msra.mxu0 0.0
      %2724 = vmatpush.msra.mxu0 0.0
      %2725 = vmatpush.msra.mxu0 0.0
      %2726 = vmatpush.msra.mxu0 0.0
      %2727 = vmatpush.msra.mxu0 0.0
      %2728 = vmatpush.msra.mxu0 %v2671
      %2729 = vmatmul.f32.gmra.mxu0 %v2665
      %v2730 = vpop.f32.mrf.mxu0
      %v2731 = vadd.f32 0.0, %v2730
      %2732 = vdwg.mxu0
      %v2733 = vadd.f32 %v2640, %v2691
      %v2734 = vadd.f32 %v2641, %v2711
      %v2735 = vadd.f32 %v2642, %v2731
      %s2736 = scalar_lea.vmem %s1, 224
      %v2737 = vld [vmem:[%s2736] sm:$0xff]
      %2738 = vst [vmem:[#allocation1] ss:$2 sm:$0xff] %v198
      %s2739 = scalar_lea.vmem [#allocation1], 16
      %2740 = vst [vmem:[%s2739] ss:$2 sm:$0xff] %v199
      %v2741 = vld.sshfl [vmem:[#allocation1] sm:$0xff pattern:$0x75316420]
      %v2742 = vld.sshfl [vmem:[#allocation1 + $0x8] sm:$0xff pattern:$0x75316420]
      %v2743 = vld.sshfl [vmem:[#allocation1 + $0x10] sm:$0xff pattern:$0x75316420]
      %v2744 = vld.sshfl [vmem:[#allocation1 + $0x18] sm:$0xff pattern:$0x75316420]
      %2745 = vrot.lane.b32.xlu0 %v2741, 40
      %v2746 = vpop.permute.xlu0 %2745
      %2747 = vrot.lane.b32.xlu0 %v2742, 40
      %v2748 = vpop.permute.xlu0 %2747
      %2749 = vrot.lane.b32.xlu0 %v2743, 40
      %v2750 = vpop.permute.xlu0 %2749
      %2751 = vrot.lane.b32.xlu0 %v2744, 40
      %v2752 = vpop.permute.xlu0 %2751
      %vm2753 = vcmask 326656
      %v2754 = vsel %vm2753, %v2746, %v2748
      %v2755 = vsel %vm2753, %v2748, %v2750
      %v2756 = vsel %vm2753, %v2750, %v2752
      %v2758 = vsel %vm220, %v2737, 0
      %v2760 = vsel %vm224, %v2754, 0
      %v2762 = vsel %vm224, %v2755, 0
      %v2764 = vsel %vm224, %v2756, 0
      %2766 = vmatpush.msra.mxu0 0.0
      %2767 = vmatpush.msra.mxu0 0.0
      %2768 = vmatpush.msra.mxu0 0.0
      %2769 = vmatpush.msra.mxu0 0.0
      %2770 = vmatpush.msra.mxu0 0.0
      %2771 = vmatpush.msra.mxu0 0.0
      %2772 = vmatpush.msra.mxu0 0.0
      %2773 = vmatpush.msra.mxu0 0.0
      %2774 = vmatpush.msra.mxu0 0.0
      %2775 = vmatpush.msra.mxu0 0.0
      %2776 = vmatpush.msra.mxu0 0.0
      %2777 = vmatpush.msra.mxu0 0.0
      %2778 = vmatpush.msra.mxu0 0.0
      %2779 = vmatpush.msra.mxu0 0.0
      %2780 = vmatpush.msra.mxu0 0.0
      %2781 = vmatpush.msra.mxu0 %v2760
      %2782 = vmatmul.f32.gmra.mxu0 %v2758
      %v2783 = vpop.f32.mrf.mxu0
      %v2784 = vadd.f32 0.0, %v2783
      %2785 = vdwg.mxu0
      %2786 = vmatpush.msra.mxu0 0.0
      %2787 = vmatpush.msra.mxu0 0.0
      %2788 = vmatpush.msra.mxu0 0.0
      %2789 = vmatpush.msra.mxu0 0.0
      %2790 = vmatpush.msra.mxu0 0.0
      %2791 = vmatpush.msra.mxu0 0.0
      %2792 = vmatpush.msra.mxu0 0.0
      %2793 = vmatpush.msra.mxu0 0.0
      %2794 = vmatpush.msra.mxu0 0.0
      %2795 = vmatpush.msra.mxu0 0.0
      %2796 = vmatpush.msra.mxu0 0.0
      %2797 = vmatpush.msra.mxu0 0.0
      %2798 = vmatpush.msra.mxu0 0.0
      %2799 = vmatpush.msra.mxu0 0.0
      %2800 = vmatpush.msra.mxu0 0.0
      %2801 = vmatpush.msra.mxu0 %v2762
      %2802 = vmatmul.f32.gmra.mxu0 %v2758
      %v2803 = vpop.f32.mrf.mxu0
      %v2804 = vadd.f32 0.0, %v2803
      %2805 = vdwg.mxu0
      %2806 = vmatpush.msra.mxu0 0.0
      %2807 = vmatpush.msra.mxu0 0.0
      %2808 = vmatpush.msra.mxu0 0.0
      %2809 = vmatpush.msra.mxu0 0.0
      %2810 = vmatpush.msra.mxu0 0.0
      %2811 = vmatpush.msra.mxu0 0.0
      %2812 = vmatpush.msra.mxu0 0.0
      %2813 = vmatpush.msra.mxu0 0.0
      %2814 = vmatpush.msra.mxu0 0.0
      %2815 = vmatpush.msra.mxu0 0.0
      %2816 = vmatpush.msra.mxu0 0.0
      %2817 = vmatpush.msra.mxu0 0.0
      %2818 = vmatpush.msra.mxu0 0.0
      %2819 = vmatpush.msra.mxu0 0.0
      %2820 = vmatpush.msra.mxu0 0.0
      %2821 = vmatpush.msra.mxu0 %v2764
      %2822 = vmatmul.f32.gmra.mxu0 %v2758
      %v2823 = vpop.f32.mrf.mxu0
      %v2824 = vadd.f32 0.0, %v2823
      %2825 = vdwg.mxu0
      %v2826 = vadd.f32 %v2733, %v2784
      %v2827 = vadd.f32 %v2734, %v2804
      %v2828 = vadd.f32 %v2735, %v2824
      %s2829 = scalar_lea.vmem %s1, 232
      %v2830 = vld [vmem:[%s2829] sm:$0xff]
      %2831 = vst [vmem:[#allocation1] ss:$2 sm:$0xff] %v198
      %s2832 = scalar_lea.vmem [#allocation1], 16
      %2833 = vst [vmem:[%s2832] ss:$2 sm:$0xff] %v199
      %v2834 = vld.sshfl [vmem:[#allocation1] sm:$0xff pattern:$0x75316420]
      %v2835 = vld.sshfl [vmem:[#allocation1 + $0x8] sm:$0xff pattern:$0x75316420]
      %v2836 = vld.sshfl [vmem:[#allocation1 + $0x10] sm:$0xff pattern:$0x75316420]
      %v2837 = vld.sshfl [vmem:[#allocation1 + $0x18] sm:$0xff pattern:$0x75316420]
      %2838 = vrot.lane.b32.xlu0 %v2834, 39
      %v2839 = vpop.permute.xlu0 %2838
      %2840 = vrot.lane.b32.xlu0 %v2835, 39
      %v2841 = vpop.permute.xlu0 %2840
      %2842 = vrot.lane.b32.xlu0 %v2836, 39
      %v2843 = vpop.permute.xlu0 %2842
      %2844 = vrot.lane.b32.xlu0 %v2837, 39
      %v2845 = vpop.permute.xlu0 %2844
      %vm2846 = vcmask 318464
      %v2847 = vsel %vm2846, %v2839, %v2841
      %v2848 = vsel %vm2846, %v2841, %v2843
      %v2849 = vsel %vm2846, %v2843, %v2845
      %v2851 = vsel %vm220, %v2830, 0
      %v2853 = vsel %vm224, %v2847, 0
      %v2855 = vsel %vm224, %v2848, 0
      %v2857 = vsel %vm224, %v2849, 0
      %2859 = vmatpush.msra.mxu0 0.0
      %2860 = vmatpush.msra.mxu0 0.0
      %2861 = vmatpush.msra.mxu0 0.0
      %2862 = vmatpush.msra.mxu0 0.0
      %2863 = vmatpush.msra.mxu0 0.0
      %2864 = vmatpush.msra.mxu0 0.0
      %2865 = vmatpush.msra.mxu0 0.0
      %2866 = vmatpush.msra.mxu0 0.0
      %2867 = vmatpush.msra.mxu0 0.0
      %2868 = vmatpush.msra.mxu0 0.0
      %2869 = vmatpush.msra.mxu0 0.0
      %2870 = vmatpush.msra.mxu0 0.0
      %2871 = vmatpush.msra.mxu0 0.0
      %2872 = vmatpush.msra.mxu0 0.0
      %2873 = vmatpush.msra.mxu0 0.0
      %2874 = vmatpush.msra.mxu0 %v2853
      %2875 = vmatmul.f32.gmra.mxu0 %v2851
      %v2876 = vpop.f32.mrf.mxu0
      %v2877 = vadd.f32 0.0, %v2876
      %2878 = vdwg.mxu0
      %2879 = vmatpush.msra.mxu0 0.0
      %2880 = vmatpush.msra.mxu0 0.0
      %2881 = vmatpush.msra.mxu0 0.0
      %2882 = vmatpush.msra.mxu0 0.0
      %2883 = vmatpush.msra.mxu0 0.0
      %2884 = vmatpush.msra.mxu0 0.0
      %2885 = vmatpush.msra.mxu0 0.0
      %2886 = vmatpush.msra.mxu0 0.0
      %2887 = vmatpush.msra.mxu0 0.0
      %2888 = vmatpush.msra.mxu0 0.0
      %2889 = vmatpush.msra.mxu0 0.0
      %2890 = vmatpush.msra.mxu0 0.0
      %2891 = vmatpush.msra.mxu0 0.0
      %2892 = vmatpush.msra.mxu0 0.0
      %2893 = vmatpush.msra.mxu0 0.0
      %2894 = vmatpush.msra.mxu0 %v2855
      %2895 = vmatmul.f32.gmra.mxu0 %v2851
      %v2896 = vpop.f32.mrf.mxu0
      %v2897 = vadd.f32 0.0, %v2896
      %2898 = vdwg.mxu0
      %2899 = vmatpush.msra.mxu0 0.0
      %2900 = vmatpush.msra.mxu0 0.0
      %2901 = vmatpush.msra.mxu0 0.0
      %2902 = vmatpush.msra.mxu0 0.0
      %2903 = vmatpush.msra.mxu0 0.0
      %2904 = vmatpush.msra.mxu0 0.0
      %2905 = vmatpush.msra.mxu0 0.0
      %2906 = vmatpush.msra.mxu0 0.0
      %2907 = vmatpush.msra.mxu0 0.0
      %2908 = vmatpush.msra.mxu0 0.0
      %2909 = vmatpush.msra.mxu0 0.0
      %2910 = vmatpush.msra.mxu0 0.0
      %2911 = vmatpush.msra.mxu0 0.0
      %2912 = vmatpush.msra.mxu0 0.0
      %2913 = vmatpush.msra.mxu0 0.0
      %2914 = vmatpush.msra.mxu0 %v2857
      %2915 = vmatmul.f32.gmra.mxu0 %v2851
      %v2916 = vpop.f32.mrf.mxu0
      %v2917 = vadd.f32 0.0, %v2916
      %2918 = vdwg.mxu0
      %v2919 = vadd.f32 %v2826, %v2877
      %v2920 = vadd.f32 %v2827, %v2897
      %v2921 = vadd.f32 %v2828, %v2917
      %s2922 = scalar_lea.vmem %s1, 240
      %v2923 = vld [vmem:[%s2922] sm:$0xff]
      %2924 = vst [vmem:[#allocation1] ss:$2 sm:$0xff] %v198
      %s2925 = scalar_lea.vmem [#allocation1], 16
      %2926 = vst [vmem:[%s2925] ss:$2 sm:$0xff] %v199
      %v2927 = vld.sshfl [vmem:[#allocation1] sm:$0xff pattern:$0x75316420]
      %v2928 = vld.sshfl [vmem:[#allocation1 + $0x8] sm:$0xff pattern:$0x75316420]
      %v2929 = vld.sshfl [vmem:[#allocation1 + $0x10] sm:$0xff pattern:$0x75316420]
      %v2930 = vld.sshfl [vmem:[#allocation1 + $0x18] sm:$0xff pattern:$0x75316420]
      %2931 = vrot.lane.b32.xlu0 %v2927, 38
      %v2932 = vpop.permute.xlu0 %2931
      %2933 = vrot.lane.b32.xlu0 %v2928, 38
      %v2934 = vpop.permute.xlu0 %2933
      %2935 = vrot.lane.b32.xlu0 %v2929, 38
      %v2936 = vpop.permute.xlu0 %2935
      %2937 = vrot.lane.b32.xlu0 %v2930, 38
      %v2938 = vpop.permute.xlu0 %2937
      %vm2939 = vcmask 310272
      %v2940 = vsel %vm2939, %v2932, %v2934
      %v2941 = vsel %vm2939, %v2934, %v2936
      %v2942 = vsel %vm2939, %v2936, %v2938
      %v2944 = vsel %vm220, %v2923, 0
      %v2946 = vsel %vm224, %v2940, 0
      %v2948 = vsel %vm224, %v2941, 0
      %v2950 = vsel %vm224, %v2942, 0
      %2952 = vmatpush.msra.mxu0 0.0
      %2953 = vmatpush.msra.mxu0 0.0
      %2954 = vmatpush.msra.mxu0 0.0
      %2955 = vmatpush.msra.mxu0 0.0
      %2956 = vmatpush.msra.mxu0 0.0
      %2957 = vmatpush.msra.mxu0 0.0
      %2958 = vmatpush.msra.mxu0 0.0
      %2959 = vmatpush.msra.mxu0 0.0
      %2960 = vmatpush.msra.mxu0 0.0
      %2961 = vmatpush.msra.mxu0 0.0
      %2962 = vmatpush.msra.mxu0 0.0
      %2963 = vmatpush.msra.mxu0 0.0
      %2964 = vmatpush.msra.mxu0 0.0
      %2965 = vmatpush.msra.mxu0 0.0
      %2966 = vmatpush.msra.mxu0 0.0
      %2967 = vmatpush.msra.mxu0 %v2946
      %2968 = vmatmul.f32.gmra.mxu0 %v2944
      %v2969 = vpop.f32.mrf.mxu0
      %v2970 = vadd.f32 0.0, %v2969
      %2971 = vdwg.mxu0
      %2972 = vmatpush.msra.mxu0 0.0
      %2973 = vmatpush.msra.mxu0 0.0
      %2974 = vmatpush.msra.mxu0 0.0
      %2975 = vmatpush.msra.mxu0 0.0
      %2976 = vmatpush.msra.mxu0 0.0
      %2977 = vmatpush.msra.mxu0 0.0
      %2978 = vmatpush.msra.mxu0 0.0
      %2979 = vmatpush.msra.mxu0 0.0
      %2980 = vmatpush.msra.mxu0 0.0
      %2981 = vmatpush.msra.mxu0 0.0
      %2982 = vmatpush.msra.mxu0 0.0
      %2983 = vmatpush.msra.mxu0 0.0
      %2984 = vmatpush.msra.mxu0 0.0
      %2985 = vmatpush.msra.mxu0 0.0
      %2986 = vmatpush.msra.mxu0 0.0
      %2987 = vmatpush.msra.mxu0 %v2948
      %2988 = vmatmul.f32.gmra.mxu0 %v2944
      %v2989 = vpop.f32.mrf.mxu0
      %v2990 = vadd.f32 0.0, %v2989
      %2991 = vdwg.mxu0
      %2992 = vmatpush.msra.mxu0 0.0
      %2993 = vmatpush.msra.mxu0 0.0
      %2994 = vmatpush.msra.mxu0 0.0
      %2995 = vmatpush.msra.mxu0 0.0
      %2996 = vmatpush.msra.mxu0 0.0
      %2997 = vmatpush.msra.mxu0 0.0
      %2998 = vmatpush.msra.mxu0 0.0
      %2999 = vmatpush.msra.mxu0 0.0
      %3000 = vmatpush.msra.mxu0 0.0
      %3001 = vmatpush.msra.mxu0 0.0
      %3002 = vmatpush.msra.mxu0 0.0
      %3003 = vmatpush.msra.mxu0 0.0
      %3004 = vmatpush.msra.mxu0 0.0
      %3005 = vmatpush.msra.mxu0 0.0
      %3006 = vmatpush.msra.mxu0 0.0
      %3007 = vmatpush.msra.mxu0 %v2950
      %3008 = vmatmul.f32.gmra.mxu0 %v2944
      %v3009 = vpop.f32.mrf.mxu0
      %v3010 = vadd.f32 0.0, %v3009
      %3011 = vdwg.mxu0
      %v3012 = vadd.f32 %v2919, %v2970
      %v3013 = vadd.f32 %v2920, %v2990
      %v3014 = vadd.f32 %v2921, %v3010
      %s3015 = scalar_lea.vmem %s1, 248
      %v3016 = vld [vmem:[%s3015] sm:$0xff]
      %3017 = vst [vmem:[#allocation1] ss:$2 sm:$0xff] %v198
      %s3018 = scalar_lea.vmem [#allocation1], 16
      %3019 = vst [vmem:[%s3018] ss:$2 sm:$0xff] %v199
      %v3020 = vld.sshfl [vmem:[#allocation1] sm:$0xff pattern:$0x75316420]
      %v3021 = vld.sshfl [vmem:[#allocation1 + $0x8] sm:$0xff pattern:$0x75316420]
      %v3022 = vld.sshfl [vmem:[#allocation1 + $0x10] sm:$0xff pattern:$0x75316420]
      %v3023 = vld.sshfl [vmem:[#allocation1 + $0x18] sm:$0xff pattern:$0x75316420]
      %3024 = vrot.lane.b32.xlu0 %v3020, 37
      %v3025 = vpop.permute.xlu0 %3024
      %3026 = vrot.lane.b32.xlu0 %v3021, 37
      %v3027 = vpop.permute.xlu0 %3026
      %3028 = vrot.lane.b32.xlu0 %v3022, 37
      %v3029 = vpop.permute.xlu0 %3028
      %3030 = vrot.lane.b32.xlu0 %v3023, 37
      %v3031 = vpop.permute.xlu0 %3030
      %vm3032 = vcmask 302080
      %v3033 = vsel %vm3032, %v3025, %v3027
      %v3034 = vsel %vm3032, %v3027, %v3029
      %v3035 = vsel %vm3032, %v3029, %v3031
      %v3037 = vsel %vm220, %v3016, 0
      %v3039 = vsel %vm224, %v3033, 0
      %v3041 = vsel %vm224, %v3034, 0
      %v3043 = vsel %vm224, %v3035, 0
      %3045 = vmatpush.msra.mxu0 0.0
      %3046 = vmatpush.msra.mxu0 0.0
      %3047 = vmatpush.msra.mxu0 0.0
      %3048 = vmatpush.msra.mxu0 0.0
      %3049 = vmatpush.msra.mxu0 0.0
      %3050 = vmatpush.msra.mxu0 0.0
      %3051 = vmatpush.msra.mxu0 0.0
      %3052 = vmatpush.msra.mxu0 0.0
      %3053 = vmatpush.msra.mxu0 0.0
      %3054 = vmatpush.msra.mxu0 0.0
      %3055 = vmatpush.msra.mxu0 0.0
      %3056 = vmatpush.msra.mxu0 0.0
      %3057 = vmatpush.msra.mxu0 0.0
      %3058 = vmatpush.msra.mxu0 0.0
      %3059 = vmatpush.msra.mxu0 0.0
      %3060 = vmatpush.msra.mxu0 %v3039
      %3061 = vmatmul.f32.gmra.mxu0 %v3037
      %v3062 = vpop.f32.mrf.mxu0
      %v3063 = vadd.f32 0.0, %v3062
      %3064 = vdwg.mxu0
      %3065 = vmatpush.msra.mxu0 0.0
      %3066 = vmatpush.msra.mxu0 0.0
      %3067 = vmatpush.msra.mxu0 0.0
      %3068 = vmatpush.msra.mxu0 0.0
      %3069 = vmatpush.msra.mxu0 0.0
      %3070 = vmatpush.msra.mxu0 0.0
      %3071 = vmatpush.msra.mxu0 0.0
      %3072 = vmatpush.msra.mxu0 0.0
      %3073 = vmatpush.msra.mxu0 0.0
      %3074 = vmatpush.msra.mxu0 0.0
      %3075 = vmatpush.msra.mxu0 0.0
      %3076 = vmatpush.msra.mxu0 0.0
      %3077 = vmatpush.msra.mxu0 0.0
      %3078 = vmatpush.msra.mxu0 0.0
      %3079 = vmatpush.msra.mxu0 0.0
      %3080 = vmatpush.msra.mxu0 %v3041
      %3081 = vmatmul.f32.gmra.mxu0 %v3037
      %v3082 = vpop.f32.mrf.mxu0
      %v3083 = vadd.f32 0.0, %v3082
      %3084 = vdwg.mxu0
      %3085 = vmatpush.msra.mxu0 0.0
      %3086 = vmatpush.msra.mxu0 0.0
      %3087 = vmatpush.msra.mxu0 0.0
      %3088 = vmatpush.msra.mxu0 0.0
      %3089 = vmatpush.msra.mxu0 0.0
      %3090 = vmatpush.msra.mxu0 0.0
      %3091 = vmatpush.msra.mxu0 0.0
      %3092 = vmatpush.msra.mxu0 0.0
      %3093 = vmatpush.msra.mxu0 0.0
      %3094 = vmatpush.msra.mxu0 0.0
      %3095 = vmatpush.msra.mxu0 0.0
      %3096 = vmatpush.msra.mxu0 0.0
      %3097 = vmatpush.msra.mxu0 0.0
      %3098 = vmatpush.msra.mxu0 0.0
      %3099 = vmatpush.msra.mxu0 0.0
      %3100 = vmatpush.msra.mxu0 %v3043
      %3101 = vmatmul.f32.gmra.mxu0 %v3037
      %v3102 = vpop.f32.mrf.mxu0
      %v3103 = vadd.f32 0.0, %v3102
      %3104 = vdwg.mxu0
      %v3105 = vadd.f32 %v3012, %v3063
      %v3106 = vadd.f32 %v3013, %v3083
      %v3107 = vadd.f32 %v3014, %v3103
      %s3108 = scalar_lea.vmem %s1, 256
      %v3109 = vld [vmem:[%s3108] sm:$0xff]
      %3110 = vst [vmem:[#allocation1] ss:$2 sm:$0xff] %v198
      %s3111 = scalar_lea.vmem [#allocation1], 16
      %3112 = vst [vmem:[%s3111] ss:$2 sm:$0xff] %v199
      %v3113 = vld.sshfl [vmem:[#allocation1] sm:$0xff pattern:$0x75316420]
      %v3114 = vld.sshfl [vmem:[#allocation1 + $0x8] sm:$0xff pattern:$0x75316420]
      %v3115 = vld.sshfl [vmem:[#allocation1 + $0x10] sm:$0xff pattern:$0x75316420]
      %v3116 = vld.sshfl [vmem:[#allocation1 + $0x18] sm:$0xff pattern:$0x75316420]
      %3117 = vrot.lane.b32.xlu0 %v3113, 36
      %v3118 = vpop.permute.xlu0 %3117
      %3119 = vrot.lane.b32.xlu0 %v3114, 36
      %v3120 = vpop.permute.xlu0 %3119
      %3121 = vrot.lane.b32.xlu0 %v3115, 36
      %v3122 = vpop.permute.xlu0 %3121
      %3123 = vrot.lane.b32.xlu0 %v3116, 36
      %v3124 = vpop.permute.xlu0 %3123
      %vm3125 = vcmask 293888
      %v3126 = vsel %vm3125, %v3118, %v3120
      %v3127 = vsel %vm3125, %v3120, %v3122
      %v3128 = vsel %vm3125, %v3122, %v3124
      %v3130 = vsel %vm220, %v3109, 0
      %v3132 = vsel %vm224, %v3126, 0
      %v3134 = vsel %vm224, %v3127, 0
      %v3136 = vsel %vm224, %v3128, 0
      %3138 = vmatpush.msra.mxu0 0.0
      %3139 = vmatpush.msra.mxu0 0.0
      %3140 = vmatpush.msra.mxu0 0.0
      %3141 = vmatpush.msra.mxu0 0.0
      %3142 = vmatpush.msra.mxu0 0.0
      %3143 = vmatpush.msra.mxu0 0.0
      %3144 = vmatpush.msra.mxu0 0.0
      %3145 = vmatpush.msra.mxu0 0.0
      %3146 = vmatpush.msra.mxu0 0.0
      %3147 = vmatpush.msra.mxu0 0.0
      %3148 = vmatpush.msra.mxu0 0.0
      %3149 = vmatpush.msra.mxu0 0.0
      %3150 = vmatpush.msra.mxu0 0.0
      %3151 = vmatpush.msra.mxu0 0.0
      %3152 = vmatpush.msra.mxu0 0.0
      %3153 = vmatpush.msra.mxu0 %v3132
      %3154 = vmatmul.f32.gmra.mxu0 %v3130
      %v3155 = vpop.f32.mrf.mxu0
      %v3156 = vadd.f32 0.0, %v3155
      %3157 = vdwg.mxu0
      %3158 = vmatpush.msra.mxu0 0.0
      %3159 = vmatpush.msra.mxu0 0.0
      %3160 = vmatpush.msra.mxu0 0.0
      %3161 = vmatpush.msra.mxu0 0.0
      %3162 = vmatpush.msra.mxu0 0.0
      %3163 = vmatpush.msra.mxu0 0.0
      %3164 = vmatpush.msra.mxu0 0.0
      %3165 = vmatpush.msra.mxu0 0.0
      %3166 = vmatpush.msra.mxu0 0.0
      %3167 = vmatpush.msra.mxu0 0.0
      %3168 = vmatpush.msra.mxu0 0.0
      %3169 = vmatpush.msra.mxu0 0.0
      %3170 = vmatpush.msra.mxu0 0.0
      %3171 = vmatpush.msra.mxu0 0.0
      %3172 = vmatpush.msra.mxu0 0.0
      %3173 = vmatpush.msra.mxu0 %v3134
      %3174 = vmatmul.f32.gmra.mxu0 %v3130
      %v3175 = vpop.f32.mrf.mxu0
      %v3176 = vadd.f32 0.0, %v3175
      %3177 = vdwg.mxu0
      %3178 = vmatpush.msra.mxu0 0.0
      %3179 = vmatpush.msra.mxu0 0.0
      %3180 = vmatpush.msra.mxu0 0.0
      %3181 = vmatpush.msra.mxu0 0.0
      %3182 = vmatpush.msra.mxu0 0.0
      %3183 = vmatpush.msra.mxu0 0.0
      %3184 = vmatpush.msra.mxu0 0.0
      %3185 = vmatpush.msra.mxu0 0.0
      %3186 = vmatpush.msra.mxu0 0.0
      %3187 = vmatpush.msra.mxu0 0.0
      %3188 = vmatpush.msra.mxu0 0.0
      %3189 = vmatpush.msra.mxu0 0.0
      %3190 = vmatpush.msra.mxu0 0.0
      %3191 = vmatpush.msra.mxu0 0.0
      %3192 = vmatpush.msra.mxu0 0.0
      %3193 = vmatpush.msra.mxu0 %v3136
      %3194 = vmatmul.f32.gmra.mxu0 %v3130
      %v3195 = vpop.f32.mrf.mxu0
      %v3196 = vadd.f32 0.0, %v3195
      %3197 = vdwg.mxu0
      %v3198 = vadd.f32 %v3105, %v3156
      %v3199 = vadd.f32 %v3106, %v3176
      %v3200 = vadd.f32 %v3107, %v3196
      %s3201 = scalar_lea.vmem %s1, 264
      %v3202 = vld [vmem:[%s3201] sm:$0xff]
      %3203 = vst [vmem:[#allocation1] ss:$2 sm:$0xff] %v198
      %s3204 = scalar_lea.vmem [#allocation1], 16
      %3205 = vst [vmem:[%s3204] ss:$2 sm:$0xff] %v199
      %v3206 = vld.sshfl [vmem:[#allocation1] sm:$0xff pattern:$0x75316420]
      %v3207 = vld.sshfl [vmem:[#allocation1 + $0x8] sm:$0xff pattern:$0x75316420]
      %v3208 = vld.sshfl [vmem:[#allocation1 + $0x10] sm:$0xff pattern:$0x75316420]
      %v3209 = vld.sshfl [vmem:[#allocation1 + $0x18] sm:$0xff pattern:$0x75316420]
      %3210 = vrot.lane.b32.xlu0 %v3206, 35
      %v3211 = vpop.permute.xlu0 %3210
      %3212 = vrot.lane.b32.xlu0 %v3207, 35
      %v3213 = vpop.permute.xlu0 %3212
      %3214 = vrot.lane.b32.xlu0 %v3208, 35
      %v3215 = vpop.permute.xlu0 %3214
      %3216 = vrot.lane.b32.xlu0 %v3209, 35
      %v3217 = vpop.permute.xlu0 %3216
      %vm3218 = vcmask 285696
      %v3219 = vsel %vm3218, %v3211, %v3213
      %v3220 = vsel %vm3218, %v3213, %v3215
      %v3221 = vsel %vm3218, %v3215, %v3217
      %v3223 = vsel %vm220, %v3202, 0
      %v3225 = vsel %vm224, %v3219, 0
      %v3227 = vsel %vm224, %v3220, 0
      %v3229 = vsel %vm224, %v3221, 0
      %3231 = vmatpush.msra.mxu0 0.0
      %3232 = vmatpush.msra.mxu0 0.0
      %3233 = vmatpush.msra.mxu0 0.0
      %3234 = vmatpush.msra.mxu0 0.0
      %3235 = vmatpush.msra.mxu0 0.0
      %3236 = vmatpush.msra.mxu0 0.0
      %3237 = vmatpush.msra.mxu0 0.0
      %3238 = vmatpush.msra.mxu0 0.0
      %3239 = vmatpush.msra.mxu0 0.0
      %3240 = vmatpush.msra.mxu0 0.0
      %3241 = vmatpush.msra.mxu0 0.0
      %3242 = vmatpush.msra.mxu0 0.0
      %3243 = vmatpush.msra.mxu0 0.0
      %3244 = vmatpush.msra.mxu0 0.0
      %3245 = vmatpush.msra.mxu0 0.0
      %3246 = vmatpush.msra.mxu0 %v3225
      %3247 = vmatmul.f32.gmra.mxu0 %v3223
      %v3248 = vpop.f32.mrf.mxu0
      %v3249 = vadd.f32 0.0, %v3248
      %3250 = vdwg.mxu0
      %3251 = vmatpush.msra.mxu0 0.0
      %3252 = vmatpush.msra.mxu0 0.0
      %3253 = vmatpush.msra.mxu0 0.0
      %3254 = vmatpush.msra.mxu0 0.0
      %3255 = vmatpush.msra.mxu0 0.0
      %3256 = vmatpush.msra.mxu0 0.0
      %3257 = vmatpush.msra.mxu0 0.0
      %3258 = vmatpush.msra.mxu0 0.0
      %3259 = vmatpush.msra.mxu0 0.0
      %3260 = vmatpush.msra.mxu0 0.0
      %3261 = vmatpush.msra.mxu0 0.0
      %3262 = vmatpush.msra.mxu0 0.0
      %3263 = vmatpush.msra.mxu0 0.0
      %3264 = vmatpush.msra.mxu0 0.0
      %3265 = vmatpush.msra.mxu0 0.0
      %3266 = vmatpush.msra.mxu0 %v3227
      %3267 = vmatmul.f32.gmra.mxu0 %v3223
      %v3268 = vpop.f32.mrf.mxu0
      %v3269 = vadd.f32 0.0, %v3268
      %3270 = vdwg.mxu0
      %3271 = vmatpush.msra.mxu0 0.0
      %3272 = vmatpush.msra.mxu0 0.0
      %3273 = vmatpush.msra.mxu0 0.0
      %3274 = vmatpush.msra.mxu0 0.0
      %3275 = vmatpush.msra.mxu0 0.0
      %3276 = vmatpush.msra.mxu0 0.0
      %3277 = vmatpush.msra.mxu0 0.0
      %3278 = vmatpush.msra.mxu0 0.0
      %3279 = vmatpush.msra.mxu0 0.0
      %3280 = vmatpush.msra.mxu0 0.0
      %3281 = vmatpush.msra.mxu0 0.0
      %3282 = vmatpush.msra.mxu0 0.0
      %3283 = vmatpush.msra.mxu0 0.0
      %3284 = vmatpush.msra.mxu0 0.0
      %3285 = vmatpush.msra.mxu0 0.0
      %3286 = vmatpush.msra.mxu0 %v3229
      %3287 = vmatmul.f32.gmra.mxu0 %v3223
      %v3288 = vpop.f32.mrf.mxu0
      %v3289 = vadd.f32 0.0, %v3288
      %3290 = vdwg.mxu0
      %v3291 = vadd.f32 %v3198, %v3249
      %v3292 = vadd.f32 %v3199, %v3269
      %v3293 = vadd.f32 %v3200, %v3289
      %s3294 = scalar_lea.vmem %s1, 272
      %v3295 = vld [vmem:[%s3294] sm:$0xff]
      %3296 = vst [vmem:[#allocation1] ss:$2 sm:$0xff] %v198
      %s3297 = scalar_lea.vmem [#allocation1], 16
      %3298 = vst [vmem:[%s3297] ss:$2 sm:$0xff] %v199
      %v3299 = vld.sshfl [vmem:[#allocation1] sm:$0xff pattern:$0x75316420]
      %v3300 = vld.sshfl [vmem:[#allocation1 + $0x8] sm:$0xff pattern:$0x75316420]
      %v3301 = vld.sshfl [vmem:[#allocation1 + $0x10] sm:$0xff pattern:$0x75316420]
      %v3302 = vld.sshfl [vmem:[#allocation1 + $0x18] sm:$0xff pattern:$0x75316420]
      %3303 = vrot.lane.b32.xlu0 %v3299, 34
      %v3304 = vpop.permute.xlu0 %3303
      %3305 = vrot.lane.b32.xlu0 %v3300, 34
      %v3306 = vpop.permute.xlu0 %3305
      %3307 = vrot.lane.b32.xlu0 %v3301, 34
      %v3308 = vpop.permute.xlu0 %3307
      %3309 = vrot.lane.b32.xlu0 %v3302, 34
      %v3310 = vpop.permute.xlu0 %3309
      %vm3311 = vcmask 277504
      %v3312 = vsel %vm3311, %v3304, %v3306
      %v3313 = vsel %vm3311, %v3306, %v3308
      %v3314 = vsel %vm3311, %v3308, %v3310
      %v3316 = vsel %vm220, %v3295, 0
      %v3318 = vsel %vm224, %v3312, 0
      %v3320 = vsel %vm224, %v3313, 0
      %v3322 = vsel %vm224, %v3314, 0
      %3324 = vmatpush.msra.mxu0 0.0
      %3325 = vmatpush.msra.mxu0 0.0
      %3326 = vmatpush.msra.mxu0 0.0
      %3327 = vmatpush.msra.mxu0 0.0
      %3328 = vmatpush.msra.mxu0 0.0
      %3329 = vmatpush.msra.mxu0 0.0
      %3330 = vmatpush.msra.mxu0 0.0
      %3331 = vmatpush.msra.mxu0 0.0
      %3332 = vmatpush.msra.mxu0 0.0
      %3333 = vmatpush.msra.mxu0 0.0
      %3334 = vmatpush.msra.mxu0 0.0
      %3335 = vmatpush.msra.mxu0 0.0
      %3336 = vmatpush.msra.mxu0 0.0
      %3337 = vmatpush.msra.mxu0 0.0
      %3338 = vmatpush.msra.mxu0 0.0
      %3339 = vmatpush.msra.mxu0 %v3318
      %3340 = vmatmul.f32.gmra.mxu0 %v3316
      %v3341 = vpop.f32.mrf.mxu0
      %v3342 = vadd.f32 0.0, %v3341
      %3343 = vdwg.mxu0
      %3344 = vmatpush.msra.mxu0 0.0
      %3345 = vmatpush.msra.mxu0 0.0
      %3346 = vmatpush.msra.mxu0 0.0
      %3347 = vmatpush.msra.mxu0 0.0
      %3348 = vmatpush.msra.mxu0 0.0
      %3349 = vmatpush.msra.mxu0 0.0
      %3350 = vmatpush.msra.mxu0 0.0
      %3351 = vmatpush.msra.mxu0 0.0
      %3352 = vmatpush.msra.mxu0 0.0
      %3353 = vmatpush.msra.mxu0 0.0
      %3354 = vmatpush.msra.mxu0 0.0
      %3355 = vmatpush.msra.mxu0 0.0
      %3356 = vmatpush.msra.mxu0 0.0
      %3357 = vmatpush.msra.mxu0 0.0
      %3358 = vmatpush.msra.mxu0 0.0
      %3359 = vmatpush.msra.mxu0 %v3320
      %3360 = vmatmul.f32.gmra.mxu0 %v3316
      %v3361 = vpop.f32.mrf.mxu0
      %v3362 = vadd.f32 0.0, %v3361
      %3363 = vdwg.mxu0
      %3364 = vmatpush.msra.mxu0 0.0
      %3365 = vmatpush.msra.mxu0 0.0
      %3366 = vmatpush.msra.mxu0 0.0
      %3367 = vmatpush.msra.mxu0 0.0
      %3368 = vmatpush.msra.mxu0 0.0
      %3369 = vmatpush.msra.mxu0 0.0
      %3370 = vmatpush.msra.mxu0 0.0
      %3371 = vmatpush.msra.mxu0 0.0
      %3372 = vmatpush.msra.mxu0 0.0
      %3373 = vmatpush.msra.mxu0 0.0
      %3374 = vmatpush.msra.mxu0 0.0
      %3375 = vmatpush.msra.mxu0 0.0
      %3376 = vmatpush.msra.mxu0 0.0
      %3377 = vmatpush.msra.mxu0 0.0
      %3378 = vmatpush.msra.mxu0 0.0
      %3379 = vmatpush.msra.mxu0 %v3322
      %3380 = vmatmul.f32.gmra.mxu0 %v3316
      %v3381 = vpop.f32.mrf.mxu0
      %v3382 = vadd.f32 0.0, %v3381
      %3383 = vdwg.mxu0
      %v3384 = vadd.f32 %v3291, %v3342
      %v3385 = vadd.f32 %v3292, %v3362
      %v3386 = vadd.f32 %v3293, %v3382
      %s3387 = scalar_lea.vmem %s1, 280
      %v3388 = vld [vmem:[%s3387] sm:$0xff]
      %3389 = vst [vmem:[#allocation1] ss:$2 sm:$0xff] %v198
      %s3390 = scalar_lea.vmem [#allocation1], 16
      %3391 = vst [vmem:[%s3390] ss:$2 sm:$0xff] %v199
      %v3392 = vld.sshfl [vmem:[#allocation1] sm:$0xff pattern:$0x75316420]
      %v3393 = vld.sshfl [vmem:[#allocation1 + $0x8] sm:$0xff pattern:$0x75316420]
      %v3394 = vld.sshfl [vmem:[#allocation1 + $0x10] sm:$0xff pattern:$0x75316420]
      %v3395 = vld.sshfl [vmem:[#allocation1 + $0x18] sm:$0xff pattern:$0x75316420]
      %3396 = vrot.lane.b32.xlu0 %v3392, 18
      %v3397 = vpop.permute.xlu0 %3396
      %3398 = vrot.lane.b32.xlu0 %v3393, 18
      %v3399 = vpop.permute.xlu0 %3398
      %3400 = vrot.lane.b32.xlu0 %v3394, 18
      %v3401 = vpop.permute.xlu0 %3400
      %3402 = vrot.lane.b32.xlu0 %v3395, 18
      %v3403 = vpop.permute.xlu0 %3402
      %vm3404 = vcmask 146432
      %v3405 = vsel %vm3404, %v3397, %v3399
      %v3406 = vsel %vm3404, %v3399, %v3401
      %v3407 = vsel %vm3404, %v3401, %v3403
      %v3409 = vsel %vm220, %v3388, 0
      %v3411 = vsel %vm224, %v3405, 0
      %v3413 = vsel %vm224, %v3406, 0
      %v3415 = vsel %vm224, %v3407, 0
      %3417 = vmatpush.msra.mxu0 0.0
      %3418 = vmatpush.msra.mxu0 0.0
      %3419 = vmatpush.msra.mxu0 0.0
      %3420 = vmatpush.msra.mxu0 0.0
      %3421 = vmatpush.msra.mxu0 0.0
      %3422 = vmatpush.msra.mxu0 0.0
      %3423 = vmatpush.msra.mxu0 0.0
      %3424 = vmatpush.msra.mxu0 0.0
      %3425 = vmatpush.msra.mxu0 0.0
      %3426 = vmatpush.msra.mxu0 0.0
      %3427 = vmatpush.msra.mxu0 0.0
      %3428 = vmatpush.msra.mxu0 0.0
      %3429 = vmatpush.msra.mxu0 0.0
      %3430 = vmatpush.msra.mxu0 0.0
      %3431 = vmatpush.msra.mxu0 0.0
      %3432 = vmatpush.msra.mxu0 %v3411
      %3433 = vmatmul.f32.gmra.mxu0 %v3409
      %v3434 = vpop.f32.mrf.mxu0
      %v3435 = vadd.f32 0.0, %v3434
      %3436 = vdwg.mxu0
      %3437 = vmatpush.msra.mxu0 0.0
      %3438 = vmatpush.msra.mxu0 0.0
      %3439 = vmatpush.msra.mxu0 0.0
      %3440 = vmatpush.msra.mxu0 0.0
      %3441 = vmatpush.msra.mxu0 0.0
      %3442 = vmatpush.msra.mxu0 0.0
      %3443 = vmatpush.msra.mxu0 0.0
      %3444 = vmatpush.msra.mxu0 0.0
      %3445 = vmatpush.msra.mxu0 0.0
      %3446 = vmatpush.msra.mxu0 0.0
      %3447 = vmatpush.msra.mxu0 0.0
      %3448 = vmatpush.msra.mxu0 0.0
      %3449 = vmatpush.msra.mxu0 0.0
      %3450 = vmatpush.msra.mxu0 0.0
      %3451 = vmatpush.msra.mxu0 0.0
      %3452 = vmatpush.msra.mxu0 %v3413
      %3453 = vmatmul.f32.gmra.mxu0 %v3409
      %v3454 = vpop.f32.mrf.mxu0
      %v3455 = vadd.f32 0.0, %v3454
      %3456 = vdwg.mxu0
      %3457 = vmatpush.msra.mxu0 0.0
      %3458 = vmatpush.msra.mxu0 0.0
      %3459 = vmatpush.msra.mxu0 0.0
      %3460 = vmatpush.msra.mxu0 0.0
      %3461 = vmatpush.msra.mxu0 0.0
      %3462 = vmatpush.msra.mxu0 0.0
      %3463 = vmatpush.msra.mxu0 0.0
      %3464 = vmatpush.msra.mxu0 0.0
      %3465 = vmatpush.msra.mxu0 0.0
      %3466 = vmatpush.msra.mxu0 0.0
      %3467 = vmatpush.msra.mxu0 0.0
      %3468 = vmatpush.msra.mxu0 0.0
      %3469 = vmatpush.msra.mxu0 0.0
      %3470 = vmatpush.msra.mxu0 0.0
      %3471 = vmatpush.msra.mxu0 0.0
      %3472 = vmatpush.msra.mxu0 %v3415
      %3473 = vmatmul.f32.gmra.mxu0 %v3409
      %v3474 = vpop.f32.mrf.mxu0
      %v3475 = vadd.f32 0.0, %v3474
      %3476 = vdwg.mxu0
      %v3477 = vadd.f32 %v3384, %v3435
      %v3478 = vadd.f32 %v3385, %v3455
      %v3479 = vadd.f32 %v3386, %v3475
      %s3480 = scalar_lea.vmem %s1, 288
      %v3481 = vld [vmem:[%s3480] sm:$0xff]
      %3482 = vst [vmem:[#allocation1] ss:$2 sm:$0xff] %v198
      %s3483 = scalar_lea.vmem [#allocation1], 16
      %3484 = vst [vmem:[%s3483] ss:$2 sm:$0xff] %v199
      %v3485 = vld.sshfl [vmem:[#allocation1] sm:$0xff pattern:$0x75316420]
      %v3486 = vld.sshfl [vmem:[#allocation1 + $0x8] sm:$0xff pattern:$0x75316420]
      %v3487 = vld.sshfl [vmem:[#allocation1 + $0x10] sm:$0xff pattern:$0x75316420]
      %v3488 = vld.sshfl [vmem:[#allocation1 + $0x18] sm:$0xff pattern:$0x75316420]
      %3489 = vrot.lane.b32.xlu0 %v3485, 17
      %v3490 = vpop.permute.xlu0 %3489
      %3491 = vrot.lane.b32.xlu0 %v3486, 17
      %v3492 = vpop.permute.xlu0 %3491
      %3493 = vrot.lane.b32.xlu0 %v3487, 17
      %v3494 = vpop.permute.xlu0 %3493
      %3495 = vrot.lane.b32.xlu0 %v3488, 17
      %v3496 = vpop.permute.xlu0 %3495
      %vm3497 = vcmask 138240
      %v3498 = vsel %vm3497, %v3490, %v3492
      %v3499 = vsel %vm3497, %v3492, %v3494
      %v3500 = vsel %vm3497, %v3494, %v3496
      %v3502 = vsel %vm220, %v3481, 0
      %v3504 = vsel %vm224, %v3498, 0
      %v3506 = vsel %vm224, %v3499, 0
      %v3508 = vsel %vm224, %v3500, 0
      %3510 = vmatpush.msra.mxu0 0.0
      %3511 = vmatpush.msra.mxu0 0.0
      %3512 = vmatpush.msra.mxu0 0.0
      %3513 = vmatpush.msra.mxu0 0.0
      %3514 = vmatpush.msra.mxu0 0.0
      %3515 = vmatpush.msra.mxu0 0.0
      %3516 = vmatpush.msra.mxu0 0.0
      %3517 = vmatpush.msra.mxu0 0.0
      %3518 = vmatpush.msra.mxu0 0.0
      %3519 = vmatpush.msra.mxu0 0.0
      %3520 = vmatpush.msra.mxu0 0.0
      %3521 = vmatpush.msra.mxu0 0.0
      %3522 = vmatpush.msra.mxu0 0.0
      %3523 = vmatpush.msra.mxu0 0.0
      %3524 = vmatpush.msra.mxu0 0.0
      %3525 = vmatpush.msra.mxu0 %v3504
      %3526 = vmatmul.f32.gmra.mxu0 %v3502
      %v3527 = vpop.f32.mrf.mxu0
      %v3528 = vadd.f32 0.0, %v3527
      %3529 = vdwg.mxu0
      %3530 = vmatpush.msra.mxu0 0.0
      %3531 = vmatpush.msra.mxu0 0.0
      %3532 = vmatpush.msra.mxu0 0.0
      %3533 = vmatpush.msra.mxu0 0.0
      %3534 = vmatpush.msra.mxu0 0.0
      %3535 = vmatpush.msra.mxu0 0.0
      %3536 = vmatpush.msra.mxu0 0.0
      %3537 = vmatpush.msra.mxu0 0.0
      %3538 = vmatpush.msra.mxu0 0.0
      %3539 = vmatpush.msra.mxu0 0.0
      %3540 = vmatpush.msra.mxu0 0.0
      %3541 = vmatpush.msra.mxu0 0.0
      %3542 = vmatpush.msra.mxu0 0.0
      %3543 = vmatpush.msra.mxu0 0.0
      %3544 = vmatpush.msra.mxu0 0.0
      %3545 = vmatpush.msra.mxu0 %v3506
      %3546 = vmatmul.f32.gmra.mxu0 %v3502
      %v3547 = vpop.f32.mrf.mxu0
      %v3548 = vadd.f32 0.0, %v3547
      %3549 = vdwg.mxu0
      %3550 = vmatpush.msra.mxu0 0.0
      %3551 = vmatpush.msra.mxu0 0.0
      %3552 = vmatpush.msra.mxu0 0.0
      %3553 = vmatpush.msra.mxu0 0.0
      %3554 = vmatpush.msra.mxu0 0.0
      %3555 = vmatpush.msra.mxu0 0.0
      %3556 = vmatpush.msra.mxu0 0.0
      %3557 = vmatpush.msra.mxu0 0.0
      %3558 = vmatpush.msra.mxu0 0.0
      %3559 = vmatpush.msra.mxu0 0.0
      %3560 = vmatpush.msra.mxu0 0.0
      %3561 = vmatpush.msra.mxu0 0.0
      %3562 = vmatpush.msra.mxu0 0.0
      %3563 = vmatpush.msra.mxu0 0.0
      %3564 = vmatpush.msra.mxu0 0.0
      %3565 = vmatpush.msra.mxu0 %v3508
      %3566 = vmatmul.f32.gmra.mxu0 %v3502
      %v3567 = vpop.f32.mrf.mxu0
      %v3568 = vadd.f32 0.0, %v3567
      %3569 = vdwg.mxu0
      %v3570 = vadd.f32 %v3477, %v3528
      %v3571 = vadd.f32 %v3478, %v3548
      %v3572 = vadd.f32 %v3479, %v3568
      %s3573 = scalar_lea.vmem %s1, 296
      %v3574 = vld [vmem:[%s3573] sm:$0xff]
      %3575 = vst [vmem:[#allocation1] ss:$2 sm:$0xff] %v198
      %s3576 = scalar_lea.vmem [#allocation1], 16
      %3577 = vst [vmem:[%s3576] ss:$2 sm:$0xff] %v199
      %v3578 = vld.sshfl [vmem:[#allocation1] sm:$0xff pattern:$0x75316420]
      %v3579 = vld.sshfl [vmem:[#allocation1 + $0x8] sm:$0xff pattern:$0x75316420]
      %v3580 = vld.sshfl [vmem:[#allocation1 + $0x10] sm:$0xff pattern:$0x75316420]
      %v3581 = vld.sshfl [vmem:[#allocation1 + $0x18] sm:$0xff pattern:$0x75316420]
      %3582 = vrot.lane.b32.xlu0 %v3578, 16
      %v3583 = vpop.permute.xlu0 %3582
      %3584 = vrot.lane.b32.xlu0 %v3579, 16
      %v3585 = vpop.permute.xlu0 %3584
      %3586 = vrot.lane.b32.xlu0 %v3580, 16
      %v3587 = vpop.permute.xlu0 %3586
      %3588 = vrot.lane.b32.xlu0 %v3581, 16
      %v3589 = vpop.permute.xlu0 %3588
      %vm3590 = vcmask 130048
      %v3591 = vsel %vm3590, %v3583, %v3585
      %v3592 = vsel %vm3590, %v3585, %v3587
      %v3593 = vsel %vm3590, %v3587, %v3589
      %v3595 = vsel %vm220, %v3574, 0
      %v3597 = vsel %vm224, %v3591, 0
      %v3599 = vsel %vm224, %v3592, 0
      %v3601 = vsel %vm224, %v3593, 0
      %3603 = vmatpush.msra.mxu0 0.0
      %3604 = vmatpush.msra.mxu0 0.0
      %3605 = vmatpush.msra.mxu0 0.0
      %3606 = vmatpush.msra.mxu0 0.0
      %3607 = vmatpush.msra.mxu0 0.0
      %3608 = vmatpush.msra.mxu0 0.0
      %3609 = vmatpush.msra.mxu0 0.0
      %3610 = vmatpush.msra.mxu0 0.0
      %3611 = vmatpush.msra.mxu0 0.0
      %3612 = vmatpush.msra.mxu0 0.0
      %3613 = vmatpush.msra.mxu0 0.0
      %3614 = vmatpush.msra.mxu0 0.0
      %3615 = vmatpush.msra.mxu0 0.0
      %3616 = vmatpush.msra.mxu0 0.0
      %3617 = vmatpush.msra.mxu0 0.0
      %3618 = vmatpush.msra.mxu0 %v3597
      %3619 = vmatmul.f32.gmra.mxu0 %v3595
      %v3620 = vpop.f32.mrf.mxu0
      %v3621 = vadd.f32 0.0, %v3620
      %3622 = vdwg.mxu0
      %3623 = vmatpush.msra.mxu0 0.0
      %3624 = vmatpush.msra.mxu0 0.0
      %3625 = vmatpush.msra.mxu0 0.0
      %3626 = vmatpush.msra.mxu0 0.0
      %3627 = vmatpush.msra.mxu0 0.0
      %3628 = vmatpush.msra.mxu0 0.0
      %3629 = vmatpush.msra.mxu0 0.0
      %3630 = vmatpush.msra.mxu0 0.0
      %3631 = vmatpush.msra.mxu0 0.0
      %3632 = vmatpush.msra.mxu0 0.0
      %3633 = vmatpush.msra.mxu0 0.0
      %3634 = vmatpush.msra.mxu0 0.0
      %3635 = vmatpush.msra.mxu0 0.0
      %3636 = vmatpush.msra.mxu0 0.0
      %3637 = vmatpush.msra.mxu0 0.0
      %3638 = vmatpush.msra.mxu0 %v3599
      %3639 = vmatmul.f32.gmra.mxu0 %v3595
      %v3640 = vpop.f32.mrf.mxu0
      %v3641 = vadd.f32 0.0, %v3640
      %3642 = vdwg.mxu0
      %3643 = vmatpush.msra.mxu0 0.0
      %3644 = vmatpush.msra.mxu0 0.0
      %3645 = vmatpush.msra.mxu0 0.0
      %3646 = vmatpush.msra.mxu0 0.0
      %3647 = vmatpush.msra.mxu0 0.0
      %3648 = vmatpush.msra.mxu0 0.0
      %3649 = vmatpush.msra.mxu0 0.0
      %3650 = vmatpush.msra.mxu0 0.0
      %3651 = vmatpush.msra.mxu0 0.0
      %3652 = vmatpush.msra.mxu0 0.0
      %3653 = vmatpush.msra.mxu0 0.0
      %3654 = vmatpush.msra.mxu0 0.0
      %3655 = vmatpush.msra.mxu0 0.0
      %3656 = vmatpush.msra.mxu0 0.0
      %3657 = vmatpush.msra.mxu0 0.0
      %3658 = vmatpush.msra.mxu0 %v3601
      %3659 = vmatmul.f32.gmra.mxu0 %v3595
      %v3660 = vpop.f32.mrf.mxu0
      %v3661 = vadd.f32 0.0, %v3660
      %3662 = vdwg.mxu0
      %v3663 = vadd.f32 %v3570, %v3621
      %v3664 = vadd.f32 %v3571, %v3641
      %v3665 = vadd.f32 %v3572, %v3661
      %s3666 = scalar_lea.vmem %s1, 304
      %v3667 = vld [vmem:[%s3666] sm:$0xff]
      %3668 = vst [vmem:[#allocation1] ss:$2 sm:$0xff] %v198
      %s3669 = scalar_lea.vmem [#allocation1], 16
      %3670 = vst [vmem:[%s3669] ss:$2 sm:$0xff] %v199
      %v3671 = vld.sshfl [vmem:[#allocation1] sm:$0xff pattern:$0x75316420]
      %v3672 = vld.sshfl [vmem:[#allocation1 + $0x8] sm:$0xff pattern:$0x75316420]
      %v3673 = vld.sshfl [vmem:[#allocation1 + $0x10] sm:$0xff pattern:$0x75316420]
      %v3674 = vld.sshfl [vmem:[#allocation1 + $0x18] sm:$0xff pattern:$0x75316420]
      %3675 = vrot.lane.b32.xlu0 %v3671, 15
      %v3676 = vpop.permute.xlu0 %3675
      %3677 = vrot.lane.b32.xlu0 %v3672, 15
      %v3678 = vpop.permute.xlu0 %3677
      %3679 = vrot.lane.b32.xlu0 %v3673, 15
      %v3680 = vpop.permute.xlu0 %3679
      %3681 = vrot.lane.b32.xlu0 %v3674, 15
      %v3682 = vpop.permute.xlu0 %3681
      %vm3683 = vcmask 121856
      %v3684 = vsel %vm3683, %v3676, %v3678
      %v3685 = vsel %vm3683, %v3678, %v3680
      %v3686 = vsel %vm3683, %v3680, %v3682
      %v3688 = vsel %vm220, %v3667, 0
      %v3690 = vsel %vm224, %v3684, 0
      %v3692 = vsel %vm224, %v3685, 0
      %v3694 = vsel %vm224, %v3686, 0
      %3696 = vmatpush.msra.mxu0 0.0
      %3697 = vmatpush.msra.mxu0 0.0
      %3698 = vmatpush.msra.mxu0 0.0
      %3699 = vmatpush.msra.mxu0 0.0
      %3700 = vmatpush.msra.mxu0 0.0
      %3701 = vmatpush.msra.mxu0 0.0
      %3702 = vmatpush.msra.mxu0 0.0
      %3703 = vmatpush.msra.mxu0 0.0
      %3704 = vmatpush.msra.mxu0 0.0
      %3705 = vmatpush.msra.mxu0 0.0
      %3706 = vmatpush.msra.mxu0 0.0
      %3707 = vmatpush.msra.mxu0 0.0
      %3708 = vmatpush.msra.mxu0 0.0
      %3709 = vmatpush.msra.mxu0 0.0
      %3710 = vmatpush.msra.mxu0 0.0
      %3711 = vmatpush.msra.mxu0 %v3690
      %3712 = vmatmul.f32.gmra.mxu0 %v3688
      %v3713 = vpop.f32.mrf.mxu0
      %v3714 = vadd.f32 0.0, %v3713
      %3715 = vdwg.mxu0
      %3716 = vmatpush.msra.mxu0 0.0
      %3717 = vmatpush.msra.mxu0 0.0
      %3718 = vmatpush.msra.mxu0 0.0
      %3719 = vmatpush.msra.mxu0 0.0
      %3720 = vmatpush.msra.mxu0 0.0
      %3721 = vmatpush.msra.mxu0 0.0
      %3722 = vmatpush.msra.mxu0 0.0
      %3723 = vmatpush.msra.mxu0 0.0
      %3724 = vmatpush.msra.mxu0 0.0
      %3725 = vmatpush.msra.mxu0 0.0
      %3726 = vmatpush.msra.mxu0 0.0
      %3727 = vmatpush.msra.mxu0 0.0
      %3728 = vmatpush.msra.mxu0 0.0
      %3729 = vmatpush.msra.mxu0 0.0
      %3730 = vmatpush.msra.mxu0 0.0
      %3731 = vmatpush.msra.mxu0 %v3692
      %3732 = vmatmul.f32.gmra.mxu0 %v3688
      %v3733 = vpop.f32.mrf.mxu0
      %v3734 = vadd.f32 0.0, %v3733
      %3735 = vdwg.mxu0
      %3736 = vmatpush.msra.mxu0 0.0
      %3737 = vmatpush.msra.mxu0 0.0
      %3738 = vmatpush.msra.mxu0 0.0
      %3739 = vmatpush.msra.mxu0 0.0
      %3740 = vmatpush.msra.mxu0 0.0
      %3741 = vmatpush.msra.mxu0 0.0
      %3742 = vmatpush.msra.mxu0 0.0
      %3743 = vmatpush.msra.mxu0 0.0
      %3744 = vmatpush.msra.mxu0 0.0
      %3745 = vmatpush.msra.mxu0 0.0
      %3746 = vmatpush.msra.mxu0 0.0
      %3747 = vmatpush.msra.mxu0 0.0
      %3748 = vmatpush.msra.mxu0 0.0
      %3749 = vmatpush.msra.mxu0 0.0
      %3750 = vmatpush.msra.mxu0 0.0
      %3751 = vmatpush.msra.mxu0 %v3694
      %3752 = vmatmul.f32.gmra.mxu0 %v3688
      %v3753 = vpop.f32.mrf.mxu0
      %v3754 = vadd.f32 0.0, %v3753
      %3755 = vdwg.mxu0
      %v3756 = vadd.f32 %v3663, %v3714
      %v3757 = vadd.f32 %v3664, %v3734
      %v3758 = vadd.f32 %v3665, %v3754
      %s3759 = scalar_lea.vmem %s1, 312
      %v3760 = vld [vmem:[%s3759] sm:$0xff]
      %3761 = vst [vmem:[#allocation1] ss:$2 sm:$0xff] %v198
      %s3762 = scalar_lea.vmem [#allocation1], 16
      %3763 = vst [vmem:[%s3762] ss:$2 sm:$0xff] %v199
      %v3764 = vld.sshfl [vmem:[#allocation1] sm:$0xff pattern:$0x75316420]
      %v3765 = vld.sshfl [vmem:[#allocation1 + $0x8] sm:$0xff pattern:$0x75316420]
      %v3766 = vld.sshfl [vmem:[#allocation1 + $0x10] sm:$0xff pattern:$0x75316420]
      %v3767 = vld.sshfl [vmem:[#allocation1 + $0x18] sm:$0xff pattern:$0x75316420]
      %3768 = vrot.lane.b32.xlu0 %v3764, 14
      %v3769 = vpop.permute.xlu0 %3768
      %3770 = vrot.lane.b32.xlu0 %v3765, 14
      %v3771 = vpop.permute.xlu0 %3770
      %3772 = vrot.lane.b32.xlu0 %v3766, 14
      %v3773 = vpop.permute.xlu0 %3772
      %3774 = vrot.lane.b32.xlu0 %v3767, 14
      %v3775 = vpop.permute.xlu0 %3774
      %vm3776 = vcmask 113664
      %v3777 = vsel %vm3776, %v3769, %v3771
      %v3778 = vsel %vm3776, %v3771, %v3773
      %v3779 = vsel %vm3776, %v3773, %v3775
      %v3781 = vsel %vm220, %v3760, 0
      %v3783 = vsel %vm224, %v3777, 0
      %v3785 = vsel %vm224, %v3778, 0
      %v3787 = vsel %vm224, %v3779, 0
      %3789 = vmatpush.msra.mxu0 0.0
      %3790 = vmatpush.msra.mxu0 0.0
      %3791 = vmatpush.msra.mxu0 0.0
      %3792 = vmatpush.msra.mxu0 0.0
      %3793 = vmatpush.msra.mxu0 0.0
      %3794 = vmatpush.msra.mxu0 0.0
      %3795 = vmatpush.msra.mxu0 0.0
      %3796 = vmatpush.msra.mxu0 0.0
      %3797 = vmatpush.msra.mxu0 0.0
      %3798 = vmatpush.msra.mxu0 0.0
      %3799 = vmatpush.msra.mxu0 0.0
      %3800 = vmatpush.msra.mxu0 0.0
      %3801 = vmatpush.msra.mxu0 0.0
      %3802 = vmatpush.msra.mxu0 0.0
      %3803 = vmatpush.msra.mxu0 0.0
      %3804 = vmatpush.msra.mxu0 %v3783
      %3805 = vmatmul.f32.gmra.mxu0 %v3781
      %v3806 = vpop.f32.mrf.mxu0
      %v3807 = vadd.f32 0.0, %v3806
      %3808 = vdwg.mxu0
      %3809 = vmatpush.msra.mxu0 0.0
      %3810 = vmatpush.msra.mxu0 0.0
      %3811 = vmatpush.msra.mxu0 0.0
      %3812 = vmatpush.msra.mxu0 0.0
      %3813 = vmatpush.msra.mxu0 0.0
      %3814 = vmatpush.msra.mxu0 0.0
      %3815 = vmatpush.msra.mxu0 0.0
      %3816 = vmatpush.msra.mxu0 0.0
      %3817 = vmatpush.msra.mxu0 0.0
      %3818 = vmatpush.msra.mxu0 0.0
      %3819 = vmatpush.msra.mxu0 0.0
      %3820 = vmatpush.msra.mxu0 0.0
      %3821 = vmatpush.msra.mxu0 0.0
      %3822 = vmatpush.msra.mxu0 0.0
      %3823 = vmatpush.msra.mxu0 0.0
      %3824 = vmatpush.msra.mxu0 %v3785
      %3825 = vmatmul.f32.gmra.mxu0 %v3781
      %v3826 = vpop.f32.mrf.mxu0
      %v3827 = vadd.f32 0.0, %v3826
      %3828 = vdwg.mxu0
      %3829 = vmatpush.msra.mxu0 0.0
      %3830 = vmatpush.msra.mxu0 0.0
      %3831 = vmatpush.msra.mxu0 0.0
      %3832 = vmatpush.msra.mxu0 0.0
      %3833 = vmatpush.msra.mxu0 0.0
      %3834 = vmatpush.msra.mxu0 0.0
      %3835 = vmatpush.msra.mxu0 0.0
      %3836 = vmatpush.msra.mxu0 0.0
      %3837 = vmatpush.msra.mxu0 0.0
      %3838 = vmatpush.msra.mxu0 0.0
      %3839 = vmatpush.msra.mxu0 0.0
      %3840 = vmatpush.msra.mxu0 0.0
      %3841 = vmatpush.msra.mxu0 0.0
      %3842 = vmatpush.msra.mxu0 0.0
      %3843 = vmatpush.msra.mxu0 0.0
      %3844 = vmatpush.msra.mxu0 %v3787
      %3845 = vmatmul.f32.gmra.mxu0 %v3781
      %v3846 = vpop.f32.mrf.mxu0
      %v3847 = vadd.f32 0.0, %v3846
      %3848 = vdwg.mxu0
      %v3849 = vadd.f32 %v3756, %v3807
      %v3850 = vadd.f32 %v3757, %v3827
      %v3851 = vadd.f32 %v3758, %v3847
      %s3852 = scalar_lea.vmem %s1, 320
      %v3853 = vld [vmem:[%s3852] sm:$0xff]
      %3854 = vst [vmem:[#allocation1] ss:$2 sm:$0xff] %v198
      %s3855 = scalar_lea.vmem [#allocation1], 16
      %3856 = vst [vmem:[%s3855] ss:$2 sm:$0xff] %v199
      %v3857 = vld.sshfl [vmem:[#allocation1] sm:$0xff pattern:$0x75316420]
      %v3858 = vld.sshfl [vmem:[#allocation1 + $0x8] sm:$0xff pattern:$0x75316420]
      %v3859 = vld.sshfl [vmem:[#allocation1 + $0x10] sm:$0xff pattern:$0x75316420]
      %v3860 = vld.sshfl [vmem:[#allocation1 + $0x18] sm:$0xff pattern:$0x75316420]
      %3861 = vrot.lane.b32.xlu0 %v3857, 13
      %v3862 = vpop.permute.xlu0 %3861
      %3863 = vrot.lane.b32.xlu0 %v3858, 13
      %v3864 = vpop.permute.xlu0 %3863
      %3865 = vrot.lane.b32.xlu0 %v3859, 13
      %v3866 = vpop.permute.xlu0 %3865
      %3867 = vrot.lane.b32.xlu0 %v3860, 13
      %v3868 = vpop.permute.xlu0 %3867
      %vm3869 = vcmask 105472
      %v3870 = vsel %vm3869, %v3862, %v3864
      %v3871 = vsel %vm3869, %v3864, %v3866
      %v3872 = vsel %vm3869, %v3866, %v3868
      %v3874 = vsel %vm220, %v3853, 0
      %v3876 = vsel %vm224, %v3870, 0
      %v3878 = vsel %vm224, %v3871, 0
      %v3880 = vsel %vm224, %v3872, 0
      %3882 = vmatpush.msra.mxu0 0.0
      %3883 = vmatpush.msra.mxu0 0.0
      %3884 = vmatpush.msra.mxu0 0.0
      %3885 = vmatpush.msra.mxu0 0.0
      %3886 = vmatpush.msra.mxu0 0.0
      %3887 = vmatpush.msra.mxu0 0.0
      %3888 = vmatpush.msra.mxu0 0.0
      %3889 = vmatpush.msra.mxu0 0.0
      %3890 = vmatpush.msra.mxu0 0.0
      %3891 = vmatpush.msra.mxu0 0.0
      %3892 = vmatpush.msra.mxu0 0.0
      %3893 = vmatpush.msra.mxu0 0.0
      %3894 = vmatpush.msra.mxu0 0.0
      %3895 = vmatpush.msra.mxu0 0.0
      %3896 = vmatpush.msra.mxu0 0.0
      %3897 = vmatpush.msra.mxu0 %v3876
      %3898 = vmatmul.f32.gmra.mxu0 %v3874
      %v3899 = vpop.f32.mrf.mxu0
      %v3900 = vadd.f32 0.0, %v3899
      %3901 = vdwg.mxu0
      %3902 = vmatpush.msra.mxu0 0.0
      %3903 = vmatpush.msra.mxu0 0.0
      %3904 = vmatpush.msra.mxu0 0.0
      %3905 = vmatpush.msra.mxu0 0.0
      %3906 = vmatpush.msra.mxu0 0.0
      %3907 = vmatpush.msra.mxu0 0.0
      %3908 = vmatpush.msra.mxu0 0.0
      %3909 = vmatpush.msra.mxu0 0.0
      %3910 = vmatpush.msra.mxu0 0.0
      %3911 = vmatpush.msra.mxu0 0.0
      %3912 = vmatpush.msra.mxu0 0.0
      %3913 = vmatpush.msra.mxu0 0.0
      %3914 = vmatpush.msra.mxu0 0.0
      %3915 = vmatpush.msra.mxu0 0.0
      %3916 = vmatpush.msra.mxu0 0.0
      %3917 = vmatpush.msra.mxu0 %v3878
      %3918 = vmatmul.f32.gmra.mxu0 %v3874
      %v3919 = vpop.f32.mrf.mxu0
      %v3920 = vadd.f32 0.0, %v3919
      %3921 = vdwg.mxu0
      %3922 = vmatpush.msra.mxu0 0.0
      %3923 = vmatpush.msra.mxu0 0.0
      %3924 = vmatpush.msra.mxu0 0.0
      %3925 = vmatpush.msra.mxu0 0.0
      %3926 = vmatpush.msra.mxu0 0.0
      %3927 = vmatpush.msra.mxu0 0.0
      %3928 = vmatpush.msra.mxu0 0.0
      %3929 = vmatpush.msra.mxu0 0.0
      %3930 = vmatpush.msra.mxu0 0.0
      %3931 = vmatpush.msra.mxu0 0.0
      %3932 = vmatpush.msra.mxu0 0.0
      %3933 = vmatpush.msra.mxu0 0.0
      %3934 = vmatpush.msra.mxu0 0.0
      %3935 = vmatpush.msra.mxu0 0.0
      %3936 = vmatpush.msra.mxu0 0.0
      %3937 = vmatpush.msra.mxu0 %v3880
      %3938 = vmatmul.f32.gmra.mxu0 %v3874
      %v3939 = vpop.f32.mrf.mxu0
      %v3940 = vadd.f32 0.0, %v3939
      %3941 = vdwg.mxu0
      %v3942 = vadd.f32 %v3849, %v3900
      %v3943 = vadd.f32 %v3850, %v3920
      %v3944 = vadd.f32 %v3851, %v3940
      %s3945 = scalar_lea.vmem %s1, 328
      %v3946 = vld [vmem:[%s3945] sm:$0xff]
      %3947 = vst [vmem:[#allocation1] ss:$2 sm:$0xff] %v198
      %s3948 = scalar_lea.vmem [#allocation1], 16
      %3949 = vst [vmem:[%s3948] ss:$2 sm:$0xff] %v199
      %v3950 = vld.sshfl [vmem:[#allocation1] sm:$0xff pattern:$0x75316420]
      %v3951 = vld.sshfl [vmem:[#allocation1 + $0x8] sm:$0xff pattern:$0x75316420]
      %v3952 = vld.sshfl [vmem:[#allocation1 + $0x10] sm:$0xff pattern:$0x75316420]
      %v3953 = vld.sshfl [vmem:[#allocation1 + $0x18] sm:$0xff pattern:$0x75316420]
      %3954 = vrot.lane.b32.xlu0 %v3950, 12
      %v3955 = vpop.permute.xlu0 %3954
      %3956 = vrot.lane.b32.xlu0 %v3951, 12
      %v3957 = vpop.permute.xlu0 %3956
      %3958 = vrot.lane.b32.xlu0 %v3952, 12
      %v3959 = vpop.permute.xlu0 %3958
      %3960 = vrot.lane.b32.xlu0 %v3953, 12
      %v3961 = vpop.permute.xlu0 %3960
      %vm3962 = vcmask 97280
      %v3963 = vsel %vm3962, %v3955, %v3957
      %v3964 = vsel %vm3962, %v3957, %v3959
      %v3965 = vsel %vm3962, %v3959, %v3961
      %v3967 = vsel %vm220, %v3946, 0
      %v3969 = vsel %vm224, %v3963, 0
      %v3971 = vsel %vm224, %v3964, 0
      %v3973 = vsel %vm224, %v3965, 0
      %3975 = vmatpush.msra.mxu0 0.0
      %3976 = vmatpush.msra.mxu0 0.0
      %3977 = vmatpush.msra.mxu0 0.0
      %3978 = vmatpush.msra.mxu0 0.0
      %3979 = vmatpush.msra.mxu0 0.0
      %3980 = vmatpush.msra.mxu0 0.0
      %3981 = vmatpush.msra.mxu0 0.0
      %3982 = vmatpush.msra.mxu0 0.0
      %3983 = vmatpush.msra.mxu0 0.0
      %3984 = vmatpush.msra.mxu0 0.0
      %3985 = vmatpush.msra.mxu0 0.0
      %3986 = vmatpush.msra.mxu0 0.0
      %3987 = vmatpush.msra.mxu0 0.0
      %3988 = vmatpush.msra.mxu0 0.0
      %3989 = vmatpush.msra.mxu0 0.0
      %3990 = vmatpush.msra.mxu0 %v3969
      %3991 = vmatmul.f32.gmra.mxu0 %v3967
      %v3992 = vpop.f32.mrf.mxu0
      %v3993 = vadd.f32 0.0, %v3992
      %3994 = vdwg.mxu0
      %3995 = vmatpush.msra.mxu0 0.0
      %3996 = vmatpush.msra.mxu0 0.0
      %3997 = vmatpush.msra.mxu0 0.0
      %3998 = vmatpush.msra.mxu0 0.0
      %3999 = vmatpush.msra.mxu0 0.0
      %4000 = vmatpush.msra.mxu0 0.0
      %4001 = vmatpush.msra.mxu0 0.0
      %4002 = vmatpush.msra.mxu0 0.0
      %4003 = vmatpush.msra.mxu0 0.0
      %4004 = vmatpush.msra.mxu0 0.0
      %4005 = vmatpush.msra.mxu0 0.0
      %4006 = vmatpush.msra.mxu0 0.0
      %4007 = vmatpush.msra.mxu0 0.0
      %4008 = vmatpush.msra.mxu0 0.0
      %4009 = vmatpush.msra.mxu0 0.0
      %4010 = vmatpush.msra.mxu0 %v3971
      %4011 = vmatmul.f32.gmra.mxu0 %v3967
      %v4012 = vpop.f32.mrf.mxu0
      %v4013 = vadd.f32 0.0, %v4012
      %4014 = vdwg.mxu0
      %4015 = vmatpush.msra.mxu0 0.0
      %4016 = vmatpush.msra.mxu0 0.0
      %4017 = vmatpush.msra.mxu0 0.0
      %4018 = vmatpush.msra.mxu0 0.0
      %4019 = vmatpush.msra.mxu0 0.0
      %4020 = vmatpush.msra.mxu0 0.0
      %4021 = vmatpush.msra.mxu0 0.0
      %4022 = vmatpush.msra.mxu0 0.0
      %4023 = vmatpush.msra.mxu0 0.0
      %4024 = vmatpush.msra.mxu0 0.0
      %4025 = vmatpush.msra.mxu0 0.0
      %4026 = vmatpush.msra.mxu0 0.0
      %4027 = vmatpush.msra.mxu0 0.0
      %4028 = vmatpush.msra.mxu0 0.0
      %4029 = vmatpush.msra.mxu0 0.0
      %4030 = vmatpush.msra.mxu0 %v3973
      %4031 = vmatmul.f32.gmra.mxu0 %v3967
      %v4032 = vpop.f32.mrf.mxu0
      %v4033 = vadd.f32 0.0, %v4032
      %4034 = vdwg.mxu0
      %v4035 = vadd.f32 %v3942, %v3993
      %v4036 = vadd.f32 %v3943, %v4013
      %v4037 = vadd.f32 %v3944, %v4033
      %s4038 = scalar_lea.vmem %s1, 336
      %v4039 = vld [vmem:[%s4038] sm:$0xff]
      %4040 = vst [vmem:[#allocation1] ss:$2 sm:$0xff] %v198
      %s4041 = scalar_lea.vmem [#allocation1], 16
      %4042 = vst [vmem:[%s4041] ss:$2 sm:$0xff] %v199
      %v4043 = vld.sshfl [vmem:[#allocation1 + $0x8] sm:$0xff pattern:$0x75316420]
      %v4044 = vld.sshfl [vmem:[#allocation1 + $0x10] sm:$0xff pattern:$0x75316420]
      %v4045 = vld.sshfl [vmem:[#allocation1 + $0x18] sm:$0xff pattern:$0x75316420]
      %4046 = vrot.lane.b32.xlu0 %v4043, 124
      %v4047 = vpop.permute.xlu0 %4046
      %4048 = vrot.lane.b32.xlu0 %v4044, 124
      %v4049 = vpop.permute.xlu0 %4048
      %4050 = vrot.lane.b32.xlu0 %v4045, 124
      %v4051 = vpop.permute.xlu0 %4050
      %v4052 = vsel %vm558, %v4047, %v4049
      %v4053 = vsel %vm558, %v4049, %v4051
      %v4055 = vsel %vm220, %v4039, 0
      %v4057 = vsel %vm224, %v4052, 0
      %v4059 = vsel %vm224, %v4053, 0
      %v4061 = vsel %vm224, %v4051, 0
      %4063 = vmatpush.msra.mxu0 0.0
      %4064 = vmatpush.msra.mxu0 0.0
      %4065 = vmatpush.msra.mxu0 0.0
      %4066 = vmatpush.msra.mxu0 0.0
      %4067 = vmatpush.msra.mxu0 0.0
      %4068 = vmatpush.msra.mxu0 0.0
      %4069 = vmatpush.msra.mxu0 0.0
      %4070 = vmatpush.msra.mxu0 0.0
      %4071 = vmatpush.msra.mxu0 0.0
      %4072 = vmatpush.msra.mxu0 0.0
      %4073 = vmatpush.msra.mxu0 0.0
      %4074 = vmatpush.msra.mxu0 0.0
      %4075 = vmatpush.msra.mxu0 0.0
      %4076 = vmatpush.msra.mxu0 0.0
      %4077 = vmatpush.msra.mxu0 0.0
      %4078 = vmatpush.msra.mxu0 %v4057
      %4079 = vmatmul.f32.gmra.mxu0 %v4055
      %v4080 = vpop.f32.mrf.mxu0
      %v4081 = vadd.f32 0.0, %v4080
      %4082 = vdwg.mxu0
      %4083 = vmatpush.msra.mxu0 0.0
      %4084 = vmatpush.msra.mxu0 0.0
      %4085 = vmatpush.msra.mxu0 0.0
      %4086 = vmatpush.msra.mxu0 0.0
      %4087 = vmatpush.msra.mxu0 0.0
      %4088 = vmatpush.msra.mxu0 0.0
      %4089 = vmatpush.msra.mxu0 0.0
      %4090 = vmatpush.msra.mxu0 0.0
      %4091 = vmatpush.msra.mxu0 0.0
      %4092 = vmatpush.msra.mxu0 0.0
      %4093 = vmatpush.msra.mxu0 0.0
      %4094 = vmatpush.msra.mxu0 0.0
      %4095 = vmatpush.msra.mxu0 0.0
      %4096 = vmatpush.msra.mxu0 0.0
      %4097 = vmatpush.msra.mxu0 0.0
      %4098 = vmatpush.msra.mxu0 %v4059
      %4099 = vmatmul.f32.gmra.mxu0 %v4055
      %v4100 = vpop.f32.mrf.mxu0
      %v4101 = vadd.f32 0.0, %v4100
      %4102 = vdwg.mxu0
      %4103 = vmatpush.msra.mxu0 0.0
      %4104 = vmatpush.msra.mxu0 0.0
      %4105 = vmatpush.msra.mxu0 0.0
      %4106 = vmatpush.msra.mxu0 0.0
      %4107 = vmatpush.msra.mxu0 0.0
      %4108 = vmatpush.msra.mxu0 0.0
      %4109 = vmatpush.msra.mxu0 0.0
      %4110 = vmatpush.msra.mxu0 0.0
      %4111 = vmatpush.msra.mxu0 0.0
      %4112 = vmatpush.msra.mxu0 0.0
      %4113 = vmatpush.msra.mxu0 0.0
      %4114 = vmatpush.msra.mxu0 0.0
      %4115 = vmatpush.msra.mxu0 0.0
      %4116 = vmatpush.msra.mxu0 0.0
      %4117 = vmatpush.msra.mxu0 0.0
      %4118 = vmatpush.msra.mxu0 %v4061
      %4119 = vmatmul.f32.gmra.mxu0 %v4055
      %v4120 = vpop.f32.mrf.mxu0
      %v4121 = vadd.f32 0.0, %v4120
      %4122 = vdwg.mxu0
      %v4123 = vadd.f32 %v4035, %v4081
      %v4124 = vadd.f32 %v4036, %v4101
      %v4125 = vadd.f32 %v4037, %v4121
      %s4126 = scalar_lea.vmem %s1, 344
      %v4127 = vld [vmem:[%s4126] sm:$0xff]
      %4128 = vst [vmem:[#allocation1] ss:$2 sm:$0xff] %v198
      %s4129 = scalar_lea.vmem [#allocation1], 16
      %4130 = vst [vmem:[%s4129] ss:$2 sm:$0xff] %v199
      %v4131 = vld.sshfl [vmem:[#allocation1 + $0x8] sm:$0xff pattern:$0x75316420]
      %v4132 = vld.sshfl [vmem:[#allocation1 + $0x10] sm:$0xff pattern:$0x75316420]
      %v4133 = vld.sshfl [vmem:[#allocation1 + $0x18] sm:$0xff pattern:$0x75316420]
      %4134 = vrot.lane.b32.xlu0 %v4131, 123
      %v4135 = vpop.permute.xlu0 %4134
      %4136 = vrot.lane.b32.xlu0 %v4132, 123
      %v4137 = vpop.permute.xlu0 %4136
      %4138 = vrot.lane.b32.xlu0 %v4133, 123
      %v4139 = vpop.permute.xlu0 %4138
      %v4140 = vsel %vm647, %v4135, %v4137
      %v4141 = vsel %vm647, %v4137, %v4139
      %v4143 = vsel %vm220, %v4127, 0
      %v4145 = vsel %vm224, %v4140, 0
      %v4147 = vsel %vm224, %v4141, 0
      %v4149 = vsel %vm224, %v4139, 0
      %4151 = vmatpush.msra.mxu0 0.0
      %4152 = vmatpush.msra.mxu0 0.0
      %4153 = vmatpush.msra.mxu0 0.0
      %4154 = vmatpush.msra.mxu0 0.0
      %4155 = vmatpush.msra.mxu0 0.0
      %4156 = vmatpush.msra.mxu0 0.0
      %4157 = vmatpush.msra.mxu0 0.0
      %4158 = vmatpush.msra.mxu0 0.0
      %4159 = vmatpush.msra.mxu0 0.0
      %4160 = vmatpush.msra.mxu0 0.0
      %4161 = vmatpush.msra.mxu0 0.0
      %4162 = vmatpush.msra.mxu0 0.0
      %4163 = vmatpush.msra.mxu0 0.0
      %4164 = vmatpush.msra.mxu0 0.0
      %4165 = vmatpush.msra.mxu0 0.0
      %4166 = vmatpush.msra.mxu0 %v4145
      %4167 = vmatmul.f32.gmra.mxu0 %v4143
      %v4168 = vpop.f32.mrf.mxu0
      %v4169 = vadd.f32 0.0, %v4168
      %4170 = vdwg.mxu0
      %4171 = vmatpush.msra.mxu0 0.0
      %4172 = vmatpush.msra.mxu0 0.0
      %4173 = vmatpush.msra.mxu0 0.0
      %4174 = vmatpush.msra.mxu0 0.0
      %4175 = vmatpush.msra.mxu0 0.0
      %4176 = vmatpush.msra.mxu0 0.0
      %4177 = vmatpush.msra.mxu0 0.0
      %4178 = vmatpush.msra.mxu0 0.0
      %4179 = vmatpush.msra.mxu0 0.0
      %4180 = vmatpush.msra.mxu0 0.0
      %4181 = vmatpush.msra.mxu0 0.0
      %4182 = vmatpush.msra.mxu0 0.0
      %4183 = vmatpush.msra.mxu0 0.0
      %4184 = vmatpush.msra.mxu0 0.0
      %4185 = vmatpush.msra.mxu0 0.0
      %4186 = vmatpush.msra.mxu0 %v4147
      %4187 = vmatmul.f32.gmra.mxu0 %v4143
      %v4188 = vpop.f32.mrf.mxu0
      %v4189 = vadd.f32 0.0, %v4188
      %4190 = vdwg.mxu0
      %4191 = vmatpush.msra.mxu0 0.0
      %4192 = vmatpush.msra.mxu0 0.0
      %4193 = vmatpush.msra.mxu0 0.0
      %4194 = vmatpush.msra.mxu0 0.0
      %4195 = vmatpush.msra.mxu0 0.0
      %4196 = vmatpush.msra.mxu0 0.0
      %4197 = vmatpush.msra.mxu0 0.0
      %4198 = vmatpush.msra.mxu0 0.0
      %4199 = vmatpush.msra.mxu0 0.0
      %4200 = vmatpush.msra.mxu0 0.0
      %4201 = vmatpush.msra.mxu0 0.0
      %4202 = vmatpush.msra.mxu0 0.0
      %4203 = vmatpush.msra.mxu0 0.0
      %4204 = vmatpush.msra.mxu0 0.0
      %4205 = vmatpush.msra.mxu0 0.0
      %4206 = vmatpush.msra.mxu0 %v4149
      %4207 = vmatmul.f32.gmra.mxu0 %v4143
      %v4208 = vpop.f32.mrf.mxu0
      %v4209 = vadd.f32 0.0, %v4208
      %4210 = vdwg.mxu0
      %v4211 = vadd.f32 %v4123, %v4169
      %v4212 = vadd.f32 %v4124, %v4189
      %v4213 = vadd.f32 %v4125, %v4209
      %s4214 = scalar_lea.vmem %s1, 352
      %v4215 = vld [vmem:[%s4214] sm:$0xff]
      %4216 = vst [vmem:[#allocation1] ss:$2 sm:$0xff] %v198
      %s4217 = scalar_lea.vmem [#allocation1], 16
      %4218 = vst [vmem:[%s4217] ss:$2 sm:$0xff] %v199
      %v4219 = vld.sshfl [vmem:[#allocation1 + $0x8] sm:$0xff pattern:$0x75316420]
      %v4220 = vld.sshfl [vmem:[#allocation1 + $0x10] sm:$0xff pattern:$0x75316420]
      %v4221 = vld.sshfl [vmem:[#allocation1 + $0x18] sm:$0xff pattern:$0x75316420]
      %4222 = vrot.lane.b32.xlu0 %v4219, 122
      %v4223 = vpop.permute.xlu0 %4222
      %4224 = vrot.lane.b32.xlu0 %v4220, 122
      %v4225 = vpop.permute.xlu0 %4224
      %4226 = vrot.lane.b32.xlu0 %v4221, 122
      %v4227 = vpop.permute.xlu0 %4226
      %v4228 = vsel %vm736, %v4223, %v4225
      %v4229 = vsel %vm736, %v4225, %v4227
      %v4231 = vsel %vm220, %v4215, 0
      %v4233 = vsel %vm224, %v4228, 0
      %v4235 = vsel %vm224, %v4229, 0
      %v4237 = vsel %vm224, %v4227, 0
      %4239 = vmatpush.msra.mxu0 0.0
      %4240 = vmatpush.msra.mxu0 0.0
      %4241 = vmatpush.msra.mxu0 0.0
      %4242 = vmatpush.msra.mxu0 0.0
      %4243 = vmatpush.msra.mxu0 0.0
      %4244 = vmatpush.msra.mxu0 0.0
      %4245 = vmatpush.msra.mxu0 0.0
      %4246 = vmatpush.msra.mxu0 0.0
      %4247 = vmatpush.msra.mxu0 0.0
      %4248 = vmatpush.msra.mxu0 0.0
      %4249 = vmatpush.msra.mxu0 0.0
      %4250 = vmatpush.msra.mxu0 0.0
      %4251 = vmatpush.msra.mxu0 0.0
      %4252 = vmatpush.msra.mxu0 0.0
      %4253 = vmatpush.msra.mxu0 0.0
      %4254 = vmatpush.msra.mxu0 %v4233
      %4255 = vmatmul.f32.gmra.mxu0 %v4231
      %v4256 = vpop.f32.mrf.mxu0
      %v4257 = vadd.f32 0.0, %v4256
      %4258 = vdwg.mxu0
      %4259 = vmatpush.msra.mxu0 0.0
      %4260 = vmatpush.msra.mxu0 0.0
      %4261 = vmatpush.msra.mxu0 0.0
      %4262 = vmatpush.msra.mxu0 0.0
      %4263 = vmatpush.msra.mxu0 0.0
      %4264 = vmatpush.msra.mxu0 0.0
      %4265 = vmatpush.msra.mxu0 0.0
      %4266 = vmatpush.msra.mxu0 0.0
      %4267 = vmatpush.msra.mxu0 0.0
      %4268 = vmatpush.msra.mxu0 0.0
      %4269 = vmatpush.msra.mxu0 0.0
      %4270 = vmatpush.msra.mxu0 0.0
      %4271 = vmatpush.msra.mxu0 0.0
      %4272 = vmatpush.msra.mxu0 0.0
      %4273 = vmatpush.msra.mxu0 0.0
      %4274 = vmatpush.msra.mxu0 %v4235
      %4275 = vmatmul.f32.gmra.mxu0 %v4231
      %v4276 = vpop.f32.mrf.mxu0
      %v4277 = vadd.f32 0.0, %v4276
      %4278 = vdwg.mxu0
      %4279 = vmatpush.msra.mxu0 0.0
      %4280 = vmatpush.msra.mxu0 0.0
      %4281 = vmatpush.msra.mxu0 0.0
      %4282 = vmatpush.msra.mxu0 0.0
      %4283 = vmatpush.msra.mxu0 0.0
      %4284 = vmatpush.msra.mxu0 0.0
      %4285 = vmatpush.msra.mxu0 0.0
      %4286 = vmatpush.msra.mxu0 0.0
      %4287 = vmatpush.msra.mxu0 0.0
      %4288 = vmatpush.msra.mxu0 0.0
      %4289 = vmatpush.msra.mxu0 0.0
      %4290 = vmatpush.msra.mxu0 0.0
      %4291 = vmatpush.msra.mxu0 0.0
      %4292 = vmatpush.msra.mxu0 0.0
      %4293 = vmatpush.msra.mxu0 0.0
      %4294 = vmatpush.msra.mxu0 %v4237
      %4295 = vmatmul.f32.gmra.mxu0 %v4231
      %v4296 = vpop.f32.mrf.mxu0
      %v4297 = vadd.f32 0.0, %v4296
      %4298 = vdwg.mxu0
      %v4299 = vadd.f32 %v4211, %v4257
      %v4300 = vadd.f32 %v4212, %v4277
      %v4301 = vadd.f32 %v4213, %v4297
      %s4302 = scalar_lea.vmem %s1, 360
      %v4303 = vld [vmem:[%s4302] sm:$0xff]
      %4304 = vst [vmem:[#allocation1] ss:$2 sm:$0xff] %v198
      %s4305 = scalar_lea.vmem [#allocation1], 16
      %4306 = vst [vmem:[%s4305] ss:$2 sm:$0xff] %v199
      %v4307 = vld.sshfl [vmem:[#allocation1 + $0x8] sm:$0xff pattern:$0x75316420]
      %v4308 = vld.sshfl [vmem:[#allocation1 + $0x10] sm:$0xff pattern:$0x75316420]
      %v4309 = vld.sshfl [vmem:[#allocation1 + $0x18] sm:$0xff pattern:$0x75316420]
      %4310 = vrot.lane.b32.xlu0 %v4307, 121
      %v4311 = vpop.permute.xlu0 %4310
      %4312 = vrot.lane.b32.xlu0 %v4308, 121
      %v4313 = vpop.permute.xlu0 %4312
      %4314 = vrot.lane.b32.xlu0 %v4309, 121
      %v4315 = vpop.permute.xlu0 %4314
      %vm4316 = vcmask 990208
      %v4317 = vsel %vm4316, %v4311, %v4313
      %v4318 = vsel %vm4316, %v4313, %v4315
      %v4320 = vsel %vm220, %v4303, 0
      %v4322 = vsel %vm224, %v4317, 0
      %v4324 = vsel %vm224, %v4318, 0
      %v4326 = vsel %vm224, %v4315, 0
      %4328 = vmatpush.msra.mxu0 0.0
      %4329 = vmatpush.msra.mxu0 0.0
      %4330 = vmatpush.msra.mxu0 0.0
      %4331 = vmatpush.msra.mxu0 0.0
      %4332 = vmatpush.msra.mxu0 0.0
      %4333 = vmatpush.msra.mxu0 0.0
      %4334 = vmatpush.msra.mxu0 0.0
      %4335 = vmatpush.msra.mxu0 0.0
      %4336 = vmatpush.msra.mxu0 0.0
      %4337 = vmatpush.msra.mxu0 0.0
      %4338 = vmatpush.msra.mxu0 0.0
      %4339 = vmatpush.msra.mxu0 0.0
      %4340 = vmatpush.msra.mxu0 0.0
      %4341 = vmatpush.msra.mxu0 0.0
      %4342 = vmatpush.msra.mxu0 0.0
      %4343 = vmatpush.msra.mxu0 %v4322
      %4344 = vmatmul.f32.gmra.mxu0 %v4320
      %v4345 = vpop.f32.mrf.mxu0
      %v4346 = vadd.f32 0.0, %v4345
      %4347 = vdwg.mxu0
      %4348 = vmatpush.msra.mxu0 0.0
      %4349 = vmatpush.msra.mxu0 0.0
      %4350 = vmatpush.msra.mxu0 0.0
      %4351 = vmatpush.msra.mxu0 0.0
      %4352 = vmatpush.msra.mxu0 0.0
      %4353 = vmatpush.msra.mxu0 0.0
      %4354 = vmatpush.msra.mxu0 0.0
      %4355 = vmatpush.msra.mxu0 0.0
      %4356 = vmatpush.msra.mxu0 0.0
      %4357 = vmatpush.msra.mxu0 0.0
      %4358 = vmatpush.msra.mxu0 0.0
      %4359 = vmatpush.msra.mxu0 0.0
      %4360 = vmatpush.msra.mxu0 0.0
      %4361 = vmatpush.msra.mxu0 0.0
      %4362 = vmatpush.msra.mxu0 0.0
      %4363 = vmatpush.msra.mxu0 %v4324
      %4364 = vmatmul.f32.gmra.mxu0 %v4320
      %v4365 = vpop.f32.mrf.mxu0
      %v4366 = vadd.f32 0.0, %v4365
      %4367 = vdwg.mxu0
      %4368 = vmatpush.msra.mxu0 0.0
      %4369 = vmatpush.msra.mxu0 0.0
      %4370 = vmatpush.msra.mxu0 0.0
      %4371 = vmatpush.msra.mxu0 0.0
      %4372 = vmatpush.msra.mxu0 0.0
      %4373 = vmatpush.msra.mxu0 0.0
      %4374 = vmatpush.msra.mxu0 0.0
      %4375 = vmatpush.msra.mxu0 0.0
      %4376 = vmatpush.msra.mxu0 0.0
      %4377 = vmatpush.msra.mxu0 0.0
      %4378 = vmatpush.msra.mxu0 0.0
      %4379 = vmatpush.msra.mxu0 0.0
      %4380 = vmatpush.msra.mxu0 0.0
      %4381 = vmatpush.msra.mxu0 0.0
      %4382 = vmatpush.msra.mxu0 0.0
      %4383 = vmatpush.msra.mxu0 %v4326
      %4384 = vmatmul.f32.gmra.mxu0 %v4320
      %v4385 = vpop.f32.mrf.mxu0
      %v4386 = vadd.f32 0.0, %v4385
      %4387 = vdwg.mxu0
      %v4388 = vadd.f32 %v4299, %v4346
      %v4389 = vadd.f32 %v4300, %v4366
      %v4390 = vadd.f32 %v4301, %v4386
      %s4391 = scalar_lea.vmem %s1, 368
      %v4392 = vld [vmem:[%s4391] sm:$0xff]
      %4393 = vst [vmem:[#allocation1] ss:$2 sm:$0xff] %v198
      %s4394 = scalar_lea.vmem [#allocation1], 16
      %4395 = vst [vmem:[%s4394] ss:$2 sm:$0xff] %v199
      %v4396 = vld.sshfl [vmem:[#allocation1 + $0x8] sm:$0xff pattern:$0x75316420]
      %v4397 = vld.sshfl [vmem:[#allocation1 + $0x10] sm:$0xff pattern:$0x75316420]
      %v4398 = vld.sshfl [vmem:[#allocation1 + $0x18] sm:$0xff pattern:$0x75316420]
      %4399 = vrot.lane.b32.xlu0 %v4396, 120
      %v4400 = vpop.permute.xlu0 %4399
      %4401 = vrot.lane.b32.xlu0 %v4397, 120
      %v4402 = vpop.permute.xlu0 %4401
      %4403 = vrot.lane.b32.xlu0 %v4398, 120
      %v4404 = vpop.permute.xlu0 %4403
      %vm4405 = vcmask 982016
      %v4406 = vsel %vm4405, %v4400, %v4402
      %v4407 = vsel %vm4405, %v4402, %v4404
      %v4409 = vsel %vm220, %v4392, 0
      %v4411 = vsel %vm224, %v4406, 0
      %v4413 = vsel %vm224, %v4407, 0
      %v4415 = vsel %vm224, %v4404, 0
      %4417 = vmatpush.msra.mxu0 0.0
      %4418 = vmatpush.msra.mxu0 0.0
      %4419 = vmatpush.msra.mxu0 0.0
      %4420 = vmatpush.msra.mxu0 0.0
      %4421 = vmatpush.msra.mxu0 0.0
      %4422 = vmatpush.msra.mxu0 0.0
      %4423 = vmatpush.msra.mxu0 0.0
      %4424 = vmatpush.msra.mxu0 0.0
      %4425 = vmatpush.msra.mxu0 0.0
      %4426 = vmatpush.msra.mxu0 0.0
      %4427 = vmatpush.msra.mxu0 0.0
      %4428 = vmatpush.msra.mxu0 0.0
      %4429 = vmatpush.msra.mxu0 0.0
      %4430 = vmatpush.msra.mxu0 0.0
      %4431 = vmatpush.msra.mxu0 0.0
      %4432 = vmatpush.msra.mxu0 %v4411
      %4433 = vmatmul.f32.gmra.mxu0 %v4409
      %v4434 = vpop.f32.mrf.mxu0
      %v4435 = vadd.f32 0.0, %v4434
      %4436 = vdwg.mxu0
      %4437 = vmatpush.msra.mxu0 0.0
      %4438 = vmatpush.msra.mxu0 0.0
      %4439 = vmatpush.msra.mxu0 0.0
      %4440 = vmatpush.msra.mxu0 0.0
      %4441 = vmatpush.msra.mxu0 0.0
      %4442 = vmatpush.msra.mxu0 0.0
      %4443 = vmatpush.msra.mxu0 0.0
      %4444 = vmatpush.msra.mxu0 0.0
      %4445 = vmatpush.msra.mxu0 0.0
      %4446 = vmatpush.msra.mxu0 0.0
      %4447 = vmatpush.msra.mxu0 0.0
      %4448 = vmatpush.msra.mxu0 0.0
      %4449 = vmatpush.msra.mxu0 0.0
      %4450 = vmatpush.msra.mxu0 0.0
      %4451 = vmatpush.msra.mxu0 0.0
      %4452 = vmatpush.msra.mxu0 %v4413
      %4453 = vmatmul.f32.gmra.mxu0 %v4409
      %v4454 = vpop.f32.mrf.mxu0
      %v4455 = vadd.f32 0.0, %v4454
      %4456 = vdwg.mxu0
      %4457 = vmatpush.msra.mxu0 0.0
      %4458 = vmatpush.msra.mxu0 0.0
      %4459 = vmatpush.msra.mxu0 0.0
      %4460 = vmatpush.msra.mxu0 0.0
      %4461 = vmatpush.msra.mxu0 0.0
      %4462 = vmatpush.msra.mxu0 0.0
      %4463 = vmatpush.msra.mxu0 0.0
      %4464 = vmatpush.msra.mxu0 0.0
      %4465 = vmatpush.msra.mxu0 0.0
      %4466 = vmatpush.msra.mxu0 0.0
      %4467 = vmatpush.msra.mxu0 0.0
      %4468 = vmatpush.msra.mxu0 0.0
      %4469 = vmatpush.msra.mxu0 0.0
      %4470 = vmatpush.msra.mxu0 0.0
      %4471 = vmatpush.msra.mxu0 0.0
      %4472 = vmatpush.msra.mxu0 %v4415
      %4473 = vmatmul.f32.gmra.mxu0 %v4409
      %v4474 = vpop.f32.mrf.mxu0
      %v4475 = vadd.f32 0.0, %v4474
      %4476 = vdwg.mxu0
      %v4477 = vadd.f32 %v4388, %v4435
      %v4478 = vadd.f32 %v4389, %v4455
      %v4479 = vadd.f32 %v4390, %v4475
      %s4480 = scalar_lea.vmem %s1, 376
      %v4481 = vld [vmem:[%s4480] sm:$0xff]
      %4482 = vst [vmem:[#allocation1] ss:$2 sm:$0xff] %v198
      %s4483 = scalar_lea.vmem [#allocation1], 16
      %4484 = vst [vmem:[%s4483] ss:$2 sm:$0xff] %v199
      %v4485 = vld.sshfl [vmem:[#allocation1 + $0x8] sm:$0xff pattern:$0x75316420]
      %v4486 = vld.sshfl [vmem:[#allocation1 + $0x10] sm:$0xff pattern:$0x75316420]
      %v4487 = vld.sshfl [vmem:[#allocation1 + $0x18] sm:$0xff pattern:$0x75316420]
      %4488 = vrot.lane.b32.xlu0 %v4485, 119
      %v4489 = vpop.permute.xlu0 %4488
      %4490 = vrot.lane.b32.xlu0 %v4486, 119
      %v4491 = vpop.permute.xlu0 %4490
      %4492 = vrot.lane.b32.xlu0 %v4487, 119
      %v4493 = vpop.permute.xlu0 %4492
      %vm4494 = vcmask 973824
      %v4495 = vsel %vm4494, %v4489, %v4491
      %v4496 = vsel %vm4494, %v4491, %v4493
      %v4498 = vsel %vm220, %v4481, 0
      %v4500 = vsel %vm224, %v4495, 0
      %v4502 = vsel %vm224, %v4496, 0
      %v4504 = vsel %vm224, %v4493, 0
      %4506 = vmatpush.msra.mxu0 0.0
      %4507 = vmatpush.msra.mxu0 0.0
      %4508 = vmatpush.msra.mxu0 0.0
      %4509 = vmatpush.msra.mxu0 0.0
      %4510 = vmatpush.msra.mxu0 0.0
      %4511 = vmatpush.msra.mxu0 0.0
      %4512 = vmatpush.msra.mxu0 0.0
      %4513 = vmatpush.msra.mxu0 0.0
      %4514 = vmatpush.msra.mxu0 0.0
      %4515 = vmatpush.msra.mxu0 0.0
      %4516 = vmatpush.msra.mxu0 0.0
      %4517 = vmatpush.msra.mxu0 0.0
      %4518 = vmatpush.msra.mxu0 0.0
      %4519 = vmatpush.msra.mxu0 0.0
      %4520 = vmatpush.msra.mxu0 0.0
      %4521 = vmatpush.msra.mxu0 %v4500
      %4522 = vmatmul.f32.gmra.mxu0 %v4498
      %v4523 = vpop.f32.mrf.mxu0
      %v4524 = vadd.f32 0.0, %v4523
      %4525 = vdwg.mxu0
      %4526 = vmatpush.msra.mxu0 0.0
      %4527 = vmatpush.msra.mxu0 0.0
      %4528 = vmatpush.msra.mxu0 0.0
      %4529 = vmatpush.msra.mxu0 0.0
      %4530 = vmatpush.msra.mxu0 0.0
      %4531 = vmatpush.msra.mxu0 0.0
      %4532 = vmatpush.msra.mxu0 0.0
      %4533 = vmatpush.msra.mxu0 0.0
      %4534 = vmatpush.msra.mxu0 0.0
      %4535 = vmatpush.msra.mxu0 0.0
      %4536 = vmatpush.msra.mxu0 0.0
      %4537 = vmatpush.msra.mxu0 0.0
      %4538 = vmatpush.msra.mxu0 0.0
      %4539 = vmatpush.msra.mxu0 0.0
      %4540 = vmatpush.msra.mxu0 0.0
      %4541 = vmatpush.msra.mxu0 %v4502
      %4542 = vmatmul.f32.gmra.mxu0 %v4498
      %v4543 = vpop.f32.mrf.mxu0
      %v4544 = vadd.f32 0.0, %v4543
      %4545 = vdwg.mxu0
      %4546 = vmatpush.msra.mxu0 0.0
      %4547 = vmatpush.msra.mxu0 0.0
      %4548 = vmatpush.msra.mxu0 0.0
      %4549 = vmatpush.msra.mxu0 0.0
      %4550 = vmatpush.msra.mxu0 0.0
      %4551 = vmatpush.msra.mxu0 0.0
      %4552 = vmatpush.msra.mxu0 0.0
      %4553 = vmatpush.msra.mxu0 0.0
      %4554 = vmatpush.msra.mxu0 0.0
      %4555 = vmatpush.msra.mxu0 0.0
      %4556 = vmatpush.msra.mxu0 0.0
      %4557 = vmatpush.msra.mxu0 0.0
      %4558 = vmatpush.msra.mxu0 0.0
      %4559 = vmatpush.msra.mxu0 0.0
      %4560 = vmatpush.msra.mxu0 0.0
      %4561 = vmatpush.msra.mxu0 %v4504
      %4562 = vmatmul.f32.gmra.mxu0 %v4498
      %v4563 = vpop.f32.mrf.mxu0
      %v4564 = vadd.f32 0.0, %v4563
      %4565 = vdwg.mxu0
      %v4566 = vadd.f32 %v4477, %v4524
      %v4567 = vadd.f32 %v4478, %v4544
      %v4568 = vadd.f32 %v4479, %v4564
      %s4569 = scalar_lea.vmem %s1, 384
      %v4570 = vld [vmem:[%s4569] sm:$0xff]
      %4571 = vst [vmem:[#allocation1] ss:$2 sm:$0xff] %v198
      %s4572 = scalar_lea.vmem [#allocation1], 16
      %4573 = vst [vmem:[%s4572] ss:$2 sm:$0xff] %v199
      %v4574 = vld.sshfl [vmem:[#allocation1 + $0x8] sm:$0xff pattern:$0x75316420]
      %v4575 = vld.sshfl [vmem:[#allocation1 + $0x10] sm:$0xff pattern:$0x75316420]
      %v4576 = vld.sshfl [vmem:[#allocation1 + $0x18] sm:$0xff pattern:$0x75316420]
      %4577 = vrot.lane.b32.xlu0 %v4574, 118
      %v4578 = vpop.permute.xlu0 %4577
      %4579 = vrot.lane.b32.xlu0 %v4575, 118
      %v4580 = vpop.permute.xlu0 %4579
      %4581 = vrot.lane.b32.xlu0 %v4576, 118
      %v4582 = vpop.permute.xlu0 %4581
      %vm4583 = vcmask 965632
      %v4584 = vsel %vm4583, %v4578, %v4580
      %v4585 = vsel %vm4583, %v4580, %v4582
      %v4587 = vsel %vm220, %v4570, 0
      %v4589 = vsel %vm224, %v4584, 0
      %v4591 = vsel %vm224, %v4585, 0
      %v4593 = vsel %vm224, %v4582, 0
      %4595 = vmatpush.msra.mxu0 0.0
      %4596 = vmatpush.msra.mxu0 0.0
      %4597 = vmatpush.msra.mxu0 0.0
      %4598 = vmatpush.msra.mxu0 0.0
      %4599 = vmatpush.msra.mxu0 0.0
      %4600 = vmatpush.msra.mxu0 0.0
      %4601 = vmatpush.msra.mxu0 0.0
      %4602 = vmatpush.msra.mxu0 0.0
      %4603 = vmatpush.msra.mxu0 0.0
      %4604 = vmatpush.msra.mxu0 0.0
      %4605 = vmatpush.msra.mxu0 0.0
      %4606 = vmatpush.msra.mxu0 0.0
      %4607 = vmatpush.msra.mxu0 0.0
      %4608 = vmatpush.msra.mxu0 0.0
      %4609 = vmatpush.msra.mxu0 0.0
      %4610 = vmatpush.msra.mxu0 %v4589
      %4611 = vmatmul.f32.gmra.mxu0 %v4587
      %v4612 = vpop.f32.mrf.mxu0
      %v4613 = vadd.f32 0.0, %v4612
      %4614 = vdwg.mxu0
      %4615 = vmatpush.msra.mxu0 0.0
      %4616 = vmatpush.msra.mxu0 0.0
      %4617 = vmatpush.msra.mxu0 0.0
      %4618 = vmatpush.msra.mxu0 0.0
      %4619 = vmatpush.msra.mxu0 0.0
      %4620 = vmatpush.msra.mxu0 0.0
      %4621 = vmatpush.msra.mxu0 0.0
      %4622 = vmatpush.msra.mxu0 0.0
      %4623 = vmatpush.msra.mxu0 0.0
      %4624 = vmatpush.msra.mxu0 0.0
      %4625 = vmatpush.msra.mxu0 0.0
      %4626 = vmatpush.msra.mxu0 0.0
      %4627 = vmatpush.msra.mxu0 0.0
      %4628 = vmatpush.msra.mxu0 0.0
      %4629 = vmatpush.msra.mxu0 0.0
      %4630 = vmatpush.msra.mxu0 %v4591
      %4631 = vmatmul.f32.gmra.mxu0 %v4587
      %v4632 = vpop.f32.mrf.mxu0
      %v4633 = vadd.f32 0.0, %v4632
      %4634 = vdwg.mxu0
      %4635 = vmatpush.msra.mxu0 0.0
      %4636 = vmatpush.msra.mxu0 0.0
      %4637 = vmatpush.msra.mxu0 0.0
      %4638 = vmatpush.msra.mxu0 0.0
      %4639 = vmatpush.msra.mxu0 0.0
      %4640 = vmatpush.msra.mxu0 0.0
      %4641 = vmatpush.msra.mxu0 0.0
      %4642 = vmatpush.msra.mxu0 0.0
      %4643 = vmatpush.msra.mxu0 0.0
      %4644 = vmatpush.msra.mxu0 0.0
      %4645 = vmatpush.msra.mxu0 0.0
      %4646 = vmatpush.msra.mxu0 0.0
      %4647 = vmatpush.msra.mxu0 0.0
      %4648 = vmatpush.msra.mxu0 0.0
      %4649 = vmatpush.msra.mxu0 0.0
      %4650 = vmatpush.msra.mxu0 %v4593
      %4651 = vmatmul.f32.gmra.mxu0 %v4587
      %v4652 = vpop.f32.mrf.mxu0
      %v4653 = vadd.f32 0.0, %v4652
      %4654 = vdwg.mxu0
      %v4655 = vadd.f32 %v4566, %v4613
      %v4656 = vadd.f32 %v4567, %v4633
      %v4657 = vadd.f32 %v4568, %v4653
      %v4658 = vld [vmem:[%s2] sm:$0xff]
      %v4659 = vld [vmem:[%s3] sm:$0x7]
      %4661 = vset.pattern.permute.xlu0 0
      %4662 = vperm.xlu0 %4661, %v4658
      %v4663 = vpop.permute.xlu0 %4662
      %v4665 = vadd.f32 %v4655, %v4663
      %v4666 = vadd.f32 %v4656, %v4663
      %v4667 = vadd.f32 %v4657, %v4663
      %v4669 = vperm.slane %v4659, 0
      %v4670 = vperm.slane %v4659, 1
      %v4671 = vperm.slane %v4659, 2
      %v4675 = vmul.f32 %v4665, %v4669
      %v4676 = vmul.f32 %v4666, %v4670
      %v4677 = vmul.f32 %v4667, %v4671
      %v4678 = vadd.f32 %v4675, %v4676
      %vm4679 = vcmask 785408
      %v4680 = vsel %vm4679, %v4677, 0.0
      %v4681 = vadd.f32 %v4678, %v4680
      %4682 = vadd.xlane.f32.xlu0 %v4681
      %v4683 = vpop.xlane.xlu0 %4682
      %v4684 = vmul.f32 %v4683, 0.00390625
      %v4685 = vsub.f32 %v4665, %v4684
      %v4686 = vsub.f32 %v4666, %v4684
      %v4687 = vsub.f32 %v4667, %v4684
      %v4688 = vmul.f32 %v4685, %v4669
      %v4689 = vmul.f32 %v4686, %v4670
      %v4690 = vmul.f32 %v4687, %v4671
      %v4691 = vmul.f32 %v4688, %v4688
      %v4692 = vmul.f32 %v4689, %v4689
      %v4693 = vmul.f32 %v4690, %v4690
      %v4694 = vadd.f32 %v4691, %v4692
      %v4695 = vsel %vm4679, %v4693, 0.0
      %v4696 = vadd.f32 %v4694, %v4695
      %4697 = vadd.xlane.f32.xlu0 %v4696
      %v4698 = vpop.xlane.xlu0 %4697
      %v4699 = vmul.f32 %v4698, 0.00390625
      %v4700 = vadd.f32 %v4699, 1e-05
      %v4701 = vrsqrt.pop %v4700
      %v4702 = vmul.f32 %v4701, %v4700
      %v4703 = vmul.f32 %v4702, %v4701
      %v4704 = vmul.f32 0.5, %v4703
      %v4705 = vsub.f32 1.5, %v4704
      %v4706 = vmul.f32 %v4701, %v4705
      %vm4707 = vweird.f32 %v4700
      %vm4708 = vweird.f32 %v4701
      %vm4709 = vmor %vm4707, %vm4708
      %v4710 = vsel %vm4709, %v4701, %v4706
      %v4711 = vmul.f32 %v4685, %v4710
      %v4712 = vmul.f32 %v4686, %v4710
      %v4713 = vmul.f32 %v4687, %v4710
      %v4714 = vmax.f32 %v4711, 0.0
      %v4715 = vmax.f32 %v4712, 0.0
      %v4716 = vmax.f32 %v4713, 0.0
      %4717 = vst [vmem:[%s197] sm:$0xff] %v4714
      %4718 = vst [vmem:[%s197 + $0x8] sm:$0xff] %v4715
      %4719 = vst.msk [vmem:[%s197 + $0x10] sm:$0xff] %vm4679, %v4716
      %p4720 = scmp.lt.s32.totalorder %s15, 1
      %s4721 = scalar_select %p4720, %s15, 1
      %s4722 = smul.addr %s4721, 3
      %s4723 = smul.addr %s4722, 8
      %s4724 = scalar_lea.vmem %s4, %s4723
      // Predicated region
      $region37: #{_lambda_.5} parent=35 // pred_check
        %p4725 = pneg %p122
      $region38: #{_lambda_.5} parent=35 // pred_check_branch
        %4727 = sbr.rel (%p4725) target = $region40
      $region39: #{_lambda_.5} parent=35 // pred_region
        _
      $region40: #{_lambda_.5} parent=35 // pred_fallthru
        _
    $region36: #{_lambda_.5} parent=5 // pred_fallthru
      _
    %p4728 = scmp.le.s32.totalorder 2, %s10
    // Predicated region
    $region41: #{_lambda_.5} parent=5 // pred_check
      %p4729 = pneg %p4728
    $region42: #{_lambda_.5} parent=5 // pred_check_branch
      %4731 = sbr.rel (%p4729) target = $region44
    $region43: #{_lambda_.5} parent=5 // pred_region
      %s4732 = ssub.s32 %s10, 2
      // Predicated region
      $region45: #{_lambda_.5} parent=43 // pred_check
        %p4733 = pneg %p128
      $region46: #{_lambda_.5} parent=43 // pred_check_branch
        %4735 = sbr.rel (%p4733) target = $region48
      $region47: #{_lambda_.5} parent=43 // pred_region
        %p4736 = scmp.lt.s32.totalorder %s16, 1
        %s4737 = scalar_select %p4736, %s16, 1
        %s4738 = smul.addr %s4737, 3
        %s4739 = smul.addr %s4738, 8
        %s4740 = scalar_lea.vmem %s4, %s4739
      $region48: #{_lambda_.5} parent=43 // pred_fallthru
        _
    $region44: #{_lambda_.5} parent=5 // pred_fallthru
      _
  $region6: #{_lambda_.5} parent=0 // loop_footer
    %s14 = sadd.s32 1, %s10
  $region7: #{_lambda_.5} parent=0 // loop_footer_branch
    %9 = sbr.rel target = $region3
  $region8: #{_lambda_.5} parent=0 // loop_exit
    _

// kernel: _lambda_.7
$region0: #{_lambda_.7}
  #allocation0 [shape = 'u32[]', space=smem, size = 0x4, offset = 0x4, fixed_abs, tag = 'smem constant byte address 0x4 - core index']
  #allocation1 [shape = 'u32[72,128]{1,0:T(1,128)}', space=vmem, size = 0x9000, scoped, tag = 'internal scratch']
  %s0 = inlined_call_operand.vmem [shape: f32[2,4,16,27], index: 0, kind: input, shape index: {}]
  %s1 = inlined_call_operand.vmem [shape: f32[16,32,16], index: 1, kind: input, shape index: {}]
  %s2 = inlined_call_operand.vmem [shape: f32[32,1], index: 2, kind: input, shape index: {}]
  %s3 = inlined_call_operand.vmem [shape: f32[1,20], index: 3, kind: input, shape index: {}]
  %s4 = inlined_call_operand.vmem [shape: f32[2,32,20], index: 4, kind: output, shape index: {}]
  %s5 = sld [smem:[#allocation0]]
  $region49: #{_lambda_.7} parent=0
    _
  %s7 = ssub.s32 1, %s5
  %s8 = scalar_select 0, %s7, %s5
  loop: start=0, step=1, limit=4
  $region2: #{_lambda_.7} parent=0 // loop_pre_header
    _
  $region3: #{_lambda_.7} parent=0 // loop_header
    %s10 = sphi 0, %s14
    %p11 = scmp.ge.s32.totalorder %s10, 4
    %s20 = sphi 0, %s22
    %s23 = sphi 0, %s20
    %s24 = sphi 0, %s23
    %s40 = sphi 0, %s24
    %s44 = sphi 0, %s44
    %s46 = sphi 0, %s44
    %s47 = sphi 0, %s46
    %s61 = sphi 0, %s47
    %s65 = sphi 0, %s65
    %s67 = sphi 0, %s65
    %s68 = sphi 0, %s67
    %s82 = sphi 0, %s68
    %s86 = sphi 0, %s86
    %s88 = sphi 0, %s86
    %s89 = sphi 0, %s88
    %s103 = sphi 0, %s89
    %s109 = sphi 0, %s111
    %s112 = sphi 0, %s109
    %s113 = sphi 0, %s112
    %s129 = sphi 0, %s113
  $region4: #{_lambda_.7} parent=0 // loop_header_branch
    %13 = sbr.rel (%p11) target = $region8
  $region5: #{_lambda_.7} parent=0 // loop_body
    %s15 = ssub.s32 %s10, 1
    %s16 = ssub.s32 %s10, 2
    %s17 = sadd.s32 %s10, 1
    %s18 = ssub.s32 %s10, %s17
    %p19 = scmp.eq.s32.totalorder %s18, 0
    %s21 = sadd.s32 %s20, 1
    %s22 = scalar_select %p19, %s20, %s21
    %p25 = pneg %p19
    %p26 = scmp.eq.s32.totalorder %s10, 1
    %p27 = por %p25, %p26
    %p28 = scmp.ne.s32.totalorder %s20, %s23
    %p29 = scmp.eq.s32.totalorder %s10, 0
    %p30 = por %p28, %p29
    %p31 = scmp.ne.s32.totalorder %s20, %s23
    %p32 = scmp.eq.s32.totalorder %s15, 1
    %p33 = por %p31, %p32
    %p34 = scmp.ne.s32.totalorder %s23, %s24
    %p35 = scmp.eq.s32.totalorder %s15, 0
    %p36 = por %p34, %p35
    %p37 = scmp.ne.s32.totalorder %s23, %s24
    %p38 = scmp.eq.s32.totalorder %s16, 1
    %p39 = por %p37, %p38
    %p41 = scmp.ne.s32.totalorder %s24, %s40
    %p42 = scmp.eq.s32.totalorder %s16, 0
    %p43 = por %p41, %p42
    %s45 = sadd.s32 %s44, 1
    %p48 = scmp.eq.s32.totalorder %s10, 1
    %p49 = scmp.ne.s32.totalorder %s44, %s46
    %p50 = scmp.eq.s32.totalorder %s10, 0
    %p51 = por %p49, %p50
    %p52 = scmp.ne.s32.totalorder %s44, %s46
    %p53 = scmp.eq.s32.totalorder %s15, 1
    %p54 = por %p52, %p53
    %p55 = scmp.ne.s32.totalorder %s46, %s47
    %p56 = scmp.eq.s32.totalorder %s15, 0
    %p57 = por %p55, %p56
    %p58 = scmp.ne.s32.totalorder %s46, %s47
    %p59 = scmp.eq.s32.totalorder %s16, 1
    %p60 = por %p58, %p59
    %p62 = scmp.ne.s32.totalorder %s47, %s61
    %p63 = scmp.eq.s32.totalorder %s16, 0
    %p64 = por %p62, %p63
    %s66 = sadd.s32 %s65, 1
    %p69 = scmp.eq.s32.totalorder %s10, 1
    %p70 = scmp.ne.s32.totalorder %s65, %s67
    %p71 = scmp.eq.s32.totalorder %s10, 0
    %p72 = por %p70, %p71
    %p73 = scmp.ne.s32.totalorder %s65, %s67
    %p74 = scmp.eq.s32.totalorder %s15, 1
    %p75 = por %p73, %p74
    %p76 = scmp.ne.s32.totalorder %s67, %s68
    %p77 = scmp.eq.s32.totalorder %s15, 0
    %p78 = por %p76, %p77
    %p79 = scmp.ne.s32.totalorder %s67, %s68
    %p80 = scmp.eq.s32.totalorder %s16, 1
    %p81 = por %p79, %p80
    %p83 = scmp.ne.s32.totalorder %s68, %s82
    %p84 = scmp.eq.s32.totalorder %s16, 0
    %p85 = por %p83, %p84
    %s87 = sadd.s32 %s86, 1
    %p90 = scmp.eq.s32.totalorder %s10, 1
    %p91 = scmp.ne.s32.totalorder %s86, %s88
    %p92 = scmp.eq.s32.totalorder %s10, 0
    %p93 = por %p91, %p92
    %p94 = scmp.ne.s32.totalorder %s86, %s88
    %p95 = scmp.eq.s32.totalorder %s15, 1
    %p96 = por %p94, %p95
    %p97 = scmp.ne.s32.totalorder %s88, %s89
    %p98 = scmp.eq.s32.totalorder %s15, 0
    %p99 = por %p97, %p98
    %p100 = scmp.ne.s32.totalorder %s88, %s89
    %p101 = scmp.eq.s32.totalorder %s16, 1
    %p102 = por %p100, %p101
    %p104 = scmp.ne.s32.totalorder %s89, %s103
    %p105 = scmp.eq.s32.totalorder %s16, 0
    %p106 = por %p104, %p105
    %s107 = ssub.s32 %s10, %s17
    %p108 = scmp.eq.s32.totalorder %s107, 0
    %s110 = sadd.s32 %s109, 1
    %s111 = scalar_select %p108, %s109, %s110
    %p114 = pneg %p108
    %p115 = scmp.eq.s32.totalorder %s10, 1
    %p116 = por %p114, %p115
    %p117 = scmp.ne.s32.totalorder %s109, %s112
    %p118 = scmp.eq.s32.totalorder %s10, 0
    %p119 = por %p117, %p118
    %p120 = scmp.ne.s32.totalorder %s109, %s112
    %p121 = scmp.eq.s32.totalorder %s15, 1
    %p122 = por %p120, %p121
    %p123 = scmp.ne.s32.totalorder %s112, %s113
    %p124 = scmp.eq.s32.totalorder %s15, 0
    %p125 = por %p123, %p124
    %p126 = scmp.ne.s32.totalorder %s112, %s113
    %p127 = scmp.eq.s32.totalorder %s16, 1
    %p128 = por %p126, %p127
    %p130 = scmp.ne.s32.totalorder %s113, %s129
    %p131 = scmp.eq.s32.totalorder %s16, 0
    %p132 = por %p130, %p131
    %p133 = scmp.le.s32.totalorder 1, %s10
    %p134 = scmp.lt.s32.totalorder %s10, 3
    %p135 = pnand %p133, %p134
    %p136 = pneg %p135
    // Predicated region
    $region9: #{_lambda_.7} parent=5 // pred_check
      _
    $region10: #{_lambda_.7} parent=5 // pred_check_branch
      %138 = sbr.rel (%p135) target = $region12
    $region11: #{_lambda_.7} parent=5 // pred_region
      %s139 = ssub.s32 %s10, 1
      // Predicated region
      $region13: #{_lambda_.7} parent=11 // pred_check
        %p140 = pneg %p57
      $region14: #{_lambda_.7} parent=11 // pred_check_branch
        %142 = sbr.rel (%p140) target = $region16
      $region15: #{_lambda_.7} parent=11 // pred_region
        _
      $region16: #{_lambda_.7} parent=11 // pred_fallthru
        _
      // Predicated region
      $region17: #{_lambda_.7} parent=11 // pred_check
        %p143 = pneg %p78
      $region18: #{_lambda_.7} parent=11 // pred_check_branch
        %145 = sbr.rel (%p143) target = $region20
      $region19: #{_lambda_.7} parent=11 // pred_region
        _
      $region20: #{_lambda_.7} parent=11 // pred_fallthru
        _
      // Predicated region
      $region21: #{_lambda_.7} parent=11 // pred_check
        %p146 = pneg %p99
      $region22: #{_lambda_.7} parent=11 // pred_check_branch
        %148 = sbr.rel (%p146) target = $region24
      $region23: #{_lambda_.7} parent=11 // pred_region
        _
      $region24: #{_lambda_.7} parent=11 // pred_fallthru
        _
    $region12: #{_lambda_.7} parent=5 // pred_fallthru
      _
    %p149 = scmp.lt.s32.totalorder %s10, 2
    // Predicated region
    $region25: #{_lambda_.7} parent=5 // pred_check
      %p150 = pneg %p149
    $region26: #{_lambda_.7} parent=5 // pred_check_branch
      %152 = sbr.rel (%p150) target = $region28
    $region27: #{_lambda_.7} parent=5 // pred_region
      // Predicated region
      $region29: #{_lambda_.7} parent=27 // pred_check
        %p153 = pneg %p30
      $region30: #{_lambda_.7} parent=27 // pred_check_branch
        %155 = sbr.rel (%p153) target = $region32
      $region31: #{_lambda_.7} parent=27 // pred_region
        %p156 = scmp.lt.s32.totalorder %s10, 1
        %s157 = scalar_select %p156, %s10, 1
        %s158 = smul.addr %s157, 8
        %s159 = smul.addr %s158, 8
        %s160 = scalar_lea.vmem %s0, %s159
      $region32: #{_lambda_.7} parent=27 // pred_fallthru
        _
    $region28: #{_lambda_.7} parent=5 // pred_fallthru
      _
    %p161 = scmp.le.s32.totalorder 1, %s10
    %p162 = scmp.lt.s32.totalorder %s10, 3
    %p163 = pnand %p161, %p162
    %p164 = pneg %p163
    // Predicated region
    $region33: #{_lambda_.7} parent=5 // pred_check
      _
    $region34: #{_lambda_.7} parent=5 // pred_check_branch
      %166 = sbr.rel (%p163) target = $region36
    $region35: #{_lambda_.7} parent=5 // pred_region
      %s167 = ssub.s32 %s10, 1
      %p168 = scmp.lt.s32.totalorder %s15, 1
      %s169 = scalar_select %p168, %s15, 1
      %s170 = smul.addr %s169, 8
      %s171 = smul.addr %s170, 8
      %s172 = scalar_lea.vmem %s0, %s171
      %p173 = pneg %p36
      %p174 = pneg %p33
      %p175 = pneg %p57
      %p176 = pneg %p54
      %p177 = pneg %p78
      %p178 = pneg %p75
      %p179 = pneg %p99
      %p180 = pneg %p96
      %p181 = pneg %p125
      %p182 = pneg %p122
      %p183 = scmp.lt.s32.totalorder %s15, 1
      %s184 = scalar_select %p183, %s15, 1
      %s185 = smul.addr %s184, 4
      %s186 = smul.addr %s185, 8
      %s187 = scalar_lea.vmem %s4, %s186
      %p188 = scmp.lt.s32.totalorder %s15, 1
      %s189 = scalar_select %p188, %s15, 1
      %s190 = smul.addr %s189, 8
      %s191 = smul.addr %s190, 8
      %s192 = scalar_lea.vmem %s0, %s191
      %p193 = scmp.lt.s32.totalorder %s15, 1
      %s194 = scalar_select %p193, %s15, 1
      %s195 = smul.addr %s194, 4
      %s196 = smul.addr %s195, 8
      %s197 = scalar_lea.vmem %s4, %s196
      %v198 = vld [vmem:[%s192] sm:$0xff]
      %v199 = vld [vmem:[%s192 + $0x8] sm:$0xff]
      %v200 = vld [vmem:[%s192 + $0x10] sm:$0xff]
      %v201 = vld [vmem:[%s192 + $0x18] sm:$0xff]
      %v202 = vld [vmem:[%s192 + $0x20] sm:$0xff]
      %v203 = vld [vmem:[%s192 + $0x28] sm:$0xff]
      %v204 = vld [vmem:[%s192 + $0x30] sm:$0xff]
      %v205 = vld [vmem:[%s192 + $0x38] sm:$0xff]
      %v206 = vld [vmem:[%s1] sm:$0xff]
      %v207 = vld [vmem:[%s1 + $0x8] sm:$0xff]
      %v208 = vld [vmem:[%s1 + $0x10] sm:$0xff]
      %v209 = vld [vmem:[%s1 + $0x18] sm:$0xff]
      %s210 = scalar_lea.vmem %s1, 32
      %v211 = vld [vmem:[%s210] sm:$0xff]
      %v212 = vld [vmem:[%s210 + $0x8] sm:$0xff]
      %v213 = vld [vmem:[%s210 + $0x10] sm:$0xff]
      %v214 = vld [vmem:[%s210 + $0x18] sm:$0xff]
      %vm215 = vcmask 130048
      %v217 = vsel %vm215, %v211, 0
      %v220 = vsel %vm215, %v212, 0
      %v223 = vsel %vm215, %v213, 0
      %v226 = vsel %vm215, %v214, 0
      %228 = vmatpush.msra.mxu0 0.0
      %229 = vmatpush.msra.mxu0 0.0
      %230 = vmatpush.msra.mxu0 0.0
      %231 = vmatpush.msra.mxu0 0.0
      %232 = vmatpush.msra.mxu0 0.0
      %233 = vmatpush.msra.mxu0 0.0
      %234 = vmatpush.msra.mxu0 0.0
      %235 = vmatpush.msra.mxu0 0.0
      %236 = vmatpush.msra.mxu0 0.0
      %237 = vmatpush.msra.mxu0 0.0
      %238 = vmatpush.msra.mxu0 0.0
      %239 = vmatpush.msra.mxu0 0.0
      %240 = vmatpush.msra.mxu0 0.0
      %241 = vmatpush.msra.mxu0 0.0
      %242 = vmatpush.msra.mxu0 %v201
      %243 = vmatpush.msra.mxu0 %v200
      %244 = vmatmul.f32.gmra.mxu0 %v217
      %v245 = vpop.f32.mrf.mxu0
      %v246 = vadd.f32 0.0, %v245
      %247 = vmatmul.f32.gmra.mxu0 %v220
      %v248 = vpop.f32.mrf.mxu0
      %v249 = vadd.f32 0.0, %v248
      %250 = vmatmul.f32.gmra.mxu0 %v223
      %v251 = vpop.f32.mrf.mxu0
      %v252 = vadd.f32 0.0, %v251
      %253 = vmatmul.f32.gmra.mxu0 %v226
      %v254 = vpop.f32.mrf.mxu0
      %v255 = vadd.f32 0.0, %v254
      %256 = vdwg.mxu0
      %v258 = vsel %vm215, %v206, 0
      %v261 = vsel %vm215, %v207, 0
      %v264 = vsel %vm215, %v208, 0
      %v267 = vsel %vm215, %v209, 0
      %269 = vmatpush.msra.mxu0 0.0
      %270 = vmatpush.msra.mxu0 0.0
      %271 = vmatpush.msra.mxu0 0.0
      %272 = vmatpush.msra.mxu0 0.0
      %273 = vmatpush.msra.mxu0 0.0
      %274 = vmatpush.msra.mxu0 0.0
      %275 = vmatpush.msra.mxu0 0.0
      %276 = vmatpush.msra.mxu0 0.0
      %277 = vmatpush.msra.mxu0 0.0
      %278 = vmatpush.msra.mxu0 0.0
      %279 = vmatpush.msra.mxu0 0.0
      %280 = vmatpush.msra.mxu0 0.0
      %281 = vmatpush.msra.mxu0 0.0
      %282 = vmatpush.msra.mxu0 0.0
      %283 = vmatpush.msra.mxu0 %v199
      %284 = vmatpush.msra.mxu0 %v198
      %285 = vmatmul.f32.gmra.mxu0 %v258
      %v286 = vpop.f32.mrf.mxu0
      %v287 = vadd.f32 %v246, %v286
      %288 = vmatmul.f32.gmra.mxu0 %v261
      %v289 = vpop.f32.mrf.mxu0
      %v290 = vadd.f32 %v249, %v289
      %291 = vmatmul.f32.gmra.mxu0 %v264
      %v292 = vpop.f32.mrf.mxu0
      %v293 = vadd.f32 %v252, %v292
      %294 = vmatmul.f32.gmra.mxu0 %v267
      %v295 = vpop.f32.mrf.mxu0
      %v296 = vadd.f32 %v255, %v295
      %297 = vdwg.mxu0
      %s298 = scalar_lea.vmem %s1, 64
      %v299 = vld [vmem:[%s298] sm:$0xff]
      %v300 = vld [vmem:[%s298 + $0x8] sm:$0xff]
      %v301 = vld [vmem:[%s298 + $0x10] sm:$0xff]
      %v302 = vld [vmem:[%s298 + $0x18] sm:$0xff]
      %305 = vrot.lane.b32.xlu0 %v198, 127
      %v306 = vpop.permute.xlu0 %305
      %307 = vrot.lane.b32.xlu0 %v199, 127
      %v308 = vpop.permute.xlu0 %307
      %v312 = vsel %vm215, %v299, 0
      %v315 = vsel %vm215, %v300, 0
      %v318 = vsel %vm215, %v301, 0
      %v321 = vsel %vm215, %v302, 0
      %323 = vmatpush.msra.mxu0 0.0
      %324 = vmatpush.msra.mxu0 0.0
      %325 = vmatpush.msra.mxu0 0.0
      %326 = vmatpush.msra.mxu0 0.0
      %327 = vmatpush.msra.mxu0 0.0
      %328 = vmatpush.msra.mxu0 0.0
      %329 = vmatpush.msra.mxu0 0.0
      %330 = vmatpush.msra.mxu0 0.0
      %331 = vmatpush.msra.mxu0 0.0
      %332 = vmatpush.msra.mxu0 0.0
      %333 = vmatpush.msra.mxu0 0.0
      %334 = vmatpush.msra.mxu0 0.0
      %335 = vmatpush.msra.mxu0 0.0
      %336 = vmatpush.msra.mxu0 0.0
      %337 = vmatpush.msra.mxu0 %v308
      %338 = vmatpush.msra.mxu0 %v306
      %339 = vmatmul.f32.gmra.mxu0 %v312
      %v340 = vpop.f32.mrf.mxu0
      %v341 = vadd.f32 0.0, %v340
      %342 = vmatmul.f32.gmra.mxu0 %v315
      %v343 = vpop.f32.mrf.mxu0
      %v344 = vadd.f32 0.0, %v343
      %345 = vmatmul.f32.gmra.mxu0 %v318
      %v346 = vpop.f32.mrf.mxu0
      %v347 = vadd.f32 0.0, %v346
      %348 = vmatmul.f32.gmra.mxu0 %v321
      %v349 = vpop.f32.mrf.mxu0
      %v350 = vadd.f32 0.0, %v349
      %351 = vdwg.mxu0
      %v352 = vadd.f32 %v287, %v341
      %v353 = vadd.f32 %v290, %v344
      %v354 = vadd.f32 %v293, %v347
      %v355 = vadd.f32 %v296, %v350
      %s356 = scalar_lea.vmem %s1, 96
      %v357 = vld [vmem:[%s356] sm:$0xff]
      %v358 = vld [vmem:[%s356 + $0x8] sm:$0xff]
      %v359 = vld [vmem:[%s356 + $0x10] sm:$0xff]
      %v360 = vld [vmem:[%s356 + $0x18] sm:$0xff]
      %363 = vrot.lane.b32.xlu0 %v200, 127
      %v364 = vpop.permute.xlu0 %363
      %365 = vrot.lane.b32.xlu0 %v201, 127
      %v366 = vpop.permute.xlu0 %365
      %v370 = vsel %vm215, %v357, 0
      %v373 = vsel %vm215, %v358, 0
      %v376 = vsel %vm215, %v359, 0
      %v379 = vsel %vm215, %v360, 0
      %381 = vmatpush.msra.mxu0 0.0
      %382 = vmatpush.msra.mxu0 0.0
      %383 = vmatpush.msra.mxu0 0.0
      %384 = vmatpush.msra.mxu0 0.0
      %385 = vmatpush.msra.mxu0 0.0
      %386 = vmatpush.msra.mxu0 0.0
      %387 = vmatpush.msra.mxu0 0.0
      %388 = vmatpush.msra.mxu0 0.0
      %389 = vmatpush.msra.mxu0 0.0
      %390 = vmatpush.msra.mxu0 0.0
      %391 = vmatpush.msra.mxu0 0.0
      %392 = vmatpush.msra.mxu0 0.0
      %393 = vmatpush.msra.mxu0 0.0
      %394 = vmatpush.msra.mxu0 0.0
      %395 = vmatpush.msra.mxu0 %v366
      %396 = vmatpush.msra.mxu0 %v364
      %397 = vmatmul.f32.gmra.mxu0 %v370
      %v398 = vpop.f32.mrf.mxu0
      %v399 = vadd.f32 0.0, %v398
      %400 = vmatmul.f32.gmra.mxu0 %v373
      %v401 = vpop.f32.mrf.mxu0
      %v402 = vadd.f32 0.0, %v401
      %403 = vmatmul.f32.gmra.mxu0 %v376
      %v404 = vpop.f32.mrf.mxu0
      %v405 = vadd.f32 0.0, %v404
      %406 = vmatmul.f32.gmra.mxu0 %v379
      %v407 = vpop.f32.mrf.mxu0
      %v408 = vadd.f32 0.0, %v407
      %409 = vdwg.mxu0
      %v410 = vadd.f32 %v352, %v399
      %v411 = vadd.f32 %v353, %v402
      %v412 = vadd.f32 %v354, %v405
      %v413 = vadd.f32 %v355, %v408
      %s414 = scalar_lea.vmem %s1, 128
      %v415 = vld [vmem:[%s414] sm:$0xff]
      %v416 = vld [vmem:[%s414 + $0x8] sm:$0xff]
      %v417 = vld [vmem:[%s414 + $0x10] sm:$0xff]
      %v418 = vld [vmem:[%s414 + $0x18] sm:$0xff]
      %v420 = vsel %vm215, %v415, 0
      %v423 = vsel %vm215, %v416, 0
      %v426 = vsel %vm215, %v417, 0
      %v429 = vsel %vm215, %v418, 0
      %431 = vmatpush.msra.mxu0 0.0
      %432 = vmatpush.msra.mxu0 0.0
      %433 = vmatpush.msra.mxu0 0.0
      %434 = vmatpush.msra.mxu0 0.0
      %435 = vmatpush.msra.mxu0 0.0
      %436 = vmatpush.msra.mxu0 0.0
      %437 = vmatpush.msra.mxu0 0.0
      %438 = vmatpush.msra.mxu0 0.0
      %439 = vmatpush.msra.mxu0 0.0
      %440 = vmatpush.msra.mxu0 0.0
      %441 = vmatpush.msra.mxu0 0.0
      %442 = vmatpush.msra.mxu0 0.0
      %443 = vmatpush.msra.mxu0 0.0
      %444 = vmatpush.msra.mxu0 0.0
      %445 = vmatpush.msra.mxu0 %v203
      %446 = vmatpush.msra.mxu0 %v202
      %447 = vmatmul.f32.gmra.mxu0 %v420
      %v448 = vpop.f32.mrf.mxu0
      %v449 = vadd.f32 0.0, %v448
      %450 = vmatmul.f32.gmra.mxu0 %v423
      %v451 = vpop.f32.mrf.mxu0
      %v452 = vadd.f32 0.0, %v451
      %453 = vmatmul.f32.gmra.mxu0 %v426
      %v454 = vpop.f32.mrf.mxu0
      %v455 = vadd.f32 0.0, %v454
      %456 = vmatmul.f32.gmra.mxu0 %v429
      %v457 = vpop.f32.mrf.mxu0
      %v458 = vadd.f32 0.0, %v457
      %459 = vdwg.mxu0
      %v460 = vadd.f32 %v410, %v449
      %v461 = vadd.f32 %v411, %v452
      %v462 = vadd.f32 %v412, %v455
      %v463 = vadd.f32 %v413, %v458
      %s464 = scalar_lea.vmem %s1, 160
      %v465 = vld [vmem:[%s464] sm:$0xff]
      %v466 = vld [vmem:[%s464 + $0x8] sm:$0xff]
      %v467 = vld [vmem:[%s464 + $0x10] sm:$0xff]
      %v468 = vld [vmem:[%s464 + $0x18] sm:$0xff]
      %v470 = vsel %vm215, %v465, 0
      %v473 = vsel %vm215, %v466, 0
      %v476 = vsel %vm215, %v467, 0
      %v479 = vsel %vm215, %v468, 0
      %481 = vmatpush.msra.mxu0 0.0
      %482 = vmatpush.msra.mxu0 0.0
      %483 = vmatpush.msra.mxu0 0.0
      %484 = vmatpush.msra.mxu0 0.0
      %485 = vmatpush.msra.mxu0 0.0
      %486 = vmatpush.msra.mxu0 0.0
      %487 = vmatpush.msra.mxu0 0.0
      %488 = vmatpush.msra.mxu0 0.0
      %489 = vmatpush.msra.mxu0 0.0
      %490 = vmatpush.msra.mxu0 0.0
      %491 = vmatpush.msra.mxu0 0.0
      %492 = vmatpush.msra.mxu0 0.0
      %493 = vmatpush.msra.mxu0 0.0
      %494 = vmatpush.msra.mxu0 0.0
      %495 = vmatpush.msra.mxu0 %v205
      %496 = vmatpush.msra.mxu0 %v204
      %497 = vmatmul.f32.gmra.mxu0 %v470
      %v498 = vpop.f32.mrf.mxu0
      %v499 = vadd.f32 0.0, %v498
      %500 = vmatmul.f32.gmra.mxu0 %v473
      %v501 = vpop.f32.mrf.mxu0
      %v502 = vadd.f32 0.0, %v501
      %503 = vmatmul.f32.gmra.mxu0 %v476
      %v504 = vpop.f32.mrf.mxu0
      %v505 = vadd.f32 0.0, %v504
      %506 = vmatmul.f32.gmra.mxu0 %v479
      %v507 = vpop.f32.mrf.mxu0
      %v508 = vadd.f32 0.0, %v507
      %509 = vdwg.mxu0
      %v510 = vadd.f32 %v460, %v499
      %v511 = vadd.f32 %v461, %v502
      %v512 = vadd.f32 %v462, %v505
      %v513 = vadd.f32 %v463, %v508
      %s514 = scalar_lea.vmem %s1, 192
      %v515 = vld [vmem:[%s514] sm:$0xff]
      %v516 = vld [vmem:[%s514 + $0x8] sm:$0xff]
      %v517 = vld [vmem:[%s514 + $0x10] sm:$0xff]
      %v518 = vld [vmem:[%s514 + $0x18] sm:$0xff]
      %521 = vrot.lane.b32.xlu0 %v202, 127
      %v522 = vpop.permute.xlu0 %521
      %523 = vrot.lane.b32.xlu0 %v203, 127
      %v524 = vpop.permute.xlu0 %523
      %v528 = vsel %vm215, %v515, 0
      %v531 = vsel %vm215, %v516, 0
      %v534 = vsel %vm215, %v517, 0
      %v537 = vsel %vm215, %v518, 0
      %539 = vmatpush.msra.mxu0 0.0
      %540 = vmatpush.msra.mxu0 0.0
      %541 = vmatpush.msra.mxu0 0.0
      %542 = vmatpush.msra.mxu0 0.0
      %543 = vmatpush.msra.mxu0 0.0
      %544 = vmatpush.msra.mxu0 0.0
      %545 = vmatpush.msra.mxu0 0.0
      %546 = vmatpush.msra.mxu0 0.0
      %547 = vmatpush.msra.mxu0 0.0
      %548 = vmatpush.msra.mxu0 0.0
      %549 = vmatpush.msra.mxu0 0.0
      %550 = vmatpush.msra.mxu0 0.0
      %551 = vmatpush.msra.mxu0 0.0
      %552 = vmatpush.msra.mxu0 0.0
      %553 = vmatpush.msra.mxu0 %v524
      %554 = vmatpush.msra.mxu0 %v522
      %555 = vmatmul.f32.gmra.mxu0 %v528
      %v556 = vpop.f32.mrf.mxu0
      %v557 = vadd.f32 0.0, %v556
      %558 = vmatmul.f32.gmra.mxu0 %v531
      %v559 = vpop.f32.mrf.mxu0
      %v560 = vadd.f32 0.0, %v559
      %561 = vmatmul.f32.gmra.mxu0 %v534
      %v562 = vpop.f32.mrf.mxu0
      %v563 = vadd.f32 0.0, %v562
      %564 = vmatmul.f32.gmra.mxu0 %v537
      %v565 = vpop.f32.mrf.mxu0
      %v566 = vadd.f32 0.0, %v565
      %567 = vdwg.mxu0
      %v568 = vadd.f32 %v510, %v557
      %v569 = vadd.f32 %v511, %v560
      %v570 = vadd.f32 %v512, %v563
      %v571 = vadd.f32 %v513, %v566
      %s572 = scalar_lea.vmem %s1, 224
      %v573 = vld [vmem:[%s572] sm:$0xff]
      %v574 = vld [vmem:[%s572 + $0x8] sm:$0xff]
      %v575 = vld [vmem:[%s572 + $0x10] sm:$0xff]
      %v576 = vld [vmem:[%s572 + $0x18] sm:$0xff]
      %579 = vrot.lane.b32.xlu0 %v204, 127
      %v580 = vpop.permute.xlu0 %579
      %581 = vrot.lane.b32.xlu0 %v205, 127
      %v582 = vpop.permute.xlu0 %581
      %v586 = vsel %vm215, %v573, 0
      %v589 = vsel %vm215, %v574, 0
      %v592 = vsel %vm215, %v575, 0
      %v595 = vsel %vm215, %v576, 0
      %597 = vmatpush.msra.mxu0 0.0
      %598 = vmatpush.msra.mxu0 0.0
      %599 = vmatpush.msra.mxu0 0.0
      %600 = vmatpush.msra.mxu0 0.0
      %601 = vmatpush.msra.mxu0 0.0
      %602 = vmatpush.msra.mxu0 0.0
      %603 = vmatpush.msra.mxu0 0.0
      %604 = vmatpush.msra.mxu0 0.0
      %605 = vmatpush.msra.mxu0 0.0
      %606 = vmatpush.msra.mxu0 0.0
      %607 = vmatpush.msra.mxu0 0.0
      %608 = vmatpush.msra.mxu0 0.0
      %609 = vmatpush.msra.mxu0 0.0
      %610 = vmatpush.msra.mxu0 0.0
      %611 = vmatpush.msra.mxu0 %v582
      %612 = vmatpush.msra.mxu0 %v580
      %613 = vmatmul.f32.gmra.mxu0 %v586
      %v614 = vpop.f32.mrf.mxu0
      %v615 = vadd.f32 0.0, %v614
      %616 = vmatmul.f32.gmra.mxu0 %v589
      %v617 = vpop.f32.mrf.mxu0
      %v618 = vadd.f32 0.0, %v617
      %619 = vmatmul.f32.gmra.mxu0 %v592
      %v620 = vpop.f32.mrf.mxu0
      %v621 = vadd.f32 0.0, %v620
      %622 = vmatmul.f32.gmra.mxu0 %v595
      %v623 = vpop.f32.mrf.mxu0
      %v624 = vadd.f32 0.0, %v623
      %625 = vdwg.mxu0
      %v626 = vadd.f32 %v568, %v615
      %v627 = vadd.f32 %v569, %v618
      %v628 = vadd.f32 %v570, %v621
      %v629 = vadd.f32 %v571, %v624
      %s630 = scalar_lea.vmem %s1, 256
      %v631 = vld [vmem:[%s630] sm:$0xff]
      %v632 = vld [vmem:[%s630 + $0x8] sm:$0xff]
      %v633 = vld [vmem:[%s630 + $0x10] sm:$0xff]
      %v634 = vld [vmem:[%s630 + $0x18] sm:$0xff]
      %635 = vrot.lane.b32.xlu0 %v198, 123
      %v636 = vpop.permute.xlu0 %635
      %637 = vrot.lane.b32.xlu0 %v199, 123
      %v638 = vpop.permute.xlu0 %637
      %v642 = vsel %vm215, %v631, 0
      %v645 = vsel %vm215, %v632, 0
      %v648 = vsel %vm215, %v633, 0
      %v651 = vsel %vm215, %v634, 0
      %653 = vmatpush.msra.mxu0 0.0
      %654 = vmatpush.msra.mxu0 0.0
      %655 = vmatpush.msra.mxu0 0.0
      %656 = vmatpush.msra.mxu0 0.0
      %657 = vmatpush.msra.mxu0 0.0
      %658 = vmatpush.msra.mxu0 0.0
      %659 = vmatpush.msra.mxu0 0.0
      %660 = vmatpush.msra.mxu0 0.0
      %661 = vmatpush.msra.mxu0 0.0
      %662 = vmatpush.msra.mxu0 0.0
      %663 = vmatpush.msra.mxu0 0.0
      %664 = vmatpush.msra.mxu0 0.0
      %665 = vmatpush.msra.mxu0 0.0
      %666 = vmatpush.msra.mxu0 0.0
      %667 = vmatpush.msra.mxu0 %v638
      %668 = vmatpush.msra.mxu0 %v636
      %669 = vmatmul.f32.gmra.mxu0 %v642
      %v670 = vpop.f32.mrf.mxu0
      %v671 = vadd.f32 0.0, %v670
      %672 = vmatmul.f32.gmra.mxu0 %v645
      %v673 = vpop.f32.mrf.mxu0
      %v674 = vadd.f32 0.0, %v673
      %675 = vmatmul.f32.gmra.mxu0 %v648
      %v676 = vpop.f32.mrf.mxu0
      %v677 = vadd.f32 0.0, %v676
      %678 = vmatmul.f32.gmra.mxu0 %v651
      %v679 = vpop.f32.mrf.mxu0
      %v680 = vadd.f32 0.0, %v679
      %681 = vdwg.mxu0
      %v682 = vadd.f32 %v626, %v671
      %v683 = vadd.f32 %v627, %v674
      %v684 = vadd.f32 %v628, %v677
      %v685 = vadd.f32 %v629, %v680
      %s686 = scalar_lea.vmem %s1, 288
      %v687 = vld [vmem:[%s686] sm:$0xff]
      %v688 = vld [vmem:[%s686 + $0x8] sm:$0xff]
      %v689 = vld [vmem:[%s686 + $0x10] sm:$0xff]
      %v690 = vld [vmem:[%s686 + $0x18] sm:$0xff]
      %691 = vrot.lane.b32.xlu0 %v200, 123
      %v692 = vpop.permute.xlu0 %691
      %693 = vrot.lane.b32.xlu0 %v201, 123
      %v694 = vpop.permute.xlu0 %693
      %v698 = vsel %vm215, %v687, 0
      %v701 = vsel %vm215, %v688, 0
      %v704 = vsel %vm215, %v689, 0
      %v707 = vsel %vm215, %v690, 0
      %709 = vmatpush.msra.mxu0 0.0
      %710 = vmatpush.msra.mxu0 0.0
      %711 = vmatpush.msra.mxu0 0.0
      %712 = vmatpush.msra.mxu0 0.0
      %713 = vmatpush.msra.mxu0 0.0
      %714 = vmatpush.msra.mxu0 0.0
      %715 = vmatpush.msra.mxu0 0.0
      %716 = vmatpush.msra.mxu0 0.0
      %717 = vmatpush.msra.mxu0 0.0
      %718 = vmatpush.msra.mxu0 0.0
      %719 = vmatpush.msra.mxu0 0.0
      %720 = vmatpush.msra.mxu0 0.0
      %721 = vmatpush.msra.mxu0 0.0
      %722 = vmatpush.msra.mxu0 0.0
      %723 = vmatpush.msra.mxu0 %v694
      %724 = vmatpush.msra.mxu0 %v692
      %725 = vmatmul.f32.gmra.mxu0 %v698
      %v726 = vpop.f32.mrf.mxu0
      %v727 = vadd.f32 0.0, %v726
      %728 = vmatmul.f32.gmra.mxu0 %v701
      %v729 = vpop.f32.mrf.mxu0
      %v730 = vadd.f32 0.0, %v729
      %731 = vmatmul.f32.gmra.mxu0 %v704
      %v732 = vpop.f32.mrf.mxu0
      %v733 = vadd.f32 0.0, %v732
      %734 = vmatmul.f32.gmra.mxu0 %v707
      %v735 = vpop.f32.mrf.mxu0
      %v736 = vadd.f32 0.0, %v735
      %737 = vdwg.mxu0
      %v738 = vadd.f32 %v682, %v727
      %v739 = vadd.f32 %v683, %v730
      %v740 = vadd.f32 %v684, %v733
      %v741 = vadd.f32 %v685, %v736
      %s742 = scalar_lea.vmem %s1, 320
      %v743 = vld [vmem:[%s742] sm:$0xff]
      %v744 = vld [vmem:[%s742 + $0x8] sm:$0xff]
      %v745 = vld [vmem:[%s742 + $0x10] sm:$0xff]
      %v746 = vld [vmem:[%s742 + $0x18] sm:$0xff]
      %747 = vrot.lane.b32.xlu0 %v198, 122
      %v748 = vpop.permute.xlu0 %747
      %749 = vrot.lane.b32.xlu0 %v199, 122
      %v750 = vpop.permute.xlu0 %749
      %v754 = vsel %vm215, %v743, 0
      %v757 = vsel %vm215, %v744, 0
      %v760 = vsel %vm215, %v745, 0
      %v763 = vsel %vm215, %v746, 0
      %765 = vmatpush.msra.mxu0 0.0
      %766 = vmatpush.msra.mxu0 0.0
      %767 = vmatpush.msra.mxu0 0.0
      %768 = vmatpush.msra.mxu0 0.0
      %769 = vmatpush.msra.mxu0 0.0
      %770 = vmatpush.msra.mxu0 0.0
      %771 = vmatpush.msra.mxu0 0.0
      %772 = vmatpush.msra.mxu0 0.0
      %773 = vmatpush.msra.mxu0 0.0
      %774 = vmatpush.msra.mxu0 0.0
      %775 = vmatpush.msra.mxu0 0.0
      %776 = vmatpush.msra.mxu0 0.0
      %777 = vmatpush.msra.mxu0 0.0
      %778 = vmatpush.msra.mxu0 0.0
      %779 = vmatpush.msra.mxu0 %v750
      %780 = vmatpush.msra.mxu0 %v748
      %781 = vmatmul.f32.gmra.mxu0 %v754
      %v782 = vpop.f32.mrf.mxu0
      %v783 = vadd.f32 0.0, %v782
      %784 = vmatmul.f32.gmra.mxu0 %v757
      %v785 = vpop.f32.mrf.mxu0
      %v786 = vadd.f32 0.0, %v785
      %787 = vmatmul.f32.gmra.mxu0 %v760
      %v788 = vpop.f32.mrf.mxu0
      %v789 = vadd.f32 0.0, %v788
      %790 = vmatmul.f32.gmra.mxu0 %v763
      %v791 = vpop.f32.mrf.mxu0
      %v792 = vadd.f32 0.0, %v791
      %793 = vdwg.mxu0
      %v794 = vadd.f32 %v738, %v783
      %v795 = vadd.f32 %v739, %v786
      %v796 = vadd.f32 %v740, %v789
      %v797 = vadd.f32 %v741, %v792
      %s798 = scalar_lea.vmem %s1, 352
      %v799 = vld [vmem:[%s798] sm:$0xff]
      %v800 = vld [vmem:[%s798 + $0x8] sm:$0xff]
      %v801 = vld [vmem:[%s798 + $0x10] sm:$0xff]
      %v802 = vld [vmem:[%s798 + $0x18] sm:$0xff]
      %803 = vrot.lane.b32.xlu0 %v200, 122
      %v804 = vpop.permute.xlu0 %803
      %805 = vrot.lane.b32.xlu0 %v201, 122
      %v806 = vpop.permute.xlu0 %805
      %v810 = vsel %vm215, %v799, 0
      %v813 = vsel %vm215, %v800, 0
      %v816 = vsel %vm215, %v801, 0
      %v819 = vsel %vm215, %v802, 0
      %821 = vmatpush.msra.mxu0 0.0
      %822 = vmatpush.msra.mxu0 0.0
      %823 = vmatpush.msra.mxu0 0.0
      %824 = vmatpush.msra.mxu0 0.0
      %825 = vmatpush.msra.mxu0 0.0
      %826 = vmatpush.msra.mxu0 0.0
      %827 = vmatpush.msra.mxu0 0.0
      %828 = vmatpush.msra.mxu0 0.0
      %829 = vmatpush.msra.mxu0 0.0
      %830 = vmatpush.msra.mxu0 0.0
      %831 = vmatpush.msra.mxu0 0.0
      %832 = vmatpush.msra.mxu0 0.0
      %833 = vmatpush.msra.mxu0 0.0
      %834 = vmatpush.msra.mxu0 0.0
      %835 = vmatpush.msra.mxu0 %v806
      %836 = vmatpush.msra.mxu0 %v804
      %837 = vmatmul.f32.gmra.mxu0 %v810
      %v838 = vpop.f32.mrf.mxu0
      %v839 = vadd.f32 0.0, %v838
      %840 = vmatmul.f32.gmra.mxu0 %v813
      %v841 = vpop.f32.mrf.mxu0
      %v842 = vadd.f32 0.0, %v841
      %843 = vmatmul.f32.gmra.mxu0 %v816
      %v844 = vpop.f32.mrf.mxu0
      %v845 = vadd.f32 0.0, %v844
      %846 = vmatmul.f32.gmra.mxu0 %v819
      %v847 = vpop.f32.mrf.mxu0
      %v848 = vadd.f32 0.0, %v847
      %849 = vdwg.mxu0
      %v850 = vadd.f32 %v794, %v839
      %v851 = vadd.f32 %v795, %v842
      %v852 = vadd.f32 %v796, %v845
      %v853 = vadd.f32 %v797, %v848
      %s854 = scalar_lea.vmem %s1, 384
      %v855 = vld [vmem:[%s854] sm:$0xff]
      %v856 = vld [vmem:[%s854 + $0x8] sm:$0xff]
      %v857 = vld [vmem:[%s854 + $0x10] sm:$0xff]
      %v858 = vld [vmem:[%s854 + $0x18] sm:$0xff]
      %859 = vrot.lane.b32.xlu0 %v202, 123
      %v860 = vpop.permute.xlu0 %859
      %861 = vrot.lane.b32.xlu0 %v203, 123
      %v862 = vpop.permute.xlu0 %861
      %v866 = vsel %vm215, %v855, 0
      %v869 = vsel %vm215, %v856, 0
      %v872 = vsel %vm215, %v857, 0
      %v875 = vsel %vm215, %v858, 0
      %877 = vmatpush.msra.mxu0 0.0
      %878 = vmatpush.msra.mxu0 0.0
      %879 = vmatpush.msra.mxu0 0.0
      %880 = vmatpush.msra.mxu0 0.0
      %881 = vmatpush.msra.mxu0 0.0
      %882 = vmatpush.msra.mxu0 0.0
      %883 = vmatpush.msra.mxu0 0.0
      %884 = vmatpush.msra.mxu0 0.0
      %885 = vmatpush.msra.mxu0 0.0
      %886 = vmatpush.msra.mxu0 0.0
      %887 = vmatpush.msra.mxu0 0.0
      %888 = vmatpush.msra.mxu0 0.0
      %889 = vmatpush.msra.mxu0 0.0
      %890 = vmatpush.msra.mxu0 0.0
      %891 = vmatpush.msra.mxu0 %v862
      %892 = vmatpush.msra.mxu0 %v860
      %893 = vmatmul.f32.gmra.mxu0 %v866
      %v894 = vpop.f32.mrf.mxu0
      %v895 = vadd.f32 0.0, %v894
      %896 = vmatmul.f32.gmra.mxu0 %v869
      %v897 = vpop.f32.mrf.mxu0
      %v898 = vadd.f32 0.0, %v897
      %899 = vmatmul.f32.gmra.mxu0 %v872
      %v900 = vpop.f32.mrf.mxu0
      %v901 = vadd.f32 0.0, %v900
      %902 = vmatmul.f32.gmra.mxu0 %v875
      %v903 = vpop.f32.mrf.mxu0
      %v904 = vadd.f32 0.0, %v903
      %905 = vdwg.mxu0
      %v906 = vadd.f32 %v850, %v895
      %v907 = vadd.f32 %v851, %v898
      %v908 = vadd.f32 %v852, %v901
      %v909 = vadd.f32 %v853, %v904
      %s910 = scalar_lea.vmem %s1, 416
      %v911 = vld [vmem:[%s910] sm:$0xff]
      %v912 = vld [vmem:[%s910 + $0x8] sm:$0xff]
      %v913 = vld [vmem:[%s910 + $0x10] sm:$0xff]
      %v914 = vld [vmem:[%s910 + $0x18] sm:$0xff]
      %915 = vrot.lane.b32.xlu0 %v204, 123
      %v916 = vpop.permute.xlu0 %915
      %917 = vrot.lane.b32.xlu0 %v205, 123
      %v918 = vpop.permute.xlu0 %917
      %v922 = vsel %vm215, %v911, 0
      %v925 = vsel %vm215, %v912, 0
      %v928 = vsel %vm215, %v913, 0
      %v931 = vsel %vm215, %v914, 0
      %933 = vmatpush.msra.mxu0 0.0
      %934 = vmatpush.msra.mxu0 0.0
      %935 = vmatpush.msra.mxu0 0.0
      %936 = vmatpush.msra.mxu0 0.0
      %937 = vmatpush.msra.mxu0 0.0
      %938 = vmatpush.msra.mxu0 0.0
      %939 = vmatpush.msra.mxu0 0.0
      %940 = vmatpush.msra.mxu0 0.0
      %941 = vmatpush.msra.mxu0 0.0
      %942 = vmatpush.msra.mxu0 0.0
      %943 = vmatpush.msra.mxu0 0.0
      %944 = vmatpush.msra.mxu0 0.0
      %945 = vmatpush.msra.mxu0 0.0
      %946 = vmatpush.msra.mxu0 0.0
      %947 = vmatpush.msra.mxu0 %v918
      %948 = vmatpush.msra.mxu0 %v916
      %949 = vmatmul.f32.gmra.mxu0 %v922
      %v950 = vpop.f32.mrf.mxu0
      %v951 = vadd.f32 0.0, %v950
      %952 = vmatmul.f32.gmra.mxu0 %v925
      %v953 = vpop.f32.mrf.mxu0
      %v954 = vadd.f32 0.0, %v953
      %955 = vmatmul.f32.gmra.mxu0 %v928
      %v956 = vpop.f32.mrf.mxu0
      %v957 = vadd.f32 0.0, %v956
      %958 = vmatmul.f32.gmra.mxu0 %v931
      %v959 = vpop.f32.mrf.mxu0
      %v960 = vadd.f32 0.0, %v959
      %961 = vdwg.mxu0
      %v962 = vadd.f32 %v906, %v951
      %v963 = vadd.f32 %v907, %v954
      %v964 = vadd.f32 %v908, %v957
      %v965 = vadd.f32 %v909, %v960
      %s966 = scalar_lea.vmem %s1, 448
      %v967 = vld [vmem:[%s966] sm:$0xff]
      %v968 = vld [vmem:[%s966 + $0x8] sm:$0xff]
      %v969 = vld [vmem:[%s966 + $0x10] sm:$0xff]
      %v970 = vld [vmem:[%s966 + $0x18] sm:$0xff]
      %971 = vrot.lane.b32.xlu0 %v202, 122
      %v972 = vpop.permute.xlu0 %971
      %973 = vrot.lane.b32.xlu0 %v203, 122
      %v974 = vpop.permute.xlu0 %973
      %v978 = vsel %vm215, %v967, 0
      %v981 = vsel %vm215, %v968, 0
      %v984 = vsel %vm215, %v969, 0
      %v987 = vsel %vm215, %v970, 0
      %989 = vmatpush.msra.mxu0 0.0
      %990 = vmatpush.msra.mxu0 0.0
      %991 = vmatpush.msra.mxu0 0.0
      %992 = vmatpush.msra.mxu0 0.0
      %993 = vmatpush.msra.mxu0 0.0
      %994 = vmatpush.msra.mxu0 0.0
      %995 = vmatpush.msra.mxu0 0.0
      %996 = vmatpush.msra.mxu0 0.0
      %997 = vmatpush.msra.mxu0 0.0
      %998 = vmatpush.msra.mxu0 0.0
      %999 = vmatpush.msra.mxu0 0.0
      %1000 = vmatpush.msra.mxu0 0.0
      %1001 = vmatpush.msra.mxu0 0.0
      %1002 = vmatpush.msra.mxu0 0.0
      %1003 = vmatpush.msra.mxu0 %v974
      %1004 = vmatpush.msra.mxu0 %v972
      %1005 = vmatmul.f32.gmra.mxu0 %v978
      %v1006 = vpop.f32.mrf.mxu0
      %v1007 = vadd.f32 0.0, %v1006
      %1008 = vmatmul.f32.gmra.mxu0 %v981
      %v1009 = vpop.f32.mrf.mxu0
      %v1010 = vadd.f32 0.0, %v1009
      %1011 = vmatmul.f32.gmra.mxu0 %v984
      %v1012 = vpop.f32.mrf.mxu0
      %v1013 = vadd.f32 0.0, %v1012
      %1014 = vmatmul.f32.gmra.mxu0 %v987
      %v1015 = vpop.f32.mrf.mxu0
      %v1016 = vadd.f32 0.0, %v1015
      %1017 = vdwg.mxu0
      %v1018 = vadd.f32 %v962, %v1007
      %v1019 = vadd.f32 %v963, %v1010
      %v1020 = vadd.f32 %v964, %v1013
      %v1021 = vadd.f32 %v965, %v1016
      %s1022 = scalar_lea.vmem %s1, 480
      %v1023 = vld [vmem:[%s1022] sm:$0xff]
      %v1024 = vld [vmem:[%s1022 + $0x8] sm:$0xff]
      %v1025 = vld [vmem:[%s1022 + $0x10] sm:$0xff]
      %v1026 = vld [vmem:[%s1022 + $0x18] sm:$0xff]
      %1027 = vrot.lane.b32.xlu0 %v204, 122
      %v1028 = vpop.permute.xlu0 %1027
      %1029 = vrot.lane.b32.xlu0 %v205, 122
      %v1030 = vpop.permute.xlu0 %1029
      %v1034 = vsel %vm215, %v1023, 0
      %v1037 = vsel %vm215, %v1024, 0
      %v1040 = vsel %vm215, %v1025, 0
      %v1043 = vsel %vm215, %v1026, 0
      %1045 = vmatpush.msra.mxu0 0.0
      %1046 = vmatpush.msra.mxu0 0.0
      %1047 = vmatpush.msra.mxu0 0.0
      %1048 = vmatpush.msra.mxu0 0.0
      %1049 = vmatpush.msra.mxu0 0.0
      %1050 = vmatpush.msra.mxu0 0.0
      %1051 = vmatpush.msra.mxu0 0.0
      %1052 = vmatpush.msra.mxu0 0.0
      %1053 = vmatpush.msra.mxu0 0.0
      %1054 = vmatpush.msra.mxu0 0.0
      %1055 = vmatpush.msra.mxu0 0.0
      %1056 = vmatpush.msra.mxu0 0.0
      %1057 = vmatpush.msra.mxu0 0.0
      %1058 = vmatpush.msra.mxu0 0.0
      %1059 = vmatpush.msra.mxu0 %v1030
      %1060 = vmatpush.msra.mxu0 %v1028
      %1061 = vmatmul.f32.gmra.mxu0 %v1034
      %v1062 = vpop.f32.mrf.mxu0
      %v1063 = vadd.f32 0.0, %v1062
      %1064 = vmatmul.f32.gmra.mxu0 %v1037
      %v1065 = vpop.f32.mrf.mxu0
      %v1066 = vadd.f32 0.0, %v1065
      %1067 = vmatmul.f32.gmra.mxu0 %v1040
      %v1068 = vpop.f32.mrf.mxu0
      %v1069 = vadd.f32 0.0, %v1068
      %1070 = vmatmul.f32.gmra.mxu0 %v1043
      %v1071 = vpop.f32.mrf.mxu0
      %v1072 = vadd.f32 0.0, %v1071
      %1073 = vdwg.mxu0
      %v1074 = vadd.f32 %v1018, %v1063
      %v1075 = vadd.f32 %v1019, %v1066
      %v1076 = vadd.f32 %v1020, %v1069
      %v1077 = vadd.f32 %v1021, %v1072
      %v1078 = vld [vmem:[%s2] sm:$0xff]
      %v1079 = vld [vmem:[%s2 + $0x8] sm:$0xff]
      %v1080 = vld [vmem:[%s2 + $0x10] sm:$0xff]
      %v1081 = vld [vmem:[%s2 + $0x18] sm:$0xff]
      %v1082 = vld [vmem:[%s3] sm:$0x1]
      %1084 = vset.pattern.permute.xlu0 0
      %1085 = vperm.xlu0 %1084, %v1078
      %v1086 = vpop.permute.xlu0 %1085
      %1089 = vset.pattern.permute.xlu0 0
      %1090 = vperm.xlu0 %1089, %v1079
      %v1091 = vpop.permute.xlu0 %1090
      %1094 = vset.pattern.permute.xlu0 0
      %1095 = vperm.xlu0 %1094, %v1080
      %v1096 = vpop.permute.xlu0 %1095
      %1099 = vset.pattern.permute.xlu0 0
      %1100 = vperm.xlu0 %1099, %v1081
      %v1101 = vpop.permute.xlu0 %1100
      %v1103 = vadd.f32 %v1074, %v1086
      %v1104 = vadd.f32 %v1075, %v1091
      %v1105 = vadd.f32 %v1076, %v1096
      %v1106 = vadd.f32 %v1077, %v1101
      %v1108 = vperm.slane %v1082, 0
      %v1110 = vmul.f32 %v1103, %v1108
      %v1111 = vmul.f32 %v1104, %v1108
      %v1112 = vmul.f32 %v1105, %v1108
      %v1113 = vmul.f32 %v1106, %v1108
      %vm1114 = vcmask 162816
      %v1115 = vsel %vm1114, %v1110, 0.0
      %1116 = vadd.xlane.f32.xlu0 %v1115
      %v1117 = vpop.xlane.xlu0 %1116
      %v1118 = vsel %vm1114, %v1111, 0.0
      %1119 = vadd.xlane.f32.xlu0 %v1118
      %v1120 = vpop.xlane.xlu0 %1119
      %v1121 = vsel %vm1114, %v1112, 0.0
      %1122 = vadd.xlane.f32.xlu0 %v1121
      %v1123 = vpop.xlane.xlu0 %1122
      %v1124 = vsel %vm1114, %v1113, 0.0
      %1125 = vadd.xlane.f32.xlu0 %v1124
      %v1126 = vpop.xlane.xlu0 %1125
      %v1127 = vmul.f32 %v1117, 0.0625
      %v1128 = vmul.f32 %v1120, 0.0625
      %v1129 = vmul.f32 %v1123, 0.0625
      %v1130 = vmul.f32 %v1126, 0.0625
      %v1131 = vsub.f32 %v1103, %v1127
      %v1132 = vsub.f32 %v1104, %v1128
      %v1133 = vsub.f32 %v1105, %v1129
      %v1134 = vsub.f32 %v1106, %v1130
      %v1135 = vmul.f32 %v1131, %v1108
      %v1136 = vmul.f32 %v1132, %v1108
      %v1137 = vmul.f32 %v1133, %v1108
      %v1138 = vmul.f32 %v1134, %v1108
      %v1139 = vmul.f32 %v1135, %v1135
      %v1140 = vmul.f32 %v1136, %v1136
      %v1141 = vmul.f32 %v1137, %v1137
      %v1142 = vmul.f32 %v1138, %v1138
      %v1143 = vsel %vm1114, %v1139, 0.0
      %1144 = vadd.xlane.f32.xlu0 %v1143
      %v1145 = vpop.xlane.xlu0 %1144
      %v1146 = vsel %vm1114, %v1140, 0.0
      %1147 = vadd.xlane.f32.xlu0 %v1146
      %v1148 = vpop.xlane.xlu0 %1147
      %v1149 = vsel %vm1114, %v1141, 0.0
      %1150 = vadd.xlane.f32.xlu0 %v1149
      %v1151 = vpop.xlane.xlu0 %1150
      %v1152 = vsel %vm1114, %v1142, 0.0
      %1153 = vadd.xlane.f32.xlu0 %v1152
      %v1154 = vpop.xlane.xlu0 %1153
      %v1155 = vmul.f32 %v1145, 0.0625
      %v1156 = vmul.f32 %v1148, 0.0625
      %v1157 = vmul.f32 %v1151, 0.0625
      %v1158 = vmul.f32 %v1154, 0.0625
      %v1159 = vadd.f32 %v1155, 1e-05
      %v1160 = vadd.f32 %v1156, 1e-05
      %v1161 = vadd.f32 %v1157, 1e-05
      %v1162 = vadd.f32 %v1158, 1e-05
      %v1163 = vrsqrt.pop %v1159
      %v1164 = vmul.f32 %v1163, %v1159
      %v1165 = vmul.f32 %v1164, %v1163
      %v1166 = vmul.f32 0.5, %v1165
      %v1167 = vsub.f32 1.5, %v1166
      %v1168 = vmul.f32 %v1163, %v1167
      %vm1169 = vweird.f32 %v1159
      %vm1170 = vweird.f32 %v1163
      %vm1171 = vmor %vm1169, %vm1170
      %v1172 = vsel %vm1171, %v1163, %v1168
      %v1173 = vrsqrt.pop %v1160
      %v1174 = vmul.f32 %v1173, %v1160
      %v1175 = vmul.f32 %v1174, %v1173
      %v1176 = vmul.f32 0.5, %v1175
      %v1177 = vsub.f32 1.5, %v1176
      %v1178 = vmul.f32 %v1173, %v1177
      %vm1179 = vweird.f32 %v1160
      %vm1180 = vweird.f32 %v1173
      %vm1181 = vmor %vm1179, %vm1180
      %v1182 = vsel %vm1181, %v1173, %v1178
      %v1183 = vrsqrt.pop %v1161
      %v1184 = vmul.f32 %v1183, %v1161
      %v1185 = vmul.f32 %v1184, %v1183
      %v1186 = vmul.f32 0.5, %v1185
      %v1187 = vsub.f32 1.5, %v1186
      %v1188 = vmul.f32 %v1183, %v1187
      %vm1189 = vweird.f32 %v1161
      %vm1190 = vweird.f32 %v1183
      %vm1191 = vmor %vm1189, %vm1190
      %v1192 = vsel %vm1191, %v1183, %v1188
      %v1193 = vrsqrt.pop %v1162
      %v1194 = vmul.f32 %v1193, %v1162
      %v1195 = vmul.f32 %v1194, %v1193
      %v1196 = vmul.f32 0.5, %v1195
      %v1197 = vsub.f32 1.5, %v1196
      %v1198 = vmul.f32 %v1193, %v1197
      %vm1199 = vweird.f32 %v1162
      %vm1200 = vweird.f32 %v1193
      %vm1201 = vmor %vm1199, %vm1200
      %v1202 = vsel %vm1201, %v1193, %v1198
      %v1203 = vmul.f32 %v1131, %v1172
      %v1204 = vmul.f32 %v1132, %v1182
      %v1205 = vmul.f32 %v1133, %v1192
      %v1206 = vmul.f32 %v1134, %v1202
      %v1207 = vmax.f32 %v1203, 0.0
      %v1208 = vmax.f32 %v1204, 0.0
      %v1209 = vmax.f32 %v1205, 0.0
      %v1210 = vmax.f32 %v1206, 0.0
      %1211 = vst.msk [vmem:[%s197] sm:$0xff] %vm1114, %v1207
      %1212 = vst.msk [vmem:[%s197 + $0x8] sm:$0xff] %vm1114, %v1208
      %1213 = vst.msk [vmem:[%s197 + $0x10] sm:$0xff] %vm1114, %v1209
      %1214 = vst.msk [vmem:[%s197 + $0x18] sm:$0xff] %vm1114, %v1210
      %p1215 = scmp.lt.s32.totalorder %s15, 1
      %s1216 = scalar_select %p1215, %s15, 1
      %s1217 = smul.addr %s1216, 4
      %s1218 = smul.addr %s1217, 8
      %s1219 = scalar_lea.vmem %s4, %s1218
      // Predicated region
      $region37: #{_lambda_.7} parent=35 // pred_check
        %p1220 = pneg %p122
      $region38: #{_lambda_.7} parent=35 // pred_check_branch
        %1222 = sbr.rel (%p1220) target = $region40
      $region39: #{_lambda_.7} parent=35 // pred_region
        _
      $region40: #{_lambda_.7} parent=35 // pred_fallthru
        _
    $region36: #{_lambda_.7} parent=5 // pred_fallthru
      _
    %p1223 = scmp.le.s32.totalorder 2, %s10
    // Predicated region
    $region41: #{_lambda_.7} parent=5 // pred_check
      %p1224 = pneg %p1223
    $region42: #{_lambda_.7} parent=5 // pred_check_branch
      %1226 = sbr.rel (%p1224) target = $region44
    $region43: #{_lambda_.7} parent=5 // pred_region
      %s1227 = ssub.s32 %s10, 2
      // Predicated region
      $region45: #{_lambda_.7} parent=43 // pred_check
        %p1228 = pneg %p128
      $region46: #{_lambda_.7} parent=43 // pred_check_branch
        %1230 = sbr.rel (%p1228) target = $region48
      $region47: #{_lambda_.7} parent=43 // pred_region
        %p1231 = scmp.lt.s32.totalorder %s16, 1
        %s1232 = scalar_select %p1231, %s16, 1
        %s1233 = smul.addr %s1232, 4
        %s1234 = smul.addr %s1233, 8
        %s1235 = scalar_lea.vmem %s4, %s1234
      $region48: #{_lambda_.7} parent=43 // pred_fallthru
        _
    $region44: #{_lambda_.7} parent=5 // pred_fallthru
      _
  $region6: #{_lambda_.7} parent=0 // loop_footer
    %s14 = sadd.s32 1, %s10
  $region7: #{_lambda_.7} parent=0 // loop_footer_branch
    %9 = sbr.rel target = $region3
  $region8: #{_lambda_.7} parent=0 // loop_exit
    _

// kernel: _lambda_.8
$region0: #{_lambda_.8}
  #allocation0 [shape = 'u32[]', space=smem, size = 0x4, offset = 0x4, fixed_abs, tag = 'smem constant byte address 0x4 - core index']
  #allocation1 [shape = 'u32[72,128]{1,0:T(1,128)}', space=vmem, size = 0x9000, scoped, tag = 'internal scratch']
  %s0 = inlined_call_operand.vmem [shape: f32[2,32,38], index: 0, kind: input, shape index: {}]
  %s1 = inlined_call_operand.vmem [shape: f32[9,32,32], index: 1, kind: input, shape index: {}]
  %s2 = inlined_call_operand.vmem [shape: f32[32,1], index: 2, kind: input, shape index: {}]
  %s3 = inlined_call_operand.vmem [shape: f32[9,32,32], index: 3, kind: input, shape index: {}]
  %s4 = inlined_call_operand.vmem [shape: f32[32,1], index: 4, kind: input, shape index: {}]
  %s5 = inlined_call_operand.vmem [shape: f32[1,24], index: 5, kind: input, shape index: {}]
  %s6 = inlined_call_operand.vmem [shape: f32[2,32,24], index: 6, kind: output, shape index: {}]
  %s7 = sld [smem:[#allocation0]]
  $region57: #{_lambda_.8} parent=0
    _
  %s9 = ssub.s32 1, %s7
  %s10 = scalar_select 0, %s9, %s7
  loop: start=0, step=1, limit=4
  $region2: #{_lambda_.8} parent=0 // loop_pre_header
    _
  $region3: #{_lambda_.8} parent=0 // loop_header
    %s12 = sphi 0, %s16
    %p13 = scmp.ge.s32.totalorder %s12, 4
    %s22 = sphi 0, %s24
    %s25 = sphi 0, %s22
    %s26 = sphi 0, %s25
    %s42 = sphi 0, %s26
    %s46 = sphi 0, %s46
    %s48 = sphi 0, %s46
    %s49 = sphi 0, %s48
    %s63 = sphi 0, %s49
    %s67 = sphi 0, %s67
    %s69 = sphi 0, %s67
    %s70 = sphi 0, %s69
    %s84 = sphi 0, %s70
    %s88 = sphi 0, %s88
    %s90 = sphi 0, %s88
    %s91 = sphi 0, %s90
    %s105 = sphi 0, %s91
    %s109 = sphi 0, %s109
    %s111 = sphi 0, %s109
    %s112 = sphi 0, %s111
    %s126 = sphi 0, %s112
    %s130 = sphi 0, %s130
    %s132 = sphi 0, %s130
    %s133 = sphi 0, %s132
    %s147 = sphi 0, %s133
    %s153 = sphi 0, %s155
    %s156 = sphi 0, %s153
    %s157 = sphi 0, %s156
    %s173 = sphi 0, %s157
  $region4: #{_lambda_.8} parent=0 // loop_header_branch
    %15 = sbr.rel (%p13) target = $region8
  $region5: #{_lambda_.8} parent=0 // loop_body
    %s17 = ssub.s32 %s12, 1
    %s18 = ssub.s32 %s12, 2
    %s19 = sadd.s32 %s12, 1
    %s20 = ssub.s32 %s12, %s19
    %p21 = scmp.eq.s32.totalorder %s20, 0
    %s23 = sadd.s32 %s22, 1
    %s24 = scalar_select %p21, %s22, %s23
    %p27 = pneg %p21
    %p28 = scmp.eq.s32.totalorder %s12, 1
    %p29 = por %p27, %p28
    %p30 = scmp.ne.s32.totalorder %s22, %s25
    %p31 = scmp.eq.s32.totalorder %s12, 0
    %p32 = por %p30, %p31
    %p33 = scmp.ne.s32.totalorder %s22, %s25
    %p34 = scmp.eq.s32.totalorder %s17, 1
    %p35 = por %p33, %p34
    %p36 = scmp.ne.s32.totalorder %s25, %s26
    %p37 = scmp.eq.s32.totalorder %s17, 0
    %p38 = por %p36, %p37
    %p39 = scmp.ne.s32.totalorder %s25, %s26
    %p40 = scmp.eq.s32.totalorder %s18, 1
    %p41 = por %p39, %p40
    %p43 = scmp.ne.s32.totalorder %s26, %s42
    %p44 = scmp.eq.s32.totalorder %s18, 0
    %p45 = por %p43, %p44
    %s47 = sadd.s32 %s46, 1
    %p50 = scmp.eq.s32.totalorder %s12, 1
    %p51 = scmp.ne.s32.totalorder %s46, %s48
    %p52 = scmp.eq.s32.totalorder %s12, 0
    %p53 = por %p51, %p52
    %p54 = scmp.ne.s32.totalorder %s46, %s48
    %p55 = scmp.eq.s32.totalorder %s17, 1
    %p56 = por %p54, %p55
    %p57 = scmp.ne.s32.totalorder %s48, %s49
    %p58 = scmp.eq.s32.totalorder %s17, 0
    %p59 = por %p57, %p58
    %p60 = scmp.ne.s32.totalorder %s48, %s49
    %p61 = scmp.eq.s32.totalorder %s18, 1
    %p62 = por %p60, %p61
    %p64 = scmp.ne.s32.totalorder %s49, %s63
    %p65 = scmp.eq.s32.totalorder %s18, 0
    %p66 = por %p64, %p65
    %s68 = sadd.s32 %s67, 1
    %p71 = scmp.eq.s32.totalorder %s12, 1
    %p72 = scmp.ne.s32.totalorder %s67, %s69
    %p73 = scmp.eq.s32.totalorder %s12, 0
    %p74 = por %p72, %p73
    %p75 = scmp.ne.s32.totalorder %s67, %s69
    %p76 = scmp.eq.s32.totalorder %s17, 1
    %p77 = por %p75, %p76
    %p78 = scmp.ne.s32.totalorder %s69, %s70
    %p79 = scmp.eq.s32.totalorder %s17, 0
    %p80 = por %p78, %p79
    %p81 = scmp.ne.s32.totalorder %s69, %s70
    %p82 = scmp.eq.s32.totalorder %s18, 1
    %p83 = por %p81, %p82
    %p85 = scmp.ne.s32.totalorder %s70, %s84
    %p86 = scmp.eq.s32.totalorder %s18, 0
    %p87 = por %p85, %p86
    %s89 = sadd.s32 %s88, 1
    %p92 = scmp.eq.s32.totalorder %s12, 1
    %p93 = scmp.ne.s32.totalorder %s88, %s90
    %p94 = scmp.eq.s32.totalorder %s12, 0
    %p95 = por %p93, %p94
    %p96 = scmp.ne.s32.totalorder %s88, %s90
    %p97 = scmp.eq.s32.totalorder %s17, 1
    %p98 = por %p96, %p97
    %p99 = scmp.ne.s32.totalorder %s90, %s91
    %p100 = scmp.eq.s32.totalorder %s17, 0
    %p101 = por %p99, %p100
    %p102 = scmp.ne.s32.totalorder %s90, %s91
    %p103 = scmp.eq.s32.totalorder %s18, 1
    %p104 = por %p102, %p103
    %p106 = scmp.ne.s32.totalorder %s91, %s105
    %p107 = scmp.eq.s32.totalorder %s18, 0
    %p108 = por %p106, %p107
    %s110 = sadd.s32 %s109, 1
    %p113 = scmp.eq.s32.totalorder %s12, 1
    %p114 = scmp.ne.s32.totalorder %s109, %s111
    %p115 = scmp.eq.s32.totalorder %s12, 0
    %p116 = por %p114, %p115
    %p117 = scmp.ne.s32.totalorder %s109, %s111
    %p118 = scmp.eq.s32.totalorder %s17, 1
    %p119 = por %p117, %p118
    %p120 = scmp.ne.s32.totalorder %s111, %s112
    %p121 = scmp.eq.s32.totalorder %s17, 0
    %p122 = por %p120, %p121
    %p123 = scmp.ne.s32.totalorder %s111, %s112
    %p124 = scmp.eq.s32.totalorder %s18, 1
    %p125 = por %p123, %p124
    %p127 = scmp.ne.s32.totalorder %s112, %s126
    %p128 = scmp.eq.s32.totalorder %s18, 0
    %p129 = por %p127, %p128
    %s131 = sadd.s32 %s130, 1
    %p134 = scmp.eq.s32.totalorder %s12, 1
    %p135 = scmp.ne.s32.totalorder %s130, %s132
    %p136 = scmp.eq.s32.totalorder %s12, 0
    %p137 = por %p135, %p136
    %p138 = scmp.ne.s32.totalorder %s130, %s132
    %p139 = scmp.eq.s32.totalorder %s17, 1
    %p140 = por %p138, %p139
    %p141 = scmp.ne.s32.totalorder %s132, %s133
    %p142 = scmp.eq.s32.totalorder %s17, 0
    %p143 = por %p141, %p142
    %p144 = scmp.ne.s32.totalorder %s132, %s133
    %p145 = scmp.eq.s32.totalorder %s18, 1
    %p146 = por %p144, %p145
    %p148 = scmp.ne.s32.totalorder %s133, %s147
    %p149 = scmp.eq.s32.totalorder %s18, 0
    %p150 = por %p148, %p149
    %s151 = ssub.s32 %s12, %s19
    %p152 = scmp.eq.s32.totalorder %s151, 0
    %s154 = sadd.s32 %s153, 1
    %s155 = scalar_select %p152, %s153, %s154
    %p158 = pneg %p152
    %p159 = scmp.eq.s32.totalorder %s12, 1
    %p160 = por %p158, %p159
    %p161 = scmp.ne.s32.totalorder %s153, %s156
    %p162 = scmp.eq.s32.totalorder %s12, 0
    %p163 = por %p161, %p162
    %p164 = scmp.ne.s32.totalorder %s153, %s156
    %p165 = scmp.eq.s32.totalorder %s17, 1
    %p166 = por %p164, %p165
    %p167 = scmp.ne.s32.totalorder %s156, %s157
    %p168 = scmp.eq.s32.totalorder %s17, 0
    %p169 = por %p167, %p168
    %p170 = scmp.ne.s32.totalorder %s156, %s157
    %p171 = scmp.eq.s32.totalorder %s18, 1
    %p172 = por %p170, %p171
    %p174 = scmp.ne.s32.totalorder %s157, %s173
    %p175 = scmp.eq.s32.totalorder %s18, 0
    %p176 = por %p174, %p175
    %p177 = scmp.le.s32.totalorder 1, %s12
    %p178 = scmp.lt.s32.totalorder %s12, 3
    %p179 = pnand %p177, %p178
    %p180 = pneg %p179
    // Predicated region
    $region9: #{_lambda_.8} parent=5 // pred_check
      _
    $region10: #{_lambda_.8} parent=5 // pred_check_branch
      %182 = sbr.rel (%p179) target = $region12
    $region11: #{_lambda_.8} parent=5 // pred_region
      %s183 = ssub.s32 %s12, 1
      // Predicated region
      $region13: #{_lambda_.8} parent=11 // pred_check
        %p184 = pneg %p59
      $region14: #{_lambda_.8} parent=11 // pred_check_branch
        %186 = sbr.rel (%p184) target = $region16
      $region15: #{_lambda_.8} parent=11 // pred_region
        _
      $region16: #{_lambda_.8} parent=11 // pred_fallthru
        _
      // Predicated region
      $region17: #{_lambda_.8} parent=11 // pred_check
        %p187 = pneg %p80
      $region18: #{_lambda_.8} parent=11 // pred_check_branch
        %189 = sbr.rel (%p187) target = $region20
      $region19: #{_lambda_.8} parent=11 // pred_region
        _
      $region20: #{_lambda_.8} parent=11 // pred_fallthru
        _
      // Predicated region
      $region21: #{_lambda_.8} parent=11 // pred_check
        %p190 = pneg %p101
      $region22: #{_lambda_.8} parent=11 // pred_check_branch
        %192 = sbr.rel (%p190) target = $region24
      $region23: #{_lambda_.8} parent=11 // pred_region
        _
      $region24: #{_lambda_.8} parent=11 // pred_fallthru
        _
      // Predicated region
      $region25: #{_lambda_.8} parent=11 // pred_check
        %p193 = pneg %p122
      $region26: #{_lambda_.8} parent=11 // pred_check_branch
        %195 = sbr.rel (%p193) target = $region28
      $region27: #{_lambda_.8} parent=11 // pred_region
        _
      $region28: #{_lambda_.8} parent=11 // pred_fallthru
        _
      // Predicated region
      $region29: #{_lambda_.8} parent=11 // pred_check
        %p196 = pneg %p143
      $region30: #{_lambda_.8} parent=11 // pred_check_branch
        %198 = sbr.rel (%p196) target = $region32
      $region31: #{_lambda_.8} parent=11 // pred_region
        _
      $region32: #{_lambda_.8} parent=11 // pred_fallthru
        _
    $region12: #{_lambda_.8} parent=5 // pred_fallthru
      _
    %p199 = scmp.lt.s32.totalorder %s12, 2
    // Predicated region
    $region33: #{_lambda_.8} parent=5 // pred_check
      %p200 = pneg %p199
    $region34: #{_lambda_.8} parent=5 // pred_check_branch
      %202 = sbr.rel (%p200) target = $region36
    $region35: #{_lambda_.8} parent=5 // pred_region
      // Predicated region
      $region37: #{_lambda_.8} parent=35 // pred_check
        %p203 = pneg %p32
      $region38: #{_lambda_.8} parent=35 // pred_check_branch
        %205 = sbr.rel (%p203) target = $region40
      $region39: #{_lambda_.8} parent=35 // pred_region
        %p206 = scmp.lt.s32.totalorder %s12, 1
        %s207 = scalar_select %p206, %s12, 1
        %s208 = smul.addr %s207, 4
        %s209 = smul.addr %s208, 8
        %s210 = scalar_lea.vmem %s0, %s209
      $region40: #{_lambda_.8} parent=35 // pred_fallthru
        _
    $region36: #{_lambda_.8} parent=5 // pred_fallthru
      _
    %p211 = scmp.le.s32.totalorder 1, %s12
    %p212 = scmp.lt.s32.totalorder %s12, 3
    %p213 = pnand %p211, %p212
    %p214 = pneg %p213
    // Predicated region
    $region41: #{_lambda_.8} parent=5 // pred_check
      _
    $region42: #{_lambda_.8} parent=5 // pred_check_branch
      %216 = sbr.rel (%p213) target = $region44
    $region43: #{_lambda_.8} parent=5 // pred_region
      %s217 = ssub.s32 %s12, 1
      %p218 = scmp.lt.s32.totalorder %s17, 1
      %s219 = scalar_select %p218, %s17, 1
      %s220 = smul.addr %s219, 4
      %s221 = smul.addr %s220, 8
      %s222 = scalar_lea.vmem %s0, %s221
      %p223 = pneg %p38
      %p224 = pneg %p35
      %p225 = pneg %p59
      %p226 = pneg %p56
      %p227 = pneg %p80
      %p228 = pneg %p77
      %p229 = pneg %p101
      %p230 = pneg %p98
      %p231 = pneg %p122
      %p232 = pneg %p119
      %p233 = pneg %p143
      %p234 = pneg %p140
      %p235 = pneg %p169
      %p236 = pneg %p166
      %p237 = scmp.lt.s32.totalorder %s17, 1
      %s238 = scalar_select %p237, %s17, 1
      %s239 = smul.addr %s238, 4
      %s240 = smul.addr %s239, 8
      %s241 = scalar_lea.vmem %s6, %s240
      %p242 = scmp.lt.s32.totalorder %s17, 1
      %s243 = scalar_select %p242, %s17, 1
      %s244 = smul.addr %s243, 4
      %s245 = smul.addr %s244, 8
      %s246 = scalar_lea.vmem %s0, %s245
      %p247 = scmp.lt.s32.totalorder %s17, 1
      %s248 = scalar_select %p247, %s17, 1
      %s249 = smul.addr %s248, 4
      %s250 = smul.addr %s249, 8
      %s251 = scalar_lea.vmem %s6, %s250
      %v252 = vld [vmem:[%s246] sm:$0xff]
      %v253 = vld [vmem:[%s246 + $0x8] sm:$0xff]
      %v254 = vld [vmem:[%s246 + $0x10] sm:$0xff]
      %v255 = vld [vmem:[%s246 + $0x18] sm:$0xff]
      %v256 = vld [vmem:[%s5] sm:$0x1]
      %v257 = vld [vmem:[%s1] sm:$0xff]
      %v258 = vld [vmem:[%s1 + $0x8] sm:$0xff]
      %v259 = vld [vmem:[%s1 + $0x10] sm:$0xff]
      %v260 = vld [vmem:[%s1 + $0x18] sm:$0xff]
      %s261 = scalar_lea.vmem %s1, 32
      %v262 = vld [vmem:[%s261] sm:$0xff]
      %v263 = vld [vmem:[%s261 + $0x8] sm:$0xff]
      %v264 = vld [vmem:[%s261 + $0x10] sm:$0xff]
      %v265 = vld [vmem:[%s261 + $0x18] sm:$0xff]
      %270 = vrot.lane.b32.xlu0 %v252, 127
      %v271 = vpop.permute.xlu0 %270
      %272 = vrot.lane.b32.xlu0 %v253, 127
      %v273 = vpop.permute.xlu0 %272
      %274 = vrot.lane.b32.xlu0 %v254, 127
      %v275 = vpop.permute.xlu0 %274
      %276 = vrot.lane.b32.xlu0 %v255, 127
      %v277 = vpop.permute.xlu0 %276
      %vm282 = vcmask 261120
      %v284 = vsel %vm282, %v262, 0
      %v287 = vsel %vm282, %v263, 0
      %v290 = vsel %vm282, %v264, 0
      %v293 = vsel %vm282, %v265, 0
      %295 = vmatpush.msra.mxu0 0.0
      %296 = vmatpush.msra.mxu0 0.0
      %297 = vmatpush.msra.mxu0 0.0
      %298 = vmatpush.msra.mxu0 0.0
      %299 = vmatpush.msra.mxu0 0.0
      %300 = vmatpush.msra.mxu0 0.0
      %301 = vmatpush.msra.mxu0 0.0
      %302 = vmatpush.msra.mxu0 0.0
      %303 = vmatpush.msra.mxu0 0.0
      %304 = vmatpush.msra.mxu0 0.0
      %305 = vmatpush.msra.mxu0 0.0
      %306 = vmatpush.msra.mxu0 0.0
      %307 = vmatpush.msra.mxu0 %v277
      %308 = vmatpush.msra.mxu0 %v275
      %309 = vmatpush.msra.mxu0 %v273
      %310 = vmatpush.msra.mxu0 %v271
      %311 = vmatmul.f32.gmra.mxu0 %v284
      %v312 = vpop.f32.mrf.mxu0
      %v313 = vadd.f32 0.0, %v312
      %314 = vmatmul.f32.gmra.mxu0 %v287
      %v315 = vpop.f32.mrf.mxu0
      %v316 = vadd.f32 0.0, %v315
      %317 = vmatmul.f32.gmra.mxu0 %v290
      %v318 = vpop.f32.mrf.mxu0
      %v319 = vadd.f32 0.0, %v318
      %320 = vmatmul.f32.gmra.mxu0 %v293
      %v321 = vpop.f32.mrf.mxu0
      %v322 = vadd.f32 0.0, %v321
      %323 = vdwg.mxu0
      %v325 = vsel %vm282, %v257, 0
      %v328 = vsel %vm282, %v258, 0
      %v331 = vsel %vm282, %v259, 0
      %v334 = vsel %vm282, %v260, 0
      %336 = vmatpush.msra.mxu0 0.0
      %337 = vmatpush.msra.mxu0 0.0
      %338 = vmatpush.msra.mxu0 0.0
      %339 = vmatpush.msra.mxu0 0.0
      %340 = vmatpush.msra.mxu0 0.0
      %341 = vmatpush.msra.mxu0 0.0
      %342 = vmatpush.msra.mxu0 0.0
      %343 = vmatpush.msra.mxu0 0.0
      %344 = vmatpush.msra.mxu0 0.0
      %345 = vmatpush.msra.mxu0 0.0
      %346 = vmatpush.msra.mxu0 0.0
      %347 = vmatpush.msra.mxu0 0.0
      %348 = vmatpush.msra.mxu0 %v255
      %349 = vmatpush.msra.mxu0 %v254
      %350 = vmatpush.msra.mxu0 %v253
      %351 = vmatpush.msra.mxu0 %v252
      %352 = vmatmul.f32.gmra.mxu0 %v325
      %v353 = vpop.f32.mrf.mxu0
      %v354 = vadd.f32 %v313, %v353
      %355 = vmatmul.f32.gmra.mxu0 %v328
      %v356 = vpop.f32.mrf.mxu0
      %v357 = vadd.f32 %v316, %v356
      %358 = vmatmul.f32.gmra.mxu0 %v331
      %v359 = vpop.f32.mrf.mxu0
      %v360 = vadd.f32 %v319, %v359
      %361 = vmatmul.f32.gmra.mxu0 %v334
      %v362 = vpop.f32.mrf.mxu0
      %v363 = vadd.f32 %v322, %v362
      %364 = vdwg.mxu0
      %s365 = scalar_lea.vmem %s1, 64
      %v366 = vld [vmem:[%s365] sm:$0xff]
      %v367 = vld [vmem:[%s365 + $0x8] sm:$0xff]
      %v368 = vld [vmem:[%s365 + $0x10] sm:$0xff]
      %v369 = vld [vmem:[%s365 + $0x18] sm:$0xff]
      %370 = vrot.lane.b32.xlu0 %v252, 126
      %v371 = vpop.permute.xlu0 %370
      %372 = vrot.lane.b32.xlu0 %v253, 126
      %v373 = vpop.permute.xlu0 %372
      %374 = vrot.lane.b32.xlu0 %v254, 126
      %v375 = vpop.permute.xlu0 %374
      %376 = vrot.lane.b32.xlu0 %v255, 126
      %v377 = vpop.permute.xlu0 %376
      %v383 = vsel %vm282, %v366, 0
      %v386 = vsel %vm282, %v367, 0
      %v389 = vsel %vm282, %v368, 0
      %v392 = vsel %vm282, %v369, 0
      %394 = vmatpush.msra.mxu0 0.0
      %395 = vmatpush.msra.mxu0 0.0
      %396 = vmatpush.msra.mxu0 0.0
      %397 = vmatpush.msra.mxu0 0.0
      %398 = vmatpush.msra.mxu0 0.0
      %399 = vmatpush.msra.mxu0 0.0
      %400 = vmatpush.msra.mxu0 0.0
      %401 = vmatpush.msra.mxu0 0.0
      %402 = vmatpush.msra.mxu0 0.0
      %403 = vmatpush.msra.mxu0 0.0
      %404 = vmatpush.msra.mxu0 0.0
      %405 = vmatpush.msra.mxu0 0.0
      %406 = vmatpush.msra.mxu0 %v377
      %407 = vmatpush.msra.mxu0 %v375
      %408 = vmatpush.msra.mxu0 %v373
      %409 = vmatpush.msra.mxu0 %v371
      %410 = vmatmul.f32.gmra.mxu0 %v383
      %v411 = vpop.f32.mrf.mxu0
      %v412 = vadd.f32 0.0, %v411
      %413 = vmatmul.f32.gmra.mxu0 %v386
      %v414 = vpop.f32.mrf.mxu0
      %v415 = vadd.f32 0.0, %v414
      %416 = vmatmul.f32.gmra.mxu0 %v389
      %v417 = vpop.f32.mrf.mxu0
      %v418 = vadd.f32 0.0, %v417
      %419 = vmatmul.f32.gmra.mxu0 %v392
      %v420 = vpop.f32.mrf.mxu0
      %v421 = vadd.f32 0.0, %v420
      %422 = vdwg.mxu0
      %v423 = vadd.f32 %v354, %v412
      %v424 = vadd.f32 %v357, %v415
      %v425 = vadd.f32 %v360, %v418
      %v426 = vadd.f32 %v363, %v421
      %s427 = scalar_lea.vmem %s1, 96
      %v428 = vld [vmem:[%s427] sm:$0xff]
      %v429 = vld [vmem:[%s427 + $0x8] sm:$0xff]
      %v430 = vld [vmem:[%s427 + $0x10] sm:$0xff]
      %v431 = vld [vmem:[%s427 + $0x18] sm:$0xff]
      %432 = vrot.lane.b32.xlu0 %v252, 122
      %v433 = vpop.permute.xlu0 %432
      %434 = vrot.lane.b32.xlu0 %v253, 122
      %v435 = vpop.permute.xlu0 %434
      %436 = vrot.lane.b32.xlu0 %v254, 122
      %v437 = vpop.permute.xlu0 %436
      %438 = vrot.lane.b32.xlu0 %v255, 122
      %v439 = vpop.permute.xlu0 %438
      %v445 = vsel %vm282, %v428, 0
      %v448 = vsel %vm282, %v429, 0
      %v451 = vsel %vm282, %v430, 0
      %v454 = vsel %vm282, %v431, 0
      %456 = vmatpush.msra.mxu0 0.0
      %457 = vmatpush.msra.mxu0 0.0
      %458 = vmatpush.msra.mxu0 0.0
      %459 = vmatpush.msra.mxu0 0.0
      %460 = vmatpush.msra.mxu0 0.0
      %461 = vmatpush.msra.mxu0 0.0
      %462 = vmatpush.msra.mxu0 0.0
      %463 = vmatpush.msra.mxu0 0.0
      %464 = vmatpush.msra.mxu0 0.0
      %465 = vmatpush.msra.mxu0 0.0
      %466 = vmatpush.msra.mxu0 0.0
      %467 = vmatpush.msra.mxu0 0.0
      %468 = vmatpush.msra.mxu0 %v439
      %469 = vmatpush.msra.mxu0 %v437
      %470 = vmatpush.msra.mxu0 %v435
      %471 = vmatpush.msra.mxu0 %v433
      %472 = vmatmul.f32.gmra.mxu0 %v445
      %v473 = vpop.f32.mrf.mxu0
      %v474 = vadd.f32 0.0, %v473
      %475 = vmatmul.f32.gmra.mxu0 %v448
      %v476 = vpop.f32.mrf.mxu0
      %v477 = vadd.f32 0.0, %v476
      %478 = vmatmul.f32.gmra.mxu0 %v451
      %v479 = vpop.f32.mrf.mxu0
      %v480 = vadd.f32 0.0, %v479
      %481 = vmatmul.f32.gmra.mxu0 %v454
      %v482 = vpop.f32.mrf.mxu0
      %v483 = vadd.f32 0.0, %v482
      %484 = vdwg.mxu0
      %v485 = vadd.f32 %v423, %v474
      %v486 = vadd.f32 %v424, %v477
      %v487 = vadd.f32 %v425, %v480
      %v488 = vadd.f32 %v426, %v483
      %s489 = scalar_lea.vmem %s1, 128
      %v490 = vld [vmem:[%s489] sm:$0xff]
      %v491 = vld [vmem:[%s489 + $0x8] sm:$0xff]
      %v492 = vld [vmem:[%s489 + $0x10] sm:$0xff]
      %v493 = vld [vmem:[%s489 + $0x18] sm:$0xff]
      %494 = vrot.lane.b32.xlu0 %v252, 121
      %v495 = vpop.permute.xlu0 %494
      %496 = vrot.lane.b32.xlu0 %v253, 121
      %v497 = vpop.permute.xlu0 %496
      %498 = vrot.lane.b32.xlu0 %v254, 121
      %v499 = vpop.permute.xlu0 %498
      %500 = vrot.lane.b32.xlu0 %v255, 121
      %v501 = vpop.permute.xlu0 %500
      %v507 = vsel %vm282, %v490, 0
      %v510 = vsel %vm282, %v491, 0
      %v513 = vsel %vm282, %v492, 0
      %v516 = vsel %vm282, %v493, 0
      %518 = vmatpush.msra.mxu0 0.0
      %519 = vmatpush.msra.mxu0 0.0
      %520 = vmatpush.msra.mxu0 0.0
      %521 = vmatpush.msra.mxu0 0.0
      %522 = vmatpush.msra.mxu0 0.0
      %523 = vmatpush.msra.mxu0 0.0
      %524 = vmatpush.msra.mxu0 0.0
      %525 = vmatpush.msra.mxu0 0.0
      %526 = vmatpush.msra.mxu0 0.0
      %527 = vmatpush.msra.mxu0 0.0
      %528 = vmatpush.msra.mxu0 0.0
      %529 = vmatpush.msra.mxu0 0.0
      %530 = vmatpush.msra.mxu0 %v501
      %531 = vmatpush.msra.mxu0 %v499
      %532 = vmatpush.msra.mxu0 %v497
      %533 = vmatpush.msra.mxu0 %v495
      %534 = vmatmul.f32.gmra.mxu0 %v507
      %v535 = vpop.f32.mrf.mxu0
      %v536 = vadd.f32 0.0, %v535
      %537 = vmatmul.f32.gmra.mxu0 %v510
      %v538 = vpop.f32.mrf.mxu0
      %v539 = vadd.f32 0.0, %v538
      %540 = vmatmul.f32.gmra.mxu0 %v513
      %v541 = vpop.f32.mrf.mxu0
      %v542 = vadd.f32 0.0, %v541
      %543 = vmatmul.f32.gmra.mxu0 %v516
      %v544 = vpop.f32.mrf.mxu0
      %v545 = vadd.f32 0.0, %v544
      %546 = vdwg.mxu0
      %v547 = vadd.f32 %v485, %v536
      %v548 = vadd.f32 %v486, %v539
      %v549 = vadd.f32 %v487, %v542
      %v550 = vadd.f32 %v488, %v545
      %s551 = scalar_lea.vmem %s1, 160
      %v552 = vld [vmem:[%s551] sm:$0xff]
      %v553 = vld [vmem:[%s551 + $0x8] sm:$0xff]
      %v554 = vld [vmem:[%s551 + $0x10] sm:$0xff]
      %v555 = vld [vmem:[%s551 + $0x18] sm:$0xff]
      %556 = vrot.lane.b32.xlu0 %v252, 120
      %v557 = vpop.permute.xlu0 %556
      %558 = vrot.lane.b32.xlu0 %v253, 120
      %v559 = vpop.permute.xlu0 %558
      %560 = vrot.lane.b32.xlu0 %v254, 120
      %v561 = vpop.permute.xlu0 %560
      %562 = vrot.lane.b32.xlu0 %v255, 120
      %v563 = vpop.permute.xlu0 %562
      %v569 = vsel %vm282, %v552, 0
      %v572 = vsel %vm282, %v553, 0
      %v575 = vsel %vm282, %v554, 0
      %v578 = vsel %vm282, %v555, 0
      %580 = vmatpush.msra.mxu0 0.0
      %581 = vmatpush.msra.mxu0 0.0
      %582 = vmatpush.msra.mxu0 0.0
      %583 = vmatpush.msra.mxu0 0.0
      %584 = vmatpush.msra.mxu0 0.0
      %585 = vmatpush.msra.mxu0 0.0
      %586 = vmatpush.msra.mxu0 0.0
      %587 = vmatpush.msra.mxu0 0.0
      %588 = vmatpush.msra.mxu0 0.0
      %589 = vmatpush.msra.mxu0 0.0
      %590 = vmatpush.msra.mxu0 0.0
      %591 = vmatpush.msra.mxu0 0.0
      %592 = vmatpush.msra.mxu0 %v563
      %593 = vmatpush.msra.mxu0 %v561
      %594 = vmatpush.msra.mxu0 %v559
      %595 = vmatpush.msra.mxu0 %v557
      %596 = vmatmul.f32.gmra.mxu0 %v569
      %v597 = vpop.f32.mrf.mxu0
      %v598 = vadd.f32 0.0, %v597
      %599 = vmatmul.f32.gmra.mxu0 %v572
      %v600 = vpop.f32.mrf.mxu0
      %v601 = vadd.f32 0.0, %v600
      %602 = vmatmul.f32.gmra.mxu0 %v575
      %v603 = vpop.f32.mrf.mxu0
      %v604 = vadd.f32 0.0, %v603
      %605 = vmatmul.f32.gmra.mxu0 %v578
      %v606 = vpop.f32.mrf.mxu0
      %v607 = vadd.f32 0.0, %v606
      %608 = vdwg.mxu0
      %v609 = vadd.f32 %v547, %v598
      %v610 = vadd.f32 %v548, %v601
      %v611 = vadd.f32 %v549, %v604
      %v612 = vadd.f32 %v550, %v607
      %s613 = scalar_lea.vmem %s1, 192
      %v614 = vld [vmem:[%s613] sm:$0xff]
      %v615 = vld [vmem:[%s613 + $0x8] sm:$0xff]
      %v616 = vld [vmem:[%s613 + $0x10] sm:$0xff]
      %v617 = vld [vmem:[%s613 + $0x18] sm:$0xff]
      %618 = vrot.lane.b32.xlu0 %v252, 116
      %v619 = vpop.permute.xlu0 %618
      %620 = vrot.lane.b32.xlu0 %v253, 116
      %v621 = vpop.permute.xlu0 %620
      %622 = vrot.lane.b32.xlu0 %v254, 116
      %v623 = vpop.permute.xlu0 %622
      %624 = vrot.lane.b32.xlu0 %v255, 116
      %v625 = vpop.permute.xlu0 %624
      %v631 = vsel %vm282, %v614, 0
      %v634 = vsel %vm282, %v615, 0
      %v637 = vsel %vm282, %v616, 0
      %v640 = vsel %vm282, %v617, 0
      %642 = vmatpush.msra.mxu0 0.0
      %643 = vmatpush.msra.mxu0 0.0
      %644 = vmatpush.msra.mxu0 0.0
      %645 = vmatpush.msra.mxu0 0.0
      %646 = vmatpush.msra.mxu0 0.0
      %647 = vmatpush.msra.mxu0 0.0
      %648 = vmatpush.msra.mxu0 0.0
      %649 = vmatpush.msra.mxu0 0.0
      %650 = vmatpush.msra.mxu0 0.0
      %651 = vmatpush.msra.mxu0 0.0
      %652 = vmatpush.msra.mxu0 0.0
      %653 = vmatpush.msra.mxu0 0.0
      %654 = vmatpush.msra.mxu0 %v625
      %655 = vmatpush.msra.mxu0 %v623
      %656 = vmatpush.msra.mxu0 %v621
      %657 = vmatpush.msra.mxu0 %v619
      %658 = vmatmul.f32.gmra.mxu0 %v631
      %v659 = vpop.f32.mrf.mxu0
      %v660 = vadd.f32 0.0, %v659
      %661 = vmatmul.f32.gmra.mxu0 %v634
      %v662 = vpop.f32.mrf.mxu0
      %v663 = vadd.f32 0.0, %v662
      %664 = vmatmul.f32.gmra.mxu0 %v637
      %v665 = vpop.f32.mrf.mxu0
      %v666 = vadd.f32 0.0, %v665
      %667 = vmatmul.f32.gmra.mxu0 %v640
      %v668 = vpop.f32.mrf.mxu0
      %v669 = vadd.f32 0.0, %v668
      %670 = vdwg.mxu0
      %v671 = vadd.f32 %v609, %v660
      %v672 = vadd.f32 %v610, %v663
      %v673 = vadd.f32 %v611, %v666
      %v674 = vadd.f32 %v612, %v669
      %s675 = scalar_lea.vmem %s1, 224
      %v676 = vld [vmem:[%s675] sm:$0xff]
      %v677 = vld [vmem:[%s675 + $0x8] sm:$0xff]
      %v678 = vld [vmem:[%s675 + $0x10] sm:$0xff]
      %v679 = vld [vmem:[%s675 + $0x18] sm:$0xff]
      %680 = vrot.lane.b32.xlu0 %v252, 115
      %v681 = vpop.permute.xlu0 %680
      %682 = vrot.lane.b32.xlu0 %v253, 115
      %v683 = vpop.permute.xlu0 %682
      %684 = vrot.lane.b32.xlu0 %v254, 115
      %v685 = vpop.permute.xlu0 %684
      %686 = vrot.lane.b32.xlu0 %v255, 115
      %v687 = vpop.permute.xlu0 %686
      %v693 = vsel %vm282, %v676, 0
      %v696 = vsel %vm282, %v677, 0
      %v699 = vsel %vm282, %v678, 0
      %v702 = vsel %vm282, %v679, 0
      %704 = vmatpush.msra.mxu0 0.0
      %705 = vmatpush.msra.mxu0 0.0
      %706 = vmatpush.msra.mxu0 0.0
      %707 = vmatpush.msra.mxu0 0.0
      %708 = vmatpush.msra.mxu0 0.0
      %709 = vmatpush.msra.mxu0 0.0
      %710 = vmatpush.msra.mxu0 0.0
      %711 = vmatpush.msra.mxu0 0.0
      %712 = vmatpush.msra.mxu0 0.0
      %713 = vmatpush.msra.mxu0 0.0
      %714 = vmatpush.msra.mxu0 0.0
      %715 = vmatpush.msra.mxu0 0.0
      %716 = vmatpush.msra.mxu0 %v687
      %717 = vmatpush.msra.mxu0 %v685
      %718 = vmatpush.msra.mxu0 %v683
      %719 = vmatpush.msra.mxu0 %v681
      %720 = vmatmul.f32.gmra.mxu0 %v693
      %v721 = vpop.f32.mrf.mxu0
      %v722 = vadd.f32 0.0, %v721
      %723 = vmatmul.f32.gmra.mxu0 %v696
      %v724 = vpop.f32.mrf.mxu0
      %v725 = vadd.f32 0.0, %v724
      %726 = vmatmul.f32.gmra.mxu0 %v699
      %v727 = vpop.f32.mrf.mxu0
      %v728 = vadd.f32 0.0, %v727
      %729 = vmatmul.f32.gmra.mxu0 %v702
      %v730 = vpop.f32.mrf.mxu0
      %v731 = vadd.f32 0.0, %v730
      %732 = vdwg.mxu0
      %v733 = vadd.f32 %v671, %v722
      %v734 = vadd.f32 %v672, %v725
      %v735 = vadd.f32 %v673, %v728
      %v736 = vadd.f32 %v674, %v731
      %s737 = scalar_lea.vmem %s1, 256
      %v738 = vld [vmem:[%s737] sm:$0xff]
      %v739 = vld [vmem:[%s737 + $0x8] sm:$0xff]
      %v740 = vld [vmem:[%s737 + $0x10] sm:$0xff]
      %v741 = vld [vmem:[%s737 + $0x18] sm:$0xff]
      %742 = vrot.lane.b32.xlu0 %v252, 114
      %v743 = vpop.permute.xlu0 %742
      %744 = vrot.lane.b32.xlu0 %v253, 114
      %v745 = vpop.permute.xlu0 %744
      %746 = vrot.lane.b32.xlu0 %v254, 114
      %v747 = vpop.permute.xlu0 %746
      %748 = vrot.lane.b32.xlu0 %v255, 114
      %v749 = vpop.permute.xlu0 %748
      %v755 = vsel %vm282, %v738, 0
      %v758 = vsel %vm282, %v739, 0
      %v761 = vsel %vm282, %v740, 0
      %v764 = vsel %vm282, %v741, 0
      %766 = vmatpush.msra.mxu0 0.0
      %767 = vmatpush.msra.mxu0 0.0
      %768 = vmatpush.msra.mxu0 0.0
      %769 = vmatpush.msra.mxu0 0.0
      %770 = vmatpush.msra.mxu0 0.0
      %771 = vmatpush.msra.mxu0 0.0
      %772 = vmatpush.msra.mxu0 0.0
      %773 = vmatpush.msra.mxu0 0.0
      %774 = vmatpush.msra.mxu0 0.0
      %775 = vmatpush.msra.mxu0 0.0
      %776 = vmatpush.msra.mxu0 0.0
      %777 = vmatpush.msra.mxu0 0.0
      %778 = vmatpush.msra.mxu0 %v749
      %779 = vmatpush.msra.mxu0 %v747
      %780 = vmatpush.msra.mxu0 %v745
      %781 = vmatpush.msra.mxu0 %v743
      %782 = vmatmul.f32.gmra.mxu0 %v755
      %v783 = vpop.f32.mrf.mxu0
      %v784 = vadd.f32 0.0, %v783
      %785 = vmatmul.f32.gmra.mxu0 %v758
      %v786 = vpop.f32.mrf.mxu0
      %v787 = vadd.f32 0.0, %v786
      %788 = vmatmul.f32.gmra.mxu0 %v761
      %v789 = vpop.f32.mrf.mxu0
      %v790 = vadd.f32 0.0, %v789
      %791 = vmatmul.f32.gmra.mxu0 %v764
      %v792 = vpop.f32.mrf.mxu0
      %v793 = vadd.f32 0.0, %v792
      %794 = vdwg.mxu0
      %v795 = vadd.f32 %v733, %v784
      %v796 = vadd.f32 %v734, %v787
      %v797 = vadd.f32 %v735, %v790
      %v798 = vadd.f32 %v736, %v793
      %v799 = vld [vmem:[%s2] sm:$0xff]
      %v800 = vld [vmem:[%s2 + $0x8] sm:$0xff]
      %v801 = vld [vmem:[%s2 + $0x10] sm:$0xff]
      %v802 = vld [vmem:[%s2 + $0x18] sm:$0xff]
      %804 = vset.pattern.permute.xlu0 0
      %805 = vperm.xlu0 %804, %v799
      %v806 = vpop.permute.xlu0 %805
      %809 = vset.pattern.permute.xlu0 0
      %810 = vperm.xlu0 %809, %v800
      %v811 = vpop.permute.xlu0 %810
      %814 = vset.pattern.permute.xlu0 0
      %815 = vperm.xlu0 %814, %v801
      %v816 = vpop.permute.xlu0 %815
      %819 = vset.pattern.permute.xlu0 0
      %820 = vperm.xlu0 %819, %v802
      %v821 = vpop.permute.xlu0 %820
      %v823 = vadd.f32 %v795, %v806
      %v824 = vadd.f32 %v796, %v811
      %v825 = vadd.f32 %v797, %v816
      %v826 = vadd.f32 %v798, %v821
      %v828 = vperm.slane %v256, 0
      %v830 = vmul.f32 %v823, %v828
      %v831 = vmul.f32 %v824, %v828
      %v832 = vmul.f32 %v825, %v828
      %v833 = vmul.f32 %v826, %v828
      %vm834 = vcmask 195584
      %v835 = vsel %vm834, %v830, 0.0
      %836 = vadd.xlane.f32.xlu0 %v835
      %v837 = vpop.xlane.xlu0 %836
      %v838 = vsel %vm834, %v831, 0.0
      %839 = vadd.xlane.f32.xlu0 %v838
      %v840 = vpop.xlane.xlu0 %839
      %v841 = vsel %vm834, %v832, 0.0
      %842 = vadd.xlane.f32.xlu0 %v841
      %v843 = vpop.xlane.xlu0 %842
      %v844 = vsel %vm834, %v833, 0.0
      %845 = vadd.xlane.f32.xlu0 %v844
      %v846 = vpop.xlane.xlu0 %845
      %v847 = vmul.f32 %v837, 0.0625
      %v848 = vmul.f32 %v840, 0.0625
      %v849 = vmul.f32 %v843, 0.0625
      %v850 = vmul.f32 %v846, 0.0625
      %v851 = vsub.f32 %v823, %v847
      %v852 = vsub.f32 %v824, %v848
      %v853 = vsub.f32 %v825, %v849
      %v854 = vsub.f32 %v826, %v850
      %v855 = vmul.f32 %v851, %v828
      %v856 = vmul.f32 %v852, %v828
      %v857 = vmul.f32 %v853, %v828
      %v858 = vmul.f32 %v854, %v828
      %v859 = vmul.f32 %v855, %v855
      %v860 = vmul.f32 %v856, %v856
      %v861 = vmul.f32 %v857, %v857
      %v862 = vmul.f32 %v858, %v858
      %v863 = vsel %vm834, %v859, 0.0
      %864 = vadd.xlane.f32.xlu0 %v863
      %v865 = vpop.xlane.xlu0 %864
      %v866 = vsel %vm834, %v860, 0.0
      %867 = vadd.xlane.f32.xlu0 %v866
      %v868 = vpop.xlane.xlu0 %867
      %v869 = vsel %vm834, %v861, 0.0
      %870 = vadd.xlane.f32.xlu0 %v869
      %v871 = vpop.xlane.xlu0 %870
      %v872 = vsel %vm834, %v862, 0.0
      %873 = vadd.xlane.f32.xlu0 %v872
      %v874 = vpop.xlane.xlu0 %873
      %v875 = vmul.f32 %v865, 0.0625
      %v876 = vmul.f32 %v868, 0.0625
      %v877 = vmul.f32 %v871, 0.0625
      %v878 = vmul.f32 %v874, 0.0625
      %v879 = vadd.f32 %v875, 1e-05
      %v880 = vadd.f32 %v876, 1e-05
      %v881 = vadd.f32 %v877, 1e-05
      %v882 = vadd.f32 %v878, 1e-05
      %v883 = vrsqrt.pop %v879
      %v884 = vmul.f32 %v883, %v879
      %v885 = vmul.f32 %v884, %v883
      %v886 = vmul.f32 0.5, %v885
      %v887 = vsub.f32 1.5, %v886
      %v888 = vmul.f32 %v883, %v887
      %vm889 = vweird.f32 %v879
      %vm890 = vweird.f32 %v883
      %vm891 = vmor %vm889, %vm890
      %v892 = vsel %vm891, %v883, %v888
      %v893 = vrsqrt.pop %v880
      %v894 = vmul.f32 %v893, %v880
      %v895 = vmul.f32 %v894, %v893
      %v896 = vmul.f32 0.5, %v895
      %v897 = vsub.f32 1.5, %v896
      %v898 = vmul.f32 %v893, %v897
      %vm899 = vweird.f32 %v880
      %vm900 = vweird.f32 %v893
      %vm901 = vmor %vm899, %vm900
      %v902 = vsel %vm901, %v893, %v898
      %v903 = vrsqrt.pop %v881
      %v904 = vmul.f32 %v903, %v881
      %v905 = vmul.f32 %v904, %v903
      %v906 = vmul.f32 0.5, %v905
      %v907 = vsub.f32 1.5, %v906
      %v908 = vmul.f32 %v903, %v907
      %vm909 = vweird.f32 %v881
      %vm910 = vweird.f32 %v903
      %vm911 = vmor %vm909, %vm910
      %v912 = vsel %vm911, %v903, %v908
      %v913 = vrsqrt.pop %v882
      %v914 = vmul.f32 %v913, %v882
      %v915 = vmul.f32 %v914, %v913
      %v916 = vmul.f32 0.5, %v915
      %v917 = vsub.f32 1.5, %v916
      %v918 = vmul.f32 %v913, %v917
      %vm919 = vweird.f32 %v882
      %vm920 = vweird.f32 %v913
      %vm921 = vmor %vm919, %vm920
      %v922 = vsel %vm921, %v913, %v918
      %v923 = vmul.f32 %v851, %v892
      %v924 = vmul.f32 %v852, %v902
      %v925 = vmul.f32 %v853, %v912
      %v926 = vmul.f32 %v854, %v922
      %v927 = vmax.f32 %v923, 0.0
      %v928 = vmax.f32 %v924, 0.0
      %v929 = vmax.f32 %v925, 0.0
      %v930 = vmax.f32 %v926, 0.0
      %935 = vrot.lane.b32.xlu0 %v927, 121
      %v936 = vpop.permute.xlu0 %935
      %937 = vrot.lane.b32.xlu0 %v928, 121
      %v938 = vpop.permute.xlu0 %937
      %939 = vrot.lane.b32.xlu0 %v929, 121
      %v940 = vpop.permute.xlu0 %939
      %941 = vrot.lane.b32.xlu0 %v930, 121
      %v942 = vpop.permute.xlu0 %941
      %947 = vrot.lane.b32.xlu0 %v927, 123
      %v948 = vpop.permute.xlu0 %947
      %949 = vrot.lane.b32.xlu0 %v928, 123
      %v950 = vpop.permute.xlu0 %949
      %951 = vrot.lane.b32.xlu0 %v929, 123
      %v952 = vpop.permute.xlu0 %951
      %953 = vrot.lane.b32.xlu0 %v930, 123
      %v954 = vpop.permute.xlu0 %953
      %959 = vrot.lane.b32.xlu0 %v927, 125
      %v960 = vpop.permute.xlu0 %959
      %961 = vrot.lane.b32.xlu0 %v928, 125
      %v962 = vpop.permute.xlu0 %961
      %963 = vrot.lane.b32.xlu0 %v929, 125
      %v964 = vpop.permute.xlu0 %963
      %965 = vrot.lane.b32.xlu0 %v930, 125
      %v966 = vpop.permute.xlu0 %965
      %971 = vrot.lane.b32.xlu0 %v927, 5
      %v972 = vpop.permute.xlu0 %971
      %973 = vrot.lane.b32.xlu0 %v928, 5
      %v974 = vpop.permute.xlu0 %973
      %975 = vrot.lane.b32.xlu0 %v929, 5
      %v976 = vpop.permute.xlu0 %975
      %977 = vrot.lane.b32.xlu0 %v930, 5
      %v978 = vpop.permute.xlu0 %977
      %983 = vrot.lane.b32.xlu0 %v927, 7
      %v984 = vpop.permute.xlu0 %983
      %985 = vrot.lane.b32.xlu0 %v928, 7
      %v986 = vpop.permute.xlu0 %985
      %987 = vrot.lane.b32.xlu0 %v929, 7
      %v988 = vpop.permute.xlu0 %987
      %989 = vrot.lane.b32.xlu0 %v930, 7
      %v990 = vpop.permute.xlu0 %989
      %995 = vrot.lane.b32.xlu0 %v927, 9
      %v996 = vpop.permute.xlu0 %995
      %997 = vrot.lane.b32.xlu0 %v928, 9
      %v998 = vpop.permute.xlu0 %997
      %999 = vrot.lane.b32.xlu0 %v929, 9
      %v1000 = vpop.permute.xlu0 %999
      %1001 = vrot.lane.b32.xlu0 %v930, 9
      %v1002 = vpop.permute.xlu0 %1001
      %1007 = vrot.lane.b32.xlu0 %v927, 17
      %v1008 = vpop.permute.xlu0 %1007
      %1009 = vrot.lane.b32.xlu0 %v928, 17
      %v1010 = vpop.permute.xlu0 %1009
      %1011 = vrot.lane.b32.xlu0 %v929, 17
      %v1012 = vpop.permute.xlu0 %1011
      %1013 = vrot.lane.b32.xlu0 %v930, 17
      %v1014 = vpop.permute.xlu0 %1013
      %vm1019 = vcmask 7168
      %v1020 = vsel %vm1019, %v936, %v948
      %v1021 = vsel %vm1019, %v938, %v950
      %v1022 = vsel %vm1019, %v940, %v952
      %v1023 = vsel %vm1019, %v942, %v954
      %vm1024 = vcmask 39936
      %v1025 = vsel %vm1024, %v1020, %v960
      %v1026 = vsel %vm1024, %v1021, %v962
      %v1027 = vsel %vm1024, %v1022, %v964
      %v1028 = vsel %vm1024, %v1023, %v966
      %vm1029 = vcmask 48128
      %v1030 = vsel %vm1029, %v1025, %v972
      %v1031 = vsel %vm1029, %v1026, %v974
      %v1032 = vsel %vm1029, %v1027, %v976
      %v1033 = vsel %vm1029, %v1028, %v978
      %vm1034 = vcmask 56320
      %v1035 = vsel %vm1034, %v1030, %v984
      %v1036 = vsel %vm1034, %v1031, %v986
      %v1037 = vsel %vm1034, %v1032, %v988
      %v1038 = vsel %vm1034, %v1033, %v990
      %vm1039 = vcmask 89088
      %v1040 = vsel %vm1039, %v1035, %v996
      %v1041 = vsel %vm1039, %v1036, %v998
      %v1042 = vsel %vm1039, %v1037, %v1000
      %v1043 = vsel %vm1039, %v1038, %v1002
      %vm1044 = vcmask 97280
      %v1045 = vsel %vm1044, %v1040, %v972
      %v1046 = vsel %vm1044, %v1041, %v974
      %v1047 = vsel %vm1044, %v1042, %v976
      %v1048 = vsel %vm1044, %v1043, %v978
      %vm1049 = vcmask 105472
      %v1050 = vsel %vm1049, %v1045, %v984
      %v1051 = vsel %vm1049, %v1046, %v986
      %v1052 = vsel %vm1049, %v1047, %v988
      %v1053 = vsel %vm1049, %v1048, %v990
      %vm1054 = vcmask 138240
      %v1055 = vsel %vm1054, %v1050, %v996
      %v1056 = vsel %vm1054, %v1051, %v998
      %v1057 = vsel %vm1054, %v1052, %v1000
      %v1058 = vsel %vm1054, %v1053, %v1002
      %vm1059 = vcmask 146432
      %v1060 = vsel %vm1059, %v1055, %v972
      %v1061 = vsel %vm1059, %v1056, %v974
      %v1062 = vsel %vm1059, %v1057, %v976
      %v1063 = vsel %vm1059, %v1058, %v978
      %vm1064 = vcmask 154624
      %v1065 = vsel %vm1064, %v1060, %v984
      %v1066 = vsel %vm1064, %v1061, %v986
      %v1067 = vsel %vm1064, %v1062, %v988
      %v1068 = vsel %vm1064, %v1063, %v990
      %vm1069 = vcmask 187392
      %v1070 = vsel %vm1069, %v1065, %v996
      %v1071 = vsel %vm1069, %v1066, %v998
      %v1072 = vsel %vm1069, %v1067, %v1000
      %v1073 = vsel %vm1069, %v1068, %v1002
      %v1074 = vsel %vm834, %v1070, %v972
      %v1075 = vsel %vm834, %v1071, %v974
      %v1076 = vsel %vm834, %v1072, %v976
      %v1077 = vsel %vm834, %v1073, %v978
      %vm1078 = vcmask 203776
      %v1079 = vsel %vm1078, %v1074, %v984
      %v1080 = vsel %vm1078, %v1075, %v986
      %v1081 = vsel %vm1078, %v1076, %v988
      %v1082 = vsel %vm1078, %v1077, %v990
      %vm1083 = vcmask 236544
      %v1084 = vsel %vm1083, %v1079, %v996
      %v1085 = vsel %vm1083, %v1080, %v998
      %v1086 = vsel %vm1083, %v1081, %v1000
      %v1087 = vsel %vm1083, %v1082, %v1002
      %vm1088 = vcmask 244736
      %v1089 = vsel %vm1088, %v1084, %v1008
      %v1090 = vsel %vm1088, %v1085, %v1010
      %v1091 = vsel %vm1088, %v1086, %v1012
      %v1092 = vsel %vm1088, %v1087, %v1014
      %1093 = vrot.lane.b32.xlu0 %v927, 116
      %v1094 = vpop.permute.xlu0 %1093
      %1095 = vrot.lane.b32.xlu0 %v928, 116
      %v1096 = vpop.permute.xlu0 %1095
      %1097 = vrot.lane.b32.xlu0 %v929, 116
      %v1098 = vpop.permute.xlu0 %1097
      %1099 = vrot.lane.b32.xlu0 %v930, 116
      %v1100 = vpop.permute.xlu0 %1099
      %1105 = vrot.lane.b32.xlu0 %v927, 118
      %v1106 = vpop.permute.xlu0 %1105
      %1107 = vrot.lane.b32.xlu0 %v928, 118
      %v1108 = vpop.permute.xlu0 %1107
      %1109 = vrot.lane.b32.xlu0 %v929, 118
      %v1110 = vpop.permute.xlu0 %1109
      %1111 = vrot.lane.b32.xlu0 %v930, 118
      %v1112 = vpop.permute.xlu0 %1111
      %vm1117 = vcmask 31744
      %v1118 = vsel %vm1117, %v1094, %v1106
      %v1119 = vsel %vm1117, %v1096, %v1108
      %v1120 = vsel %vm1117, %v1098, %v1110
      %v1121 = vsel %vm1117, %v1100, %v1112
      %v1122 = vsel %vm1024, %v1118, 0.0
      %v1123 = vsel %vm1024, %v1119, 0.0
      %v1124 = vsel %vm1024, %v1120, 0.0
      %v1125 = vsel %vm1024, %v1121, 0.0
      %1130 = vrot.lane.b32.xlu0 %v1122, 31
      %v1131 = vpop.permute.xlu0 %1130
      %1132 = vrot.lane.b32.xlu0 %v1123, 31
      %v1133 = vpop.permute.xlu0 %1132
      %1134 = vrot.lane.b32.xlu0 %v1124, 31
      %v1135 = vpop.permute.xlu0 %1134
      %1136 = vrot.lane.b32.xlu0 %v1125, 31
      %v1137 = vpop.permute.xlu0 %1136
      %vm1142 = vcmask 252928
      %v1143 = vsel %vm1142, %v1089, %v1131
      %v1144 = vsel %vm1142, %v1090, %v1133
      %v1145 = vsel %vm1142, %v1091, %v1135
      %v1146 = vsel %vm1142, %v1092, %v1137
      %v1147 = vld [vmem:[%s3] sm:$0xff]
      %v1148 = vld [vmem:[%s3 + $0x8] sm:$0xff]
      %v1149 = vld [vmem:[%s3 + $0x10] sm:$0xff]
      %v1150 = vld [vmem:[%s3 + $0x18] sm:$0xff]
      %s1151 = scalar_lea.vmem %s3, 32
      %v1152 = vld [vmem:[%s1151] sm:$0xff]
      %v1153 = vld [vmem:[%s1151 + $0x8] sm:$0xff]
      %v1154 = vld [vmem:[%s1151 + $0x10] sm:$0xff]
      %v1155 = vld [vmem:[%s1151 + $0x18] sm:$0xff]
      %1160 = vrot.lane.b32.xlu0 %v1143, 127
      %v1161 = vpop.permute.xlu0 %1160
      %1162 = vrot.lane.b32.xlu0 %v1144, 127
      %v1163 = vpop.permute.xlu0 %1162
      %1164 = vrot.lane.b32.xlu0 %v1145, 127
      %v1165 = vpop.permute.xlu0 %1164
      %1166 = vrot.lane.b32.xlu0 %v1146, 127
      %v1167 = vpop.permute.xlu0 %1166
      %v1173 = vsel %vm282, %v1152, 0
      %v1176 = vsel %vm282, %v1153, 0
      %v1179 = vsel %vm282, %v1154, 0
      %v1182 = vsel %vm282, %v1155, 0
      %1184 = vmatpush.msra.mxu0 0.0
      %1185 = vmatpush.msra.mxu0 0.0
      %1186 = vmatpush.msra.mxu0 0.0
      %1187 = vmatpush.msra.mxu0 0.0
      %1188 = vmatpush.msra.mxu0 0.0
      %1189 = vmatpush.msra.mxu0 0.0
      %1190 = vmatpush.msra.mxu0 0.0
      %1191 = vmatpush.msra.mxu0 0.0
      %1192 = vmatpush.msra.mxu0 0.0
      %1193 = vmatpush.msra.mxu0 0.0
      %1194 = vmatpush.msra.mxu0 0.0
      %1195 = vmatpush.msra.mxu0 0.0
      %1196 = vmatpush.msra.mxu0 %v1167
      %1197 = vmatpush.msra.mxu0 %v1165
      %1198 = vmatpush.msra.mxu0 %v1163
      %1199 = vmatpush.msra.mxu0 %v1161
      %1200 = vmatmul.f32.gmra.mxu0 %v1173
      %v1201 = vpop.f32.mrf.mxu0
      %v1202 = vadd.f32 0.0, %v1201
      %1203 = vmatmul.f32.gmra.mxu0 %v1176
      %v1204 = vpop.f32.mrf.mxu0
      %v1205 = vadd.f32 0.0, %v1204
      %1206 = vmatmul.f32.gmra.mxu0 %v1179
      %v1207 = vpop.f32.mrf.mxu0
      %v1208 = vadd.f32 0.0, %v1207
      %1209 = vmatmul.f32.gmra.mxu0 %v1182
      %v1210 = vpop.f32.mrf.mxu0
      %v1211 = vadd.f32 0.0, %v1210
      %1212 = vdwg.mxu0
      %v1214 = vsel %vm282, %v1147, 0
      %v1217 = vsel %vm282, %v1148, 0
      %v1220 = vsel %vm282, %v1149, 0
      %v1223 = vsel %vm282, %v1150, 0
      %1225 = vmatpush.msra.mxu0 0.0
      %1226 = vmatpush.msra.mxu0 0.0
      %1227 = vmatpush.msra.mxu0 0.0
      %1228 = vmatpush.msra.mxu0 0.0
      %1229 = vmatpush.msra.mxu0 0.0
      %1230 = vmatpush.msra.mxu0 0.0
      %1231 = vmatpush.msra.mxu0 0.0
      %1232 = vmatpush.msra.mxu0 0.0
      %1233 = vmatpush.msra.mxu0 0.0
      %1234 = vmatpush.msra.mxu0 0.0
      %1235 = vmatpush.msra.mxu0 0.0
      %1236 = vmatpush.msra.mxu0 0.0
      %1237 = vmatpush.msra.mxu0 %v1146
      %1238 = vmatpush.msra.mxu0 %v1145
      %1239 = vmatpush.msra.mxu0 %v1144
      %1240 = vmatpush.msra.mxu0 %v1143
      %1241 = vmatmul.f32.gmra.mxu0 %v1214
      %v1242 = vpop.f32.mrf.mxu0
      %v1243 = vadd.f32 %v1202, %v1242
      %1244 = vmatmul.f32.gmra.mxu0 %v1217
      %v1245 = vpop.f32.mrf.mxu0
      %v1246 = vadd.f32 %v1205, %v1245
      %1247 = vmatmul.f32.gmra.mxu0 %v1220
      %v1248 = vpop.f32.mrf.mxu0
      %v1249 = vadd.f32 %v1208, %v1248
      %1250 = vmatmul.f32.gmra.mxu0 %v1223
      %v1251 = vpop.f32.mrf.mxu0
      %v1252 = vadd.f32 %v1211, %v1251
      %1253 = vdwg.mxu0
      %s1254 = scalar_lea.vmem %s3, 64
      %v1255 = vld [vmem:[%s1254] sm:$0xff]
      %v1256 = vld [vmem:[%s1254 + $0x8] sm:$0xff]
      %v1257 = vld [vmem:[%s1254 + $0x10] sm:$0xff]
      %v1258 = vld [vmem:[%s1254 + $0x18] sm:$0xff]
      %1259 = vrot.lane.b32.xlu0 %v1143, 126
      %v1260 = vpop.permute.xlu0 %1259
      %1261 = vrot.lane.b32.xlu0 %v1144, 126
      %v1262 = vpop.permute.xlu0 %1261
      %1263 = vrot.lane.b32.xlu0 %v1145, 126
      %v1264 = vpop.permute.xlu0 %1263
      %1265 = vrot.lane.b32.xlu0 %v1146, 126
      %v1266 = vpop.permute.xlu0 %1265
      %v1272 = vsel %vm282, %v1255, 0
      %v1275 = vsel %vm282, %v1256, 0
      %v1278 = vsel %vm282, %v1257, 0
      %v1281 = vsel %vm282, %v1258, 0
      %1283 = vmatpush.msra.mxu0 0.0
      %1284 = vmatpush.msra.mxu0 0.0
      %1285 = vmatpush.msra.mxu0 0.0
      %1286 = vmatpush.msra.mxu0 0.0
      %1287 = vmatpush.msra.mxu0 0.0
      %1288 = vmatpush.msra.mxu0 0.0
      %1289 = vmatpush.msra.mxu0 0.0
      %1290 = vmatpush.msra.mxu0 0.0
      %1291 = vmatpush.msra.mxu0 0.0
      %1292 = vmatpush.msra.mxu0 0.0
      %1293 = vmatpush.msra.mxu0 0.0
      %1294 = vmatpush.msra.mxu0 0.0
      %1295 = vmatpush.msra.mxu0 %v1266
      %1296 = vmatpush.msra.mxu0 %v1264
      %1297 = vmatpush.msra.mxu0 %v1262
      %1298 = vmatpush.msra.mxu0 %v1260
      %1299 = vmatmul.f32.gmra.mxu0 %v1272
      %v1300 = vpop.f32.mrf.mxu0
      %v1301 = vadd.f32 0.0, %v1300
      %1302 = vmatmul.f32.gmra.mxu0 %v1275
      %v1303 = vpop.f32.mrf.mxu0
      %v1304 = vadd.f32 0.0, %v1303
      %1305 = vmatmul.f32.gmra.mxu0 %v1278
      %v1306 = vpop.f32.mrf.mxu0
      %v1307 = vadd.f32 0.0, %v1306
      %1308 = vmatmul.f32.gmra.mxu0 %v1281
      %v1309 = vpop.f32.mrf.mxu0
      %v1310 = vadd.f32 0.0, %v1309
      %1311 = vdwg.mxu0
      %v1312 = vadd.f32 %v1243, %v1301
      %v1313 = vadd.f32 %v1246, %v1304
      %v1314 = vadd.f32 %v1249, %v1307
      %v1315 = vadd.f32 %v1252, %v1310
      %s1316 = scalar_lea.vmem %s3, 96
      %v1317 = vld [vmem:[%s1316] sm:$0xff]
      %v1318 = vld [vmem:[%s1316 + $0x8] sm:$0xff]
      %v1319 = vld [vmem:[%s1316 + $0x10] sm:$0xff]
      %v1320 = vld [vmem:[%s1316 + $0x18] sm:$0xff]
      %1321 = vrot.lane.b32.xlu0 %v1143, 122
      %v1322 = vpop.permute.xlu0 %1321
      %1323 = vrot.lane.b32.xlu0 %v1144, 122
      %v1324 = vpop.permute.xlu0 %1323
      %1325 = vrot.lane.b32.xlu0 %v1145, 122
      %v1326 = vpop.permute.xlu0 %1325
      %1327 = vrot.lane.b32.xlu0 %v1146, 122
      %v1328 = vpop.permute.xlu0 %1327
      %v1334 = vsel %vm282, %v1317, 0
      %v1337 = vsel %vm282, %v1318, 0
      %v1340 = vsel %vm282, %v1319, 0
      %v1343 = vsel %vm282, %v1320, 0
      %1345 = vmatpush.msra.mxu0 0.0
      %1346 = vmatpush.msra.mxu0 0.0
      %1347 = vmatpush.msra.mxu0 0.0
      %1348 = vmatpush.msra.mxu0 0.0
      %1349 = vmatpush.msra.mxu0 0.0
      %1350 = vmatpush.msra.mxu0 0.0
      %1351 = vmatpush.msra.mxu0 0.0
      %1352 = vmatpush.msra.mxu0 0.0
      %1353 = vmatpush.msra.mxu0 0.0
      %1354 = vmatpush.msra.mxu0 0.0
      %1355 = vmatpush.msra.mxu0 0.0
      %1356 = vmatpush.msra.mxu0 0.0
      %1357 = vmatpush.msra.mxu0 %v1328
      %1358 = vmatpush.msra.mxu0 %v1326
      %1359 = vmatpush.msra.mxu0 %v1324
      %1360 = vmatpush.msra.mxu0 %v1322
      %1361 = vmatmul.f32.gmra.mxu0 %v1334
      %v1362 = vpop.f32.mrf.mxu0
      %v1363 = vadd.f32 0.0, %v1362
      %1364 = vmatmul.f32.gmra.mxu0 %v1337
      %v1365 = vpop.f32.mrf.mxu0
      %v1366 = vadd.f32 0.0, %v1365
      %1367 = vmatmul.f32.gmra.mxu0 %v1340
      %v1368 = vpop.f32.mrf.mxu0
      %v1369 = vadd.f32 0.0, %v1368
      %1370 = vmatmul.f32.gmra.mxu0 %v1343
      %v1371 = vpop.f32.mrf.mxu0
      %v1372 = vadd.f32 0.0, %v1371
      %1373 = vdwg.mxu0
      %v1374 = vadd.f32 %v1312, %v1363
      %v1375 = vadd.f32 %v1313, %v1366
      %v1376 = vadd.f32 %v1314, %v1369
      %v1377 = vadd.f32 %v1315, %v1372
      %s1378 = scalar_lea.vmem %s3, 128
      %v1379 = vld [vmem:[%s1378] sm:$0xff]
      %v1380 = vld [vmem:[%s1378 + $0x8] sm:$0xff]
      %v1381 = vld [vmem:[%s1378 + $0x10] sm:$0xff]
      %v1382 = vld [vmem:[%s1378 + $0x18] sm:$0xff]
      %1383 = vrot.lane.b32.xlu0 %v1143, 121
      %v1384 = vpop.permute.xlu0 %1383
      %1385 = vrot.lane.b32.xlu0 %v1144, 121
      %v1386 = vpop.permute.xlu0 %1385
      %1387 = vrot.lane.b32.xlu0 %v1145, 121
      %v1388 = vpop.permute.xlu0 %1387
      %1389 = vrot.lane.b32.xlu0 %v1146, 121
      %v1390 = vpop.permute.xlu0 %1389
      %v1396 = vsel %vm282, %v1379, 0
      %v1399 = vsel %vm282, %v1380, 0
      %v1402 = vsel %vm282, %v1381, 0
      %v1405 = vsel %vm282, %v1382, 0
      %1407 = vmatpush.msra.mxu0 0.0
      %1408 = vmatpush.msra.mxu0 0.0
      %1409 = vmatpush.msra.mxu0 0.0
      %1410 = vmatpush.msra.mxu0 0.0
      %1411 = vmatpush.msra.mxu0 0.0
      %1412 = vmatpush.msra.mxu0 0.0
      %1413 = vmatpush.msra.mxu0 0.0
      %1414 = vmatpush.msra.mxu0 0.0
      %1415 = vmatpush.msra.mxu0 0.0
      %1416 = vmatpush.msra.mxu0 0.0
      %1417 = vmatpush.msra.mxu0 0.0
      %1418 = vmatpush.msra.mxu0 0.0
      %1419 = vmatpush.msra.mxu0 %v1390
      %1420 = vmatpush.msra.mxu0 %v1388
      %1421 = vmatpush.msra.mxu0 %v1386
      %1422 = vmatpush.msra.mxu0 %v1384
      %1423 = vmatmul.f32.gmra.mxu0 %v1396
      %v1424 = vpop.f32.mrf.mxu0
      %v1425 = vadd.f32 0.0, %v1424
      %1426 = vmatmul.f32.gmra.mxu0 %v1399
      %v1427 = vpop.f32.mrf.mxu0
      %v1428 = vadd.f32 0.0, %v1427
      %1429 = vmatmul.f32.gmra.mxu0 %v1402
      %v1430 = vpop.f32.mrf.mxu0
      %v1431 = vadd.f32 0.0, %v1430
      %1432 = vmatmul.f32.gmra.mxu0 %v1405
      %v1433 = vpop.f32.mrf.mxu0
      %v1434 = vadd.f32 0.0, %v1433
      %1435 = vdwg.mxu0
      %v1436 = vadd.f32 %v1374, %v1425
      %v1437 = vadd.f32 %v1375, %v1428
      %v1438 = vadd.f32 %v1376, %v1431
      %v1439 = vadd.f32 %v1377, %v1434
      %s1440 = scalar_lea.vmem %s3, 160
      %v1441 = vld [vmem:[%s1440] sm:$0xff]
      %v1442 = vld [vmem:[%s1440 + $0x8] sm:$0xff]
      %v1443 = vld [vmem:[%s1440 + $0x10] sm:$0xff]
      %v1444 = vld [vmem:[%s1440 + $0x18] sm:$0xff]
      %1445 = vrot.lane.b32.xlu0 %v1143, 120
      %v1446 = vpop.permute.xlu0 %1445
      %1447 = vrot.lane.b32.xlu0 %v1144, 120
      %v1448 = vpop.permute.xlu0 %1447
      %1449 = vrot.lane.b32.xlu0 %v1145, 120
      %v1450 = vpop.permute.xlu0 %1449
      %1451 = vrot.lane.b32.xlu0 %v1146, 120
      %v1452 = vpop.permute.xlu0 %1451
      %v1458 = vsel %vm282, %v1441, 0
      %v1461 = vsel %vm282, %v1442, 0
      %v1464 = vsel %vm282, %v1443, 0
      %v1467 = vsel %vm282, %v1444, 0
      %1469 = vmatpush.msra.mxu0 0.0
      %1470 = vmatpush.msra.mxu0 0.0
      %1471 = vmatpush.msra.mxu0 0.0
      %1472 = vmatpush.msra.mxu0 0.0
      %1473 = vmatpush.msra.mxu0 0.0
      %1474 = vmatpush.msra.mxu0 0.0
      %1475 = vmatpush.msra.mxu0 0.0
      %1476 = vmatpush.msra.mxu0 0.0
      %1477 = vmatpush.msra.mxu0 0.0
      %1478 = vmatpush.msra.mxu0 0.0
      %1479 = vmatpush.msra.mxu0 0.0
      %1480 = vmatpush.msra.mxu0 0.0
      %1481 = vmatpush.msra.mxu0 %v1452
      %1482 = vmatpush.msra.mxu0 %v1450
      %1483 = vmatpush.msra.mxu0 %v1448
      %1484 = vmatpush.msra.mxu0 %v1446
      %1485 = vmatmul.f32.gmra.mxu0 %v1458
      %v1486 = vpop.f32.mrf.mxu0
      %v1487 = vadd.f32 0.0, %v1486
      %1488 = vmatmul.f32.gmra.mxu0 %v1461
      %v1489 = vpop.f32.mrf.mxu0
      %v1490 = vadd.f32 0.0, %v1489
      %1491 = vmatmul.f32.gmra.mxu0 %v1464
      %v1492 = vpop.f32.mrf.mxu0
      %v1493 = vadd.f32 0.0, %v1492
      %1494 = vmatmul.f32.gmra.mxu0 %v1467
      %v1495 = vpop.f32.mrf.mxu0
      %v1496 = vadd.f32 0.0, %v1495
      %1497 = vdwg.mxu0
      %v1498 = vadd.f32 %v1436, %v1487
      %v1499 = vadd.f32 %v1437, %v1490
      %v1500 = vadd.f32 %v1438, %v1493
      %v1501 = vadd.f32 %v1439, %v1496
      %s1502 = scalar_lea.vmem %s3, 192
      %v1503 = vld [vmem:[%s1502] sm:$0xff]
      %v1504 = vld [vmem:[%s1502 + $0x8] sm:$0xff]
      %v1505 = vld [vmem:[%s1502 + $0x10] sm:$0xff]
      %v1506 = vld [vmem:[%s1502 + $0x18] sm:$0xff]
      %1507 = vrot.lane.b32.xlu0 %v1143, 116
      %v1508 = vpop.permute.xlu0 %1507
      %1509 = vrot.lane.b32.xlu0 %v1144, 116
      %v1510 = vpop.permute.xlu0 %1509
      %1511 = vrot.lane.b32.xlu0 %v1145, 116
      %v1512 = vpop.permute.xlu0 %1511
      %1513 = vrot.lane.b32.xlu0 %v1146, 116
      %v1514 = vpop.permute.xlu0 %1513
      %v1520 = vsel %vm282, %v1503, 0
      %v1523 = vsel %vm282, %v1504, 0
      %v1526 = vsel %vm282, %v1505, 0
      %v1529 = vsel %vm282, %v1506, 0
      %1531 = vmatpush.msra.mxu0 0.0
      %1532 = vmatpush.msra.mxu0 0.0
      %1533 = vmatpush.msra.mxu0 0.0
      %1534 = vmatpush.msra.mxu0 0.0
      %1535 = vmatpush.msra.mxu0 0.0
      %1536 = vmatpush.msra.mxu0 0.0
      %1537 = vmatpush.msra.mxu0 0.0
      %1538 = vmatpush.msra.mxu0 0.0
      %1539 = vmatpush.msra.mxu0 0.0
      %1540 = vmatpush.msra.mxu0 0.0
      %1541 = vmatpush.msra.mxu0 0.0
      %1542 = vmatpush.msra.mxu0 0.0
      %1543 = vmatpush.msra.mxu0 %v1514
      %1544 = vmatpush.msra.mxu0 %v1512
      %1545 = vmatpush.msra.mxu0 %v1510
      %1546 = vmatpush.msra.mxu0 %v1508
      %1547 = vmatmul.f32.gmra.mxu0 %v1520
      %v1548 = vpop.f32.mrf.mxu0
      %v1549 = vadd.f32 0.0, %v1548
      %1550 = vmatmul.f32.gmra.mxu0 %v1523
      %v1551 = vpop.f32.mrf.mxu0
      %v1552 = vadd.f32 0.0, %v1551
      %1553 = vmatmul.f32.gmra.mxu0 %v1526
      %v1554 = vpop.f32.mrf.mxu0
      %v1555 = vadd.f32 0.0, %v1554
      %1556 = vmatmul.f32.gmra.mxu0 %v1529
      %v1557 = vpop.f32.mrf.mxu0
      %v1558 = vadd.f32 0.0, %v1557
      %1559 = vdwg.mxu0
      %v1560 = vadd.f32 %v1498, %v1549
      %v1561 = vadd.f32 %v1499, %v1552
      %v1562 = vadd.f32 %v1500, %v1555
      %v1563 = vadd.f32 %v1501, %v1558
      %s1564 = scalar_lea.vmem %s3, 224
      %v1565 = vld [vmem:[%s1564] sm:$0xff]
      %v1566 = vld [vmem:[%s1564 + $0x8] sm:$0xff]
      %v1567 = vld [vmem:[%s1564 + $0x10] sm:$0xff]
      %v1568 = vld [vmem:[%s1564 + $0x18] sm:$0xff]
      %1569 = vrot.lane.b32.xlu0 %v1143, 115
      %v1570 = vpop.permute.xlu0 %1569
      %1571 = vrot.lane.b32.xlu0 %v1144, 115
      %v1572 = vpop.permute.xlu0 %1571
      %1573 = vrot.lane.b32.xlu0 %v1145, 115
      %v1574 = vpop.permute.xlu0 %1573
      %1575 = vrot.lane.b32.xlu0 %v1146, 115
      %v1576 = vpop.permute.xlu0 %1575
      %v1582 = vsel %vm282, %v1565, 0
      %v1585 = vsel %vm282, %v1566, 0
      %v1588 = vsel %vm282, %v1567, 0
      %v1591 = vsel %vm282, %v1568, 0
      %1593 = vmatpush.msra.mxu0 0.0
      %1594 = vmatpush.msra.mxu0 0.0
      %1595 = vmatpush.msra.mxu0 0.0
      %1596 = vmatpush.msra.mxu0 0.0
      %1597 = vmatpush.msra.mxu0 0.0
      %1598 = vmatpush.msra.mxu0 0.0
      %1599 = vmatpush.msra.mxu0 0.0
      %1600 = vmatpush.msra.mxu0 0.0
      %1601 = vmatpush.msra.mxu0 0.0
      %1602 = vmatpush.msra.mxu0 0.0
      %1603 = vmatpush.msra.mxu0 0.0
      %1604 = vmatpush.msra.mxu0 0.0
      %1605 = vmatpush.msra.mxu0 %v1576
      %1606 = vmatpush.msra.mxu0 %v1574
      %1607 = vmatpush.msra.mxu0 %v1572
      %1608 = vmatpush.msra.mxu0 %v1570
      %1609 = vmatmul.f32.gmra.mxu0 %v1582
      %v1610 = vpop.f32.mrf.mxu0
      %v1611 = vadd.f32 0.0, %v1610
      %1612 = vmatmul.f32.gmra.mxu0 %v1585
      %v1613 = vpop.f32.mrf.mxu0
      %v1614 = vadd.f32 0.0, %v1613
      %1615 = vmatmul.f32.gmra.mxu0 %v1588
      %v1616 = vpop.f32.mrf.mxu0
      %v1617 = vadd.f32 0.0, %v1616
      %1618 = vmatmul.f32.gmra.mxu0 %v1591
      %v1619 = vpop.f32.mrf.mxu0
      %v1620 = vadd.f32 0.0, %v1619
      %1621 = vdwg.mxu0
      %v1622 = vadd.f32 %v1560, %v1611
      %v1623 = vadd.f32 %v1561, %v1614
      %v1624 = vadd.f32 %v1562, %v1617
      %v1625 = vadd.f32 %v1563, %v1620
      %s1626 = scalar_lea.vmem %s3, 256
      %v1627 = vld [vmem:[%s1626] sm:$0xff]
      %v1628 = vld [vmem:[%s1626 + $0x8] sm:$0xff]
      %v1629 = vld [vmem:[%s1626 + $0x10] sm:$0xff]
      %v1630 = vld [vmem:[%s1626 + $0x18] sm:$0xff]
      %1631 = vrot.lane.b32.xlu0 %v1143, 114
      %v1632 = vpop.permute.xlu0 %1631
      %1633 = vrot.lane.b32.xlu0 %v1144, 114
      %v1634 = vpop.permute.xlu0 %1633
      %1635 = vrot.lane.b32.xlu0 %v1145, 114
      %v1636 = vpop.permute.xlu0 %1635
      %1637 = vrot.lane.b32.xlu0 %v1146, 114
      %v1638 = vpop.permute.xlu0 %1637
      %v1644 = vsel %vm282, %v1627, 0
      %v1647 = vsel %vm282, %v1628, 0
      %v1650 = vsel %vm282, %v1629, 0
      %v1653 = vsel %vm282, %v1630, 0
      %1655 = vmatpush.msra.mxu0 0.0
      %1656 = vmatpush.msra.mxu0 0.0
      %1657 = vmatpush.msra.mxu0 0.0
      %1658 = vmatpush.msra.mxu0 0.0
      %1659 = vmatpush.msra.mxu0 0.0
      %1660 = vmatpush.msra.mxu0 0.0
      %1661 = vmatpush.msra.mxu0 0.0
      %1662 = vmatpush.msra.mxu0 0.0
      %1663 = vmatpush.msra.mxu0 0.0
      %1664 = vmatpush.msra.mxu0 0.0
      %1665 = vmatpush.msra.mxu0 0.0
      %1666 = vmatpush.msra.mxu0 0.0
      %1667 = vmatpush.msra.mxu0 %v1638
      %1668 = vmatpush.msra.mxu0 %v1636
      %1669 = vmatpush.msra.mxu0 %v1634
      %1670 = vmatpush.msra.mxu0 %v1632
      %1671 = vmatmul.f32.gmra.mxu0 %v1644
      %v1672 = vpop.f32.mrf.mxu0
      %v1673 = vadd.f32 0.0, %v1672
      %1674 = vmatmul.f32.gmra.mxu0 %v1647
      %v1675 = vpop.f32.mrf.mxu0
      %v1676 = vadd.f32 0.0, %v1675
      %1677 = vmatmul.f32.gmra.mxu0 %v1650
      %v1678 = vpop.f32.mrf.mxu0
      %v1679 = vadd.f32 0.0, %v1678
      %1680 = vmatmul.f32.gmra.mxu0 %v1653
      %v1681 = vpop.f32.mrf.mxu0
      %v1682 = vadd.f32 0.0, %v1681
      %1683 = vdwg.mxu0
      %v1684 = vadd.f32 %v1622, %v1673
      %v1685 = vadd.f32 %v1623, %v1676
      %v1686 = vadd.f32 %v1624, %v1679
      %v1687 = vadd.f32 %v1625, %v1682
      %v1688 = vld [vmem:[%s4] sm:$0xff]
      %v1689 = vld [vmem:[%s4 + $0x8] sm:$0xff]
      %v1690 = vld [vmem:[%s4 + $0x10] sm:$0xff]
      %v1691 = vld [vmem:[%s4 + $0x18] sm:$0xff]
      %1693 = vset.pattern.permute.xlu0 0
      %1694 = vperm.xlu0 %1693, %v1688
      %v1695 = vpop.permute.xlu0 %1694
      %1698 = vset.pattern.permute.xlu0 0
      %1699 = vperm.xlu0 %1698, %v1689
      %v1700 = vpop.permute.xlu0 %1699
      %1703 = vset.pattern.permute.xlu0 0
      %1704 = vperm.xlu0 %1703, %v1690
      %v1705 = vpop.permute.xlu0 %1704
      %1708 = vset.pattern.permute.xlu0 0
      %1709 = vperm.xlu0 %1708, %v1691
      %v1710 = vpop.permute.xlu0 %1709
      %v1712 = vadd.f32 %v1684, %v1695
      %v1713 = vadd.f32 %v1685, %v1700
      %v1714 = vadd.f32 %v1686, %v1705
      %v1715 = vadd.f32 %v1687, %v1710
      %v1716 = vmul.f32 %v1712, %v828
      %v1717 = vmul.f32 %v1713, %v828
      %v1718 = vmul.f32 %v1714, %v828
      %v1719 = vmul.f32 %v1715, %v828
      %v1720 = vsel %vm834, %v1716, 0.0
      %1721 = vadd.xlane.f32.xlu0 %v1720
      %v1722 = vpop.xlane.xlu0 %1721
      %v1723 = vsel %vm834, %v1717, 0.0
      %1724 = vadd.xlane.f32.xlu0 %v1723
      %v1725 = vpop.xlane.xlu0 %1724
      %v1726 = vsel %vm834, %v1718, 0.0
      %1727 = vadd.xlane.f32.xlu0 %v1726
      %v1728 = vpop.xlane.xlu0 %1727
      %v1729 = vsel %vm834, %v1719, 0.0
      %1730 = vadd.xlane.f32.xlu0 %v1729
      %v1731 = vpop.xlane.xlu0 %1730
      %v1732 = vmul.f32 %v1722, 0.0625
      %v1733 = vmul.f32 %v1725, 0.0625
      %v1734 = vmul.f32 %v1728, 0.0625
      %v1735 = vmul.f32 %v1731, 0.0625
      %v1736 = vsub.f32 %v1712, %v1732
      %v1737 = vsub.f32 %v1713, %v1733
      %v1738 = vsub.f32 %v1714, %v1734
      %v1739 = vsub.f32 %v1715, %v1735
      %v1740 = vmul.f32 %v1736, %v828
      %v1741 = vmul.f32 %v1737, %v828
      %v1742 = vmul.f32 %v1738, %v828
      %v1743 = vmul.f32 %v1739, %v828
      %v1744 = vmul.f32 %v1740, %v1740
      %v1745 = vmul.f32 %v1741, %v1741
      %v1746 = vmul.f32 %v1742, %v1742
      %v1747 = vmul.f32 %v1743, %v1743
      %v1748 = vsel %vm834, %v1744, 0.0
      %1749 = vadd.xlane.f32.xlu0 %v1748
      %v1750 = vpop.xlane.xlu0 %1749
      %v1751 = vsel %vm834, %v1745, 0.0
      %1752 = vadd.xlane.f32.xlu0 %v1751
      %v1753 = vpop.xlane.xlu0 %1752
      %v1754 = vsel %vm834, %v1746, 0.0
      %1755 = vadd.xlane.f32.xlu0 %v1754
      %v1756 = vpop.xlane.xlu0 %1755
      %v1757 = vsel %vm834, %v1747, 0.0
      %1758 = vadd.xlane.f32.xlu0 %v1757
      %v1759 = vpop.xlane.xlu0 %1758
      %v1760 = vmul.f32 %v1750, 0.0625
      %v1761 = vmul.f32 %v1753, 0.0625
      %v1762 = vmul.f32 %v1756, 0.0625
      %v1763 = vmul.f32 %v1759, 0.0625
      %v1764 = vadd.f32 %v1760, 1e-05
      %v1765 = vadd.f32 %v1761, 1e-05
      %v1766 = vadd.f32 %v1762, 1e-05
      %v1767 = vadd.f32 %v1763, 1e-05
      %v1768 = vrsqrt.pop %v1764
      %v1769 = vmul.f32 %v1768, %v1764
      %v1770 = vmul.f32 %v1769, %v1768
      %v1771 = vmul.f32 0.5, %v1770
      %v1772 = vsub.f32 1.5, %v1771
      %v1773 = vmul.f32 %v1768, %v1772
      %vm1774 = vweird.f32 %v1764
      %vm1775 = vweird.f32 %v1768
      %vm1776 = vmor %vm1774, %vm1775
      %v1777 = vsel %vm1776, %v1768, %v1773
      %v1778 = vrsqrt.pop %v1765
      %v1779 = vmul.f32 %v1778, %v1765
      %v1780 = vmul.f32 %v1779, %v1778
      %v1781 = vmul.f32 0.5, %v1780
      %v1782 = vsub.f32 1.5, %v1781
      %v1783 = vmul.f32 %v1778, %v1782
      %vm1784 = vweird.f32 %v1765
      %vm1785 = vweird.f32 %v1778
      %vm1786 = vmor %vm1784, %vm1785
      %v1787 = vsel %vm1786, %v1778, %v1783
      %v1788 = vrsqrt.pop %v1766
      %v1789 = vmul.f32 %v1788, %v1766
      %v1790 = vmul.f32 %v1789, %v1788
      %v1791 = vmul.f32 0.5, %v1790
      %v1792 = vsub.f32 1.5, %v1791
      %v1793 = vmul.f32 %v1788, %v1792
      %vm1794 = vweird.f32 %v1766
      %vm1795 = vweird.f32 %v1788
      %vm1796 = vmor %vm1794, %vm1795
      %v1797 = vsel %vm1796, %v1788, %v1793
      %v1798 = vrsqrt.pop %v1767
      %v1799 = vmul.f32 %v1798, %v1767
      %v1800 = vmul.f32 %v1799, %v1798
      %v1801 = vmul.f32 0.5, %v1800
      %v1802 = vsub.f32 1.5, %v1801
      %v1803 = vmul.f32 %v1798, %v1802
      %vm1804 = vweird.f32 %v1767
      %vm1805 = vweird.f32 %v1798
      %vm1806 = vmor %vm1804, %vm1805
      %v1807 = vsel %vm1806, %v1798, %v1803
      %v1808 = vmul.f32 %v1736, %v1777
      %v1809 = vmul.f32 %v1737, %v1787
      %v1810 = vmul.f32 %v1738, %v1797
      %v1811 = vmul.f32 %v1739, %v1807
      %v1812 = vadd.f32 %v1808, %v495
      %v1813 = vadd.f32 %v1809, %v497
      %v1814 = vadd.f32 %v1810, %v499
      %v1815 = vadd.f32 %v1811, %v501
      %1816 = vst.msk [vmem:[%s251] sm:$0xff] %vm834, %v1812
      %1817 = vst.msk [vmem:[%s251 + $0x8] sm:$0xff] %vm834, %v1813
      %1818 = vst.msk [vmem:[%s251 + $0x10] sm:$0xff] %vm834, %v1814
      %1819 = vst.msk [vmem:[%s251 + $0x18] sm:$0xff] %vm834, %v1815
      %p1820 = scmp.lt.s32.totalorder %s17, 1
      %s1821 = scalar_select %p1820, %s17, 1
      %s1822 = smul.addr %s1821, 4
      %s1823 = smul.addr %s1822, 8
      %s1824 = scalar_lea.vmem %s6, %s1823
      // Predicated region
      $region45: #{_lambda_.8} parent=43 // pred_check
        %p1825 = pneg %p166
      $region46: #{_lambda_.8} parent=43 // pred_check_branch
        %1827 = sbr.rel (%p1825) target = $region48
      $region47: #{_lambda_.8} parent=43 // pred_region
        _
      $region48: #{_lambda_.8} parent=43 // pred_fallthru
        _
    $region44: #{_lambda_.8} parent=5 // pred_fallthru
      _
    %p1828 = scmp.le.s32.totalorder 2, %s12
    // Predicated region
    $region49: #{_lambda_.8} parent=5 // pred_check
      %p1829 = pneg %p1828
    $region50: #{_lambda_.8} parent=5 // pred_check_branch
      %1831 = sbr.rel (%p1829) target = $region52
    $region51: #{_lambda_.8} parent=5 // pred_region
      %s1832 = ssub.s32 %s12, 2
      // Predicated region
      $region53: #{_lambda_.8} parent=51 // pred_check
        %p1833 = pneg %p172
      $region54: #{_lambda_.8} parent=51 // pred_check_branch
        %1835 = sbr.rel (%p1833) target = $region56
      $region55: #{_lambda_.8} parent=51 // pred_region
        %p1836 = scmp.lt.s32.totalorder %s18, 1
        %s1837 = scalar_select %p1836, %s18, 1
        %s1838 = smul.addr %s1837, 4
        %s1839 = smul.addr %s1838, 8
        %s1840 = scalar_lea.vmem %s6, %s1839
      $region56: #{_lambda_.8} parent=51 // pred_fallthru
        _
    $region52: #{_lambda_.8} parent=5 // pred_fallthru
      _
  $region6: #{_lambda_.8} parent=0 // loop_footer
    %s16 = sadd.s32 1, %s12
  $region7: #{_lambda_.8} parent=0 // loop_footer_branch
    %11 = sbr.rel target = $region3
  $region8: #{_lambda_.8} parent=0 // loop_exit
    _

</llo_original>
